<compile_context>
chip_gen: v6e
topology: v6e:2x2x1
jax: 0.10.0
libtpu: 0.0.40
codegen_flags: <defaults>
</compile_context>

<pallas_src>
import functools

import jax
import jax.numpy as jnp
from jax.experimental import pallas as pl
from jax.experimental.pallas import tpu as pltpu

EPS = 1e-5                          # PyTorch BatchNorm default eps
VMEM_LIMIT = 64 * 1024 * 1024       # <= physical VMEM on v5e/v6e (128 MiB) and v7x (64 MiB)


def _round_up(x, m):
    return ((x + m - 1) // m) * m


# ----------------------------- Pallas kernels ------------------------------

def _res2d_block_kernel(xw_ref, w13_ref, s1_ref, s3_ref, w2_ref, s2_ref, o_ref,
                        hbuf, scbuf, *, cin, cout, ho, wo):
    """One full Res_2d block for one batch element.

    xw_ref : (1, Hp, Wp2, 2*cin)  halo-padded input, even/odd columns folded into lanes
    w13_ref: (9*cin, 2*cout)      folded conv_1 | conv_3 weights (BN + bias folded)
    w2_ref : (9*cout, cout)       folded conv_2 weights
    s*_ref : (1, cout)            folded shifts (f32)
    o_ref  : (1, ho, wo, cout)    relu(bn3(conv3(x)) + bn2(conv2(relu(bn1(conv1(x))))))
    hbuf   : (ho+2, wo+2, cout)   VMEM scratch: relu(bn1(conv1)) with a zero halo
    scbuf  : (ho, wo, cout)       VMEM scratch: bn3(conv3) residual branch (f32)
    """
    w13 = w13_ref[...]
    s1 = s1_ref[...]
    s3 = s3_ref[...]

    hbuf[...] = jnp.zeros_like(hbuf)          # zero halo for the stride-1 conv_2

    # ---- pass 1: conv_1 || conv_3 (stride 2), patches built in VMEM per output row
    @pl.loop(0, ho)
    def _(i):
        taps = []
        for kh in range(3):
            r = 2 * i + kh                    # stride-2 row tap (dynamic major index)
            for kw in range(3):
                rw, pw = kw // 2, kw % 2      # column phase -> unit-stride lane slice
                taps.append(xw_ref[0, r, rw:rw + wo, pw * cin:(pw + 1) * cin])
        patch = jnp.concatenate(taps, axis=-1)                       # (wo, 9*cin)
        acc = jnp.dot(patch, w13, preferred_element_type=jnp.float32)  # (wo, 2*cout)
        hbuf[1 + i, 1:1 + wo, :] = jnp.maximum(acc[:, :cout] + s1,
                                               0.0).astype(hbuf.dtype)
        scbuf[i] = acc[:, cout:] + s3

    w2 = w2_ref[...]
    s2 = s2_ref[...]

    # ---- pass 2: conv_2 (stride 1) + residual add + final ReLU, all from VMEM
    @pl.loop(0, ho)
    def _(i):
        taps = []
        for kh in range(3):
            for kw in range(3):
                taps.append(hbuf[i + kh, kw:kw + wo, :])
        patch = jnp.concatenate(taps, axis=-1)                       # (wo, 9*cout)
        acc = jnp.dot(patch, w2, preferred_element_type=jnp.float32)
        acc = acc + s2 + scbuf[i]                                    # f32 epilogue
        o_ref[0, i] = jnp.maximum(acc, 0.0).astype(o_ref.dtype)


def _dense_head_kernel(x_ref, w1_ref, s1_ref, w2_ref, b2_ref, o_ref):
    """dense1 + folded BatchNorm1d + ReLU + fc, chained in VMEM (one launch)."""
    h = jnp.dot(x_ref[...], w1_ref[...], preferred_element_type=jnp.float32)
    h = jnp.maximum(h + s1_ref[...], 0.0)
    # TODO(synk): nn.Dropout(0.5) is identity in eval mode; training RNG mask not implemented.
    out = jnp.dot(h.astype(w2_ref.dtype), w2_ref[...],
                  preferred_element_type=jnp.float32)
    o_ref[...] = (out + b2_ref[...]).astype(o_ref.dtype)


# --------------------------- pallas_call wrappers ---------------------------

def bn_fold(bn):
    scale = bn["gamma"] / jnp.sqrt(bn["var"] + EPS)
    shift = bn["beta"] - bn["mean"] * scale
    return scale, shift


def fold_conv_bn(w, b, bn):
    """Fold eval-mode BN (and conv bias) into the flattened conv weight.

    w: PyTorch layout (Cout, Cin, kh, kw) -> (9*Cin, Cout) with BN scale applied.
    """
    cout = w.shape[0]
    scale, shift = bn_fold(bn)
    w_flat = jnp.transpose(w, (2, 3, 1, 0)).reshape(-1, cout)       # (9*Cin, Cout)
    return w_flat * scale[None, :], b * scale + shift


def res2d(x, p):
    """One fused Pallas kernel per Res_2d block (stride 2).  x: (B, H, W, Cin) bf16."""
    B, H, W, cin = x.shape
    cout = p["w1"].shape[0]
    ho = (H - 1) // 2 + 1
    wo = (W - 1) // 2 + 1

    w1, s1 = fold_conv_bn(p["w1"], p["b1"], p["bn1"])
    w3, s3 = fold_conv_bn(p["w3"], p["b3"], p["bn3"])
    w2, s2 = fold_conv_bn(p["w2"], p["b2"], p["bn2"])
    w13 = jnp.concatenate([w1, w3], axis=1).astype(jnp.bfloat16)    # (9*cin, 2*cout)
    w2 = w2.astype(jnp.bfloat16)                                    # (9*cout, cout)

    # 3x3 / pad=1 halo pad; pad the width to an even count so the even/odd column
    # phases fold into the lane dimension with a free, contiguous reshape.
    hp = H + 2
    pad_r = 1 + (W % 2)
    wp = W + 1 + pad_r                                              # even
    xw = jnp.pad(x, ((0, 0), (1, 1), (1, pad_r), (0, 0))).reshape(
        B, hp, wp // 2, 2 * cin)

    kern = functools.partial(_res2d_block_kernel, cin=cin, cout=cout, ho=ho, wo=wo)
    # TODO(synk): pipeline_mode=pl.Buffered(1) on the constant weight/shift specs would
    # drop their dead double-buffer copy (extra v7x VMEM headroom at n_channels=128).
    return pl.pallas_call(
        kern,
        out_shape=jax.ShapeDtypeStruct((B, ho, wo, cout), jnp.bfloat16),
        grid=(B,),
        in_specs=[
            pl.BlockSpec((1, hp, wp // 2, 2 * cin), lambda b: (b, 0, 0, 0)),
            pl.BlockSpec((9 * cin, 2 * cout), lambda b: (0, 0)),
            pl.BlockSpec((1, cout), lambda b: (0, 0)),
            pl.BlockSpec((1, cout), lambda b: (0, 0)),
            pl.BlockSpec((9 * cout, cout), lambda b: (0, 0)),
            pl.BlockSpec((1, cout), lambda b: (0, 0)),
        ],
        out_specs=pl.BlockSpec((1, ho, wo, cout), lambda b: (b, 0, 0, 0)),
        scratch_shapes=[pltpu.VMEM((ho + 2, wo + 2, cout), jnp.bfloat16),
                        pltpu.VMEM((ho, wo, cout), jnp.float32)],
        compiler_params=pltpu.CompilerParams(
            dimension_semantics=("parallel",),
            vmem_limit_bytes=VMEM_LIMIT),
    )(xw, w13, s1.reshape(1, cout), s3.reshape(1, cout), w2, s2.reshape(1, cout))


def dense_head(x, w1, sh1, w2, b2):
    """Fused dense1 -> BN1d -> ReLU -> (dropout=id) -> fc.  x: (B, C4)."""
    M, K = x.shape
    H = w1.shape[1]
    N = w2.shape[1]
    return pl.pallas_call(
        _dense_head_kernel,
        out_shape=jax.ShapeDtypeStruct((M, N), jnp.float32),
        grid=(1,),
        in_specs=[
            pl.BlockSpec((M, K), lambda i: (0, 0)),
            pl.BlockSpec((K, H), lambda i: (0, 0)),
            pl.BlockSpec((1, H), lambda i: (0, 0)),
            pl.BlockSpec((H, N), lambda i: (0, 0)),
            pl.BlockSpec((1, N), lambda i: (0, 0)),
        ],
        out_specs=pl.BlockSpec((M, N), lambda i: (0, 0)),
        compiler_params=pltpu.CompilerParams(
            dimension_semantics=("arbitrary",),
            vmem_limit_bytes=VMEM_LIMIT),
    )(x, w1, sh1.reshape(1, H), w2, b2.reshape(1, N))


# ------------------------------- forward pass --------------------------------

def forward(params, x_nchw):
    # spec_bn (BatchNorm2d(1), eval) folded into a scalar affine; cast to bf16 right
    # away so every later activation HBM pass is half width.
    s0, t0 = bn_fold(params["spec_bn"])
    x = x_nchw * s0[0] + t0[0]
    x = jnp.transpose(x, (0, 2, 3, 1)).astype(jnp.bfloat16)          # NCHW -> NHWC

    for name in ("layer1", "layer2", "layer3", "layer4",
                 "layer5", "layer6", "layer7"):
        x = res2d(x, params[name])

    # PyTorch: x.squeeze(2) requires the frequency axis to have collapsed to 1.
    assert x.shape[1] == 1, x.shape
    feat = x[:, 0]                                                   # (B, W7, C4)
    feat = jnp.max(feat, axis=1) if feat.shape[1] != 1 else feat[:, 0]   # MaxPool1d

    # dense1 + BatchNorm1d + ReLU + (dropout=id) + fc, fc padded to 128 lanes.
    s1, t1 = bn_fold(params["bn1d"])
    w1 = (params["dense1_w"].T * s1[None, :]).astype(jnp.bfloat16)
    sh1 = params["dense1_b"] * s1 + t1
    n_classes = params["fc_b"].shape[0]
    n_pad = max(128, _round_up(n_classes, 128))
    w2 = jnp.zeros((w1.shape[1], n_pad), jnp.bfloat16).at[:, :n_classes].set(
        params["fc_w"].T.astype(jnp.bfloat16))
    b2 = jnp.zeros((n_pad,), jnp.float32).at[:n_classes].set(params["fc_b"])
    out = dense_head(feat, w1, sh1, w2, b2)
    return out[:, :n_classes]


# ----------------------- deterministic parameter init -----------------------

def init_params(key, n_channels=8, n_classes=10):
    keys = iter(jax.random.split(key, 256))

    def nk():
        return next(keys)

    def conv(cin, cout):
        w = 0.1 * jax.random.normal(nk(), (cout, cin, 3, 3), jnp.float32)
        b = 0.05 * jax.random.normal(nk(), (cout,), jnp.float32)
        return w, b

    def bn(c):
        return dict(
            gamma=1.0 + 0.1 * jax.random.normal(nk(), (c,), jnp.float32),
            beta=0.1 * jax.random.normal(nk(), (c,), jnp.float32),
            mean=0.1 * jax.random.normal(nk(), (c,), jnp.float32),
            var=1.0 + 0.1 * jnp.abs(jax.random.normal(nk(), (c,), jnp.float32)),
        )

    def res_block(cin, cout):
        w1, b1 = conv(cin, cout)
        w2, b2 = conv(cout, cout)
        w3, b3 = conv(cin, cout)
        return dict(w1=w1, b1=b1, bn1=bn(cout),
                    w2=w2, b2=b2, bn2=bn(cout),
                    w3=w3, b3=b3, bn3=bn(cout))

    c, c2, c4 = n_channels, 2 * n_channels, 4 * n_channels
    return dict(
        spec_bn=bn(1),
        layer1=res_block(1, c),
        layer2=res_block(c, c),
        layer3=res_block(c, c2),
        layer4=res_block(c2, c2),
        layer5=res_block(c2, c2),
        layer6=res_block(c2, c2),
        layer7=res_block(c2, c4),
        dense1_w=0.1 * jax.random.normal(nk(), (c4, c4), jnp.float32),
        dense1_b=0.05 * jax.random.normal(nk(), (c4,), jnp.float32),
        bn1d=bn(c4),
        fc_w=0.1 * jax.random.normal(nk(), (n_classes, c4), jnp.float32),
        fc_b=0.05 * jax.random.normal(nk(), (n_classes,), jnp.float32),
    )


if __name__ == "__main__":
    key = jax.random.PRNGKey(0)
    pkey, xkey = jax.random.split(key)

    n_channels, n_classes = 8, 10
    params = init_params(pkey, n_channels=n_channels, n_classes=n_classes)

    # (B, 1, H, W) NCHW like PyTorch; 16x16 collapses to 1x1 after 7 stride-2 stages.
    x = jax.random.normal(xkey, (2, 1, 16, 16), jnp.float32)

    fwd = jax.jit(forward)
    out = fwd(params, x)
    jax.block_until_ready(out)
    assert out.shape == (2, n_classes), out.shape
    assert bool(jnp.all(jnp.isfinite(out)))
    print("KERNEL_OK")
</pallas_src>

<mosaic_0001>
module attributes {stable_mosaic.version = 11 : i64} {
  func.func @_res2d_block_kernel(%arg0: i32, %arg1: memref<1x18x9x2xbf16, #tpu.memory_space<vmem>>, %arg2: memref<9x16xbf16, #tpu.memory_space<vmem>>, %arg3: memref<1x8xf32, #tpu.memory_space<vmem>>, %arg4: memref<1x8xf32, #tpu.memory_space<vmem>>, %arg5: memref<72x8xbf16, #tpu.memory_space<vmem>>, %arg6: memref<1x8xf32, #tpu.memory_space<vmem>>, %arg7: memref<1x8x8x8xbf16, #tpu.memory_space<vmem>>, %arg8: memref<10x10x8xbf16, #tpu.memory_space<vmem>>, %arg9: memref<8x8x8xf32, #tpu.memory_space<vmem>>) attributes {dimension_semantics = [#tpu.dimension_semantics<parallel>], iteration_bounds = array<i64: 2>, scalar_prefetch = 0 : i64, scratch_operands = 2 : i64, tpu.core_type = #tpu.core_type<tc>, window_params = [{transform_indices = @transform_0, window_bounds = array<i64: 1, 18, 9, 2>}, {pipeline_mode = #tpu.pipeline_mode<synchronous>, transform_indices = @transform_1, window_bounds = array<i64: 9, 16>}, {pipeline_mode = #tpu.pipeline_mode<synchronous>, transform_indices = @transform_2, window_bounds = array<i64: 1, 8>}, {pipeline_mode = #tpu.pipeline_mode<synchronous>, transform_indices = @transform_3, window_bounds = array<i64: 1, 8>}, {pipeline_mode = #tpu.pipeline_mode<synchronous>, transform_indices = @transform_4, window_bounds = array<i64: 72, 8>}, {pipeline_mode = #tpu.pipeline_mode<synchronous>, transform_indices = @transform_5, window_bounds = array<i64: 1, 8>}, {transform_indices = @transform_6, window_bounds = array<i64: 1, 8, 8, 8>}]} {
    %c0 = arith.constant 0 : index
    %c0_0 = arith.constant 0 : index
    %0 = vector.load %arg2[%c0, %c0_0] : memref<9x16xbf16, #tpu.memory_space<vmem>>, vector<9x16xbf16>
    %c0_1 = arith.constant 0 : index
    %c0_2 = arith.constant 0 : index
    %1 = vector.load %arg3[%c0_1, %c0_2] : memref<1x8xf32, #tpu.memory_space<vmem>>, vector<1x8xf32>
    %c0_3 = arith.constant 0 : index
    %c0_4 = arith.constant 0 : index
    %2 = vector.load %arg4[%c0_3, %c0_4] : memref<1x8xf32, #tpu.memory_space<vmem>>, vector<1x8xf32>
    %cst = arith.constant 0.000000e+00 : bf16
    %3 = vector.broadcast %cst : bf16 to vector<10x10x8xbf16>
    %c0_5 = arith.constant 0 : index
    %c0_6 = arith.constant 0 : index
    %c0_7 = arith.constant 0 : index
    %4 = vector.load %arg8[%c0_5, %c0_6, %c0_7] : memref<10x10x8xbf16, #tpu.memory_space<vmem>>, vector<10x10x8xbf16>
    tpu.vector_store %arg8[%c0_5, %c0_6, %c0_7], %3 {strides = array<i32>} : memref<10x10x8xbf16, #tpu.memory_space<vmem>>, vector<10x10x8xbf16>,
    %c0_i32 = arith.constant 0 : i32
    %c8_i32 = arith.constant 8 : i32
    %5 = arith.addi %c0_i32, %c8_i32 : i32
    %c1_i32 = arith.constant 1 : i32
    scf.for %arg10 = %c0_i32 to %5 step %c1_i32  : i32 {
      %c1_i32_17 = arith.constant 1 : i32
      %9 = arith.muli %arg10, %c1_i32_17 : i32
      %c0_i32_18 = arith.constant 0 : i32
      %10 = arith.addi %c0_i32_18, %9 : i32
      %c2_i32 = arith.constant 2 : i32
      %11 = arith.muli %c2_i32, %10 : i32
      %c0_i32_19 = arith.constant 0 : i32
      %12 = arith.addi %11, %c0_i32_19 : i32
      %c0_20 = arith.constant 0 : index
      %13 = arith.index_cast %12 : i32 to index
      %c0_21 = arith.constant 0 : index
      %c0_22 = arith.constant 0 : index
      %14 = vector.load %arg1[%c0_20, %13, %c0_21, %c0_22] : memref<1x18x9x2xbf16, #tpu.memory_space<vmem>>, vector<1x1x8x1xbf16>
      %15 = vector.shape_cast %14 : vector<1x1x8x1xbf16> to vector<8x1xbf16>
      %c0_23 = arith.constant 0 : index
      %16 = arith.index_cast %12 : i32 to index
      %c0_24 = arith.constant 0 : index
      %c1 = arith.constant 1 : index
      %17 = vector.load %arg1[%c0_23, %16, %c0_24, %c1] : memref<1x18x9x2xbf16, #tpu.memory_space<vmem>>, vector<1x1x8x1xbf16>
      %18 = vector.shape_cast %17 : vector<1x1x8x1xbf16> to vector<8x1xbf16>
      %c0_25 = arith.constant 0 : index
      %19 = arith.index_cast %12 : i32 to index
      %c1_26 = arith.constant 1 : index
      %c0_27 = arith.constant 0 : index
      %20 = vector.load %arg1[%c0_25, %19, %c1_26, %c0_27] : memref<1x18x9x2xbf16, #tpu.memory_space<vmem>>, vector<1x1x8x1xbf16>
      %21 = vector.shape_cast %20 : vector<1x1x8x1xbf16> to vector<8x1xbf16>
      %c2_i32_28 = arith.constant 2 : i32
      %22 = arith.muli %c2_i32_28, %10 : i32
      %c1_i32_29 = arith.constant 1 : i32
      %23 = arith.addi %22, %c1_i32_29 : i32
      %c0_30 = arith.constant 0 : index
      %24 = arith.index_cast %23 : i32 to index
      %c0_31 = arith.constant 0 : index
      %c0_32 = arith.constant 0 : index
      %25 = vector.load %arg1[%c0_30, %24, %c0_31, %c0_32] : memref<1x18x9x2xbf16, #tpu.memory_space<vmem>>, vector<1x1x8x1xbf16>
      %26 = vector.shape_cast %25 : vector<1x1x8x1xbf16> to vector<8x1xbf16>
      %c0_33 = arith.constant 0 : index
      %27 = arith.index_cast %23 : i32 to index
      %c0_34 = arith.constant 0 : index
      %c1_35 = arith.constant 1 : index
      %28 = vector.load %arg1[%c0_33, %27, %c0_34, %c1_35] : memref<1x18x9x2xbf16, #tpu.memory_space<vmem>>, vector<1x1x8x1xbf16>
      %29 = vector.shape_cast %28 : vector<1x1x8x1xbf16> to vector<8x1xbf16>
      %c0_36 = arith.constant 0 : index
      %30 = arith.index_cast %23 : i32 to index
      %c1_37 = arith.constant 1 : index
      %c0_38 = arith.constant 0 : index
      %31 = vector.load %arg1[%c0_36, %30, %c1_37, %c0_38] : memref<1x18x9x2xbf16, #tpu.memory_space<vmem>>, vector<1x1x8x1xbf16>
      %32 = vector.shape_cast %31 : vector<1x1x8x1xbf16> to vector<8x1xbf16>
      %c2_i32_39 = arith.constant 2 : i32
      %33 = arith.muli %c2_i32_39, %10 : i32
      %c2_i32_40 = arith.constant 2 : i32
      %34 = arith.addi %33, %c2_i32_40 : i32
      %c0_41 = arith.constant 0 : index
      %35 = arith.index_cast %34 : i32 to index
      %c0_42 = arith.constant 0 : index
      %c0_43 = arith.constant 0 : index
      %36 = vector.load %arg1[%c0_41, %35, %c0_42, %c0_43] : memref<1x18x9x2xbf16, #tpu.memory_space<vmem>>, vector<1x1x8x1xbf16>
      %37 = vector.shape_cast %36 : vector<1x1x8x1xbf16> to vector<8x1xbf16>
      %c0_44 = arith.constant 0 : index
      %38 = arith.index_cast %34 : i32 to index
      %c0_45 = arith.constant 0 : index
      %c1_46 = arith.constant 1 : index
      %39 = vector.load %arg1[%c0_44, %38, %c0_45, %c1_46] : memref<1x18x9x2xbf16, #tpu.memory_space<vmem>>, vector<1x1x8x1xbf16>
      %40 = vector.shape_cast %39 : vector<1x1x8x1xbf16> to vector<8x1xbf16>
      %c0_47 = arith.constant 0 : index
      %41 = arith.index_cast %34 : i32 to index
      %c1_48 = arith.constant 1 : index
      %c0_49 = arith.constant 0 : index
      %42 = vector.load %arg1[%c0_47, %41, %c1_48, %c0_49] : memref<1x18x9x2xbf16, #tpu.memory_space<vmem>>, vector<1x1x8x1xbf16>
      %43 = vector.shape_cast %42 : vector<1x1x8x1xbf16> to vector<8x1xbf16>
      %44 = tpu.concatenate %15, %18, %21, %26, %29, %32, %37, %40, %43 in 1 : vector<8x1xbf16>, vector<8x1xbf16>, vector<8x1xbf16>, vector<8x1xbf16>, vector<8x1xbf16>, vector<8x1xbf16>, vector<8x1xbf16>, vector<8x1xbf16>, vector<8x1xbf16> -> vector<8x9xbf16>
      %cst_50 = arith.constant dense<0.000000e+00> : vector<8x16xf32>
      %45 = tpu.matmul %44, %0, %cst_50 {dimension_numbers = #tpu.dot_dimension_numbers<[1], [0], [0], [1], [0, 0, 1, 1], [], []>} : vector<8x9xbf16>, vector<9x16xbf16>, vector<8x16xf32> -> vector<8x16xf32>
      %46 = vector.extract_strided_slice %45 {offsets = [0, 0], sizes = [8, 8], strides = [1, 1]} : vector<8x16xf32> to vector<8x8xf32>
      %47 = vector.broadcast %1 : vector<1x8xf32> to vector<8x8xf32>
      %48 = arith.addf %46, %47 : vector<8x8xf32>
      %cst_51 = arith.constant 0.000000e+00 : f32
      %49 = vector.broadcast %cst_51 : f32 to vector<8x8xf32>
      %50 = arith.maximumf %48, %49 : vector<8x8xf32>
      %51 = arith.truncf %50 : vector<8x8xf32> to vector<8x8xbf16>
      %c1_i32_52 = arith.constant 1 : i32
      %52 = arith.addi %c1_i32_52, %10 : i32
      %53 = arith.index_cast %52 : i32 to index
      %c1_53 = arith.constant 1 : index
      %c0_54 = arith.constant 0 : index
      %54 = vector.load %arg8[%53, %c1_53, %c0_54] : memref<10x10x8xbf16, #tpu.memory_space<vmem>>, vector<1x8x8xbf16>
      %55 = vector.shape_cast %54 : vector<1x8x8xbf16> to vector<8x8xbf16>
      %56 = vector.shape_cast %51 : vector<8x8xbf16> to vector<1x8x8xbf16>
      tpu.vector_store %arg8[%53, %c1_53, %c0_54], %56 {strides = array<i32>} : memref<10x10x8xbf16, #tpu.memory_space<vmem>>, vector<1x8x8xbf16>,
      %57 = vector.extract_strided_slice %45 {offsets = [0, 8], sizes = [8, 8], strides = [1, 1]} : vector<8x16xf32> to vector<8x8xf32>
      %58 = vector.broadcast %2 : vector<1x8xf32> to vector<8x8xf32>
      %59 = arith.addf %57, %58 : vector<8x8xf32>
      %60 = arith.index_cast %10 : i32 to index
      %c0_55 = arith.constant 0 : index
      %c0_56 = arith.constant 0 : index
      %61 = vector.load %arg9[%60, %c0_55, %c0_56] : memref<8x8x8xf32, #tpu.memory_space<vmem>>, vector<1x8x8xf32>
      %62 = vector.shape_cast %61 : vector<1x8x8xf32> to vector<8x8xf32>
      %63 = vector.shape_cast %59 : vector<8x8xf32> to vector<1x8x8xf32>
      tpu.vector_store %arg9[%60, %c0_55, %c0_56], %63 {strides = array<i32>} : memref<8x8x8xf32, #tpu.memory_space<vmem>>, vector<1x8x8xf32>,
    }
    %c8_i32_8 = arith.constant 8 : i32
    %c0_9 = arith.constant 0 : index
    %c0_10 = arith.constant 0 : index
    %6 = vector.load %arg5[%c0_9, %c0_10] : memref<72x8xbf16, #tpu.memory_space<vmem>>, vector<72x8xbf16>
    %c0_11 = arith.constant 0 : index
    %c0_12 = arith.constant 0 : index
    %7 = vector.load %arg6[%c0_11, %c0_12] : memref<1x8xf32, #tpu.memory_space<vmem>>, vector<1x8xf32>
    %c0_i32_13 = arith.constant 0 : i32
    %c8_i32_14 = arith.constant 8 : i32
    %8 = arith.addi %c0_i32_13, %c8_i32_14 : i32
    %c1_i32_15 = arith.constant 1 : i32
    scf.for %arg10 = %c0_i32_13 to %8 step %c1_i32_15  : i32 {
      %c1_i32_17 = arith.constant 1 : i32
      %9 = arith.muli %arg10, %c1_i32_17 : i32
      %c0_i32_18 = arith.constant 0 : i32
      %10 = arith.addi %c0_i32_18, %9 : i32
      %c0_i32_19 = arith.constant 0 : i32
      %11 = arith.addi %10, %c0_i32_19 : i32
      %12 = arith.index_cast %11 : i32 to index
      %c0_20 = arith.constant 0 : index
      %c0_21 = arith.constant 0 : index
      %13 = vector.load %arg8[%12, %c0_20, %c0_21] : memref<10x10x8xbf16, #tpu.memory_space<vmem>>, vector<1x8x8xbf16>
      %14 = vector.shape_cast %13 : vector<1x8x8xbf16> to vector<8x8xbf16>
      %c0_i32_22 = arith.constant 0 : i32
      %15 = arith.addi %10, %c0_i32_22 : i32
      %16 = arith.index_cast %15 : i32 to index
      %c1 = arith.constant 1 : index
      %c0_23 = arith.constant 0 : index
      %17 = vector.load %arg8[%16, %c1, %c0_23] : memref<10x10x8xbf16, #tpu.memory_space<vmem>>, vector<1x8x8xbf16>
      %18 = vector.shape_cast %17 : vector<1x8x8xbf16> to vector<8x8xbf16>
      %c0_i32_24 = arith.constant 0 : i32
      %19 = arith.addi %10, %c0_i32_24 : i32
      %20 = arith.index_cast %19 : i32 to index
      %c2 = arith.constant 2 : index
      %c0_25 = arith.constant 0 : index
      %21 = vector.load %arg8[%20, %c2, %c0_25] : memref<10x10x8xbf16, #tpu.memory_space<vmem>>, vector<1x8x8xbf16>
      %22 = vector.shape_cast %21 : vector<1x8x8xbf16> to vector<8x8xbf16>
      %c1_i32_26 = arith.constant 1 : i32
      %23 = arith.addi %10, %c1_i32_26 : i32
      %24 = arith.index_cast %23 : i32 to index
      %c0_27 = arith.constant 0 : index
      %c0_28 = arith.constant 0 : index
      %25 = vector.load %arg8[%24, %c0_27, %c0_28] : memref<10x10x8xbf16, #tpu.memory_space<vmem>>, vector<1x8x8xbf16>
      %26 = vector.shape_cast %25 : vector<1x8x8xbf16> to vector<8x8xbf16>
      %c1_i32_29 = arith.constant 1 : i32
      %27 = arith.addi %10, %c1_i32_29 : i32
      %28 = arith.index_cast %27 : i32 to index
      %c1_30 = arith.constant 1 : index
      %c0_31 = arith.constant 0 : index
      %29 = vector.load %arg8[%28, %c1_30, %c0_31] : memref<10x10x8xbf16, #tpu.memory_space<vmem>>, vector<1x8x8xbf16>
      %30 = vector.shape_cast %29 : vector<1x8x8xbf16> to vector<8x8xbf16>
      %c1_i32_32 = arith.constant 1 : i32
      %31 = arith.addi %10, %c1_i32_32 : i32
      %32 = arith.index_cast %31 : i32 to index
      %c2_33 = arith.constant 2 : index
      %c0_34 = arith.constant 0 : index
      %33 = vector.load %arg8[%32, %c2_33, %c0_34] : memref<10x10x8xbf16, #tpu.memory_space<vmem>>, vector<1x8x8xbf16>
      %34 = vector.shape_cast %33 : vector<1x8x8xbf16> to vector<8x8xbf16>
      %c2_i32 = arith.constant 2 : i32
      %35 = arith.addi %10, %c2_i32 : i32
      %36 = arith.index_cast %35 : i32 to index
      %c0_35 = arith.constant 0 : index
      %c0_36 = arith.constant 0 : index
      %37 = vector.load %arg8[%36, %c0_35, %c0_36] : memref<10x10x8xbf16, #tpu.memory_space<vmem>>, vector<1x8x8xbf16>
      %38 = vector.shape_cast %37 : vector<1x8x8xbf16> to vector<8x8xbf16>
      %c2_i32_37 = arith.constant 2 : i32
      %39 = arith.addi %10, %c2_i32_37 : i32
      %40 = arith.index_cast %39 : i32 to index
      %c1_38 = arith.constant 1 : index
      %c0_39 = arith.constant 0 : index
      %41 = vector.load %arg8[%40, %c1_38, %c0_39] : memref<10x10x8xbf16, #tpu.memory_space<vmem>>, vector<1x8x8xbf16>
      %42 = vector.shape_cast %41 : vector<1x8x8xbf16> to vector<8x8xbf16>
      %c2_i32_40 = arith.constant 2 : i32
      %43 = arith.addi %10, %c2_i32_40 : i32
      %44 = arith.index_cast %43 : i32 to index
      %c2_41 = arith.constant 2 : index
      %c0_42 = arith.constant 0 : index
      %45 = vector.load %arg8[%44, %c2_41, %c0_42] : memref<10x10x8xbf16, #tpu.memory_space<vmem>>, vector<1x8x8xbf16>
      %46 = vector.shape_cast %45 : vector<1x8x8xbf16> to vector<8x8xbf16>
      %47 = tpu.concatenate %14, %18, %22, %26, %30, %34, %38, %42, %46 in 1 : vector<8x8xbf16>, vector<8x8xbf16>, vector<8x8xbf16>, vector<8x8xbf16>, vector<8x8xbf16>, vector<8x8xbf16>, vector<8x8xbf16>, vector<8x8xbf16>, vector<8x8xbf16> -> vector<8x72xbf16>
      %cst_43 = arith.constant dense<0.000000e+00> : vector<8x8xf32>
      %48 = tpu.matmul %47, %6, %cst_43 {dimension_numbers = #tpu.dot_dimension_numbers<[1], [0], [0], [1], [0, 0, 1, 1], [], []>} : vector<8x72xbf16>, vector<72x8xbf16>, vector<8x8xf32> -> vector<8x8xf32>
      %49 = vector.broadcast %7 : vector<1x8xf32> to vector<8x8xf32>
      %50 = arith.addf %48, %49 : vector<8x8xf32>
      %51 = arith.index_cast %10 : i32 to index
      %c0_44 = arith.constant 0 : index
      %c0_45 = arith.constant 0 : index
      %52 = vector.load %arg9[%51, %c0_44, %c0_45] : memref<8x8x8xf32, #tpu.memory_space<vmem>>, vector<1x8x8xf32>
      %53 = vector.shape_cast %52 : vector<1x8x8xf32> to vector<8x8xf32>
      %54 = arith.addf %50, %53 : vector<8x8xf32>
      %cst_46 = arith.constant 0.000000e+00 : f32
      %55 = vector.broadcast %cst_46 : f32 to vector<8x8xf32>
      %56 = arith.maximumf %54, %55 : vector<8x8xf32>
      %57 = arith.truncf %56 : vector<8x8xf32> to vector<8x8xbf16>
      %c0_47 = arith.constant 0 : index
      %58 = arith.index_cast %10 : i32 to index
      %c0_48 = arith.constant 0 : index
      %c0_49 = arith.constant 0 : index
      %59 = vector.load %arg7[%c0_47, %58, %c0_48, %c0_49] : memref<1x8x8x8xbf16, #tpu.memory_space<vmem>>, vector<1x1x8x8xbf16>
      %60 = vector.shape_cast %59 : vector<1x1x8x8xbf16> to vector<8x8xbf16>
      %61 = vector.shape_cast %57 : vector<8x8xbf16> to vector<1x1x8x8xbf16>
      tpu.vector_store %arg7[%c0_47, %58, %c0_48, %c0_49], %61 {strides = array<i32>} : memref<1x8x8x8xbf16, #tpu.memory_space<vmem>>, vector<1x1x8x8xbf16>,
    }
    %c8_i32_16 = arith.constant 8 : i32
    return
  }
  func.func @transform_0(%arg0: i32) -> (i32, i32, i32, i32) {
    %c0_i32 = arith.constant 0 : i32
    %c0_i32_0 = arith.constant 0 : i32
    %c0_i32_1 = arith.constant 0 : i32
    %c0_i32_2 = arith.constant 0 : i32
    return %arg0, %c0_i32, %c0_i32_0, %c0_i32_1 : i32, i32, i32, i32
  }
  func.func @transform_1(%arg0: i32) -> (i32, i32) {
    %c0_i32 = arith.constant 0 : i32
    %c0_i32_0 = arith.constant 0 : i32
    %c0_i32_1 = arith.constant 0 : i32
    return %c0_i32, %c0_i32_0 : i32, i32
  }
  func.func @transform_2(%arg0: i32) -> (i32, i32) {
    %c0_i32 = arith.constant 0 : i32
    %c0_i32_0 = arith.constant 0 : i32
    %c0_i32_1 = arith.constant 0 : i32
    return %c0_i32, %c0_i32_0 : i32, i32
  }
  func.func @transform_3(%arg0: i32) -> (i32, i32) {
    %c0_i32 = arith.constant 0 : i32
    %c0_i32_0 = arith.constant 0 : i32
    %c0_i32_1 = arith.constant 0 : i32
    return %c0_i32, %c0_i32_0 : i32, i32
  }
  func.func @transform_4(%arg0: i32) -> (i32, i32) {
    %c0_i32 = arith.constant 0 : i32
    %c0_i32_0 = arith.constant 0 : i32
    %c0_i32_1 = arith.constant 0 : i32
    return %c0_i32, %c0_i32_0 : i32, i32
  }
  func.func @transform_5(%arg0: i32) -> (i32, i32) {
    %c0_i32 = arith.constant 0 : i32
    %c0_i32_0 = arith.constant 0 : i32
    %c0_i32_1 = arith.constant 0 : i32
    return %c0_i32, %c0_i32_0 : i32, i32
  }
  func.func @transform_6(%arg0: i32) -> (i32, i32, i32, i32) {
    %c0_i32 = arith.constant 0 : i32
    %c0_i32_0 = arith.constant 0 : i32
    %c0_i32_1 = arith.constant 0 : i32
    %c0_i32_2 = arith.constant 0 : i32
    return %arg0, %c0_i32, %c0_i32_0, %c0_i32_1 : i32, i32, i32, i32
  }
}

module attributes {stable_mosaic.version = 11 : i64} {
  func.func @_res2d_block_kernel(%arg0: i32, %arg1: memref<1x10x5x16xbf16, #tpu.memory_space<vmem>>, %arg2: memref<72x16xbf16, #tpu.memory_space<vmem>>, %arg3: memref<1x8xf32, #tpu.memory_space<vmem>>, %arg4: memref<1x8xf32, #tpu.memory_space<vmem>>, %arg5: memref<72x8xbf16, #tpu.memory_space<vmem>>, %arg6: memref<1x8xf32, #tpu.memory_space<vmem>>, %arg7: memref<1x4x4x8xbf16, #tpu.memory_space<vmem>>, %arg8: memref<6x6x8xbf16, #tpu.memory_space<vmem>>, %arg9: memref<4x4x8xf32, #tpu.memory_space<vmem>>) attributes {dimension_semantics = [#tpu.dimension_semantics<parallel>], iteration_bounds = array<i64: 2>, scalar_prefetch = 0 : i64, scratch_operands = 2 : i64, tpu.core_type = #tpu.core_type<tc>, window_params = [{transform_indices = @transform_0, window_bounds = array<i64: 1, 10, 5, 16>}, {pipeline_mode = #tpu.pipeline_mode<synchronous>, transform_indices = @transform_1, window_bounds = array<i64: 72, 16>}, {pipeline_mode = #tpu.pipeline_mode<synchronous>, transform_indices = @transform_2, window_bounds = array<i64: 1, 8>}, {pipeline_mode = #tpu.pipeline_mode<synchronous>, transform_indices = @transform_3, window_bounds = array<i64: 1, 8>}, {pipeline_mode = #tpu.pipeline_mode<synchronous>, transform_indices = @transform_4, window_bounds = array<i64: 72, 8>}, {pipeline_mode = #tpu.pipeline_mode<synchronous>, transform_indices = @transform_5, window_bounds = array<i64: 1, 8>}, {transform_indices = @transform_6, window_bounds = array<i64: 1, 4, 4, 8>}]} {
    %c0 = arith.constant 0 : index
    %c0_0 = arith.constant 0 : index
    %0 = vector.load %arg2[%c0, %c0_0] : memref<72x16xbf16, #tpu.memory_space<vmem>>, vector<72x16xbf16>
    %c0_1 = arith.constant 0 : index
    %c0_2 = arith.constant 0 : index
    %1 = vector.load %arg3[%c0_1, %c0_2] : memref<1x8xf32, #tpu.memory_space<vmem>>, vector<1x8xf32>
    %c0_3 = arith.constant 0 : index
    %c0_4 = arith.constant 0 : index
    %2 = vector.load %arg4[%c0_3, %c0_4] : memref<1x8xf32, #tpu.memory_space<vmem>>, vector<1x8xf32>
    %cst = arith.constant 0.000000e+00 : bf16
    %3 = vector.broadcast %cst : bf16 to vector<6x6x8xbf16>
    %c0_5 = arith.constant 0 : index
    %c0_6 = arith.constant 0 : index
    %c0_7 = arith.constant 0 : index
    %4 = vector.load %arg8[%c0_5, %c0_6, %c0_7] : memref<6x6x8xbf16, #tpu.memory_space<vmem>>, vector<6x6x8xbf16>
    tpu.vector_store %arg8[%c0_5, %c0_6, %c0_7], %3 {strides = array<i32>} : memref<6x6x8xbf16, #tpu.memory_space<vmem>>, vector<6x6x8xbf16>,
    %c0_i32 = arith.constant 0 : i32
    %c4_i32 = arith.constant 4 : i32
    %5 = arith.addi %c0_i32, %c4_i32 : i32
    %c1_i32 = arith.constant 1 : i32
    scf.for %arg10 = %c0_i32 to %5 step %c1_i32  : i32 {
      %c1_i32_17 = arith.constant 1 : i32
      %9 = arith.muli %arg10, %c1_i32_17 : i32
      %c0_i32_18 = arith.constant 0 : i32
      %10 = arith.addi %c0_i32_18, %9 : i32
      %c2_i32 = arith.constant 2 : i32
      %11 = arith.muli %c2_i32, %10 : i32
      %c0_i32_19 = arith.constant 0 : i32
      %12 = arith.addi %11, %c0_i32_19 : i32
      %c0_20 = arith.constant 0 : index
      %13 = arith.index_cast %12 : i32 to index
      %c0_21 = arith.constant 0 : index
      %c0_22 = arith.constant 0 : index
      %14 = vector.load %arg1[%c0_20, %13, %c0_21, %c0_22] : memref<1x10x5x16xbf16, #tpu.memory_space<vmem>>, vector<1x1x4x8xbf16>
      %15 = vector.shape_cast %14 : vector<1x1x4x8xbf16> to vector<4x8xbf16>
      %c0_23 = arith.constant 0 : index
      %16 = arith.index_cast %12 : i32 to index
      %c0_24 = arith.constant 0 : index
      %c8 = arith.constant 8 : index
      %17 = vector.load %arg1[%c0_23, %16, %c0_24, %c8] : memref<1x10x5x16xbf16, #tpu.memory_space<vmem>>, vector<1x1x4x8xbf16>
      %18 = vector.shape_cast %17 : vector<1x1x4x8xbf16> to vector<4x8xbf16>
      %c0_25 = arith.constant 0 : index
      %19 = arith.index_cast %12 : i32 to index
      %c1 = arith.constant 1 : index
      %c0_26 = arith.constant 0 : index
      %20 = vector.load %arg1[%c0_25, %19, %c1, %c0_26] : memref<1x10x5x16xbf16, #tpu.memory_space<vmem>>, vector<1x1x4x8xbf16>
      %21 = vector.shape_cast %20 : vector<1x1x4x8xbf16> to vector<4x8xbf16>
      %c2_i32_27 = arith.constant 2 : i32
      %22 = arith.muli %c2_i32_27, %10 : i32
      %c1_i32_28 = arith.constant 1 : i32
      %23 = arith.addi %22, %c1_i32_28 : i32
      %c0_29 = arith.constant 0 : index
      %24 = arith.index_cast %23 : i32 to index
      %c0_30 = arith.constant 0 : index
      %c0_31 = arith.constant 0 : index
      %25 = vector.load %arg1[%c0_29, %24, %c0_30, %c0_31] : memref<1x10x5x16xbf16, #tpu.memory_space<vmem>>, vector<1x1x4x8xbf16>
      %26 = vector.shape_cast %25 : vector<1x1x4x8xbf16> to vector<4x8xbf16>
      %c0_32 = arith.constant 0 : index
      %27 = arith.index_cast %23 : i32 to index
      %c0_33 = arith.constant 0 : index
      %c8_34 = arith.constant 8 : index
      %28 = vector.load %arg1[%c0_32, %27, %c0_33, %c8_34] : memref<1x10x5x16xbf16, #tpu.memory_space<vmem>>, vector<1x1x4x8xbf16>
      %29 = vector.shape_cast %28 : vector<1x1x4x8xbf16> to vector<4x8xbf16>
      %c0_35 = arith.constant 0 : index
      %30 = arith.index_cast %23 : i32 to index
      %c1_36 = arith.constant 1 : index
      %c0_37 = arith.constant 0 : index
      %31 = vector.load %arg1[%c0_35, %30, %c1_36, %c0_37] : memref<1x10x5x16xbf16, #tpu.memory_space<vmem>>, vector<1x1x4x8xbf16>
      %32 = vector.shape_cast %31 : vector<1x1x4x8xbf16> to vector<4x8xbf16>
      %c2_i32_38 = arith.constant 2 : i32
      %33 = arith.muli %c2_i32_38, %10 : i32
      %c2_i32_39 = arith.constant 2 : i32
      %34 = arith.addi %33, %c2_i32_39 : i32
      %c0_40 = arith.constant 0 : index
      %35 = arith.index_cast %34 : i32 to index
      %c0_41 = arith.constant 0 : index
      %c0_42 = arith.constant 0 : index
      %36 = vector.load %arg1[%c0_40, %35, %c0_41, %c0_42] : memref<1x10x5x16xbf16, #tpu.memory_space<vmem>>, vector<1x1x4x8xbf16>
      %37 = vector.shape_cast %36 : vector<1x1x4x8xbf16> to vector<4x8xbf16>
      %c0_43 = arith.constant 0 : index
      %38 = arith.index_cast %34 : i32 to index
      %c0_44 = arith.constant 0 : index
      %c8_45 = arith.constant 8 : index
      %39 = vector.load %arg1[%c0_43, %38, %c0_44, %c8_45] : memref<1x10x5x16xbf16, #tpu.memory_space<vmem>>, vector<1x1x4x8xbf16>
      %40 = vector.shape_cast %39 : vector<1x1x4x8xbf16> to vector<4x8xbf16>
      %c0_46 = arith.constant 0 : index
      %41 = arith.index_cast %34 : i32 to index
      %c1_47 = arith.constant 1 : index
      %c0_48 = arith.constant 0 : index
      %42 = vector.load %arg1[%c0_46, %41, %c1_47, %c0_48] : memref<1x10x5x16xbf16, #tpu.memory_space<vmem>>, vector<1x1x4x8xbf16>
      %43 = vector.shape_cast %42 : vector<1x1x4x8xbf16> to vector<4x8xbf16>
      %44 = tpu.concatenate %15, %18, %21, %26, %29, %32, %37, %40, %43 in 1 : vector<4x8xbf16>, vector<4x8xbf16>, vector<4x8xbf16>, vector<4x8xbf16>, vector<4x8xbf16>, vector<4x8xbf16>, vector<4x8xbf16>, vector<4x8xbf16>, vector<4x8xbf16> -> vector<4x72xbf16>
      %cst_49 = arith.constant dense<0.000000e+00> : vector<4x16xf32>
      %45 = tpu.matmul %44, %0, %cst_49 {dimension_numbers = #tpu.dot_dimension_numbers<[1], [0], [0], [1], [0, 0, 1, 1], [], []>} : vector<4x72xbf16>, vector<72x16xbf16>, vector<4x16xf32> -> vector<4x16xf32>
      %46 = vector.extract_strided_slice %45 {offsets = [0, 0], sizes = [4, 8], strides = [1, 1]} : vector<4x16xf32> to vector<4x8xf32>
      %47 = vector.broadcast %1 : vector<1x8xf32> to vector<4x8xf32>
      %48 = arith.addf %46, %47 : vector<4x8xf32>
      %cst_50 = arith.constant 0.000000e+00 : f32
      %49 = vector.broadcast %cst_50 : f32 to vector<4x8xf32>
      %50 = arith.maximumf %48, %49 : vector<4x8xf32>
      %51 = arith.truncf %50 : vector<4x8xf32> to vector<4x8xbf16>
      %c1_i32_51 = arith.constant 1 : i32
      %52 = arith.addi %c1_i32_51, %10 : i32
      %53 = arith.index_cast %52 : i32 to index
      %c1_52 = arith.constant 1 : index
      %c0_53 = arith.constant 0 : index
      %54 = vector.load %arg8[%53, %c1_52, %c0_53] : memref<6x6x8xbf16, #tpu.memory_space<vmem>>, vector<1x4x8xbf16>
      %55 = vector.shape_cast %54 : vector<1x4x8xbf16> to vector<4x8xbf16>
      %56 = vector.shape_cast %51 : vector<4x8xbf16> to vector<1x4x8xbf16>
      tpu.vector_store %arg8[%53, %c1_52, %c0_53], %56 {strides = array<i32>} : memref<6x6x8xbf16, #tpu.memory_space<vmem>>, vector<1x4x8xbf16>,
      %57 = vector.extract_strided_slice %45 {offsets = [0, 8], sizes = [4, 8], strides = [1, 1]} : vector<4x16xf32> to vector<4x8xf32>
      %58 = vector.broadcast %2 : vector<1x8xf32> to vector<4x8xf32>
      %59 = arith.addf %57, %58 : vector<4x8xf32>
      %60 = arith.index_cast %10 : i32 to index
      %c0_54 = arith.constant 0 : index
      %c0_55 = arith.constant 0 : index
      %61 = vector.load %arg9[%60, %c0_54, %c0_55] : memref<4x4x8xf32, #tpu.memory_space<vmem>>, vector<1x4x8xf32>
      %62 = vector.shape_cast %61 : vector<1x4x8xf32> to vector<4x8xf32>
      %63 = vector.shape_cast %59 : vector<4x8xf32> to vector<1x4x8xf32>
      tpu.vector_store %arg9[%60, %c0_54, %c0_55], %63 {strides = array<i32>} : memref<4x4x8xf32, #tpu.memory_space<vmem>>, vector<1x4x8xf32>,
    }
    %c4_i32_8 = arith.constant 4 : i32
    %c0_9 = arith.constant 0 : index
    %c0_10 = arith.constant 0 : index
    %6 = vector.load %arg5[%c0_9, %c0_10] : memref<72x8xbf16, #tpu.memory_space<vmem>>, vector<72x8xbf16>
    %c0_11 = arith.constant 0 : index
    %c0_12 = arith.constant 0 : index
    %7 = vector.load %arg6[%c0_11, %c0_12] : memref<1x8xf32, #tpu.memory_space<vmem>>, vector<1x8xf32>
    %c0_i32_13 = arith.constant 0 : i32
    %c4_i32_14 = arith.constant 4 : i32
    %8 = arith.addi %c0_i32_13, %c4_i32_14 : i32
    %c1_i32_15 = arith.constant 1 : i32
    scf.for %arg10 = %c0_i32_13 to %8 step %c1_i32_15  : i32 {
      %c1_i32_17 = arith.constant 1 : i32
      %9 = arith.muli %arg10, %c1_i32_17 : i32
      %c0_i32_18 = arith.constant 0 : i32
      %10 = arith.addi %c0_i32_18, %9 : i32
      %c0_i32_19 = arith.constant 0 : i32
      %11 = arith.addi %10, %c0_i32_19 : i32
      %12 = arith.index_cast %11 : i32 to index
      %c0_20 = arith.constant 0 : index
      %c0_21 = arith.constant 0 : index
      %13 = vector.load %arg8[%12, %c0_20, %c0_21] : memref<6x6x8xbf16, #tpu.memory_space<vmem>>, vector<1x4x8xbf16>
      %14 = vector.shape_cast %13 : vector<1x4x8xbf16> to vector<4x8xbf16>
      %c0_i32_22 = arith.constant 0 : i32
      %15 = arith.addi %10, %c0_i32_22 : i32
      %16 = arith.index_cast %15 : i32 to index
      %c1 = arith.constant 1 : index
      %c0_23 = arith.constant 0 : index
      %17 = vector.load %arg8[%16, %c1, %c0_23] : memref<6x6x8xbf16, #tpu.memory_space<vmem>>, vector<1x4x8xbf16>
      %18 = vector.shape_cast %17 : vector<1x4x8xbf16> to vector<4x8xbf16>
      %c0_i32_24 = arith.constant 0 : i32
      %19 = arith.addi %10, %c0_i32_24 : i32
      %20 = arith.index_cast %19 : i32 to index
      %c2 = arith.constant 2 : index
      %c0_25 = arith.constant 0 : index
      %21 = vector.load %arg8[%20, %c2, %c0_25] : memref<6x6x8xbf16, #tpu.memory_space<vmem>>, vector<1x4x8xbf16>
      %22 = vector.shape_cast %21 : vector<1x4x8xbf16> to vector<4x8xbf16>
      %c1_i32_26 = arith.constant 1 : i32
      %23 = arith.addi %10, %c1_i32_26 : i32
      %24 = arith.index_cast %23 : i32 to index
      %c0_27 = arith.constant 0 : index
      %c0_28 = arith.constant 0 : index
      %25 = vector.load %arg8[%24, %c0_27, %c0_28] : memref<6x6x8xbf16, #tpu.memory_space<vmem>>, vector<1x4x8xbf16>
      %26 = vector.shape_cast %25 : vector<1x4x8xbf16> to vector<4x8xbf16>
      %c1_i32_29 = arith.constant 1 : i32
      %27 = arith.addi %10, %c1_i32_29 : i32
      %28 = arith.index_cast %27 : i32 to index
      %c1_30 = arith.constant 1 : index
      %c0_31 = arith.constant 0 : index
      %29 = vector.load %arg8[%28, %c1_30, %c0_31] : memref<6x6x8xbf16, #tpu.memory_space<vmem>>, vector<1x4x8xbf16>
      %30 = vector.shape_cast %29 : vector<1x4x8xbf16> to vector<4x8xbf16>
      %c1_i32_32 = arith.constant 1 : i32
      %31 = arith.addi %10, %c1_i32_32 : i32
      %32 = arith.index_cast %31 : i32 to index
      %c2_33 = arith.constant 2 : index
      %c0_34 = arith.constant 0 : index
      %33 = vector.load %arg8[%32, %c2_33, %c0_34] : memref<6x6x8xbf16, #tpu.memory_space<vmem>>, vector<1x4x8xbf16>
      %34 = vector.shape_cast %33 : vector<1x4x8xbf16> to vector<4x8xbf16>
      %c2_i32 = arith.constant 2 : i32
      %35 = arith.addi %10, %c2_i32 : i32
      %36 = arith.index_cast %35 : i32 to index
      %c0_35 = arith.constant 0 : index
      %c0_36 = arith.constant 0 : index
      %37 = vector.load %arg8[%36, %c0_35, %c0_36] : memref<6x6x8xbf16, #tpu.memory_space<vmem>>, vector<1x4x8xbf16>
      %38 = vector.shape_cast %37 : vector<1x4x8xbf16> to vector<4x8xbf16>
      %c2_i32_37 = arith.constant 2 : i32
      %39 = arith.addi %10, %c2_i32_37 : i32
      %40 = arith.index_cast %39 : i32 to index
      %c1_38 = arith.constant 1 : index
      %c0_39 = arith.constant 0 : index
      %41 = vector.load %arg8[%40, %c1_38, %c0_39] : memref<6x6x8xbf16, #tpu.memory_space<vmem>>, vector<1x4x8xbf16>
      %42 = vector.shape_cast %41 : vector<1x4x8xbf16> to vector<4x8xbf16>
      %c2_i32_40 = arith.constant 2 : i32
      %43 = arith.addi %10, %c2_i32_40 : i32
      %44 = arith.index_cast %43 : i32 to index
      %c2_41 = arith.constant 2 : index
      %c0_42 = arith.constant 0 : index
      %45 = vector.load %arg8[%44, %c2_41, %c0_42] : memref<6x6x8xbf16, #tpu.memory_space<vmem>>, vector<1x4x8xbf16>
      %46 = vector.shape_cast %45 : vector<1x4x8xbf16> to vector<4x8xbf16>
      %47 = tpu.concatenate %14, %18, %22, %26, %30, %34, %38, %42, %46 in 1 : vector<4x8xbf16>, vector<4x8xbf16>, vector<4x8xbf16>, vector<4x8xbf16>, vector<4x8xbf16>, vector<4x8xbf16>, vector<4x8xbf16>, vector<4x8xbf16>, vector<4x8xbf16> -> vector<4x72xbf16>
      %cst_43 = arith.constant dense<0.000000e+00> : vector<4x8xf32>
      %48 = tpu.matmul %47, %6, %cst_43 {dimension_numbers = #tpu.dot_dimension_numbers<[1], [0], [0], [1], [0, 0, 1, 1], [], []>} : vector<4x72xbf16>, vector<72x8xbf16>, vector<4x8xf32> -> vector<4x8xf32>
      %49 = vector.broadcast %7 : vector<1x8xf32> to vector<4x8xf32>
      %50 = arith.addf %48, %49 : vector<4x8xf32>
      %51 = arith.index_cast %10 : i32 to index
      %c0_44 = arith.constant 0 : index
      %c0_45 = arith.constant 0 : index
      %52 = vector.load %arg9[%51, %c0_44, %c0_45] : memref<4x4x8xf32, #tpu.memory_space<vmem>>, vector<1x4x8xf32>
      %53 = vector.shape_cast %52 : vector<1x4x8xf32> to vector<4x8xf32>
      %54 = arith.addf %50, %53 : vector<4x8xf32>
      %cst_46 = arith.constant 0.000000e+00 : f32
      %55 = vector.broadcast %cst_46 : f32 to vector<4x8xf32>
      %56 = arith.maximumf %54, %55 : vector<4x8xf32>
      %57 = arith.truncf %56 : vector<4x8xf32> to vector<4x8xbf16>
      %c0_47 = arith.constant 0 : index
      %58 = arith.index_cast %10 : i32 to index
      %c0_48 = arith.constant 0 : index
      %c0_49 = arith.constant 0 : index
      %59 = vector.load %arg7[%c0_47, %58, %c0_48, %c0_49] : memref<1x4x4x8xbf16, #tpu.memory_space<vmem>>, vector<1x1x4x8xbf16>
      %60 = vector.shape_cast %59 : vector<1x1x4x8xbf16> to vector<4x8xbf16>
      %61 = vector.shape_cast %57 : vector<4x8xbf16> to vector<1x1x4x8xbf16>
      tpu.vector_store %arg7[%c0_47, %58, %c0_48, %c0_49], %61 {strides = array<i32>} : memref<1x4x4x8xbf16, #tpu.memory_space<vmem>>, vector<1x1x4x8xbf16>,
    }
    %c4_i32_16 = arith.constant 4 : i32
    return
  }
  func.func @transform_0(%arg0: i32) -> (i32, i32, i32, i32) {
    %c0_i32 = arith.constant 0 : i32
    %c0_i32_0 = arith.constant 0 : i32
    %c0_i32_1 = arith.constant 0 : i32
    %c0_i32_2 = arith.constant 0 : i32
    return %arg0, %c0_i32, %c0_i32_0, %c0_i32_1 : i32, i32, i32, i32
  }
  func.func @transform_1(%arg0: i32) -> (i32, i32) {
    %c0_i32 = arith.constant 0 : i32
    %c0_i32_0 = arith.constant 0 : i32
    %c0_i32_1 = arith.constant 0 : i32
    return %c0_i32, %c0_i32_0 : i32, i32
  }
  func.func @transform_2(%arg0: i32) -> (i32, i32) {
    %c0_i32 = arith.constant 0 : i32
    %c0_i32_0 = arith.constant 0 : i32
    %c0_i32_1 = arith.constant 0 : i32
    return %c0_i32, %c0_i32_0 : i32, i32
  }
  func.func @transform_3(%arg0: i32) -> (i32, i32) {
    %c0_i32 = arith.constant 0 : i32
    %c0_i32_0 = arith.constant 0 : i32
    %c0_i32_1 = arith.constant 0 : i32
    return %c0_i32, %c0_i32_0 : i32, i32
  }
  func.func @transform_4(%arg0: i32) -> (i32, i32) {
    %c0_i32 = arith.constant 0 : i32
    %c0_i32_0 = arith.constant 0 : i32
    %c0_i32_1 = arith.constant 0 : i32
    return %c0_i32, %c0_i32_0 : i32, i32
  }
  func.func @transform_5(%arg0: i32) -> (i32, i32) {
    %c0_i32 = arith.constant 0 : i32
    %c0_i32_0 = arith.constant 0 : i32
    %c0_i32_1 = arith.constant 0 : i32
    return %c0_i32, %c0_i32_0 : i32, i32
  }
  func.func @transform_6(%arg0: i32) -> (i32, i32, i32, i32) {
    %c0_i32 = arith.constant 0 : i32
    %c0_i32_0 = arith.constant 0 : i32
    %c0_i32_1 = arith.constant 0 : i32
    %c0_i32_2 = arith.constant 0 : i32
    return %arg0, %c0_i32, %c0_i32_0, %c0_i32_1 : i32, i32, i32, i32
  }
}

module attributes {stable_mosaic.version = 11 : i64} {
  func.func @_res2d_block_kernel(%arg0: i32, %arg1: memref<1x6x3x16xbf16, #tpu.memory_space<vmem>>, %arg2: memref<72x32xbf16, #tpu.memory_space<vmem>>, %arg3: memref<1x16xf32, #tpu.memory_space<vmem>>, %arg4: memref<1x16xf32, #tpu.memory_space<vmem>>, %arg5: memref<144x16xbf16, #tpu.memory_space<vmem>>, %arg6: memref<1x16xf32, #tpu.memory_space<vmem>>, %arg7: memref<1x2x2x16xbf16, #tpu.memory_space<vmem>>, %arg8: memref<4x4x16xbf16, #tpu.memory_space<vmem>>, %arg9: memref<2x2x16xf32, #tpu.memory_space<vmem>>) attributes {dimension_semantics = [#tpu.dimension_semantics<parallel>], iteration_bounds = array<i64: 2>, scalar_prefetch = 0 : i64, scratch_operands = 2 : i64, tpu.core_type = #tpu.core_type<tc>, window_params = [{transform_indices = @transform_0, window_bounds = array<i64: 1, 6, 3, 16>}, {pipeline_mode = #tpu.pipeline_mode<synchronous>, transform_indices = @transform_1, window_bounds = array<i64: 72, 32>}, {pipeline_mode = #tpu.pipeline_mode<synchronous>, transform_indices = @transform_2, window_bounds = array<i64: 1, 16>}, {pipeline_mode = #tpu.pipeline_mode<synchronous>, transform_indices = @transform_3, window_bounds = array<i64: 1, 16>}, {pipeline_mode = #tpu.pipeline_mode<synchronous>, transform_indices = @transform_4, window_bounds = array<i64: 144, 16>}, {pipeline_mode = #tpu.pipeline_mode<synchronous>, transform_indices = @transform_5, window_bounds = array<i64: 1, 16>}, {transform_indices = @transform_6, window_bounds = array<i64: 1, 2, 2, 16>}]} {
    %c0 = arith.constant 0 : index
    %c0_0 = arith.constant 0 : index
    %0 = vector.load %arg2[%c0, %c0_0] : memref<72x32xbf16, #tpu.memory_space<vmem>>, vector<72x32xbf16>
    %c0_1 = arith.constant 0 : index
    %c0_2 = arith.constant 0 : index
    %1 = vector.load %arg3[%c0_1, %c0_2] : memref<1x16xf32, #tpu.memory_space<vmem>>, vector<1x16xf32>
    %c0_3 = arith.constant 0 : index
    %c0_4 = arith.constant 0 : index
    %2 = vector.load %arg4[%c0_3, %c0_4] : memref<1x16xf32, #tpu.memory_space<vmem>>, vector<1x16xf32>
    %cst = arith.constant 0.000000e+00 : bf16
    %3 = vector.broadcast %cst : bf16 to vector<4x4x16xbf16>
    %c0_5 = arith.constant 0 : index
    %c0_6 = arith.constant 0 : index
    %c0_7 = arith.constant 0 : index
    %4 = vector.load %arg8[%c0_5, %c0_6, %c0_7] : memref<4x4x16xbf16, #tpu.memory_space<vmem>>, vector<4x4x16xbf16>
    tpu.vector_store %arg8[%c0_5, %c0_6, %c0_7], %3 {strides = array<i32>} : memref<4x4x16xbf16, #tpu.memory_space<vmem>>, vector<4x4x16xbf16>,
    %c0_i32 = arith.constant 0 : i32
    %c2_i32 = arith.constant 2 : i32
    %5 = arith.addi %c0_i32, %c2_i32 : i32
    %c1_i32 = arith.constant 1 : i32
    scf.for %arg10 = %c0_i32 to %5 step %c1_i32  : i32 {
      %c1_i32_17 = arith.constant 1 : i32
      %9 = arith.muli %arg10, %c1_i32_17 : i32
      %c0_i32_18 = arith.constant 0 : i32
      %10 = arith.addi %c0_i32_18, %9 : i32
      %c2_i32_19 = arith.constant 2 : i32
      %11 = arith.muli %c2_i32_19, %10 : i32
      %c0_i32_20 = arith.constant 0 : i32
      %12 = arith.addi %11, %c0_i32_20 : i32
      %c0_21 = arith.constant 0 : index
      %13 = arith.index_cast %12 : i32 to index
      %c0_22 = arith.constant 0 : index
      %c0_23 = arith.constant 0 : index
      %14 = vector.load %arg1[%c0_21, %13, %c0_22, %c0_23] : memref<1x6x3x16xbf16, #tpu.memory_space<vmem>>, vector<1x1x2x8xbf16>
      %15 = vector.shape_cast %14 : vector<1x1x2x8xbf16> to vector<2x8xbf16>
      %c0_24 = arith.constant 0 : index
      %16 = arith.index_cast %12 : i32 to index
      %c0_25 = arith.constant 0 : index
      %c8 = arith.constant 8 : index
      %17 = vector.load %arg1[%c0_24, %16, %c0_25, %c8] : memref<1x6x3x16xbf16, #tpu.memory_space<vmem>>, vector<1x1x2x8xbf16>
      %18 = vector.shape_cast %17 : vector<1x1x2x8xbf16> to vector<2x8xbf16>
      %c0_26 = arith.constant 0 : index
      %19 = arith.index_cast %12 : i32 to index
      %c1 = arith.constant 1 : index
      %c0_27 = arith.constant 0 : index
      %20 = vector.load %arg1[%c0_26, %19, %c1, %c0_27] : memref<1x6x3x16xbf16, #tpu.memory_space<vmem>>, vector<1x1x2x8xbf16>
      %21 = vector.shape_cast %20 : vector<1x1x2x8xbf16> to vector<2x8xbf16>
      %c2_i32_28 = arith.constant 2 : i32
      %22 = arith.muli %c2_i32_28, %10 : i32
      %c1_i32_29 = arith.constant 1 : i32
      %23 = arith.addi %22, %c1_i32_29 : i32
      %c0_30 = arith.constant 0 : index
      %24 = arith.index_cast %23 : i32 to index
      %c0_31 = arith.constant 0 : index
      %c0_32 = arith.constant 0 : index
      %25 = vector.load %arg1[%c0_30, %24, %c0_31, %c0_32] : memref<1x6x3x16xbf16, #tpu.memory_space<vmem>>, vector<1x1x2x8xbf16>
      %26 = vector.shape_cast %25 : vector<1x1x2x8xbf16> to vector<2x8xbf16>
      %c0_33 = arith.constant 0 : index
      %27 = arith.index_cast %23 : i32 to index
      %c0_34 = arith.constant 0 : index
      %c8_35 = arith.constant 8 : index
      %28 = vector.load %arg1[%c0_33, %27, %c0_34, %c8_35] : memref<1x6x3x16xbf16, #tpu.memory_space<vmem>>, vector<1x1x2x8xbf16>
      %29 = vector.shape_cast %28 : vector<1x1x2x8xbf16> to vector<2x8xbf16>
      %c0_36 = arith.constant 0 : index
      %30 = arith.index_cast %23 : i32 to index
      %c1_37 = arith.constant 1 : index
      %c0_38 = arith.constant 0 : index
      %31 = vector.load %arg1[%c0_36, %30, %c1_37, %c0_38] : memref<1x6x3x16xbf16, #tpu.memory_space<vmem>>, vector<1x1x2x8xbf16>
      %32 = vector.shape_cast %31 : vector<1x1x2x8xbf16> to vector<2x8xbf16>
      %c2_i32_39 = arith.constant 2 : i32
      %33 = arith.muli %c2_i32_39, %10 : i32
      %c2_i32_40 = arith.constant 2 : i32
      %34 = arith.addi %33, %c2_i32_40 : i32
      %c0_41 = arith.constant 0 : index
      %35 = arith.index_cast %34 : i32 to index
      %c0_42 = arith.constant 0 : index
      %c0_43 = arith.constant 0 : index
      %36 = vector.load %arg1[%c0_41, %35, %c0_42, %c0_43] : memref<1x6x3x16xbf16, #tpu.memory_space<vmem>>, vector<1x1x2x8xbf16>
      %37 = vector.shape_cast %36 : vector<1x1x2x8xbf16> to vector<2x8xbf16>
      %c0_44 = arith.constant 0 : index
      %38 = arith.index_cast %34 : i32 to index
      %c0_45 = arith.constant 0 : index
      %c8_46 = arith.constant 8 : index
      %39 = vector.load %arg1[%c0_44, %38, %c0_45, %c8_46] : memref<1x6x3x16xbf16, #tpu.memory_space<vmem>>, vector<1x1x2x8xbf16>
      %40 = vector.shape_cast %39 : vector<1x1x2x8xbf16> to vector<2x8xbf16>
      %c0_47 = arith.constant 0 : index
      %41 = arith.index_cast %34 : i32 to index
      %c1_48 = arith.constant 1 : index
      %c0_49 = arith.constant 0 : index
      %42 = vector.load %arg1[%c0_47, %41, %c1_48, %c0_49] : memref<1x6x3x16xbf16, #tpu.memory_space<vmem>>, vector<1x1x2x8xbf16>
      %43 = vector.shape_cast %42 : vector<1x1x2x8xbf16> to vector<2x8xbf16>
      %44 = tpu.concatenate %15, %18, %21, %26, %29, %32, %37, %40, %43 in 1 : vector<2x8xbf16>, vector<2x8xbf16>, vector<2x8xbf16>, vector<2x8xbf16>, vector<2x8xbf16>, vector<2x8xbf16>, vector<2x8xbf16>, vector<2x8xbf16>, vector<2x8xbf16> -> vector<2x72xbf16>
      %cst_50 = arith.constant dense<0.000000e+00> : vector<2x32xf32>
      %45 = tpu.matmul %44, %0, %cst_50 {dimension_numbers = #tpu.dot_dimension_numbers<[1], [0], [0], [1], [0, 0, 1, 1], [], []>} : vector<2x72xbf16>, vector<72x32xbf16>, vector<2x32xf32> -> vector<2x32xf32>
      %46 = vector.extract_strided_slice %45 {offsets = [0, 0], sizes = [2, 16], strides = [1, 1]} : vector<2x32xf32> to vector<2x16xf32>
      %47 = vector.broadcast %1 : vector<1x16xf32> to vector<2x16xf32>
      %48 = arith.addf %46, %47 : vector<2x16xf32>
      %cst_51 = arith.constant 0.000000e+00 : f32
      %49 = vector.broadcast %cst_51 : f32 to vector<2x16xf32>
      %50 = arith.maximumf %48, %49 : vector<2x16xf32>
      %51 = arith.truncf %50 : vector<2x16xf32> to vector<2x16xbf16>
      %c1_i32_52 = arith.constant 1 : i32
      %52 = arith.addi %c1_i32_52, %10 : i32
      %53 = arith.index_cast %52 : i32 to index
      %c1_53 = arith.constant 1 : index
      %c0_54 = arith.constant 0 : index
      %54 = vector.load %arg8[%53, %c1_53, %c0_54] : memref<4x4x16xbf16, #tpu.memory_space<vmem>>, vector<1x2x16xbf16>
      %55 = vector.shape_cast %54 : vector<1x2x16xbf16> to vector<2x16xbf16>
      %56 = vector.shape_cast %51 : vector<2x16xbf16> to vector<1x2x16xbf16>
      tpu.vector_store %arg8[%53, %c1_53, %c0_54], %56 {strides = array<i32>} : memref<4x4x16xbf16, #tpu.memory_space<vmem>>, vector<1x2x16xbf16>,
      %57 = vector.extract_strided_slice %45 {offsets = [0, 16], sizes = [2, 16], strides = [1, 1]} : vector<2x32xf32> to vector<2x16xf32>
      %58 = vector.broadcast %2 : vector<1x16xf32> to vector<2x16xf32>
      %59 = arith.addf %57, %58 : vector<2x16xf32>
      %60 = arith.index_cast %10 : i32 to index
      %c0_55 = arith.constant 0 : index
      %c0_56 = arith.constant 0 : index
      %61 = vector.load %arg9[%60, %c0_55, %c0_56] : memref<2x2x16xf32, #tpu.memory_space<vmem>>, vector<1x2x16xf32>
      %62 = vector.shape_cast %61 : vector<1x2x16xf32> to vector<2x16xf32>
      %63 = vector.shape_cast %59 : vector<2x16xf32> to vector<1x2x16xf32>
      tpu.vector_store %arg9[%60, %c0_55, %c0_56], %63 {strides = array<i32>} : memref<2x2x16xf32, #tpu.memory_space<vmem>>, vector<1x2x16xf32>,
    }
    %c2_i32_8 = arith.constant 2 : i32
    %c0_9 = arith.constant 0 : index
    %c0_10 = arith.constant 0 : index
    %6 = vector.load %arg5[%c0_9, %c0_10] : memref<144x16xbf16, #tpu.memory_space<vmem>>, vector<144x16xbf16>
    %c0_11 = arith.constant 0 : index
    %c0_12 = arith.constant 0 : index
    %7 = vector.load %arg6[%c0_11, %c0_12] : memref<1x16xf32, #tpu.memory_space<vmem>>, vector<1x16xf32>
    %c0_i32_13 = arith.constant 0 : i32
    %c2_i32_14 = arith.constant 2 : i32
    %8 = arith.addi %c0_i32_13, %c2_i32_14 : i32
    %c1_i32_15 = arith.constant 1 : i32
    scf.for %arg10 = %c0_i32_13 to %8 step %c1_i32_15  : i32 {
      %c1_i32_17 = arith.constant 1 : i32
      %9 = arith.muli %arg10, %c1_i32_17 : i32
      %c0_i32_18 = arith.constant 0 : i32
      %10 = arith.addi %c0_i32_18, %9 : i32
      %c0_i32_19 = arith.constant 0 : i32
      %11 = arith.addi %10, %c0_i32_19 : i32
      %12 = arith.index_cast %11 : i32 to index
      %c0_20 = arith.constant 0 : index
      %c0_21 = arith.constant 0 : index
      %13 = vector.load %arg8[%12, %c0_20, %c0_21] : memref<4x4x16xbf16, #tpu.memory_space<vmem>>, vector<1x2x16xbf16>
      %14 = vector.shape_cast %13 : vector<1x2x16xbf16> to vector<2x16xbf16>
      %c0_i32_22 = arith.constant 0 : i32
      %15 = arith.addi %10, %c0_i32_22 : i32
      %16 = arith.index_cast %15 : i32 to index
      %c1 = arith.constant 1 : index
      %c0_23 = arith.constant 0 : index
      %17 = vector.load %arg8[%16, %c1, %c0_23] : memref<4x4x16xbf16, #tpu.memory_space<vmem>>, vector<1x2x16xbf16>
      %18 = vector.shape_cast %17 : vector<1x2x16xbf16> to vector<2x16xbf16>
      %c0_i32_24 = arith.constant 0 : i32
      %19 = arith.addi %10, %c0_i32_24 : i32
      %20 = arith.index_cast %19 : i32 to index
      %c2 = arith.constant 2 : index
      %c0_25 = arith.constant 0 : index
      %21 = vector.load %arg8[%20, %c2, %c0_25] : memref<4x4x16xbf16, #tpu.memory_space<vmem>>, vector<1x2x16xbf16>
      %22 = vector.shape_cast %21 : vector<1x2x16xbf16> to vector<2x16xbf16>
      %c1_i32_26 = arith.constant 1 : i32
      %23 = arith.addi %10, %c1_i32_26 : i32
      %24 = arith.index_cast %23 : i32 to index
      %c0_27 = arith.constant 0 : index
      %c0_28 = arith.constant 0 : index
      %25 = vector.load %arg8[%24, %c0_27, %c0_28] : memref<4x4x16xbf16, #tpu.memory_space<vmem>>, vector<1x2x16xbf16>
      %26 = vector.shape_cast %25 : vector<1x2x16xbf16> to vector<2x16xbf16>
      %c1_i32_29 = arith.constant 1 : i32
      %27 = arith.addi %10, %c1_i32_29 : i32
      %28 = arith.index_cast %27 : i32 to index
      %c1_30 = arith.constant 1 : index
      %c0_31 = arith.constant 0 : index
      %29 = vector.load %arg8[%28, %c1_30, %c0_31] : memref<4x4x16xbf16, #tpu.memory_space<vmem>>, vector<1x2x16xbf16>
      %30 = vector.shape_cast %29 : vector<1x2x16xbf16> to vector<2x16xbf16>
      %c1_i32_32 = arith.constant 1 : i32
      %31 = arith.addi %10, %c1_i32_32 : i32
      %32 = arith.index_cast %31 : i32 to index
      %c2_33 = arith.constant 2 : index
      %c0_34 = arith.constant 0 : index
      %33 = vector.load %arg8[%32, %c2_33, %c0_34] : memref<4x4x16xbf16, #tpu.memory_space<vmem>>, vector<1x2x16xbf16>
      %34 = vector.shape_cast %33 : vector<1x2x16xbf16> to vector<2x16xbf16>
      %c2_i32_35 = arith.constant 2 : i32
      %35 = arith.addi %10, %c2_i32_35 : i32
      %36 = arith.index_cast %35 : i32 to index
      %c0_36 = arith.constant 0 : index
      %c0_37 = arith.constant 0 : index
      %37 = vector.load %arg8[%36, %c0_36, %c0_37] : memref<4x4x16xbf16, #tpu.memory_space<vmem>>, vector<1x2x16xbf16>
      %38 = vector.shape_cast %37 : vector<1x2x16xbf16> to vector<2x16xbf16>
      %c2_i32_38 = arith.constant 2 : i32
      %39 = arith.addi %10, %c2_i32_38 : i32
      %40 = arith.index_cast %39 : i32 to index
      %c1_39 = arith.constant 1 : index
      %c0_40 = arith.constant 0 : index
      %41 = vector.load %arg8[%40, %c1_39, %c0_40] : memref<4x4x16xbf16, #tpu.memory_space<vmem>>, vector<1x2x16xbf16>
      %42 = vector.shape_cast %41 : vector<1x2x16xbf16> to vector<2x16xbf16>
      %c2_i32_41 = arith.constant 2 : i32
      %43 = arith.addi %10, %c2_i32_41 : i32
      %44 = arith.index_cast %43 : i32 to index
      %c2_42 = arith.constant 2 : index
      %c0_43 = arith.constant 0 : index
      %45 = vector.load %arg8[%44, %c2_42, %c0_43] : memref<4x4x16xbf16, #tpu.memory_space<vmem>>, vector<1x2x16xbf16>
      %46 = vector.shape_cast %45 : vector<1x2x16xbf16> to vector<2x16xbf16>
      %47 = tpu.concatenate %14, %18, %22, %26, %30, %34, %38, %42, %46 in 1 : vector<2x16xbf16>, vector<2x16xbf16>, vector<2x16xbf16>, vector<2x16xbf16>, vector<2x16xbf16>, vector<2x16xbf16>, vector<2x16xbf16>, vector<2x16xbf16>, vector<2x16xbf16> -> vector<2x144xbf16>
      %cst_44 = arith.constant dense<0.000000e+00> : vector<2x16xf32>
      %48 = tpu.matmul %47, %6, %cst_44 {dimension_numbers = #tpu.dot_dimension_numbers<[1], [0], [0], [1], [0, 0, 1, 1], [], []>} : vector<2x144xbf16>, vector<144x16xbf16>, vector<2x16xf32> -> vector<2x16xf32>
      %49 = vector.broadcast %7 : vector<1x16xf32> to vector<2x16xf32>
      %50 = arith.addf %48, %49 : vector<2x16xf32>
      %51 = arith.index_cast %10 : i32 to index
      %c0_45 = arith.constant 0 : index
      %c0_46 = arith.constant 0 : index
      %52 = vector.load %arg9[%51, %c0_45, %c0_46] : memref<2x2x16xf32, #tpu.memory_space<vmem>>, vector<1x2x16xf32>
      %53 = vector.shape_cast %52 : vector<1x2x16xf32> to vector<2x16xf32>
      %54 = arith.addf %50, %53 : vector<2x16xf32>
      %cst_47 = arith.constant 0.000000e+00 : f32
      %55 = vector.broadcast %cst_47 : f32 to vector<2x16xf32>
      %56 = arith.maximumf %54, %55 : vector<2x16xf32>
      %57 = arith.truncf %56 : vector<2x16xf32> to vector<2x16xbf16>
      %c0_48 = arith.constant 0 : index
      %58 = arith.index_cast %10 : i32 to index
      %c0_49 = arith.constant 0 : index
      %c0_50 = arith.constant 0 : index
      %59 = vector.load %arg7[%c0_48, %58, %c0_49, %c0_50] : memref<1x2x2x16xbf16, #tpu.memory_space<vmem>>, vector<1x1x2x16xbf16>
      %60 = vector.shape_cast %59 : vector<1x1x2x16xbf16> to vector<2x16xbf16>
      %61 = vector.shape_cast %57 : vector<2x16xbf16> to vector<1x1x2x16xbf16>
      tpu.vector_store %arg7[%c0_48, %58, %c0_49, %c0_50], %61 {strides = array<i32>} : memref<1x2x2x16xbf16, #tpu.memory_space<vmem>>, vector<1x1x2x16xbf16>,
    }
    %c2_i32_16 = arith.constant 2 : i32
    return
  }
  func.func @transform_0(%arg0: i32) -> (i32, i32, i32, i32) {
    %c0_i32 = arith.constant 0 : i32
    %c0_i32_0 = arith.constant 0 : i32
    %c0_i32_1 = arith.constant 0 : i32
    %c0_i32_2 = arith.constant 0 : i32
    return %arg0, %c0_i32, %c0_i32_0, %c0_i32_1 : i32, i32, i32, i32
  }
  func.func @transform_1(%arg0: i32) -> (i32, i32) {
    %c0_i32 = arith.constant 0 : i32
    %c0_i32_0 = arith.constant 0 : i32
    %c0_i32_1 = arith.constant 0 : i32
    return %c0_i32, %c0_i32_0 : i32, i32
  }
  func.func @transform_2(%arg0: i32) -> (i32, i32) {
    %c0_i32 = arith.constant 0 : i32
    %c0_i32_0 = arith.constant 0 : i32
    %c0_i32_1 = arith.constant 0 : i32
    return %c0_i32, %c0_i32_0 : i32, i32
  }
  func.func @transform_3(%arg0: i32) -> (i32, i32) {
    %c0_i32 = arith.constant 0 : i32
    %c0_i32_0 = arith.constant 0 : i32
    %c0_i32_1 = arith.constant 0 : i32
    return %c0_i32, %c0_i32_0 : i32, i32
  }
  func.func @transform_4(%arg0: i32) -> (i32, i32) {
    %c0_i32 = arith.constant 0 : i32
    %c0_i32_0 = arith.constant 0 : i32
    %c0_i32_1 = arith.constant 0 : i32
    return %c0_i32, %c0_i32_0 : i32, i32
  }
  func.func @transform_5(%arg0: i32) -> (i32, i32) {
    %c0_i32 = arith.constant 0 : i32
    %c0_i32_0 = arith.constant 0 : i32
    %c0_i32_1 = arith.constant 0 : i32
    return %c0_i32, %c0_i32_0 : i32, i32
  }
  func.func @transform_6(%arg0: i32) -> (i32, i32, i32, i32) {
    %c0_i32 = arith.constant 0 : i32
    %c0_i32_0 = arith.constant 0 : i32
    %c0_i32_1 = arith.constant 0 : i32
    %c0_i32_2 = arith.constant 0 : i32
    return %arg0, %c0_i32, %c0_i32_0, %c0_i32_1 : i32, i32, i32, i32
  }
}

module attributes {stable_mosaic.version = 11 : i64} {
  func.func @_res2d_block_kernel(%arg0: i32, %arg1: memref<1x3x2x32xbf16, #tpu.memory_space<vmem>>, %arg2: memref<144x32xbf16, #tpu.memory_space<vmem>>, %arg3: memref<1x16xf32, #tpu.memory_space<vmem>>, %arg4: memref<1x16xf32, #tpu.memory_space<vmem>>, %arg5: memref<144x16xbf16, #tpu.memory_space<vmem>>, %arg6: memref<1x16xf32, #tpu.memory_space<vmem>>, %arg7: memref<1x1x1x16xbf16, #tpu.memory_space<vmem>>, %arg8: memref<3x3x16xbf16, #tpu.memory_space<vmem>>, %arg9: memref<1x1x16xf32, #tpu.memory_space<vmem>>) attributes {dimension_semantics = [#tpu.dimension_semantics<parallel>], iteration_bounds = array<i64: 2>, scalar_prefetch = 0 : i64, scratch_operands = 2 : i64, tpu.core_type = #tpu.core_type<tc>, window_params = [{transform_indices = @transform_0, window_bounds = array<i64: 1, 3, 2, 32>}, {pipeline_mode = #tpu.pipeline_mode<synchronous>, transform_indices = @transform_1, window_bounds = array<i64: 144, 32>}, {pipeline_mode = #tpu.pipeline_mode<synchronous>, transform_indices = @transform_2, window_bounds = array<i64: 1, 16>}, {pipeline_mode = #tpu.pipeline_mode<synchronous>, transform_indices = @transform_3, window_bounds = array<i64: 1, 16>}, {pipeline_mode = #tpu.pipeline_mode<synchronous>, transform_indices = @transform_4, window_bounds = array<i64: 144, 16>}, {pipeline_mode = #tpu.pipeline_mode<synchronous>, transform_indices = @transform_5, window_bounds = array<i64: 1, 16>}, {transform_indices = @transform_6, window_bounds = array<i64: 1, 1, 1, 16>}]} {
    %c0 = arith.constant 0 : index
    %c0_0 = arith.constant 0 : index
    %0 = vector.load %arg2[%c0, %c0_0] : memref<144x32xbf16, #tpu.memory_space<vmem>>, vector<144x32xbf16>
    %c0_1 = arith.constant 0 : index
    %c0_2 = arith.constant 0 : index
    %1 = vector.load %arg3[%c0_1, %c0_2] : memref<1x16xf32, #tpu.memory_space<vmem>>, vector<1x16xf32>
    %c0_3 = arith.constant 0 : index
    %c0_4 = arith.constant 0 : index
    %2 = vector.load %arg4[%c0_3, %c0_4] : memref<1x16xf32, #tpu.memory_space<vmem>>, vector<1x16xf32>
    %cst = arith.constant 0.000000e+00 : bf16
    %3 = vector.broadcast %cst : bf16 to vector<3x3x16xbf16>
    %c0_5 = arith.constant 0 : index
    %c0_6 = arith.constant 0 : index
    %c0_7 = arith.constant 0 : index
    %4 = vector.load %arg8[%c0_5, %c0_6, %c0_7] : memref<3x3x16xbf16, #tpu.memory_space<vmem>>, vector<3x3x16xbf16>
    tpu.vector_store %arg8[%c0_5, %c0_6, %c0_7], %3 {strides = array<i32>} : memref<3x3x16xbf16, #tpu.memory_space<vmem>>, vector<3x3x16xbf16>,
    %c0_i32 = arith.constant 0 : i32
    %c1_i32 = arith.constant 1 : i32
    %5 = arith.muli %c0_i32, %c1_i32 : i32
    %c0_i32_8 = arith.constant 0 : i32
    %6 = arith.addi %c0_i32_8, %5 : i32
    %c2_i32 = arith.constant 2 : i32
    %7 = arith.muli %c2_i32, %6 : i32
    %c0_i32_9 = arith.constant 0 : i32
    %8 = arith.addi %7, %c0_i32_9 : i32
    %c0_10 = arith.constant 0 : index
    %9 = arith.index_cast %8 : i32 to index
    %c0_11 = arith.constant 0 : index
    %c0_12 = arith.constant 0 : index
    %10 = vector.load %arg1[%c0_10, %9, %c0_11, %c0_12] : memref<1x3x2x32xbf16, #tpu.memory_space<vmem>>, vector<1x1x1x16xbf16>
    %11 = vector.shape_cast %10 : vector<1x1x1x16xbf16> to vector<1x16xbf16>
    %c0_13 = arith.constant 0 : index
    %12 = arith.index_cast %8 : i32 to index
    %c0_14 = arith.constant 0 : index
    %c16 = arith.constant 16 : index
    %13 = vector.load %arg1[%c0_13, %12, %c0_14, %c16] : memref<1x3x2x32xbf16, #tpu.memory_space<vmem>>, vector<1x1x1x16xbf16>
    %14 = vector.shape_cast %13 : vector<1x1x1x16xbf16> to vector<1x16xbf16>
    %c0_15 = arith.constant 0 : index
    %15 = arith.index_cast %8 : i32 to index
    %c1 = arith.constant 1 : index
    %c0_16 = arith.constant 0 : index
    %16 = vector.load %arg1[%c0_15, %15, %c1, %c0_16] : memref<1x3x2x32xbf16, #tpu.memory_space<vmem>>, vector<1x1x1x16xbf16>
    %17 = vector.shape_cast %16 : vector<1x1x1x16xbf16> to vector<1x16xbf16>
    %c2_i32_17 = arith.constant 2 : i32
    %18 = arith.muli %c2_i32_17, %6 : i32
    %c1_i32_18 = arith.constant 1 : i32
    %19 = arith.addi %18, %c1_i32_18 : i32
    %c0_19 = arith.constant 0 : index
    %20 = arith.index_cast %19 : i32 to index
    %c0_20 = arith.constant 0 : index
    %c0_21 = arith.constant 0 : index
    %21 = vector.load %arg1[%c0_19, %20, %c0_20, %c0_21] : memref<1x3x2x32xbf16, #tpu.memory_space<vmem>>, vector<1x1x1x16xbf16>
    %22 = vector.shape_cast %21 : vector<1x1x1x16xbf16> to vector<1x16xbf16>
    %c0_22 = arith.constant 0 : index
    %23 = arith.index_cast %19 : i32 to index
    %c0_23 = arith.constant 0 : index
    %c16_24 = arith.constant 16 : index
    %24 = vector.load %arg1[%c0_22, %23, %c0_23, %c16_24] : memref<1x3x2x32xbf16, #tpu.memory_space<vmem>>, vector<1x1x1x16xbf16>
    %25 = vector.shape_cast %24 : vector<1x1x1x16xbf16> to vector<1x16xbf16>
    %c0_25 = arith.constant 0 : index
    %26 = arith.index_cast %19 : i32 to index
    %c1_26 = arith.constant 1 : index
    %c0_27 = arith.constant 0 : index
    %27 = vector.load %arg1[%c0_25, %26, %c1_26, %c0_27] : memref<1x3x2x32xbf16, #tpu.memory_space<vmem>>, vector<1x1x1x16xbf16>
    %28 = vector.shape_cast %27 : vector<1x1x1x16xbf16> to vector<1x16xbf16>
    %c2_i32_28 = arith.constant 2 : i32
    %29 = arith.muli %c2_i32_28, %6 : i32
    %c2_i32_29 = arith.constant 2 : i32
    %30 = arith.addi %29, %c2_i32_29 : i32
    %c0_30 = arith.constant 0 : index
    %31 = arith.index_cast %30 : i32 to index
    %c0_31 = arith.constant 0 : index
    %c0_32 = arith.constant 0 : index
    %32 = vector.load %arg1[%c0_30, %31, %c0_31, %c0_32] : memref<1x3x2x32xbf16, #tpu.memory_space<vmem>>, vector<1x1x1x16xbf16>
    %33 = vector.shape_cast %32 : vector<1x1x1x16xbf16> to vector<1x16xbf16>
    %c0_33 = arith.constant 0 : index
    %34 = arith.index_cast %30 : i32 to index
    %c0_34 = arith.constant 0 : index
    %c16_35 = arith.constant 16 : index
    %35 = vector.load %arg1[%c0_33, %34, %c0_34, %c16_35] : memref<1x3x2x32xbf16, #tpu.memory_space<vmem>>, vector<1x1x1x16xbf16>
    %36 = vector.shape_cast %35 : vector<1x1x1x16xbf16> to vector<1x16xbf16>
    %c0_36 = arith.constant 0 : index
    %37 = arith.index_cast %30 : i32 to index
    %c1_37 = arith.constant 1 : index
    %c0_38 = arith.constant 0 : index
    %38 = vector.load %arg1[%c0_36, %37, %c1_37, %c0_38] : memref<1x3x2x32xbf16, #tpu.memory_space<vmem>>, vector<1x1x1x16xbf16>
    %39 = vector.shape_cast %38 : vector<1x1x1x16xbf16> to vector<1x16xbf16>
    %40 = tpu.concatenate %11, %14, %17, %22, %25, %28, %33, %36, %39 in 1 : vector<1x16xbf16>, vector<1x16xbf16>, vector<1x16xbf16>, vector<1x16xbf16>, vector<1x16xbf16>, vector<1x16xbf16>, vector<1x16xbf16>, vector<1x16xbf16>, vector<1x16xbf16> -> vector<1x144xbf16>
    %cst_39 = arith.constant dense<0.000000e+00> : vector<1x32xf32>
    %41 = tpu.matmul %40, %0, %cst_39 {dimension_numbers = #tpu.dot_dimension_numbers<[1], [0], [0], [1], [0, 0, 1, 1], [], []>} : vector<1x144xbf16>, vector<144x32xbf16>, vector<1x32xf32> -> vector<1x32xf32>
    %42 = vector.extract_strided_slice %41 {offsets = [0, 0], sizes = [1, 16], strides = [1, 1]} : vector<1x32xf32> to vector<1x16xf32>
    %43 = arith.addf %42, %1 : vector<1x16xf32>
    %cst_40 = arith.constant 0.000000e+00 : f32
    %44 = vector.broadcast %cst_40 : f32 to vector<1x16xf32>
    %45 = arith.maximumf %43, %44 : vector<1x16xf32>
    %46 = arith.truncf %45 : vector<1x16xf32> to vector<1x16xbf16>
    %c1_i32_41 = arith.constant 1 : i32
    %47 = arith.addi %c1_i32_41, %6 : i32
    %48 = arith.index_cast %47 : i32 to index
    %c1_42 = arith.constant 1 : index
    %c0_43 = arith.constant 0 : index
    %49 = vector.load %arg8[%48, %c1_42, %c0_43] : memref<3x3x16xbf16, #tpu.memory_space<vmem>>, vector<1x1x16xbf16>
    %50 = vector.shape_cast %49 : vector<1x1x16xbf16> to vector<1x16xbf16>
    %51 = vector.shape_cast %46 : vector<1x16xbf16> to vector<1x1x16xbf16>
    tpu.vector_store %arg8[%48, %c1_42, %c0_43], %51 {strides = array<i32>} : memref<3x3x16xbf16, #tpu.memory_space<vmem>>, vector<1x1x16xbf16>,
    %52 = vector.extract_strided_slice %41 {offsets = [0, 16], sizes = [1, 16], strides = [1, 1]} : vector<1x32xf32> to vector<1x16xf32>
    %53 = arith.addf %52, %2 : vector<1x16xf32>
    %54 = arith.index_cast %6 : i32 to index
    %c0_44 = arith.constant 0 : index
    %c0_45 = arith.constant 0 : index
    %55 = vector.load %arg9[%54, %c0_44, %c0_45] : memref<1x1x16xf32, #tpu.memory_space<vmem>>, vector<1x1x16xf32>
    %56 = vector.shape_cast %55 : vector<1x1x16xf32> to vector<1x16xf32>
    %57 = vector.shape_cast %53 : vector<1x16xf32> to vector<1x1x16xf32>
    tpu.vector_store %arg9[%54, %c0_44, %c0_45], %57 {strides = array<i32>} : memref<1x1x16xf32, #tpu.memory_space<vmem>>, vector<1x1x16xf32>,
    %c1_i32_46 = arith.constant 1 : i32
    %c0_47 = arith.constant 0 : index
    %c0_48 = arith.constant 0 : index
    %58 = vector.load %arg5[%c0_47, %c0_48] : memref<144x16xbf16, #tpu.memory_space<vmem>>, vector<144x16xbf16>
    %c0_49 = arith.constant 0 : index
    %c0_50 = arith.constant 0 : index
    %59 = vector.load %arg6[%c0_49, %c0_50] : memref<1x16xf32, #tpu.memory_space<vmem>>, vector<1x16xf32>
    %c0_i32_51 = arith.constant 0 : i32
    %c1_i32_52 = arith.constant 1 : i32
    %60 = arith.muli %c0_i32_51, %c1_i32_52 : i32
    %c0_i32_53 = arith.constant 0 : i32
    %61 = arith.addi %c0_i32_53, %60 : i32
    %c0_i32_54 = arith.constant 0 : i32
    %62 = arith.addi %61, %c0_i32_54 : i32
    %63 = arith.index_cast %62 : i32 to index
    %c0_55 = arith.constant 0 : index
    %c0_56 = arith.constant 0 : index
    %64 = vector.load %arg8[%63, %c0_55, %c0_56] : memref<3x3x16xbf16, #tpu.memory_space<vmem>>, vector<1x1x16xbf16>
    %65 = vector.shape_cast %64 : vector<1x1x16xbf16> to vector<1x16xbf16>
    %c0_i32_57 = arith.constant 0 : i32
    %66 = arith.addi %61, %c0_i32_57 : i32
    %67 = arith.index_cast %66 : i32 to index
    %c1_58 = arith.constant 1 : index
    %c0_59 = arith.constant 0 : index
    %68 = vector.load %arg8[%67, %c1_58, %c0_59] : memref<3x3x16xbf16, #tpu.memory_space<vmem>>, vector<1x1x16xbf16>
    %69 = vector.shape_cast %68 : vector<1x1x16xbf16> to vector<1x16xbf16>
    %c0_i32_60 = arith.constant 0 : i32
    %70 = arith.addi %61, %c0_i32_60 : i32
    %71 = arith.index_cast %70 : i32 to index
    %c2 = arith.constant 2 : index
    %c0_61 = arith.constant 0 : index
    %72 = vector.load %arg8[%71, %c2, %c0_61] : memref<3x3x16xbf16, #tpu.memory_space<vmem>>, vector<1x1x16xbf16>
    %73 = vector.shape_cast %72 : vector<1x1x16xbf16> to vector<1x16xbf16>
    %c1_i32_62 = arith.constant 1 : i32
    %74 = arith.addi %61, %c1_i32_62 : i32
    %75 = arith.index_cast %74 : i32 to index
    %c0_63 = arith.constant 0 : index
    %c0_64 = arith.constant 0 : index
    %76 = vector.load %arg8[%75, %c0_63, %c0_64] : memref<3x3x16xbf16, #tpu.memory_space<vmem>>, vector<1x1x16xbf16>
    %77 = vector.shape_cast %76 : vector<1x1x16xbf16> to vector<1x16xbf16>
    %c1_i32_65 = arith.constant 1 : i32
    %78 = arith.addi %61, %c1_i32_65 : i32
    %79 = arith.index_cast %78 : i32 to index
    %c1_66 = arith.constant 1 : index
    %c0_67 = arith.constant 0 : index
    %80 = vector.load %arg8[%79, %c1_66, %c0_67] : memref<3x3x16xbf16, #tpu.memory_space<vmem>>, vector<1x1x16xbf16>
    %81 = vector.shape_cast %80 : vector<1x1x16xbf16> to vector<1x16xbf16>
    %c1_i32_68 = arith.constant 1 : i32
    %82 = arith.addi %61, %c1_i32_68 : i32
    %83 = arith.index_cast %82 : i32 to index
    %c2_69 = arith.constant 2 : index
    %c0_70 = arith.constant 0 : index
    %84 = vector.load %arg8[%83, %c2_69, %c0_70] : memref<3x3x16xbf16, #tpu.memory_space<vmem>>, vector<1x1x16xbf16>
    %85 = vector.shape_cast %84 : vector<1x1x16xbf16> to vector<1x16xbf16>
    %c2_i32_71 = arith.constant 2 : i32
    %86 = arith.addi %61, %c2_i32_71 : i32
    %87 = arith.index_cast %86 : i32 to index
    %c0_72 = arith.constant 0 : index
    %c0_73 = arith.constant 0 : index
    %88 = vector.load %arg8[%87, %c0_72, %c0_73] : memref<3x3x16xbf16, #tpu.memory_space<vmem>>, vector<1x1x16xbf16>
    %89 = vector.shape_cast %88 : vector<1x1x16xbf16> to vector<1x16xbf16>
    %c2_i32_74 = arith.constant 2 : i32
    %90 = arith.addi %61, %c2_i32_74 : i32
    %91 = arith.index_cast %90 : i32 to index
    %c1_75 = arith.constant 1 : index
    %c0_76 = arith.constant 0 : index
    %92 = vector.load %arg8[%91, %c1_75, %c0_76] : memref<3x3x16xbf16, #tpu.memory_space<vmem>>, vector<1x1x16xbf16>
    %93 = vector.shape_cast %92 : vector<1x1x16xbf16> to vector<1x16xbf16>
    %c2_i32_77 = arith.constant 2 : i32
    %94 = arith.addi %61, %c2_i32_77 : i32
    %95 = arith.index_cast %94 : i32 to index
    %c2_78 = arith.constant 2 : index
    %c0_79 = arith.constant 0 : index
    %96 = vector.load %arg8[%95, %c2_78, %c0_79] : memref<3x3x16xbf16, #tpu.memory_space<vmem>>, vector<1x1x16xbf16>
    %97 = vector.shape_cast %96 : vector<1x1x16xbf16> to vector<1x16xbf16>
    %98 = tpu.concatenate %65, %69, %73, %77, %81, %85, %89, %93, %97 in 1 : vector<1x16xbf16>, vector<1x16xbf16>, vector<1x16xbf16>, vector<1x16xbf16>, vector<1x16xbf16>, vector<1x16xbf16>, vector<1x16xbf16>, vector<1x16xbf16>, vector<1x16xbf16> -> vector<1x144xbf16>
    %cst_80 = arith.constant dense<0.000000e+00> : vector<1x16xf32>
    %99 = tpu.matmul %98, %58, %cst_80 {dimension_numbers = #tpu.dot_dimension_numbers<[1], [0], [0], [1], [0, 0, 1, 1], [], []>} : vector<1x144xbf16>, vector<144x16xbf16>, vector<1x16xf32> -> vector<1x16xf32>
    %100 = arith.addf %99, %59 : vector<1x16xf32>
    %101 = arith.index_cast %61 : i32 to index
    %c0_81 = arith.constant 0 : index
    %c0_82 = arith.constant 0 : index
    %102 = vector.load %arg9[%101, %c0_81, %c0_82] : memref<1x1x16xf32, #tpu.memory_space<vmem>>, vector<1x1x16xf32>
    %103 = vector.shape_cast %102 : vector<1x1x16xf32> to vector<1x16xf32>
    %104 = arith.addf %100, %103 : vector<1x16xf32>
    %cst_83 = arith.constant 0.000000e+00 : f32
    %105 = vector.broadcast %cst_83 : f32 to vector<1x16xf32>
    %106 = arith.maximumf %104, %105 : vector<1x16xf32>
    %107 = arith.truncf %106 : vector<1x16xf32> to vector<1x16xbf16>
    %c0_84 = arith.constant 0 : index
    %108 = arith.index_cast %61 : i32 to index
    %c0_85 = arith.constant 0 : index
    %c0_86 = arith.constant 0 : index
    %109 = vector.load %arg7[%c0_84, %108, %c0_85, %c0_86] : memref<1x1x1x16xbf16, #tpu.memory_space<vmem>>, vector<1x1x1x16xbf16>
    %110 = vector.shape_cast %109 : vector<1x1x1x16xbf16> to vector<1x16xbf16>
    %111 = vector.shape_cast %107 : vector<1x16xbf16> to vector<1x1x1x16xbf16>
    tpu.vector_store %arg7[%c0_84, %108, %c0_85, %c0_86], %111 {strides = array<i32>} : memref<1x1x1x16xbf16, #tpu.memory_space<vmem>>, vector<1x1x1x16xbf16>,
    %c1_i32_87 = arith.constant 1 : i32
    return
  }
  func.func @transform_0(%arg0: i32) -> (i32, i32, i32, i32) {
    %c0_i32 = arith.constant 0 : i32
    %c0_i32_0 = arith.constant 0 : i32
    %c0_i32_1 = arith.constant 0 : i32
    %c0_i32_2 = arith.constant 0 : i32
    return %arg0, %c0_i32, %c0_i32_0, %c0_i32_1 : i32, i32, i32, i32
  }
  func.func @transform_1(%arg0: i32) -> (i32, i32) {
    %c0_i32 = arith.constant 0 : i32
    %c0_i32_0 = arith.constant 0 : i32
    %c0_i32_1 = arith.constant 0 : i32
    return %c0_i32, %c0_i32_0 : i32, i32
  }
  func.func @transform_2(%arg0: i32) -> (i32, i32) {
    %c0_i32 = arith.constant 0 : i32
    %c0_i32_0 = arith.constant 0 : i32
    %c0_i32_1 = arith.constant 0 : i32
    return %c0_i32, %c0_i32_0 : i32, i32
  }
  func.func @transform_3(%arg0: i32) -> (i32, i32) {
    %c0_i32 = arith.constant 0 : i32
    %c0_i32_0 = arith.constant 0 : i32
    %c0_i32_1 = arith.constant 0 : i32
    return %c0_i32, %c0_i32_0 : i32, i32
  }
  func.func @transform_4(%arg0: i32) -> (i32, i32) {
    %c0_i32 = arith.constant 0 : i32
    %c0_i32_0 = arith.constant 0 : i32
    %c0_i32_1 = arith.constant 0 : i32
    return %c0_i32, %c0_i32_0 : i32, i32
  }
  func.func @transform_5(%arg0: i32) -> (i32, i32) {
    %c0_i32 = arith.constant 0 : i32
    %c0_i32_0 = arith.constant 0 : i32
    %c0_i32_1 = arith.constant 0 : i32
    return %c0_i32, %c0_i32_0 : i32, i32
  }
  func.func @transform_6(%arg0: i32) -> (i32, i32, i32, i32) {
    %c0_i32 = arith.constant 0 : i32
    %c0_i32_0 = arith.constant 0 : i32
    %c0_i32_1 = arith.constant 0 : i32
    %c0_i32_2 = arith.constant 0 : i32
    return %arg0, %c0_i32, %c0_i32_0, %c0_i32_1 : i32, i32, i32, i32
  }
}

module attributes {stable_mosaic.version = 11 : i64} {
  func.func @_res2d_block_kernel(%arg0: i32, %arg1: memref<1x4x2x32xbf16, #tpu.memory_space<vmem>>, %arg2: memref<144x32xbf16, #tpu.memory_space<vmem>>, %arg3: memref<1x16xf32, #tpu.memory_space<vmem>>, %arg4: memref<1x16xf32, #tpu.memory_space<vmem>>, %arg5: memref<144x16xbf16, #tpu.memory_space<vmem>>, %arg6: memref<1x16xf32, #tpu.memory_space<vmem>>, %arg7: memref<1x1x1x16xbf16, #tpu.memory_space<vmem>>, %arg8: memref<3x3x16xbf16, #tpu.memory_space<vmem>>, %arg9: memref<1x1x16xf32, #tpu.memory_space<vmem>>) attributes {dimension_semantics = [#tpu.dimension_semantics<parallel>], iteration_bounds = array<i64: 2>, scalar_prefetch = 0 : i64, scratch_operands = 2 : i64, tpu.core_type = #tpu.core_type<tc>, window_params = [{transform_indices = @transform_0, window_bounds = array<i64: 1, 4, 2, 32>}, {pipeline_mode = #tpu.pipeline_mode<synchronous>, transform_indices = @transform_1, window_bounds = array<i64: 144, 32>}, {pipeline_mode = #tpu.pipeline_mode<synchronous>, transform_indices = @transform_2, window_bounds = array<i64: 1, 16>}, {pipeline_mode = #tpu.pipeline_mode<synchronous>, transform_indices = @transform_3, window_bounds = array<i64: 1, 16>}, {pipeline_mode = #tpu.pipeline_mode<synchronous>, transform_indices = @transform_4, window_bounds = array<i64: 144, 16>}, {pipeline_mode = #tpu.pipeline_mode<synchronous>, transform_indices = @transform_5, window_bounds = array<i64: 1, 16>}, {transform_indices = @transform_6, window_bounds = array<i64: 1, 1, 1, 16>}]} {
    %c0 = arith.constant 0 : index
    %c0_0 = arith.constant 0 : index
    %0 = vector.load %arg2[%c0, %c0_0] : memref<144x32xbf16, #tpu.memory_space<vmem>>, vector<144x32xbf16>
    %c0_1 = arith.constant 0 : index
    %c0_2 = arith.constant 0 : index
    %1 = vector.load %arg3[%c0_1, %c0_2] : memref<1x16xf32, #tpu.memory_space<vmem>>, vector<1x16xf32>
    %c0_3 = arith.constant 0 : index
    %c0_4 = arith.constant 0 : index
    %2 = vector.load %arg4[%c0_3, %c0_4] : memref<1x16xf32, #tpu.memory_space<vmem>>, vector<1x16xf32>
    %cst = arith.constant 0.000000e+00 : bf16
    %3 = vector.broadcast %cst : bf16 to vector<3x3x16xbf16>
    %c0_5 = arith.constant 0 : index
    %c0_6 = arith.constant 0 : index
    %c0_7 = arith.constant 0 : index
    %4 = vector.load %arg8[%c0_5, %c0_6, %c0_7] : memref<3x3x16xbf16, #tpu.memory_space<vmem>>, vector<3x3x16xbf16>
    tpu.vector_store %arg8[%c0_5, %c0_6, %c0_7], %3 {strides = array<i32>} : memref<3x3x16xbf16, #tpu.memory_space<vmem>>, vector<3x3x16xbf16>,
    %c0_i32 = arith.constant 0 : i32
    %c1_i32 = arith.constant 1 : i32
    %5 = arith.muli %c0_i32, %c1_i32 : i32
    %c0_i32_8 = arith.constant 0 : i32
    %6 = arith.addi %c0_i32_8, %5 : i32
    %c2_i32 = arith.constant 2 : i32
    %7 = arith.muli %c2_i32, %6 : i32
    %c0_i32_9 = arith.constant 0 : i32
    %8 = arith.addi %7, %c0_i32_9 : i32
    %c0_10 = arith.constant 0 : index
    %9 = arith.index_cast %8 : i32 to index
    %c0_11 = arith.constant 0 : index
    %c0_12 = arith.constant 0 : index
    %10 = vector.load %arg1[%c0_10, %9, %c0_11, %c0_12] : memref<1x4x2x32xbf16, #tpu.memory_space<vmem>>, vector<1x1x1x16xbf16>
    %11 = vector.shape_cast %10 : vector<1x1x1x16xbf16> to vector<1x16xbf16>
    %c0_13 = arith.constant 0 : index
    %12 = arith.index_cast %8 : i32 to index
    %c0_14 = arith.constant 0 : index
    %c16 = arith.constant 16 : index
    %13 = vector.load %arg1[%c0_13, %12, %c0_14, %c16] : memref<1x4x2x32xbf16, #tpu.memory_space<vmem>>, vector<1x1x1x16xbf16>
    %14 = vector.shape_cast %13 : vector<1x1x1x16xbf16> to vector<1x16xbf16>
    %c0_15 = arith.constant 0 : index
    %15 = arith.index_cast %8 : i32 to index
    %c1 = arith.constant 1 : index
    %c0_16 = arith.constant 0 : index
    %16 = vector.load %arg1[%c0_15, %15, %c1, %c0_16] : memref<1x4x2x32xbf16, #tpu.memory_space<vmem>>, vector<1x1x1x16xbf16>
    %17 = vector.shape_cast %16 : vector<1x1x1x16xbf16> to vector<1x16xbf16>
    %c2_i32_17 = arith.constant 2 : i32
    %18 = arith.muli %c2_i32_17, %6 : i32
    %c1_i32_18 = arith.constant 1 : i32
    %19 = arith.addi %18, %c1_i32_18 : i32
    %c0_19 = arith.constant 0 : index
    %20 = arith.index_cast %19 : i32 to index
    %c0_20 = arith.constant 0 : index
    %c0_21 = arith.constant 0 : index
    %21 = vector.load %arg1[%c0_19, %20, %c0_20, %c0_21] : memref<1x4x2x32xbf16, #tpu.memory_space<vmem>>, vector<1x1x1x16xbf16>
    %22 = vector.shape_cast %21 : vector<1x1x1x16xbf16> to vector<1x16xbf16>
    %c0_22 = arith.constant 0 : index
    %23 = arith.index_cast %19 : i32 to index
    %c0_23 = arith.constant 0 : index
    %c16_24 = arith.constant 16 : index
    %24 = vector.load %arg1[%c0_22, %23, %c0_23, %c16_24] : memref<1x4x2x32xbf16, #tpu.memory_space<vmem>>, vector<1x1x1x16xbf16>
    %25 = vector.shape_cast %24 : vector<1x1x1x16xbf16> to vector<1x16xbf16>
    %c0_25 = arith.constant 0 : index
    %26 = arith.index_cast %19 : i32 to index
    %c1_26 = arith.constant 1 : index
    %c0_27 = arith.constant 0 : index
    %27 = vector.load %arg1[%c0_25, %26, %c1_26, %c0_27] : memref<1x4x2x32xbf16, #tpu.memory_space<vmem>>, vector<1x1x1x16xbf16>
    %28 = vector.shape_cast %27 : vector<1x1x1x16xbf16> to vector<1x16xbf16>
    %c2_i32_28 = arith.constant 2 : i32
    %29 = arith.muli %c2_i32_28, %6 : i32
    %c2_i32_29 = arith.constant 2 : i32
    %30 = arith.addi %29, %c2_i32_29 : i32
    %c0_30 = arith.constant 0 : index
    %31 = arith.index_cast %30 : i32 to index
    %c0_31 = arith.constant 0 : index
    %c0_32 = arith.constant 0 : index
    %32 = vector.load %arg1[%c0_30, %31, %c0_31, %c0_32] : memref<1x4x2x32xbf16, #tpu.memory_space<vmem>>, vector<1x1x1x16xbf16>
    %33 = vector.shape_cast %32 : vector<1x1x1x16xbf16> to vector<1x16xbf16>
    %c0_33 = arith.constant 0 : index
    %34 = arith.index_cast %30 : i32 to index
    %c0_34 = arith.constant 0 : index
    %c16_35 = arith.constant 16 : index
    %35 = vector.load %arg1[%c0_33, %34, %c0_34, %c16_35] : memref<1x4x2x32xbf16, #tpu.memory_space<vmem>>, vector<1x1x1x16xbf16>
    %36 = vector.shape_cast %35 : vector<1x1x1x16xbf16> to vector<1x16xbf16>
    %c0_36 = arith.constant 0 : index
    %37 = arith.index_cast %30 : i32 to index
    %c1_37 = arith.constant 1 : index
    %c0_38 = arith.constant 0 : index
    %38 = vector.load %arg1[%c0_36, %37, %c1_37, %c0_38] : memref<1x4x2x32xbf16, #tpu.memory_space<vmem>>, vector<1x1x1x16xbf16>
    %39 = vector.shape_cast %38 : vector<1x1x1x16xbf16> to vector<1x16xbf16>
    %40 = tpu.concatenate %11, %14, %17, %22, %25, %28, %33, %36, %39 in 1 : vector<1x16xbf16>, vector<1x16xbf16>, vector<1x16xbf16>, vector<1x16xbf16>, vector<1x16xbf16>, vector<1x16xbf16>, vector<1x16xbf16>, vector<1x16xbf16>, vector<1x16xbf16> -> vector<1x144xbf16>
    %cst_39 = arith.constant dense<0.000000e+00> : vector<1x32xf32>
    %41 = tpu.matmul %40, %0, %cst_39 {dimension_numbers = #tpu.dot_dimension_numbers<[1], [0], [0], [1], [0, 0, 1, 1], [], []>} : vector<1x144xbf16>, vector<144x32xbf16>, vector<1x32xf32> -> vector<1x32xf32>
    %42 = vector.extract_strided_slice %41 {offsets = [0, 0], sizes = [1, 16], strides = [1, 1]} : vector<1x32xf32> to vector<1x16xf32>
    %43 = arith.addf %42, %1 : vector<1x16xf32>
    %cst_40 = arith.constant 0.000000e+00 : f32
    %44 = vector.broadcast %cst_40 : f32 to vector<1x16xf32>
    %45 = arith.maximumf %43, %44 : vector<1x16xf32>
    %46 = arith.truncf %45 : vector<1x16xf32> to vector<1x16xbf16>
    %c1_i32_41 = arith.constant 1 : i32
    %47 = arith.addi %c1_i32_41, %6 : i32
    %48 = arith.index_cast %47 : i32 to index
    %c1_42 = arith.constant 1 : index
    %c0_43 = arith.constant 0 : index
    %49 = vector.load %arg8[%48, %c1_42, %c0_43] : memref<3x3x16xbf16, #tpu.memory_space<vmem>>, vector<1x1x16xbf16>
    %50 = vector.shape_cast %49 : vector<1x1x16xbf16> to vector<1x16xbf16>
    %51 = vector.shape_cast %46 : vector<1x16xbf16> to vector<1x1x16xbf16>
    tpu.vector_store %arg8[%48, %c1_42, %c0_43], %51 {strides = array<i32>} : memref<3x3x16xbf16, #tpu.memory_space<vmem>>, vector<1x1x16xbf16>,
    %52 = vector.extract_strided_slice %41 {offsets = [0, 16], sizes = [1, 16], strides = [1, 1]} : vector<1x32xf32> to vector<1x16xf32>
    %53 = arith.addf %52, %2 : vector<1x16xf32>
    %54 = arith.index_cast %6 : i32 to index
    %c0_44 = arith.constant 0 : index
    %c0_45 = arith.constant 0 : index
    %55 = vector.load %arg9[%54, %c0_44, %c0_45] : memref<1x1x16xf32, #tpu.memory_space<vmem>>, vector<1x1x16xf32>
    %56 = vector.shape_cast %55 : vector<1x1x16xf32> to vector<1x16xf32>
    %57 = vector.shape_cast %53 : vector<1x16xf32> to vector<1x1x16xf32>
    tpu.vector_store %arg9[%54, %c0_44, %c0_45], %57 {strides = array<i32>} : memref<1x1x16xf32, #tpu.memory_space<vmem>>, vector<1x1x16xf32>,
    %c1_i32_46 = arith.constant 1 : i32
    %c0_47 = arith.constant 0 : index
    %c0_48 = arith.constant 0 : index
    %58 = vector.load %arg5[%c0_47, %c0_48] : memref<144x16xbf16, #tpu.memory_space<vmem>>, vector<144x16xbf16>
    %c0_49 = arith.constant 0 : index
    %c0_50 = arith.constant 0 : index
    %59 = vector.load %arg6[%c0_49, %c0_50] : memref<1x16xf32, #tpu.memory_space<vmem>>, vector<1x16xf32>
    %c0_i32_51 = arith.constant 0 : i32
    %c1_i32_52 = arith.constant 1 : i32
    %60 = arith.muli %c0_i32_51, %c1_i32_52 : i32
    %c0_i32_53 = arith.constant 0 : i32
    %61 = arith.addi %c0_i32_53, %60 : i32
    %c0_i32_54 = arith.constant 0 : i32
    %62 = arith.addi %61, %c0_i32_54 : i32
    %63 = arith.index_cast %62 : i32 to index
    %c0_55 = arith.constant 0 : index
    %c0_56 = arith.constant 0 : index
    %64 = vector.load %arg8[%63, %c0_55, %c0_56] : memref<3x3x16xbf16, #tpu.memory_space<vmem>>, vector<1x1x16xbf16>
    %65 = vector.shape_cast %64 : vector<1x1x16xbf16> to vector<1x16xbf16>
    %c0_i32_57 = arith.constant 0 : i32
    %66 = arith.addi %61, %c0_i32_57 : i32
    %67 = arith.index_cast %66 : i32 to index
    %c1_58 = arith.constant 1 : index
    %c0_59 = arith.constant 0 : index
    %68 = vector.load %arg8[%67, %c1_58, %c0_59] : memref<3x3x16xbf16, #tpu.memory_space<vmem>>, vector<1x1x16xbf16>
    %69 = vector.shape_cast %68 : vector<1x1x16xbf16> to vector<1x16xbf16>
    %c0_i32_60 = arith.constant 0 : i32
    %70 = arith.addi %61, %c0_i32_60 : i32
    %71 = arith.index_cast %70 : i32 to index
    %c2 = arith.constant 2 : index
    %c0_61 = arith.constant 0 : index
    %72 = vector.load %arg8[%71, %c2, %c0_61] : memref<3x3x16xbf16, #tpu.memory_space<vmem>>, vector<1x1x16xbf16>
    %73 = vector.shape_cast %72 : vector<1x1x16xbf16> to vector<1x16xbf16>
    %c1_i32_62 = arith.constant 1 : i32
    %74 = arith.addi %61, %c1_i32_62 : i32
    %75 = arith.index_cast %74 : i32 to index
    %c0_63 = arith.constant 0 : index
    %c0_64 = arith.constant 0 : index
    %76 = vector.load %arg8[%75, %c0_63, %c0_64] : memref<3x3x16xbf16, #tpu.memory_space<vmem>>, vector<1x1x16xbf16>
    %77 = vector.shape_cast %76 : vector<1x1x16xbf16> to vector<1x16xbf16>
    %c1_i32_65 = arith.constant 1 : i32
    %78 = arith.addi %61, %c1_i32_65 : i32
    %79 = arith.index_cast %78 : i32 to index
    %c1_66 = arith.constant 1 : index
    %c0_67 = arith.constant 0 : index
    %80 = vector.load %arg8[%79, %c1_66, %c0_67] : memref<3x3x16xbf16, #tpu.memory_space<vmem>>, vector<1x1x16xbf16>
    %81 = vector.shape_cast %80 : vector<1x1x16xbf16> to vector<1x16xbf16>
    %c1_i32_68 = arith.constant 1 : i32
    %82 = arith.addi %61, %c1_i32_68 : i32
    %83 = arith.index_cast %82 : i32 to index
    %c2_69 = arith.constant 2 : index
    %c0_70 = arith.constant 0 : index
    %84 = vector.load %arg8[%83, %c2_69, %c0_70] : memref<3x3x16xbf16, #tpu.memory_space<vmem>>, vector<1x1x16xbf16>
    %85 = vector.shape_cast %84 : vector<1x1x16xbf16> to vector<1x16xbf16>
    %c2_i32_71 = arith.constant 2 : i32
    %86 = arith.addi %61, %c2_i32_71 : i32
    %87 = arith.index_cast %86 : i32 to index
    %c0_72 = arith.constant 0 : index
    %c0_73 = arith.constant 0 : index
    %88 = vector.load %arg8[%87, %c0_72, %c0_73] : memref<3x3x16xbf16, #tpu.memory_space<vmem>>, vector<1x1x16xbf16>
    %89 = vector.shape_cast %88 : vector<1x1x16xbf16> to vector<1x16xbf16>
    %c2_i32_74 = arith.constant 2 : i32
    %90 = arith.addi %61, %c2_i32_74 : i32
    %91 = arith.index_cast %90 : i32 to index
    %c1_75 = arith.constant 1 : index
    %c0_76 = arith.constant 0 : index
    %92 = vector.load %arg8[%91, %c1_75, %c0_76] : memref<3x3x16xbf16, #tpu.memory_space<vmem>>, vector<1x1x16xbf16>
    %93 = vector.shape_cast %92 : vector<1x1x16xbf16> to vector<1x16xbf16>
    %c2_i32_77 = arith.constant 2 : i32
    %94 = arith.addi %61, %c2_i32_77 : i32
    %95 = arith.index_cast %94 : i32 to index
    %c2_78 = arith.constant 2 : index
    %c0_79 = arith.constant 0 : index
    %96 = vector.load %arg8[%95, %c2_78, %c0_79] : memref<3x3x16xbf16, #tpu.memory_space<vmem>>, vector<1x1x16xbf16>
    %97 = vector.shape_cast %96 : vector<1x1x16xbf16> to vector<1x16xbf16>
    %98 = tpu.concatenate %65, %69, %73, %77, %81, %85, %89, %93, %97 in 1 : vector<1x16xbf16>, vector<1x16xbf16>, vector<1x16xbf16>, vector<1x16xbf16>, vector<1x16xbf16>, vector<1x16xbf16>, vector<1x16xbf16>, vector<1x16xbf16>, vector<1x16xbf16> -> vector<1x144xbf16>
    %cst_80 = arith.constant dense<0.000000e+00> : vector<1x16xf32>
    %99 = tpu.matmul %98, %58, %cst_80 {dimension_numbers = #tpu.dot_dimension_numbers<[1], [0], [0], [1], [0, 0, 1, 1], [], []>} : vector<1x144xbf16>, vector<144x16xbf16>, vector<1x16xf32> -> vector<1x16xf32>
    %100 = arith.addf %99, %59 : vector<1x16xf32>
    %101 = arith.index_cast %61 : i32 to index
    %c0_81 = arith.constant 0 : index
    %c0_82 = arith.constant 0 : index
    %102 = vector.load %arg9[%101, %c0_81, %c0_82] : memref<1x1x16xf32, #tpu.memory_space<vmem>>, vector<1x1x16xf32>
    %103 = vector.shape_cast %102 : vector<1x1x16xf32> to vector<1x16xf32>
    %104 = arith.addf %100, %103 : vector<1x16xf32>
    %cst_83 = arith.constant 0.000000e+00 : f32
    %105 = vector.broadcast %cst_83 : f32 to vector<1x16xf32>
    %106 = arith.maximumf %104, %105 : vector<1x16xf32>
    %107 = arith.truncf %106 : vector<1x16xf32> to vector<1x16xbf16>
    %c0_84 = arith.constant 0 : index
    %108 = arith.index_cast %61 : i32 to index
    %c0_85 = arith.constant 0 : index
    %c0_86 = arith.constant 0 : index
    %109 = vector.load %arg7[%c0_84, %108, %c0_85, %c0_86] : memref<1x1x1x16xbf16, #tpu.memory_space<vmem>>, vector<1x1x1x16xbf16>
    %110 = vector.shape_cast %109 : vector<1x1x1x16xbf16> to vector<1x16xbf16>
    %111 = vector.shape_cast %107 : vector<1x16xbf16> to vector<1x1x1x16xbf16>
    tpu.vector_store %arg7[%c0_84, %108, %c0_85, %c0_86], %111 {strides = array<i32>} : memref<1x1x1x16xbf16, #tpu.memory_space<vmem>>, vector<1x1x1x16xbf16>,
    %c1_i32_87 = arith.constant 1 : i32
    return
  }
  func.func @transform_0(%arg0: i32) -> (i32, i32, i32, i32) {
    %c0_i32 = arith.constant 0 : i32
    %c0_i32_0 = arith.constant 0 : i32
    %c0_i32_1 = arith.constant 0 : i32
    %c0_i32_2 = arith.constant 0 : i32
    return %arg0, %c0_i32, %c0_i32_0, %c0_i32_1 : i32, i32, i32, i32
  }
  func.func @transform_1(%arg0: i32) -> (i32, i32) {
    %c0_i32 = arith.constant 0 : i32
    %c0_i32_0 = arith.constant 0 : i32
    %c0_i32_1 = arith.constant 0 : i32
    return %c0_i32, %c0_i32_0 : i32, i32
  }
  func.func @transform_2(%arg0: i32) -> (i32, i32) {
    %c0_i32 = arith.constant 0 : i32
    %c0_i32_0 = arith.constant 0 : i32
    %c0_i32_1 = arith.constant 0 : i32
    return %c0_i32, %c0_i32_0 : i32, i32
  }
  func.func @transform_3(%arg0: i32) -> (i32, i32) {
    %c0_i32 = arith.constant 0 : i32
    %c0_i32_0 = arith.constant 0 : i32
    %c0_i32_1 = arith.constant 0 : i32
    return %c0_i32, %c0_i32_0 : i32, i32
  }
  func.func @transform_4(%arg0: i32) -> (i32, i32) {
    %c0_i32 = arith.constant 0 : i32
    %c0_i32_0 = arith.constant 0 : i32
    %c0_i32_1 = arith.constant 0 : i32
    return %c0_i32, %c0_i32_0 : i32, i32
  }
  func.func @transform_5(%arg0: i32) -> (i32, i32) {
    %c0_i32 = arith.constant 0 : i32
    %c0_i32_0 = arith.constant 0 : i32
    %c0_i32_1 = arith.constant 0 : i32
    return %c0_i32, %c0_i32_0 : i32, i32
  }
  func.func @transform_6(%arg0: i32) -> (i32, i32, i32, i32) {
    %c0_i32 = arith.constant 0 : i32
    %c0_i32_0 = arith.constant 0 : i32
    %c0_i32_1 = arith.constant 0 : i32
    %c0_i32_2 = arith.constant 0 : i32
    return %arg0, %c0_i32, %c0_i32_0, %c0_i32_1 : i32, i32, i32, i32
  }
}

module attributes {stable_mosaic.version = 11 : i64} {
  func.func @_res2d_block_kernel(%arg0: i32, %arg1: memref<1x3x2x32xbf16, #tpu.memory_space<vmem>>, %arg2: memref<144x64xbf16, #tpu.memory_space<vmem>>, %arg3: memref<1x32xf32, #tpu.memory_space<vmem>>, %arg4: memref<1x32xf32, #tpu.memory_space<vmem>>, %arg5: memref<288x32xbf16, #tpu.memory_space<vmem>>, %arg6: memref<1x32xf32, #tpu.memory_space<vmem>>, %arg7: memref<1x1x1x32xbf16, #tpu.memory_space<vmem>>, %arg8: memref<3x3x32xbf16, #tpu.memory_space<vmem>>, %arg9: memref<1x1x32xf32, #tpu.memory_space<vmem>>) attributes {dimension_semantics = [#tpu.dimension_semantics<parallel>], iteration_bounds = array<i64: 2>, scalar_prefetch = 0 : i64, scratch_operands = 2 : i64, tpu.core_type = #tpu.core_type<tc>, window_params = [{transform_indices = @transform_0, window_bounds = array<i64: 1, 3, 2, 32>}, {pipeline_mode = #tpu.pipeline_mode<synchronous>, transform_indices = @transform_1, window_bounds = array<i64: 144, 64>}, {pipeline_mode = #tpu.pipeline_mode<synchronous>, transform_indices = @transform_2, window_bounds = array<i64: 1, 32>}, {pipeline_mode = #tpu.pipeline_mode<synchronous>, transform_indices = @transform_3, window_bounds = array<i64: 1, 32>}, {pipeline_mode = #tpu.pipeline_mode<synchronous>, transform_indices = @transform_4, window_bounds = array<i64: 288, 32>}, {pipeline_mode = #tpu.pipeline_mode<synchronous>, transform_indices = @transform_5, window_bounds = array<i64: 1, 32>}, {transform_indices = @transform_6, window_bounds = array<i64: 1, 1, 1, 32>}]} {
    %c0 = arith.constant 0 : index
    %c0_0 = arith.constant 0 : index
    %0 = vector.load %arg2[%c0, %c0_0] : memref<144x64xbf16, #tpu.memory_space<vmem>>, vector<144x64xbf16>
    %c0_1 = arith.constant 0 : index
    %c0_2 = arith.constant 0 : index
    %1 = vector.load %arg3[%c0_1, %c0_2] : memref<1x32xf32, #tpu.memory_space<vmem>>, vector<1x32xf32>
    %c0_3 = arith.constant 0 : index
    %c0_4 = arith.constant 0 : index
    %2 = vector.load %arg4[%c0_3, %c0_4] : memref<1x32xf32, #tpu.memory_space<vmem>>, vector<1x32xf32>
    %cst = arith.constant 0.000000e+00 : bf16
    %3 = vector.broadcast %cst : bf16 to vector<3x3x32xbf16>
    %c0_5 = arith.constant 0 : index
    %c0_6 = arith.constant 0 : index
    %c0_7 = arith.constant 0 : index
    %4 = vector.load %arg8[%c0_5, %c0_6, %c0_7] : memref<3x3x32xbf16, #tpu.memory_space<vmem>>, vector<3x3x32xbf16>
    tpu.vector_store %arg8[%c0_5, %c0_6, %c0_7], %3 {strides = array<i32>} : memref<3x3x32xbf16, #tpu.memory_space<vmem>>, vector<3x3x32xbf16>,
    %c0_i32 = arith.constant 0 : i32
    %c1_i32 = arith.constant 1 : i32
    %5 = arith.muli %c0_i32, %c1_i32 : i32
    %c0_i32_8 = arith.constant 0 : i32
    %6 = arith.addi %c0_i32_8, %5 : i32
    %c2_i32 = arith.constant 2 : i32
    %7 = arith.muli %c2_i32, %6 : i32
    %c0_i32_9 = arith.constant 0 : i32
    %8 = arith.addi %7, %c0_i32_9 : i32
    %c0_10 = arith.constant 0 : index
    %9 = arith.index_cast %8 : i32 to index
    %c0_11 = arith.constant 0 : index
    %c0_12 = arith.constant 0 : index
    %10 = vector.load %arg1[%c0_10, %9, %c0_11, %c0_12] : memref<1x3x2x32xbf16, #tpu.memory_space<vmem>>, vector<1x1x1x16xbf16>
    %11 = vector.shape_cast %10 : vector<1x1x1x16xbf16> to vector<1x16xbf16>
    %c0_13 = arith.constant 0 : index
    %12 = arith.index_cast %8 : i32 to index
    %c0_14 = arith.constant 0 : index
    %c16 = arith.constant 16 : index
    %13 = vector.load %arg1[%c0_13, %12, %c0_14, %c16] : memref<1x3x2x32xbf16, #tpu.memory_space<vmem>>, vector<1x1x1x16xbf16>
    %14 = vector.shape_cast %13 : vector<1x1x1x16xbf16> to vector<1x16xbf16>
    %c0_15 = arith.constant 0 : index
    %15 = arith.index_cast %8 : i32 to index
    %c1 = arith.constant 1 : index
    %c0_16 = arith.constant 0 : index
    %16 = vector.load %arg1[%c0_15, %15, %c1, %c0_16] : memref<1x3x2x32xbf16, #tpu.memory_space<vmem>>, vector<1x1x1x16xbf16>
    %17 = vector.shape_cast %16 : vector<1x1x1x16xbf16> to vector<1x16xbf16>
    %c2_i32_17 = arith.constant 2 : i32
    %18 = arith.muli %c2_i32_17, %6 : i32
    %c1_i32_18 = arith.constant 1 : i32
    %19 = arith.addi %18, %c1_i32_18 : i32
    %c0_19 = arith.constant 0 : index
    %20 = arith.index_cast %19 : i32 to index
    %c0_20 = arith.constant 0 : index
    %c0_21 = arith.constant 0 : index
    %21 = vector.load %arg1[%c0_19, %20, %c0_20, %c0_21] : memref<1x3x2x32xbf16, #tpu.memory_space<vmem>>, vector<1x1x1x16xbf16>
    %22 = vector.shape_cast %21 : vector<1x1x1x16xbf16> to vector<1x16xbf16>
    %c0_22 = arith.constant 0 : index
    %23 = arith.index_cast %19 : i32 to index
    %c0_23 = arith.constant 0 : index
    %c16_24 = arith.constant 16 : index
    %24 = vector.load %arg1[%c0_22, %23, %c0_23, %c16_24] : memref<1x3x2x32xbf16, #tpu.memory_space<vmem>>, vector<1x1x1x16xbf16>
    %25 = vector.shape_cast %24 : vector<1x1x1x16xbf16> to vector<1x16xbf16>
    %c0_25 = arith.constant 0 : index
    %26 = arith.index_cast %19 : i32 to index
    %c1_26 = arith.constant 1 : index
    %c0_27 = arith.constant 0 : index
    %27 = vector.load %arg1[%c0_25, %26, %c1_26, %c0_27] : memref<1x3x2x32xbf16, #tpu.memory_space<vmem>>, vector<1x1x1x16xbf16>
    %28 = vector.shape_cast %27 : vector<1x1x1x16xbf16> to vector<1x16xbf16>
    %c2_i32_28 = arith.constant 2 : i32
    %29 = arith.muli %c2_i32_28, %6 : i32
    %c2_i32_29 = arith.constant 2 : i32
    %30 = arith.addi %29, %c2_i32_29 : i32
    %c0_30 = arith.constant 0 : index
    %31 = arith.index_cast %30 : i32 to index
    %c0_31 = arith.constant 0 : index
    %c0_32 = arith.constant 0 : index
    %32 = vector.load %arg1[%c0_30, %31, %c0_31, %c0_32] : memref<1x3x2x32xbf16, #tpu.memory_space<vmem>>, vector<1x1x1x16xbf16>
    %33 = vector.shape_cast %32 : vector<1x1x1x16xbf16> to vector<1x16xbf16>
    %c0_33 = arith.constant 0 : index
    %34 = arith.index_cast %30 : i32 to index
    %c0_34 = arith.constant 0 : index
    %c16_35 = arith.constant 16 : index
    %35 = vector.load %arg1[%c0_33, %34, %c0_34, %c16_35] : memref<1x3x2x32xbf16, #tpu.memory_space<vmem>>, vector<1x1x1x16xbf16>
    %36 = vector.shape_cast %35 : vector<1x1x1x16xbf16> to vector<1x16xbf16>
    %c0_36 = arith.constant 0 : index
    %37 = arith.index_cast %30 : i32 to index
    %c1_37 = arith.constant 1 : index
    %c0_38 = arith.constant 0 : index
    %38 = vector.load %arg1[%c0_36, %37, %c1_37, %c0_38] : memref<1x3x2x32xbf16, #tpu.memory_space<vmem>>, vector<1x1x1x16xbf16>
    %39 = vector.shape_cast %38 : vector<1x1x1x16xbf16> to vector<1x16xbf16>
    %40 = tpu.concatenate %11, %14, %17, %22, %25, %28, %33, %36, %39 in 1 : vector<1x16xbf16>, vector<1x16xbf16>, vector<1x16xbf16>, vector<1x16xbf16>, vector<1x16xbf16>, vector<1x16xbf16>, vector<1x16xbf16>, vector<1x16xbf16>, vector<1x16xbf16> -> vector<1x144xbf16>
    %cst_39 = arith.constant dense<0.000000e+00> : vector<1x64xf32>
    %41 = tpu.matmul %40, %0, %cst_39 {dimension_numbers = #tpu.dot_dimension_numbers<[1], [0], [0], [1], [0, 0, 1, 1], [], []>} : vector<1x144xbf16>, vector<144x64xbf16>, vector<1x64xf32> -> vector<1x64xf32>
    %42 = vector.extract_strided_slice %41 {offsets = [0, 0], sizes = [1, 32], strides = [1, 1]} : vector<1x64xf32> to vector<1x32xf32>
    %43 = arith.addf %42, %1 : vector<1x32xf32>
    %cst_40 = arith.constant 0.000000e+00 : f32
    %44 = vector.broadcast %cst_40 : f32 to vector<1x32xf32>
    %45 = arith.maximumf %43, %44 : vector<1x32xf32>
    %46 = arith.truncf %45 : vector<1x32xf32> to vector<1x32xbf16>
    %c1_i32_41 = arith.constant 1 : i32
    %47 = arith.addi %c1_i32_41, %6 : i32
    %48 = arith.index_cast %47 : i32 to index
    %c1_42 = arith.constant 1 : index
    %c0_43 = arith.constant 0 : index
    %49 = vector.load %arg8[%48, %c1_42, %c0_43] : memref<3x3x32xbf16, #tpu.memory_space<vmem>>, vector<1x1x32xbf16>
    %50 = vector.shape_cast %49 : vector<1x1x32xbf16> to vector<1x32xbf16>
    %51 = vector.shape_cast %46 : vector<1x32xbf16> to vector<1x1x32xbf16>
    tpu.vector_store %arg8[%48, %c1_42, %c0_43], %51 {strides = array<i32>} : memref<3x3x32xbf16, #tpu.memory_space<vmem>>, vector<1x1x32xbf16>,
    %52 = vector.extract_strided_slice %41 {offsets = [0, 32], sizes = [1, 32], strides = [1, 1]} : vector<1x64xf32> to vector<1x32xf32>
    %53 = arith.addf %52, %2 : vector<1x32xf32>
    %54 = arith.index_cast %6 : i32 to index
    %c0_44 = arith.constant 0 : index
    %c0_45 = arith.constant 0 : index
    %55 = vector.load %arg9[%54, %c0_44, %c0_45] : memref<1x1x32xf32, #tpu.memory_space<vmem>>, vector<1x1x32xf32>
    %56 = vector.shape_cast %55 : vector<1x1x32xf32> to vector<1x32xf32>
    %57 = vector.shape_cast %53 : vector<1x32xf32> to vector<1x1x32xf32>
    tpu.vector_store %arg9[%54, %c0_44, %c0_45], %57 {strides = array<i32>} : memref<1x1x32xf32, #tpu.memory_space<vmem>>, vector<1x1x32xf32>,
    %c1_i32_46 = arith.constant 1 : i32
    %c0_47 = arith.constant 0 : index
    %c0_48 = arith.constant 0 : index
    %58 = vector.load %arg5[%c0_47, %c0_48] : memref<288x32xbf16, #tpu.memory_space<vmem>>, vector<288x32xbf16>
    %c0_49 = arith.constant 0 : index
    %c0_50 = arith.constant 0 : index
    %59 = vector.load %arg6[%c0_49, %c0_50] : memref<1x32xf32, #tpu.memory_space<vmem>>, vector<1x32xf32>
    %c0_i32_51 = arith.constant 0 : i32
    %c1_i32_52 = arith.constant 1 : i32
    %60 = arith.muli %c0_i32_51, %c1_i32_52 : i32
    %c0_i32_53 = arith.constant 0 : i32
    %61 = arith.addi %c0_i32_53, %60 : i32
    %c0_i32_54 = arith.constant 0 : i32
    %62 = arith.addi %61, %c0_i32_54 : i32
    %63 = arith.index_cast %62 : i32 to index
    %c0_55 = arith.constant 0 : index
    %c0_56 = arith.constant 0 : index
    %64 = vector.load %arg8[%63, %c0_55, %c0_56] : memref<3x3x32xbf16, #tpu.memory_space<vmem>>, vector<1x1x32xbf16>
    %65 = vector.shape_cast %64 : vector<1x1x32xbf16> to vector<1x32xbf16>
    %c0_i32_57 = arith.constant 0 : i32
    %66 = arith.addi %61, %c0_i32_57 : i32
    %67 = arith.index_cast %66 : i32 to index
    %c1_58 = arith.constant 1 : index
    %c0_59 = arith.constant 0 : index
    %68 = vector.load %arg8[%67, %c1_58, %c0_59] : memref<3x3x32xbf16, #tpu.memory_space<vmem>>, vector<1x1x32xbf16>
    %69 = vector.shape_cast %68 : vector<1x1x32xbf16> to vector<1x32xbf16>
    %c0_i32_60 = arith.constant 0 : i32
    %70 = arith.addi %61, %c0_i32_60 : i32
    %71 = arith.index_cast %70 : i32 to index
    %c2 = arith.constant 2 : index
    %c0_61 = arith.constant 0 : index
    %72 = vector.load %arg8[%71, %c2, %c0_61] : memref<3x3x32xbf16, #tpu.memory_space<vmem>>, vector<1x1x32xbf16>
    %73 = vector.shape_cast %72 : vector<1x1x32xbf16> to vector<1x32xbf16>
    %c1_i32_62 = arith.constant 1 : i32
    %74 = arith.addi %61, %c1_i32_62 : i32
    %75 = arith.index_cast %74 : i32 to index
    %c0_63 = arith.constant 0 : index
    %c0_64 = arith.constant 0 : index
    %76 = vector.load %arg8[%75, %c0_63, %c0_64] : memref<3x3x32xbf16, #tpu.memory_space<vmem>>, vector<1x1x32xbf16>
    %77 = vector.shape_cast %76 : vector<1x1x32xbf16> to vector<1x32xbf16>
    %c1_i32_65 = arith.constant 1 : i32
    %78 = arith.addi %61, %c1_i32_65 : i32
    %79 = arith.index_cast %78 : i32 to index
    %c1_66 = arith.constant 1 : index
    %c0_67 = arith.constant 0 : index
    %80 = vector.load %arg8[%79, %c1_66, %c0_67] : memref<3x3x32xbf16, #tpu.memory_space<vmem>>, vector<1x1x32xbf16>
    %81 = vector.shape_cast %80 : vector<1x1x32xbf16> to vector<1x32xbf16>
    %c1_i32_68 = arith.constant 1 : i32
    %82 = arith.addi %61, %c1_i32_68 : i32
    %83 = arith.index_cast %82 : i32 to index
    %c2_69 = arith.constant 2 : index
    %c0_70 = arith.constant 0 : index
    %84 = vector.load %arg8[%83, %c2_69, %c0_70] : memref<3x3x32xbf16, #tpu.memory_space<vmem>>, vector<1x1x32xbf16>
    %85 = vector.shape_cast %84 : vector<1x1x32xbf16> to vector<1x32xbf16>
    %c2_i32_71 = arith.constant 2 : i32
    %86 = arith.addi %61, %c2_i32_71 : i32
    %87 = arith.index_cast %86 : i32 to index
    %c0_72 = arith.constant 0 : index
    %c0_73 = arith.constant 0 : index
    %88 = vector.load %arg8[%87, %c0_72, %c0_73] : memref<3x3x32xbf16, #tpu.memory_space<vmem>>, vector<1x1x32xbf16>
    %89 = vector.shape_cast %88 : vector<1x1x32xbf16> to vector<1x32xbf16>
    %c2_i32_74 = arith.constant 2 : i32
    %90 = arith.addi %61, %c2_i32_74 : i32
    %91 = arith.index_cast %90 : i32 to index
    %c1_75 = arith.constant 1 : index
    %c0_76 = arith.constant 0 : index
    %92 = vector.load %arg8[%91, %c1_75, %c0_76] : memref<3x3x32xbf16, #tpu.memory_space<vmem>>, vector<1x1x32xbf16>
    %93 = vector.shape_cast %92 : vector<1x1x32xbf16> to vector<1x32xbf16>
    %c2_i32_77 = arith.constant 2 : i32
    %94 = arith.addi %61, %c2_i32_77 : i32
    %95 = arith.index_cast %94 : i32 to index
    %c2_78 = arith.constant 2 : index
    %c0_79 = arith.constant 0 : index
    %96 = vector.load %arg8[%95, %c2_78, %c0_79] : memref<3x3x32xbf16, #tpu.memory_space<vmem>>, vector<1x1x32xbf16>
    %97 = vector.shape_cast %96 : vector<1x1x32xbf16> to vector<1x32xbf16>
    %98 = tpu.concatenate %65, %69, %73, %77, %81, %85, %89, %93, %97 in 1 : vector<1x32xbf16>, vector<1x32xbf16>, vector<1x32xbf16>, vector<1x32xbf16>, vector<1x32xbf16>, vector<1x32xbf16>, vector<1x32xbf16>, vector<1x32xbf16>, vector<1x32xbf16> -> vector<1x288xbf16>
    %cst_80 = arith.constant dense<0.000000e+00> : vector<1x32xf32>
    %99 = tpu.matmul %98, %58, %cst_80 {dimension_numbers = #tpu.dot_dimension_numbers<[1], [0], [0], [1], [0, 0, 1, 1], [], []>} : vector<1x288xbf16>, vector<288x32xbf16>, vector<1x32xf32> -> vector<1x32xf32>
    %100 = arith.addf %99, %59 : vector<1x32xf32>
    %101 = arith.index_cast %61 : i32 to index
    %c0_81 = arith.constant 0 : index
    %c0_82 = arith.constant 0 : index
    %102 = vector.load %arg9[%101, %c0_81, %c0_82] : memref<1x1x32xf32, #tpu.memory_space<vmem>>, vector<1x1x32xf32>
    %103 = vector.shape_cast %102 : vector<1x1x32xf32> to vector<1x32xf32>
    %104 = arith.addf %100, %103 : vector<1x32xf32>
    %cst_83 = arith.constant 0.000000e+00 : f32
    %105 = vector.broadcast %cst_83 : f32 to vector<1x32xf32>
    %106 = arith.maximumf %104, %105 : vector<1x32xf32>
    %107 = arith.truncf %106 : vector<1x32xf32> to vector<1x32xbf16>
    %c0_84 = arith.constant 0 : index
    %108 = arith.index_cast %61 : i32 to index
    %c0_85 = arith.constant 0 : index
    %c0_86 = arith.constant 0 : index
    %109 = vector.load %arg7[%c0_84, %108, %c0_85, %c0_86] : memref<1x1x1x32xbf16, #tpu.memory_space<vmem>>, vector<1x1x1x32xbf16>
    %110 = vector.shape_cast %109 : vector<1x1x1x32xbf16> to vector<1x32xbf16>
    %111 = vector.shape_cast %107 : vector<1x32xbf16> to vector<1x1x1x32xbf16>
    tpu.vector_store %arg7[%c0_84, %108, %c0_85, %c0_86], %111 {strides = array<i32>} : memref<1x1x1x32xbf16, #tpu.memory_space<vmem>>, vector<1x1x1x32xbf16>,
    %c1_i32_87 = arith.constant 1 : i32
    return
  }
  func.func @transform_0(%arg0: i32) -> (i32, i32, i32, i32) {
    %c0_i32 = arith.constant 0 : i32
    %c0_i32_0 = arith.constant 0 : i32
    %c0_i32_1 = arith.constant 0 : i32
    %c0_i32_2 = arith.constant 0 : i32
    return %arg0, %c0_i32, %c0_i32_0, %c0_i32_1 : i32, i32, i32, i32
  }
  func.func @transform_1(%arg0: i32) -> (i32, i32) {
    %c0_i32 = arith.constant 0 : i32
    %c0_i32_0 = arith.constant 0 : i32
    %c0_i32_1 = arith.constant 0 : i32
    return %c0_i32, %c0_i32_0 : i32, i32
  }
  func.func @transform_2(%arg0: i32) -> (i32, i32) {
    %c0_i32 = arith.constant 0 : i32
    %c0_i32_0 = arith.constant 0 : i32
    %c0_i32_1 = arith.constant 0 : i32
    return %c0_i32, %c0_i32_0 : i32, i32
  }
  func.func @transform_3(%arg0: i32) -> (i32, i32) {
    %c0_i32 = arith.constant 0 : i32
    %c0_i32_0 = arith.constant 0 : i32
    %c0_i32_1 = arith.constant 0 : i32
    return %c0_i32, %c0_i32_0 : i32, i32
  }
  func.func @transform_4(%arg0: i32) -> (i32, i32) {
    %c0_i32 = arith.constant 0 : i32
    %c0_i32_0 = arith.constant 0 : i32
    %c0_i32_1 = arith.constant 0 : i32
    return %c0_i32, %c0_i32_0 : i32, i32
  }
  func.func @transform_5(%arg0: i32) -> (i32, i32) {
    %c0_i32 = arith.constant 0 : i32
    %c0_i32_0 = arith.constant 0 : i32
    %c0_i32_1 = arith.constant 0 : i32
    return %c0_i32, %c0_i32_0 : i32, i32
  }
  func.func @transform_6(%arg0: i32) -> (i32, i32, i32, i32) {
    %c0_i32 = arith.constant 0 : i32
    %c0_i32_0 = arith.constant 0 : i32
    %c0_i32_1 = arith.constant 0 : i32
    %c0_i32_2 = arith.constant 0 : i32
    return %arg0, %c0_i32, %c0_i32_0, %c0_i32_1 : i32, i32, i32, i32
  }
}

module attributes {stable_mosaic.version = 11 : i64} {
  func.func @_dense_head_kernel(%arg0: i32, %arg1: memref<2x32xbf16, #tpu.memory_space<vmem>>, %arg2: memref<32x32xbf16, #tpu.memory_space<vmem>>, %arg3: memref<1x32xf32, #tpu.memory_space<vmem>>, %arg4: memref<32x128xbf16, #tpu.memory_space<vmem>>, %arg5: memref<1x128xf32, #tpu.memory_space<vmem>>, %arg6: memref<2x128xf32, #tpu.memory_space<vmem>>) attributes {dimension_semantics = [#tpu.dimension_semantics<arbitrary>], iteration_bounds = array<i64: 1>, scalar_prefetch = 0 : i64, scratch_operands = 0 : i64, tpu.core_type = #tpu.core_type<tc>, window_params = [{pipeline_mode = #tpu.pipeline_mode<synchronous>, transform_indices = @transform_0, window_bounds = array<i64: 2, 32>}, {pipeline_mode = #tpu.pipeline_mode<synchronous>, transform_indices = @transform_1, window_bounds = array<i64: 32, 32>}, {pipeline_mode = #tpu.pipeline_mode<synchronous>, transform_indices = @transform_2, window_bounds = array<i64: 1, 32>}, {pipeline_mode = #tpu.pipeline_mode<synchronous>, transform_indices = @transform_3, window_bounds = array<i64: 32, 128>}, {pipeline_mode = #tpu.pipeline_mode<synchronous>, transform_indices = @transform_4, window_bounds = array<i64: 1, 128>}, {pipeline_mode = #tpu.pipeline_mode<synchronous>, transform_indices = @transform_5, window_bounds = array<i64: 2, 128>}]} {
    %c0 = arith.constant 0 : index
    %c0_0 = arith.constant 0 : index
    %0 = vector.load %arg1[%c0, %c0_0] : memref<2x32xbf16, #tpu.memory_space<vmem>>, vector<2x32xbf16>
    %c0_1 = arith.constant 0 : index
    %c0_2 = arith.constant 0 : index
    %1 = vector.load %arg2[%c0_1, %c0_2] : memref<32x32xbf16, #tpu.memory_space<vmem>>, vector<32x32xbf16>
    %cst = arith.constant dense<0.000000e+00> : vector<2x32xf32>
    %2 = tpu.matmul %0, %1, %cst {dimension_numbers = #tpu.dot_dimension_numbers<[1], [0], [0], [1], [0, 0, 1, 1], [], []>} : vector<2x32xbf16>, vector<32x32xbf16>, vector<2x32xf32> -> vector<2x32xf32>
    %c0_3 = arith.constant 0 : index
    %c0_4 = arith.constant 0 : index
    %3 = vector.load %arg3[%c0_3, %c0_4] : memref<1x32xf32, #tpu.memory_space<vmem>>, vector<1x32xf32>
    %4 = vector.broadcast %3 : vector<1x32xf32> to vector<2x32xf32>
    %5 = arith.addf %2, %4 : vector<2x32xf32>
    %cst_5 = arith.constant 0.000000e+00 : f32
    %6 = vector.broadcast %cst_5 : f32 to vector<2x32xf32>
    %7 = arith.maximumf %5, %6 : vector<2x32xf32>
    %8 = arith.truncf %7 : vector<2x32xf32> to vector<2x32xbf16>
    %c0_6 = arith.constant 0 : index
    %c0_7 = arith.constant 0 : index
    %9 = vector.load %arg4[%c0_6, %c0_7] : memref<32x128xbf16, #tpu.memory_space<vmem>>, vector<32x128xbf16>
    %cst_8 = arith.constant dense<0.000000e+00> : vector<2x128xf32>
    %10 = tpu.matmul %8, %9, %cst_8 {dimension_numbers = #tpu.dot_dimension_numbers<[1], [0], [0], [1], [0, 0, 1, 1], [], []>} : vector<2x32xbf16>, vector<32x128xbf16>, vector<2x128xf32> -> vector<2x128xf32>
    %c0_9 = arith.constant 0 : index
    %c0_10 = arith.constant 0 : index
    %11 = vector.load %arg5[%c0_9, %c0_10] : memref<1x128xf32, #tpu.memory_space<vmem>>, vector<1x128xf32>
    %12 = vector.broadcast %11 : vector<1x128xf32> to vector<2x128xf32>
    %13 = arith.addf %10, %12 : vector<2x128xf32>
    %c0_11 = arith.constant 0 : index
    %c0_12 = arith.constant 0 : index
    %14 = vector.load %arg6[%c0_11, %c0_12] : memref<2x128xf32, #tpu.memory_space<vmem>>, vector<2x128xf32>
    tpu.vector_store %arg6[%c0_11, %c0_12], %13 {strides = array<i32>} : memref<2x128xf32, #tpu.memory_space<vmem>>, vector<2x128xf32>,
    return
  }
  func.func @transform_0(%arg0: i32) -> (i32, i32) {
    %c0_i32 = arith.constant 0 : i32
    %c0_i32_0 = arith.constant 0 : i32
    %c0_i32_1 = arith.constant 0 : i32
    return %c0_i32, %c0_i32_0 : i32, i32
  }
  func.func @transform_1(%arg0: i32) -> (i32, i32) {
    %c0_i32 = arith.constant 0 : i32
    %c0_i32_0 = arith.constant 0 : i32
    %c0_i32_1 = arith.constant 0 : i32
    return %c0_i32, %c0_i32_0 : i32, i32
  }
  func.func @transform_2(%arg0: i32) -> (i32, i32) {
    %c0_i32 = arith.constant 0 : i32
    %c0_i32_0 = arith.constant 0 : i32
    %c0_i32_1 = arith.constant 0 : i32
    return %c0_i32, %c0_i32_0 : i32, i32
  }
  func.func @transform_3(%arg0: i32) -> (i32, i32) {
    %c0_i32 = arith.constant 0 : i32
    %c0_i32_0 = arith.constant 0 : i32
    %c0_i32_1 = arith.constant 0 : i32
    return %c0_i32, %c0_i32_0 : i32, i32
  }
  func.func @transform_4(%arg0: i32) -> (i32, i32) {
    %c0_i32 = arith.constant 0 : i32
    %c0_i32_0 = arith.constant 0 : i32
    %c0_i32_1 = arith.constant 0 : i32
    return %c0_i32, %c0_i32_0 : i32, i32
  }
  func.func @transform_5(%arg0: i32) -> (i32, i32) {
    %c0_i32 = arith.constant 0 : i32
    %c0_i32_0 = arith.constant 0 : i32
    %c0_i32_1 = arith.constant 0 : i32
    return %c0_i32, %c0_i32_0 : i32, i32
  }
}

</mosaic_0001>

<llo_original>
// kernel: forward.8
$region0: #{forward.8}
  #allocation0 [shape = 'u32[]', space=smem, size = 0x4, offset = 0x4, fixed_abs, tag = 'smem constant byte address 0x4 - core index']
  #allocation1 [shape = 'u32[144,128]{1,0:T(1,128)}', space=vmem, size = 0x12000, scoped, tag = 'internal scratch']
  #allocation2 [shape = 'bf16[10,10,8]{2,1,0:T(8,128)(2,1)}', space=vmem, size = 0xa000, scoped, tag = 'scratch operand']
  #allocation3 [shape = 'f32[8,8,8]{2,1,0:T(8,128)}', space=vmem, size = 0x8000, scoped, tag = 'scratch operand']
  %s0 = inlined_call_operand.vmem [shape: bf16[2,18,9,2], index: 0, kind: input, shape index: {}]
  %s1 = inlined_call_operand.vmem [shape: bf16[9,16], index: 1, kind: input, shape index: {}]
  %s2 = inlined_call_operand.vmem [shape: f32[1,8], index: 2, kind: input, shape index: {}]
  %s3 = inlined_call_operand.vmem [shape: f32[1,8], index: 3, kind: input, shape index: {}]
  %s4 = inlined_call_operand.vmem [shape: bf16[72,8], index: 4, kind: input, shape index: {}]
  %s5 = inlined_call_operand.vmem [shape: f32[1,8], index: 5, kind: input, shape index: {}]
  %s6 = inlined_call_operand.vmem [shape: bf16[2,8,8,8], index: 6, kind: output, shape index: {}]
  %s7 = sld [smem:[#allocation0]]
  $region71: #{forward.8} parent=0
    _
  %s9 = ssub.s32 1, %s7
  %s10 = scalar_select 0, %s9, %s7
  loop: start=0, step=1, limit=4
  $region2: #{forward.8} parent=0 // loop_pre_header
    _
  $region3: #{forward.8} parent=0 // loop_header
    %s12 = sphi 0, %s16
    %p13 = scmp.ge.s32.totalorder %s12, 4
    %s22 = sphi 0, %s24
    %s25 = sphi 0, %s22
    %s26 = sphi 0, %s25
    %s42 = sphi 0, %s26
    %s46 = sphi 0, %s46
    %s48 = sphi 0, %s46
    %s49 = sphi 0, %s48
    %s63 = sphi 0, %s49
    %s67 = sphi 0, %s67
    %s69 = sphi 0, %s67
    %s70 = sphi 0, %s69
    %s84 = sphi 0, %s70
    %s88 = sphi 0, %s88
    %s90 = sphi 0, %s88
    %s91 = sphi 0, %s90
    %s105 = sphi 0, %s91
    %s109 = sphi 0, %s109
    %s111 = sphi 0, %s109
    %s112 = sphi 0, %s111
    %s126 = sphi 0, %s112
    %s130 = sphi 0, %s130
    %s132 = sphi 0, %s130
    %s133 = sphi 0, %s132
    %s147 = sphi 0, %s133
    %s153 = sphi 0, %s155
    %s156 = sphi 0, %s153
    %s157 = sphi 0, %s156
    %s173 = sphi 0, %s157
  $region4: #{forward.8} parent=0 // loop_header_branch
    %15 = sbr.rel (%p13) target = $region8
  $region5: #{forward.8} parent=0 // loop_body
    %s17 = ssub.s32 %s12, 1
    %s18 = ssub.s32 %s12, 2
    %s19 = sadd.s32 %s12, 1
    %s20 = ssub.s32 %s12, %s19
    %p21 = scmp.eq.s32.totalorder %s20, 0
    %s23 = sadd.s32 %s22, 1
    %s24 = scalar_select %p21, %s22, %s23
    %p27 = pneg %p21
    %p28 = scmp.eq.s32.totalorder %s12, 1
    %p29 = por %p27, %p28
    %p30 = scmp.ne.s32.totalorder %s22, %s25
    %p31 = scmp.eq.s32.totalorder %s12, 0
    %p32 = por %p30, %p31
    %p33 = scmp.ne.s32.totalorder %s22, %s25
    %p34 = scmp.eq.s32.totalorder %s17, 1
    %p35 = por %p33, %p34
    %p36 = scmp.ne.s32.totalorder %s25, %s26
    %p37 = scmp.eq.s32.totalorder %s17, 0
    %p38 = por %p36, %p37
    %p39 = scmp.ne.s32.totalorder %s25, %s26
    %p40 = scmp.eq.s32.totalorder %s18, 1
    %p41 = por %p39, %p40
    %p43 = scmp.ne.s32.totalorder %s26, %s42
    %p44 = scmp.eq.s32.totalorder %s18, 0
    %p45 = por %p43, %p44
    %s47 = sadd.s32 %s46, 1
    %p50 = scmp.eq.s32.totalorder %s12, 1
    %p51 = scmp.ne.s32.totalorder %s46, %s48
    %p52 = scmp.eq.s32.totalorder %s12, 0
    %p53 = por %p51, %p52
    %p54 = scmp.ne.s32.totalorder %s46, %s48
    %p55 = scmp.eq.s32.totalorder %s17, 1
    %p56 = por %p54, %p55
    %p57 = scmp.ne.s32.totalorder %s48, %s49
    %p58 = scmp.eq.s32.totalorder %s17, 0
    %p59 = por %p57, %p58
    %p60 = scmp.ne.s32.totalorder %s48, %s49
    %p61 = scmp.eq.s32.totalorder %s18, 1
    %p62 = por %p60, %p61
    %p64 = scmp.ne.s32.totalorder %s49, %s63
    %p65 = scmp.eq.s32.totalorder %s18, 0
    %p66 = por %p64, %p65
    %s68 = sadd.s32 %s67, 1
    %p71 = scmp.eq.s32.totalorder %s12, 1
    %p72 = scmp.ne.s32.totalorder %s67, %s69
    %p73 = scmp.eq.s32.totalorder %s12, 0
    %p74 = por %p72, %p73
    %p75 = scmp.ne.s32.totalorder %s67, %s69
    %p76 = scmp.eq.s32.totalorder %s17, 1
    %p77 = por %p75, %p76
    %p78 = scmp.ne.s32.totalorder %s69, %s70
    %p79 = scmp.eq.s32.totalorder %s17, 0
    %p80 = por %p78, %p79
    %p81 = scmp.ne.s32.totalorder %s69, %s70
    %p82 = scmp.eq.s32.totalorder %s18, 1
    %p83 = por %p81, %p82
    %p85 = scmp.ne.s32.totalorder %s70, %s84
    %p86 = scmp.eq.s32.totalorder %s18, 0
    %p87 = por %p85, %p86
    %s89 = sadd.s32 %s88, 1
    %p92 = scmp.eq.s32.totalorder %s12, 1
    %p93 = scmp.ne.s32.totalorder %s88, %s90
    %p94 = scmp.eq.s32.totalorder %s12, 0
    %p95 = por %p93, %p94
    %p96 = scmp.ne.s32.totalorder %s88, %s90
    %p97 = scmp.eq.s32.totalorder %s17, 1
    %p98 = por %p96, %p97
    %p99 = scmp.ne.s32.totalorder %s90, %s91
    %p100 = scmp.eq.s32.totalorder %s17, 0
    %p101 = por %p99, %p100
    %p102 = scmp.ne.s32.totalorder %s90, %s91
    %p103 = scmp.eq.s32.totalorder %s18, 1
    %p104 = por %p102, %p103
    %p106 = scmp.ne.s32.totalorder %s91, %s105
    %p107 = scmp.eq.s32.totalorder %s18, 0
    %p108 = por %p106, %p107
    %s110 = sadd.s32 %s109, 1
    %p113 = scmp.eq.s32.totalorder %s12, 1
    %p114 = scmp.ne.s32.totalorder %s109, %s111
    %p115 = scmp.eq.s32.totalorder %s12, 0
    %p116 = por %p114, %p115
    %p117 = scmp.ne.s32.totalorder %s109, %s111
    %p118 = scmp.eq.s32.totalorder %s17, 1
    %p119 = por %p117, %p118
    %p120 = scmp.ne.s32.totalorder %s111, %s112
    %p121 = scmp.eq.s32.totalorder %s17, 0
    %p122 = por %p120, %p121
    %p123 = scmp.ne.s32.totalorder %s111, %s112
    %p124 = scmp.eq.s32.totalorder %s18, 1
    %p125 = por %p123, %p124
    %p127 = scmp.ne.s32.totalorder %s112, %s126
    %p128 = scmp.eq.s32.totalorder %s18, 0
    %p129 = por %p127, %p128
    %s131 = sadd.s32 %s130, 1
    %p134 = scmp.eq.s32.totalorder %s12, 1
    %p135 = scmp.ne.s32.totalorder %s130, %s132
    %p136 = scmp.eq.s32.totalorder %s12, 0
    %p137 = por %p135, %p136
    %p138 = scmp.ne.s32.totalorder %s130, %s132
    %p139 = scmp.eq.s32.totalorder %s17, 1
    %p140 = por %p138, %p139
    %p141 = scmp.ne.s32.totalorder %s132, %s133
    %p142 = scmp.eq.s32.totalorder %s17, 0
    %p143 = por %p141, %p142
    %p144 = scmp.ne.s32.totalorder %s132, %s133
    %p145 = scmp.eq.s32.totalorder %s18, 1
    %p146 = por %p144, %p145
    %p148 = scmp.ne.s32.totalorder %s133, %s147
    %p149 = scmp.eq.s32.totalorder %s18, 0
    %p150 = por %p148, %p149
    %s151 = ssub.s32 %s12, %s19
    %p152 = scmp.eq.s32.totalorder %s151, 0
    %s154 = sadd.s32 %s153, 1
    %s155 = scalar_select %p152, %s153, %s154
    %p158 = pneg %p152
    %p159 = scmp.eq.s32.totalorder %s12, 1
    %p160 = por %p158, %p159
    %p161 = scmp.ne.s32.totalorder %s153, %s156
    %p162 = scmp.eq.s32.totalorder %s12, 0
    %p163 = por %p161, %p162
    %p164 = scmp.ne.s32.totalorder %s153, %s156
    %p165 = scmp.eq.s32.totalorder %s17, 1
    %p166 = por %p164, %p165
    %p167 = scmp.ne.s32.totalorder %s156, %s157
    %p168 = scmp.eq.s32.totalorder %s17, 0
    %p169 = por %p167, %p168
    %p170 = scmp.ne.s32.totalorder %s156, %s157
    %p171 = scmp.eq.s32.totalorder %s18, 1
    %p172 = por %p170, %p171
    %p174 = scmp.ne.s32.totalorder %s157, %s173
    %p175 = scmp.eq.s32.totalorder %s18, 0
    %p176 = por %p174, %p175
    %p177 = scmp.le.s32.totalorder 1, %s12
    %p178 = scmp.lt.s32.totalorder %s12, 3
    %p179 = pnand %p177, %p178
    %p180 = pneg %p179
    // Predicated region
    $region9: #{forward.8} parent=5 // pred_check
      _
    $region10: #{forward.8} parent=5 // pred_check_branch
      %182 = sbr.rel (%p179) target = $region12
    $region11: #{forward.8} parent=5 // pred_region
      %s183 = ssub.s32 %s12, 1
      // Predicated region
      $region13: #{forward.8} parent=11 // pred_check
        %p184 = pneg %p59
      $region14: #{forward.8} parent=11 // pred_check_branch
        %186 = sbr.rel (%p184) target = $region16
      $region15: #{forward.8} parent=11 // pred_region
        _
      $region16: #{forward.8} parent=11 // pred_fallthru
        _
      // Predicated region
      $region17: #{forward.8} parent=11 // pred_check
        %p187 = pneg %p80
      $region18: #{forward.8} parent=11 // pred_check_branch
        %189 = sbr.rel (%p187) target = $region20
      $region19: #{forward.8} parent=11 // pred_region
        _
      $region20: #{forward.8} parent=11 // pred_fallthru
        _
      // Predicated region
      $region21: #{forward.8} parent=11 // pred_check
        %p190 = pneg %p101
      $region22: #{forward.8} parent=11 // pred_check_branch
        %192 = sbr.rel (%p190) target = $region24
      $region23: #{forward.8} parent=11 // pred_region
        _
      $region24: #{forward.8} parent=11 // pred_fallthru
        _
      // Predicated region
      $region25: #{forward.8} parent=11 // pred_check
        %p193 = pneg %p122
      $region26: #{forward.8} parent=11 // pred_check_branch
        %195 = sbr.rel (%p193) target = $region28
      $region27: #{forward.8} parent=11 // pred_region
        _
      $region28: #{forward.8} parent=11 // pred_fallthru
        _
      // Predicated region
      $region29: #{forward.8} parent=11 // pred_check
        %p196 = pneg %p143
      $region30: #{forward.8} parent=11 // pred_check_branch
        %198 = sbr.rel (%p196) target = $region32
      $region31: #{forward.8} parent=11 // pred_region
        _
      $region32: #{forward.8} parent=11 // pred_fallthru
        _
    $region12: #{forward.8} parent=5 // pred_fallthru
      _
    %p199 = scmp.lt.s32.totalorder %s12, 2
    // Predicated region
    $region33: #{forward.8} parent=5 // pred_check
      %p200 = pneg %p199
    $region34: #{forward.8} parent=5 // pred_check_branch
      %202 = sbr.rel (%p200) target = $region36
    $region35: #{forward.8} parent=5 // pred_region
      // Predicated region
      $region37: #{forward.8} parent=35 // pred_check
        %p203 = pneg %p32
      $region38: #{forward.8} parent=35 // pred_check_branch
        %205 = sbr.rel (%p203) target = $region40
      $region39: #{forward.8} parent=35 // pred_region
        %p206 = scmp.lt.s32.totalorder %s12, 1
        %s207 = scalar_select %p206, %s12, 1
        %s208 = smul.addr %s207, 36
        %s209 = smul.addr %s208, 4
        %s210 = scalar_lea.vmem %s0, %s209
      $region40: #{forward.8} parent=35 // pred_fallthru
        _
    $region36: #{forward.8} parent=5 // pred_fallthru
      _
    %p211 = scmp.le.s32.totalorder 1, %s12
    %p212 = scmp.lt.s32.totalorder %s12, 3
    %p213 = pnand %p211, %p212
    %p214 = pneg %p213
    // Predicated region
    $region41: #{forward.8} parent=5 // pred_check
      _
    $region42: #{forward.8} parent=5 // pred_check_branch
      %216 = sbr.rel (%p213) target = $region44
    $region43: #{forward.8} parent=5 // pred_region
      %s217 = ssub.s32 %s12, 1
      %p218 = scmp.lt.s32.totalorder %s17, 1
      %s219 = scalar_select %p218, %s17, 1
      %s220 = smul.addr %s219, 36
      %s221 = smul.addr %s220, 4
      %s222 = scalar_lea.vmem %s0, %s221
      %p223 = pneg %p38
      %p224 = pneg %p35
      %p225 = pneg %p59
      %p226 = pneg %p56
      %p227 = pneg %p80
      %p228 = pneg %p77
      %p229 = pneg %p101
      %p230 = pneg %p98
      %p231 = pneg %p122
      %p232 = pneg %p119
      %p233 = pneg %p143
      %p234 = pneg %p140
      %p235 = pneg %p169
      %p236 = pneg %p166
      %p237 = scmp.lt.s32.totalorder %s17, 1
      %s238 = scalar_select %p237, %s17, 1
      %s239 = smul.addr %s238, 8
      %s240 = smul.addr %s239, 4
      %s241 = scalar_lea.vmem %s6, %s240
      %p242 = scmp.lt.s32.totalorder %s17, 1
      %s243 = scalar_select %p242, %s17, 1
      %s244 = smul.addr %s243, 36
      %s245 = smul.addr %s244, 4
      %s246 = scalar_lea.vmem %s0, %s245
      %p247 = scmp.lt.s32.totalorder %s17, 1
      %s248 = scalar_select %p247, %s17, 1
      %s249 = smul.addr %s248, 8
      %s250 = smul.addr %s249, 4
      %s251 = scalar_lea.vmem %s6, %s250
      %v253 = vld [vmem:[%s1] sm:$0xf]
      %v254 = vld [vmem:[%s1 + $0x4] sm:$0x1]
      %v255 = vld [vmem:[%s2] sm:$0x1]
      %v256 = vld [vmem:[%s3] sm:$0x1]
      %vm257 = vcmask 60416
      %258 = vst.msk [vmem:[#allocation2] sm:$0xf] %vm257, 0
      %vm259 = vcmask 57344
      %260 = vst.msk [vmem:[#allocation2 + $0x4] sm:$0x1] %vm259, 0
      %261 = vst.msk [vmem:[#allocation2 + $0x8] sm:$0xf] %vm257, 0
      %262 = vst.msk [vmem:[#allocation2 + $0xc] sm:$0x1] %vm259, 0
      %263 = vst.msk [vmem:[#allocation2 + $0x10] sm:$0xf] %vm257, 0
      %264 = vst.msk [vmem:[#allocation2 + $0x14] sm:$0x1] %vm259, 0
      %265 = vst.msk [vmem:[#allocation2 + $0x18] sm:$0xf] %vm257, 0
      %266 = vst.msk [vmem:[#allocation2 + $0x1c] sm:$0x1] %vm259, 0
      %267 = vst.msk [vmem:[#allocation2 + $0x20] sm:$0xf] %vm257, 0
      %268 = vst.msk [vmem:[#allocation2 + $0x24] sm:$0x1] %vm259, 0
      %269 = vst.msk [vmem:[#allocation2 + $0x28] sm:$0xf] %vm257, 0
      %270 = vst.msk [vmem:[#allocation2 + $0x2c] sm:$0x1] %vm259, 0
      %271 = vst.msk [vmem:[#allocation2 + $0x30] sm:$0xf] %vm257, 0
      %272 = vst.msk [vmem:[#allocation2 + $0x34] sm:$0x1] %vm259, 0
      %273 = vst.msk [vmem:[#allocation2 + $0x38] sm:$0xf] %vm257, 0
      %274 = vst.msk [vmem:[#allocation2 + $0x3c] sm:$0x1] %vm259, 0
      %275 = vst.msk [vmem:[#allocation2 + $0x40] sm:$0xf] %vm257, 0
      %276 = vst.msk [vmem:[#allocation2 + $0x44] sm:$0x1] %vm259, 0
      %277 = vst.msk [vmem:[#allocation2 + $0x48] sm:$0xf] %vm257, 0
      %278 = vst.msk [vmem:[#allocation2 + $0x4c] sm:$0x1] %vm259, 0
      loop: start=0, step=1, limit=8
      $region45: #{forward.8} parent=43 // loop_pre_header
        _
      $region46: #{forward.8} parent=43 // loop_header
        %s280 = sphi 0, %s284
        %p281 = scmp.ge.s32.totalorder %s280, 8
      $region47: #{forward.8} parent=43 // loop_header_branch
        %283 = sbr.rel (%p281) target = $region51
      $region48: #{forward.8} parent=43 // loop_body
        %s285 = smul.u32 %s280, 2
        %s286 = smul.u32 %s285, 2
        %s287 = smul.addr %s286, 4
        %s288 = scalar_lea.vmem %s246, %s287
        %v289 = vld [vmem:[%s288] sm:$0xf]
        %v290 = vld [vmem:[%s288 + $0x4] sm:$0x1]
        %s291 = sadd.s32 %s285, 1
        %s292 = smul.u32 %s291, 2
        %s293 = smul.addr %s292, 4
        %s294 = scalar_lea.vmem %s246, %s293
        %v295 = vld [vmem:[%s294] sm:$0xf]
        %v296 = vld [vmem:[%s294 + $0x4] sm:$0x1]
        %s297 = sadd.s32 %s285, 2
        %s298 = smul.u32 %s297, 2
        %s299 = smul.addr %s298, 4
        %s300 = scalar_lea.vmem %s246, %s299
        %v301 = vld [vmem:[%s300] sm:$0xf]
        %v302 = vld [vmem:[%s300 + $0x4] sm:$0x1]
        %v305 = vunpack.c.l.b16 %v289
        %v306 = vunpack.c.l.b16 %v290
        %v307 = vpack.c.b16 %v306, %v305
        %v309 = vshrl.u32 %v307, 16
        %v311 = vshll.u32 %v307, 16
        %v313 = vrot.slane %v311, 1
        %v314 = vor.u32 %v309, %v313
        %315 = vrot.lane.b32.xlu0 %v314, 2
        %v316 = vpop.permute.xlu0 %315
        %v318 = vunpack.c.l.b16 %v295
        %v319 = vpack.c.b16 %v318, %v318
        %320 = vrot.lane.b32.xlu0 %v319, 3
        %v321 = vpop.permute.xlu0 %320
        %v323 = vunpack.c.l.b16 %v296
        %v324 = vpack.c.b16 %v323, %v318
        %v326 = vshrl.u32 %v324, 16
        %v328 = vshll.u32 %v324, 16
        %v330 = vrot.slane %v328, 1
        %v331 = vor.u32 %v326, %v330
        %332 = vrot.lane.b32.xlu0 %v331, 5
        %v333 = vpop.permute.xlu0 %332
        %v335 = vunpack.c.l.b16 %v301
        %v336 = vpack.c.b16 %v335, %v335
        %337 = vrot.lane.b32.xlu0 %v336, 6
        %v338 = vpop.permute.xlu0 %337
        %v340 = vunpack.c.l.b16 %v302
        %v341 = vpack.c.b16 %v340, %v335
        %v343 = vshrl.u32 %v341, 16
        %v345 = vshll.u32 %v341, 16
        %v347 = vrot.slane %v345, 1
        %v348 = vor.u32 %v343, %v347
        %349 = vrot.lane.b32.xlu0 %v348, 8
        %v350 = vpop.permute.xlu0 %349
        %vm352 = vcmask 15360
        %v354 = vsel %vm352, %v289, %v316
        %vm355 = vcmask 23552
        %v357 = vsel %vm355, %v354, %v321
        %vm358 = vcmask 31744
        %v359 = vsel %vm358, %v357, %v321
        %vm360 = vcmask 39936
        %v362 = vsel %vm360, %v359, %v333
        %vm363 = vcmask 48128
        %v365 = vsel %vm363, %v362, %v338
        %vm366 = vcmask 56320
        %v367 = vsel %vm366, %v365, %v338
        %vm368 = vcmask 64512
        %v370 = vsel %vm368, %v367, %v350
        %v373 = vunpack.c.l.b16 %v253
        %v374 = vunpack.c.l.b16 %v254
        %v375 = vpack.c.b16 %v374, %v373
        %vm376 = vcmask 72704
        %v377 = vsel %vm376, %v370, 0
        %vm379 = vcmask 1043456
        %vm380 = vcmask 1044480
        %v381 = vsel %vm379, 4294967295, 65535
        %v382 = vsel %vm380, %v381, 0
        %v384 = vand.u32 %v375, %v382
        %386 = vmatprep.subr.bf16.mxu0 0
        %387 = vmatpush1.bf16.msra.mxu0 0
        %388 = vmatprep.subr.bf16.mxu0 0
        %389 = vmatpush1.bf16.msra.mxu0 0
        %390 = vmatprep.subr.bf16.mxu0 0
        %391 = vmatpush1.bf16.msra.mxu0 0
        %392 = vmatprep.subr.bf16.mxu0 0
        %393 = vmatpush1.bf16.msra.mxu0 0
        %394 = vmatprep.subr.bf16.mxu0 0
        %395 = vmatpush1.bf16.msra.mxu0 0
        %396 = vmatprep.subr.bf16.mxu0 0
        %397 = vmatpush1.bf16.msra.mxu0 0
        %398 = vmatprep.subr.bf16.mxu0 0
        %399 = vmatpush1.bf16.msra.mxu0 0
        %400 = vmatprep.subr.bf16.mxu0 0
        %401 = vmatpush1.bf16.msra.mxu0 %v384
        %402 = vmatprep.subr.bf16.mxu0 0
        %403 = vmatpush2.bf16.msra.mxu0 0
        %404 = vmatprep.subr.bf16.mxu0 0
        %405 = vmatpush2.bf16.msra.mxu0 0
        %406 = vmatprep.subr.bf16.mxu0 0
        %407 = vmatpush2.bf16.msra.mxu0 0
        %408 = vmatprep.subr.bf16.mxu0 0
        %409 = vmatpush2.bf16.msra.mxu0 0
        %410 = vmatprep.subr.bf16.mxu0 0
        %411 = vmatpush2.bf16.msra.mxu0 0
        %412 = vmatprep.subr.bf16.mxu0 0
        %413 = vmatpush2.bf16.msra.mxu0 0
        %414 = vmatprep.subr.bf16.mxu0 0
        %415 = vmatpush2.bf16.msra.mxu0 0
        %416 = vmatprep.subr.bf16.mxu0 0
        %417 = vmatpush2.bf16.msra.mxu0 0
        %418 = vmatprep.mubr.bf16.mxu0 0
        %419 = vmatmul.mubr.bf16.gmra.mxu0 %v377
        %v420 = vpop.f32.mrf.mxu0
        %v421 = vadd.f32 0.0, %v420
        %v422 = vpop.f32.mrf.mxu0
        %v423 = vpop.f32.mrf.mxu0
        %v424 = vpop.f32.mrf.mxu0
        %425 = vdwg.mxu0
        %v427 = vlaneseq
        %v428 = vshrl.u32 %v427, 7
        %v429 = vsub.s32 0, %v428
        %v430 = vrot.slane %v255, %v429
        %v432 = vadd.f32 %v421, %v430
        %v433 = vmax.f32 %v432, 0.0
        %v434 = vpack.c.bf16 %v433, %v433
        %s435 = sadd.s32 %s280, 1
        %v437 = vunpack.c.l.b16 %v434
        %v438 = vpack.c.b16 %v437, %v437
        %v440 = vshrl.u32 %v438, 16
        %v442 = vrot.slane %v440, 7
        %v443 = vshll.u32 %v438, 16
        %v445 = vor.u32 %v442, %v443
        %v446 = vrot.slane %v442, 4
        %s449 = smul.u32 %s435, 2
        %s450 = smul.addr %s449, 4
        %s451 = scalar_lea.vmem [#allocation2], %s450
        %vm452 = vcmask 60416
        %vm453 = vsmask.f32 7938
        %vm454 = vmand %vm452, %vm453
        %v455 = vld [vmem:[%s451] sm:$0xf]
        %v456 = vsel %vm454, %v445, %v455
        %457 = vst [vmem:[%s451] sm:$0xf] %v456
        %vm458 = vcmask 57344
        %vm459 = vsmask.f32 256
        %vm460 = vmand %vm458, %vm459
        %v461 = vld [vmem:[%s451 + $0x4] sm:$0x1]
        %v462 = vsel %vm460, %v446, %v461
        %463 = vst [vmem:[%s451 + $0x4] sm:$0x1] %v462
        %v465 = vlaneseq
        %v466 = vshrl.u32 %v465, 7
        %v467 = vsub.s32 0, %v466
        %v468 = vrot.slane %v256, %v467
        %469 = vrot.lane.b32.xlu0 %v468, 8
        %v470 = vpop.permute.xlu0 %469
        %v472 = vadd.f32 %v421, %v470
        %474 = vrot.lane.b32.xlu0 %v472, 120
        %v475 = vpop.permute.xlu0 %474
        %s477 = smul.u32 %s280, 8
        %s478 = scalar_lea.vmem [#allocation3], %s477
        %479 = vst.msk [vmem:[%s478] sm:$0xff] %vm368, %v475
      $region49: #{forward.8} parent=43 // loop_footer
        %s284 = sadd.s32 1, %s280
      $region50: #{forward.8} parent=43 // loop_footer_branch
        %279 = sbr.rel target = $region46
      $region51: #{forward.8} parent=43 // loop_exit
        _
      %v480 = vld [vmem:[%s4] sm:$0xf]
      %v481 = vld [vmem:[%s4 + $0x4] sm:$0xf]
      %v482 = vld [vmem:[%s4 + $0x8] sm:$0xf]
      %v483 = vld [vmem:[%s4 + $0xc] sm:$0xf]
      %v484 = vld [vmem:[%s4 + $0x10] sm:$0xf]
      %v485 = vld [vmem:[%s4 + $0x14] sm:$0xf]
      %v486 = vld [vmem:[%s4 + $0x18] sm:$0xf]
      %v487 = vld [vmem:[%s4 + $0x1c] sm:$0xf]
      %v488 = vld [vmem:[%s4 + $0x20] sm:$0xf]
      %v489 = vld [vmem:[%s5] sm:$0x1]
      loop: start=0, step=1, limit=8
      $region52: #{forward.8} parent=43 // loop_pre_header
        _
      $region53: #{forward.8} parent=43 // loop_header
        %s491 = sphi 0, %s495
        %p492 = scmp.ge.s32.totalorder %s491, 8
      $region54: #{forward.8} parent=43 // loop_header_branch
        %494 = sbr.rel (%p492) target = $region58
      $region55: #{forward.8} parent=43 // loop_body
        %s496 = smul.u32 %s491, 2
        %s497 = smul.addr %s496, 4
        %s498 = scalar_lea.vmem [#allocation2], %s497
        %v499 = vld [vmem:[%s498] sm:$0xf]
        %v500 = vld [vmem:[%s498 + $0x4] sm:$0x1]
        %v501 = vld [vmem:[%s498] sm:$0xe]
        %s502 = sadd.s32 %s491, 1
        %s503 = smul.u32 %s502, 2
        %s504 = smul.addr %s503, 4
        %s505 = scalar_lea.vmem [#allocation2], %s504
        %v506 = vld [vmem:[%s505] sm:$0xf]
        %v507 = vld [vmem:[%s505 + $0x4] sm:$0x1]
        %v508 = vld [vmem:[%s505] sm:$0xe]
        %s509 = sadd.s32 %s491, 2
        %s510 = smul.u32 %s509, 2
        %s511 = smul.addr %s510, 4
        %s512 = scalar_lea.vmem [#allocation2], %s511
        %v513 = vld [vmem:[%s512] sm:$0xf]
        %v514 = vld [vmem:[%s512 + $0x4] sm:$0x1]
        %v515 = vld [vmem:[%s512] sm:$0xe]
        %v518 = vunpack.c.l.b16 %v499
        %v519 = vunpack.c.l.b16 %v500
        %v520 = vpack.c.b16 %v519, %v518
        %v522 = vshrl.u32 %v520, 16
        %v524 = vshll.u32 %v520, 16
        %v526 = vrot.slane %v524, 1
        %v527 = vor.u32 %v522, %v526
        %528 = vrot.lane.b32.xlu0 %v527, 8
        %v529 = vpop.permute.xlu0 %528
        %v531 = vunpack.c.l.b16 %v501
        %v532 = vpack.c.b16 %v519, %v531
        %v533 = vrot.slane %v532, 1
        %534 = vrot.lane.b32.xlu0 %v533, 16
        %v535 = vpop.permute.xlu0 %534
        %v537 = vunpack.c.l.b16 %v506
        %v538 = vpack.c.b16 %v537, %v537
        %539 = vrot.lane.b32.xlu0 %v538, 24
        %v540 = vpop.permute.xlu0 %539
        %v542 = vunpack.c.l.b16 %v507
        %v543 = vpack.c.b16 %v542, %v537
        %v545 = vshrl.u32 %v543, 16
        %v547 = vshll.u32 %v543, 16
        %v549 = vrot.slane %v547, 1
        %v550 = vor.u32 %v545, %v549
        %551 = vrot.lane.b32.xlu0 %v550, 32
        %v552 = vpop.permute.xlu0 %551
        %v554 = vunpack.c.l.b16 %v508
        %v555 = vpack.c.b16 %v542, %v554
        %v556 = vrot.slane %v555, 1
        %557 = vrot.lane.b32.xlu0 %v556, 40
        %v558 = vpop.permute.xlu0 %557
        %v560 = vunpack.c.l.b16 %v513
        %v561 = vpack.c.b16 %v560, %v560
        %562 = vrot.lane.b32.xlu0 %v561, 48
        %v563 = vpop.permute.xlu0 %562
        %v565 = vunpack.c.l.b16 %v514
        %v566 = vpack.c.b16 %v565, %v560
        %v568 = vshrl.u32 %v566, 16
        %v570 = vshll.u32 %v566, 16
        %v572 = vrot.slane %v570, 1
        %v573 = vor.u32 %v568, %v572
        %574 = vrot.lane.b32.xlu0 %v573, 56
        %v575 = vpop.permute.xlu0 %574
        %v577 = vunpack.c.l.b16 %v515
        %v578 = vpack.c.b16 %v565, %v577
        %v579 = vrot.slane %v578, 1
        %580 = vrot.lane.b32.xlu0 %v579, 64
        %v581 = vpop.permute.xlu0 %580
        %vm582 = vcmask 64512
        %v585 = vsel %vm582, %v499, %v529
        %vm586 = vcmask 130048
        %v588 = vsel %vm586, %v585, %v535
        %vm589 = vcmask 195584
        %v591 = vsel %vm589, %v588, %v540
        %vm592 = vcmask 261120
        %v594 = vsel %vm592, %v591, %v552
        %vm595 = vcmask 326656
        %v597 = vsel %vm595, %v594, %v558
        %vm598 = vcmask 392192
        %v600 = vsel %vm598, %v597, %v563
        %vm601 = vcmask 457728
        %v603 = vsel %vm601, %v600, %v575
        %vm604 = vcmask 523264
        %v606 = vsel %vm604, %v603, %v581
        %v608 = vlaneseq
        %v609 = vshrl.u32 %v608, 7
        %v610 = vsub.s32 0, %v609
        %v611 = vrot.slane %v489, %v610
        %v622 = vunpack.c.l.b16 %v480
        %v623 = vunpack.c.l.b16 %v481
        %v624 = vunpack.c.l.b16 %v482
        %v625 = vunpack.c.l.b16 %v483
        %v626 = vunpack.c.l.b16 %v484
        %v627 = vunpack.c.l.b16 %v485
        %v628 = vunpack.c.l.b16 %v486
        %v629 = vunpack.c.l.b16 %v487
        %v630 = vunpack.c.l.b16 %v488
        %v631 = vpack.c.b16 %v623, %v622
        %v632 = vpack.c.b16 %v625, %v624
        %v633 = vpack.c.b16 %v627, %v626
        %v634 = vpack.c.b16 %v629, %v628
        %v635 = vpack.c.b16 %v630, %v630
        %vm640 = vcmask 588800
        %v641 = vsel %vm640, %v606, 0
        %vm643 = vcmask 1043456
        %v645 = vsel %vm643, %v635, 0
        %647 = vmatprep.subr.bf16.mxu0 0
        %648 = vmatpush1.bf16.msra.mxu0 0
        %649 = vmatprep.subr.bf16.mxu0 0
        %650 = vmatpush1.bf16.msra.mxu0 0
        %651 = vmatprep.subr.bf16.mxu0 0
        %652 = vmatpush1.bf16.msra.mxu0 0
        %653 = vmatprep.subr.bf16.mxu0 0
        %654 = vmatpush1.bf16.msra.mxu0 %v645
        %655 = vmatprep.subr.bf16.mxu0 0
        %656 = vmatpush1.bf16.msra.mxu0 %v634
        %657 = vmatprep.subr.bf16.mxu0 0
        %658 = vmatpush1.bf16.msra.mxu0 %v633
        %659 = vmatprep.subr.bf16.mxu0 0
        %660 = vmatpush1.bf16.msra.mxu0 %v632
        %661 = vmatprep.subr.bf16.mxu0 0
        %662 = vmatpush1.bf16.msra.mxu0 %v631
        %663 = vmatprep.subr.bf16.mxu0 0
        %664 = vmatpush2.bf16.msra.mxu0 0
        %665 = vmatprep.subr.bf16.mxu0 0
        %666 = vmatpush2.bf16.msra.mxu0 0
        %667 = vmatprep.subr.bf16.mxu0 0
        %668 = vmatpush2.bf16.msra.mxu0 0
        %669 = vmatprep.subr.bf16.mxu0 0
        %670 = vmatpush2.bf16.msra.mxu0 0
        %671 = vmatprep.subr.bf16.mxu0 0
        %672 = vmatpush2.bf16.msra.mxu0 0
        %673 = vmatprep.subr.bf16.mxu0 0
        %674 = vmatpush2.bf16.msra.mxu0 0
        %675 = vmatprep.subr.bf16.mxu0 0
        %676 = vmatpush2.bf16.msra.mxu0 0
        %677 = vmatprep.subr.bf16.mxu0 0
        %678 = vmatpush2.bf16.msra.mxu0 0
        %679 = vmatprep.mubr.bf16.mxu0 0
        %680 = vmatmul.mubr.bf16.gmra.mxu0 %v641
        %v681 = vpop.f32.mrf.mxu0
        %v682 = vadd.f32 %v611, %v681
        %v683 = vpop.f32.mrf.mxu0
        %v684 = vpop.f32.mrf.mxu0
        %v685 = vpop.f32.mrf.mxu0
        %686 = vdwg.mxu0
        %s687 = smul.u32 %s491, 8
        %s688 = scalar_lea.vmem [#allocation3], %s687
        %v689 = vld [vmem:[%s688] sm:$0xff]
        %v690 = vadd.f32 %v682, %v689
        %v691 = vmax.f32 %v690, 0.0
        %v692 = vpack.c.bf16 %v691, %v691
        %s693 = smul.addr %s491, 4
        %s694 = scalar_lea.vmem %s251, %s693
        %695 = vst.msk [vmem:[%s694] sm:$0xf] %vm257, %v692
      $region56: #{forward.8} parent=43 // loop_footer
        %s495 = sadd.s32 1, %s491
      $region57: #{forward.8} parent=43 // loop_footer_branch
        %490 = sbr.rel target = $region53
      $region58: #{forward.8} parent=43 // loop_exit
        _
      %p696 = scmp.lt.s32.totalorder %s17, 1
      %s697 = scalar_select %p696, %s17, 1
      %s698 = smul.addr %s697, 8
      %s699 = smul.addr %s698, 4
      %s700 = scalar_lea.vmem %s6, %s699
      // Predicated region
      $region59: #{forward.8} parent=43 // pred_check
        %p701 = pneg %p166
      $region60: #{forward.8} parent=43 // pred_check_branch
        %703 = sbr.rel (%p701) target = $region62
      $region61: #{forward.8} parent=43 // pred_region
        _
      $region62: #{forward.8} parent=43 // pred_fallthru
        _
    $region44: #{forward.8} parent=5 // pred_fallthru
      _
    %p704 = scmp.le.s32.totalorder 2, %s12
    // Predicated region
    $region63: #{forward.8} parent=5 // pred_check
      %p705 = pneg %p704
    $region64: #{forward.8} parent=5 // pred_check_branch
      %707 = sbr.rel (%p705) target = $region66
    $region65: #{forward.8} parent=5 // pred_region
      %s708 = ssub.s32 %s12, 2
      // Predicated region
      $region67: #{forward.8} parent=65 // pred_check
        %p709 = pneg %p172
      $region68: #{forward.8} parent=65 // pred_check_branch
        %711 = sbr.rel (%p709) target = $region70
      $region69: #{forward.8} parent=65 // pred_region
        %p712 = scmp.lt.s32.totalorder %s18, 1
        %s713 = scalar_select %p712, %s18, 1
        %s714 = smul.addr %s713, 8
        %s715 = smul.addr %s714, 4
        %s716 = scalar_lea.vmem %s6, %s715
      $region70: #{forward.8} parent=65 // pred_fallthru
        _
    $region66: #{forward.8} parent=5 // pred_fallthru
      _
  $region6: #{forward.8} parent=0 // loop_footer
    %s16 = sadd.s32 1, %s12
  $region7: #{forward.8} parent=0 // loop_footer_branch
    %11 = sbr.rel target = $region3
  $region8: #{forward.8} parent=0 // loop_exit
    _

// kernel: forward.9
$region0: #{forward.9}
  #allocation0 [shape = 'u32[]', space=smem, size = 0x4, offset = 0x4, fixed_abs, tag = 'smem constant byte address 0x4 - core index']
  #allocation1 [shape = 'u32[144,128]{1,0:T(1,128)}', space=vmem, size = 0x12000, scoped, tag = 'internal scratch']
  #allocation2 [shape = 'bf16[6,6,8]{2,1,0:T(8,128)(2,1)}', space=vmem, size = 0x3000, scoped, tag = 'scratch operand']
  #allocation3 [shape = 'f32[4,4,8]{2,1,0:T(4,128)}', space=vmem, size = 0x2000, scoped, tag = 'scratch operand']
  %s0 = inlined_call_operand.vmem [shape: bf16[2,10,5,16], index: 0, kind: input, shape index: {}]
  %s1 = inlined_call_operand.vmem [shape: bf16[72,16], index: 1, kind: input, shape index: {}]
  %s2 = inlined_call_operand.vmem [shape: f32[1,8], index: 2, kind: input, shape index: {}]
  %s3 = inlined_call_operand.vmem [shape: f32[1,8], index: 3, kind: input, shape index: {}]
  %s4 = inlined_call_operand.vmem [shape: bf16[72,8], index: 4, kind: input, shape index: {}]
  %s5 = inlined_call_operand.vmem [shape: f32[1,8], index: 5, kind: input, shape index: {}]
  %s6 = inlined_call_operand.vmem [shape: bf16[2,4,4,8], index: 6, kind: output, shape index: {}]
  %s7 = sld [smem:[#allocation0]]
  $region71: #{forward.9} parent=0
    _
  %s9 = ssub.s32 1, %s7
  %s10 = scalar_select 0, %s9, %s7
  loop: start=0, step=1, limit=4
  $region2: #{forward.9} parent=0 // loop_pre_header
    _
  $region3: #{forward.9} parent=0 // loop_header
    %s12 = sphi 0, %s16
    %p13 = scmp.ge.s32.totalorder %s12, 4
    %s22 = sphi 0, %s24
    %s25 = sphi 0, %s22
    %s26 = sphi 0, %s25
    %s42 = sphi 0, %s26
    %s46 = sphi 0, %s46
    %s48 = sphi 0, %s46
    %s49 = sphi 0, %s48
    %s63 = sphi 0, %s49
    %s67 = sphi 0, %s67
    %s69 = sphi 0, %s67
    %s70 = sphi 0, %s69
    %s84 = sphi 0, %s70
    %s88 = sphi 0, %s88
    %s90 = sphi 0, %s88
    %s91 = sphi 0, %s90
    %s105 = sphi 0, %s91
    %s109 = sphi 0, %s109
    %s111 = sphi 0, %s109
    %s112 = sphi 0, %s111
    %s126 = sphi 0, %s112
    %s130 = sphi 0, %s130
    %s132 = sphi 0, %s130
    %s133 = sphi 0, %s132
    %s147 = sphi 0, %s133
    %s153 = sphi 0, %s155
    %s156 = sphi 0, %s153
    %s157 = sphi 0, %s156
    %s173 = sphi 0, %s157
  $region4: #{forward.9} parent=0 // loop_header_branch
    %15 = sbr.rel (%p13) target = $region8
  $region5: #{forward.9} parent=0 // loop_body
    %s17 = ssub.s32 %s12, 1
    %s18 = ssub.s32 %s12, 2
    %s19 = sadd.s32 %s12, 1
    %s20 = ssub.s32 %s12, %s19
    %p21 = scmp.eq.s32.totalorder %s20, 0
    %s23 = sadd.s32 %s22, 1
    %s24 = scalar_select %p21, %s22, %s23
    %p27 = pneg %p21
    %p28 = scmp.eq.s32.totalorder %s12, 1
    %p29 = por %p27, %p28
    %p30 = scmp.ne.s32.totalorder %s22, %s25
    %p31 = scmp.eq.s32.totalorder %s12, 0
    %p32 = por %p30, %p31
    %p33 = scmp.ne.s32.totalorder %s22, %s25
    %p34 = scmp.eq.s32.totalorder %s17, 1
    %p35 = por %p33, %p34
    %p36 = scmp.ne.s32.totalorder %s25, %s26
    %p37 = scmp.eq.s32.totalorder %s17, 0
    %p38 = por %p36, %p37
    %p39 = scmp.ne.s32.totalorder %s25, %s26
    %p40 = scmp.eq.s32.totalorder %s18, 1
    %p41 = por %p39, %p40
    %p43 = scmp.ne.s32.totalorder %s26, %s42
    %p44 = scmp.eq.s32.totalorder %s18, 0
    %p45 = por %p43, %p44
    %s47 = sadd.s32 %s46, 1
    %p50 = scmp.eq.s32.totalorder %s12, 1
    %p51 = scmp.ne.s32.totalorder %s46, %s48
    %p52 = scmp.eq.s32.totalorder %s12, 0
    %p53 = por %p51, %p52
    %p54 = scmp.ne.s32.totalorder %s46, %s48
    %p55 = scmp.eq.s32.totalorder %s17, 1
    %p56 = por %p54, %p55
    %p57 = scmp.ne.s32.totalorder %s48, %s49
    %p58 = scmp.eq.s32.totalorder %s17, 0
    %p59 = por %p57, %p58
    %p60 = scmp.ne.s32.totalorder %s48, %s49
    %p61 = scmp.eq.s32.totalorder %s18, 1
    %p62 = por %p60, %p61
    %p64 = scmp.ne.s32.totalorder %s49, %s63
    %p65 = scmp.eq.s32.totalorder %s18, 0
    %p66 = por %p64, %p65
    %s68 = sadd.s32 %s67, 1
    %p71 = scmp.eq.s32.totalorder %s12, 1
    %p72 = scmp.ne.s32.totalorder %s67, %s69
    %p73 = scmp.eq.s32.totalorder %s12, 0
    %p74 = por %p72, %p73
    %p75 = scmp.ne.s32.totalorder %s67, %s69
    %p76 = scmp.eq.s32.totalorder %s17, 1
    %p77 = por %p75, %p76
    %p78 = scmp.ne.s32.totalorder %s69, %s70
    %p79 = scmp.eq.s32.totalorder %s17, 0
    %p80 = por %p78, %p79
    %p81 = scmp.ne.s32.totalorder %s69, %s70
    %p82 = scmp.eq.s32.totalorder %s18, 1
    %p83 = por %p81, %p82
    %p85 = scmp.ne.s32.totalorder %s70, %s84
    %p86 = scmp.eq.s32.totalorder %s18, 0
    %p87 = por %p85, %p86
    %s89 = sadd.s32 %s88, 1
    %p92 = scmp.eq.s32.totalorder %s12, 1
    %p93 = scmp.ne.s32.totalorder %s88, %s90
    %p94 = scmp.eq.s32.totalorder %s12, 0
    %p95 = por %p93, %p94
    %p96 = scmp.ne.s32.totalorder %s88, %s90
    %p97 = scmp.eq.s32.totalorder %s17, 1
    %p98 = por %p96, %p97
    %p99 = scmp.ne.s32.totalorder %s90, %s91
    %p100 = scmp.eq.s32.totalorder %s17, 0
    %p101 = por %p99, %p100
    %p102 = scmp.ne.s32.totalorder %s90, %s91
    %p103 = scmp.eq.s32.totalorder %s18, 1
    %p104 = por %p102, %p103
    %p106 = scmp.ne.s32.totalorder %s91, %s105
    %p107 = scmp.eq.s32.totalorder %s18, 0
    %p108 = por %p106, %p107
    %s110 = sadd.s32 %s109, 1
    %p113 = scmp.eq.s32.totalorder %s12, 1
    %p114 = scmp.ne.s32.totalorder %s109, %s111
    %p115 = scmp.eq.s32.totalorder %s12, 0
    %p116 = por %p114, %p115
    %p117 = scmp.ne.s32.totalorder %s109, %s111
    %p118 = scmp.eq.s32.totalorder %s17, 1
    %p119 = por %p117, %p118
    %p120 = scmp.ne.s32.totalorder %s111, %s112
    %p121 = scmp.eq.s32.totalorder %s17, 0
    %p122 = por %p120, %p121
    %p123 = scmp.ne.s32.totalorder %s111, %s112
    %p124 = scmp.eq.s32.totalorder %s18, 1
    %p125 = por %p123, %p124
    %p127 = scmp.ne.s32.totalorder %s112, %s126
    %p128 = scmp.eq.s32.totalorder %s18, 0
    %p129 = por %p127, %p128
    %s131 = sadd.s32 %s130, 1
    %p134 = scmp.eq.s32.totalorder %s12, 1
    %p135 = scmp.ne.s32.totalorder %s130, %s132
    %p136 = scmp.eq.s32.totalorder %s12, 0
    %p137 = por %p135, %p136
    %p138 = scmp.ne.s32.totalorder %s130, %s132
    %p139 = scmp.eq.s32.totalorder %s17, 1
    %p140 = por %p138, %p139
    %p141 = scmp.ne.s32.totalorder %s132, %s133
    %p142 = scmp.eq.s32.totalorder %s17, 0
    %p143 = por %p141, %p142
    %p144 = scmp.ne.s32.totalorder %s132, %s133
    %p145 = scmp.eq.s32.totalorder %s18, 1
    %p146 = por %p144, %p145
    %p148 = scmp.ne.s32.totalorder %s133, %s147
    %p149 = scmp.eq.s32.totalorder %s18, 0
    %p150 = por %p148, %p149
    %s151 = ssub.s32 %s12, %s19
    %p152 = scmp.eq.s32.totalorder %s151, 0
    %s154 = sadd.s32 %s153, 1
    %s155 = scalar_select %p152, %s153, %s154
    %p158 = pneg %p152
    %p159 = scmp.eq.s32.totalorder %s12, 1
    %p160 = por %p158, %p159
    %p161 = scmp.ne.s32.totalorder %s153, %s156
    %p162 = scmp.eq.s32.totalorder %s12, 0
    %p163 = por %p161, %p162
    %p164 = scmp.ne.s32.totalorder %s153, %s156
    %p165 = scmp.eq.s32.totalorder %s17, 1
    %p166 = por %p164, %p165
    %p167 = scmp.ne.s32.totalorder %s156, %s157
    %p168 = scmp.eq.s32.totalorder %s17, 0
    %p169 = por %p167, %p168
    %p170 = scmp.ne.s32.totalorder %s156, %s157
    %p171 = scmp.eq.s32.totalorder %s18, 1
    %p172 = por %p170, %p171
    %p174 = scmp.ne.s32.totalorder %s157, %s173
    %p175 = scmp.eq.s32.totalorder %s18, 0
    %p176 = por %p174, %p175
    %p177 = scmp.le.s32.totalorder 1, %s12
    %p178 = scmp.lt.s32.totalorder %s12, 3
    %p179 = pnand %p177, %p178
    %p180 = pneg %p179
    // Predicated region
    $region9: #{forward.9} parent=5 // pred_check
      _
    $region10: #{forward.9} parent=5 // pred_check_branch
      %182 = sbr.rel (%p179) target = $region12
    $region11: #{forward.9} parent=5 // pred_region
      %s183 = ssub.s32 %s12, 1
      // Predicated region
      $region13: #{forward.9} parent=11 // pred_check
        %p184 = pneg %p59
      $region14: #{forward.9} parent=11 // pred_check_branch
        %186 = sbr.rel (%p184) target = $region16
      $region15: #{forward.9} parent=11 // pred_region
        _
      $region16: #{forward.9} parent=11 // pred_fallthru
        _
      // Predicated region
      $region17: #{forward.9} parent=11 // pred_check
        %p187 = pneg %p80
      $region18: #{forward.9} parent=11 // pred_check_branch
        %189 = sbr.rel (%p187) target = $region20
      $region19: #{forward.9} parent=11 // pred_region
        _
      $region20: #{forward.9} parent=11 // pred_fallthru
        _
      // Predicated region
      $region21: #{forward.9} parent=11 // pred_check
        %p190 = pneg %p101
      $region22: #{forward.9} parent=11 // pred_check_branch
        %192 = sbr.rel (%p190) target = $region24
      $region23: #{forward.9} parent=11 // pred_region
        _
      $region24: #{forward.9} parent=11 // pred_fallthru
        _
      // Predicated region
      $region25: #{forward.9} parent=11 // pred_check
        %p193 = pneg %p122
      $region26: #{forward.9} parent=11 // pred_check_branch
        %195 = sbr.rel (%p193) target = $region28
      $region27: #{forward.9} parent=11 // pred_region
        _
      $region28: #{forward.9} parent=11 // pred_fallthru
        _
      // Predicated region
      $region29: #{forward.9} parent=11 // pred_check
        %p196 = pneg %p143
      $region30: #{forward.9} parent=11 // pred_check_branch
        %198 = sbr.rel (%p196) target = $region32
      $region31: #{forward.9} parent=11 // pred_region
        _
      $region32: #{forward.9} parent=11 // pred_fallthru
        _
    $region12: #{forward.9} parent=5 // pred_fallthru
      _
    %p199 = scmp.lt.s32.totalorder %s12, 2
    // Predicated region
    $region33: #{forward.9} parent=5 // pred_check
      %p200 = pneg %p199
    $region34: #{forward.9} parent=5 // pred_check_branch
      %202 = sbr.rel (%p200) target = $region36
    $region35: #{forward.9} parent=5 // pred_region
      // Predicated region
      $region37: #{forward.9} parent=35 // pred_check
        %p203 = pneg %p32
      $region38: #{forward.9} parent=35 // pred_check_branch
        %205 = sbr.rel (%p203) target = $region40
      $region39: #{forward.9} parent=35 // pred_region
        %p206 = scmp.lt.s32.totalorder %s12, 1
        %s207 = scalar_select %p206, %s12, 1
        %s208 = smul.addr %s207, 10
        %s209 = smul.addr %s208, 4
        %s210 = scalar_lea.vmem %s0, %s209
      $region40: #{forward.9} parent=35 // pred_fallthru
        _
    $region36: #{forward.9} parent=5 // pred_fallthru
      _
    %p211 = scmp.le.s32.totalorder 1, %s12
    %p212 = scmp.lt.s32.totalorder %s12, 3
    %p213 = pnand %p211, %p212
    %p214 = pneg %p213
    // Predicated region
    $region41: #{forward.9} parent=5 // pred_check
      _
    $region42: #{forward.9} parent=5 // pred_check_branch
      %216 = sbr.rel (%p213) target = $region44
    $region43: #{forward.9} parent=5 // pred_region
      %s217 = ssub.s32 %s12, 1
      %p218 = scmp.lt.s32.totalorder %s17, 1
      %s219 = scalar_select %p218, %s17, 1
      %s220 = smul.addr %s219, 10
      %s221 = smul.addr %s220, 4
      %s222 = scalar_lea.vmem %s0, %s221
      %p223 = pneg %p38
      %p224 = pneg %p35
      %p225 = pneg %p59
      %p226 = pneg %p56
      %p227 = pneg %p80
      %p228 = pneg %p77
      %p229 = pneg %p101
      %p230 = pneg %p98
      %p231 = pneg %p122
      %p232 = pneg %p119
      %p233 = pneg %p143
      %p234 = pneg %p140
      %p235 = pneg %p169
      %p236 = pneg %p166
      %p237 = scmp.lt.s32.totalorder %s17, 1
      %s238 = scalar_select %p237, %s17, 1
      %s239 = smul.addr %s238, 4
      %s240 = smul.addr %s239, 2
      %s241 = scalar_lea.vmem %s6, %s240
      %p242 = scmp.lt.s32.totalorder %s17, 1
      %s243 = scalar_select %p242, %s17, 1
      %s244 = smul.addr %s243, 10
      %s245 = smul.addr %s244, 4
      %s246 = scalar_lea.vmem %s0, %s245
      %p247 = scmp.lt.s32.totalorder %s17, 1
      %s248 = scalar_select %p247, %s17, 1
      %s249 = smul.addr %s248, 4
      %s250 = smul.addr %s249, 2
      %s251 = scalar_lea.vmem %s6, %s250
      %v253 = vld [vmem:[%s1] sm:$0xf]
      %v254 = vld [vmem:[%s1 + $0x4] sm:$0xf]
      %v255 = vld [vmem:[%s1 + $0x8] sm:$0xf]
      %v256 = vld [vmem:[%s1 + $0xc] sm:$0xf]
      %v257 = vld [vmem:[%s1 + $0x10] sm:$0xf]
      %v258 = vld [vmem:[%s1 + $0x14] sm:$0xf]
      %v259 = vld [vmem:[%s1 + $0x18] sm:$0xf]
      %v260 = vld [vmem:[%s1 + $0x1c] sm:$0xf]
      %v261 = vld [vmem:[%s1 + $0x20] sm:$0xf]
      %v262 = vld [vmem:[%s2] sm:$0x1]
      %v263 = vld [vmem:[%s3] sm:$0x1]
      %vm264 = vcmask 59392
      %265 = vst.msk [vmem:[#allocation2] sm:$0x7] %vm264, 0
      %266 = vst.msk [vmem:[#allocation2 + $0x4] sm:$0x7] %vm264, 0
      %267 = vst.msk [vmem:[#allocation2 + $0x8] sm:$0x7] %vm264, 0
      %268 = vst.msk [vmem:[#allocation2 + $0xc] sm:$0x7] %vm264, 0
      %269 = vst.msk [vmem:[#allocation2 + $0x10] sm:$0x7] %vm264, 0
      %270 = vst.msk [vmem:[#allocation2 + $0x14] sm:$0x7] %vm264, 0
      loop: start=0, step=1, limit=4
      $region45: #{forward.9} parent=43 // loop_pre_header
        _
      $region46: #{forward.9} parent=43 // loop_header
        %s272 = sphi 0, %s276
        %p273 = scmp.ge.s32.totalorder %s272, 4
      $region47: #{forward.9} parent=43 // loop_header_branch
        %275 = sbr.rel (%p273) target = $region51
      $region48: #{forward.9} parent=43 // loop_body
        %s277 = smul.u32 %s272, 2
        %s278 = smul.addr %s277, 4
        %s279 = scalar_lea.vmem %s246, %s278
        %v280 = vld [vmem:[%s279] sm:$0x3]
        %v281 = vld [vmem:[%s279] sm:$0x7]
        %s282 = sadd.s32 %s277, 1
        %s283 = smul.addr %s282, 4
        %s284 = scalar_lea.vmem %s246, %s283
        %v285 = vld [vmem:[%s284] sm:$0x3]
        %v286 = vld [vmem:[%s284] sm:$0x7]
        %s287 = sadd.s32 %s277, 2
        %s288 = smul.addr %s287, 4
        %s289 = scalar_lea.vmem %s246, %s288
        %v290 = vld [vmem:[%s289] sm:$0x3]
        %v291 = vld [vmem:[%s289] sm:$0x7]
        %v293 = vunpack.c.l.b16 %v281
        %v294 = vpack.c.b16 %v293, %v293
        %v296 = vshrl.u32 %v294, 16
        %v298 = vshll.u32 %v294, 16
        %v300 = vrot.slane %v298, 1
        %v301 = vor.u32 %v296, %v300
        %302 = vrot.lane.b32.xlu0 %v301, 16
        %v303 = vpop.permute.xlu0 %302
        %v305 = vunpack.c.l.b16 %v285
        %v306 = vpack.c.b16 %v305, %v305
        %307 = vrot.lane.b32.xlu0 %v306, 24
        %v308 = vpop.permute.xlu0 %307
        %v310 = vunpack.c.l.b16 %v286
        %v311 = vpack.c.b16 %v310, %v310
        %v313 = vshrl.u32 %v311, 16
        %v315 = vshll.u32 %v311, 16
        %v317 = vrot.slane %v315, 1
        %v318 = vor.u32 %v313, %v317
        %319 = vrot.lane.b32.xlu0 %v318, 40
        %v320 = vpop.permute.xlu0 %319
        %v322 = vunpack.c.l.b16 %v290
        %v323 = vpack.c.b16 %v322, %v322
        %324 = vrot.lane.b32.xlu0 %v323, 48
        %v325 = vpop.permute.xlu0 %324
        %v327 = vunpack.c.l.b16 %v291
        %v328 = vpack.c.b16 %v327, %v327
        %v330 = vshrl.u32 %v328, 16
        %v332 = vshll.u32 %v328, 16
        %v334 = vrot.slane %v332, 1
        %v335 = vor.u32 %v330, %v334
        %336 = vrot.lane.b32.xlu0 %v335, 64
        %v337 = vpop.permute.xlu0 %336
        %vm339 = vcmask 130048
        %v341 = vsel %vm339, %v280, %v303
        %vm342 = vcmask 195584
        %v344 = vsel %vm342, %v341, %v308
        %vm345 = vcmask 261120
        %v346 = vsel %vm345, %v344, %v308
        %vm347 = vcmask 326656
        %v349 = vsel %vm347, %v346, %v320
        %vm350 = vcmask 392192
        %v352 = vsel %vm350, %v349, %v325
        %vm353 = vcmask 457728
        %v354 = vsel %vm353, %v352, %v325
        %vm355 = vcmask 523264
        %v357 = vsel %vm355, %v354, %v337
        %v367 = vunpack.c.l.b16 %v253
        %v368 = vunpack.c.l.b16 %v254
        %v369 = vunpack.c.l.b16 %v255
        %v370 = vunpack.c.l.b16 %v256
        %v371 = vunpack.c.l.b16 %v257
        %v372 = vunpack.c.l.b16 %v258
        %v373 = vunpack.c.l.b16 %v259
        %v374 = vunpack.c.l.b16 %v260
        %v375 = vunpack.c.l.b16 %v261
        %v376 = vpack.c.b16 %v368, %v367
        %v377 = vpack.c.b16 %v370, %v369
        %v378 = vpack.c.b16 %v372, %v371
        %v379 = vpack.c.b16 %v374, %v373
        %v380 = vpack.c.b16 %v375, %v375
        %vm385 = vcmask 588800
        %v386 = vsel %vm385, %v357, 0
        %vm388 = vcmask 1043456
        %v390 = vsel %vm388, %v380, 0
        %392 = vmatprep.subr.bf16.mxu0 0
        %393 = vmatpush1.bf16.msra.mxu0 0
        %394 = vmatprep.subr.bf16.mxu0 0
        %395 = vmatpush1.bf16.msra.mxu0 0
        %396 = vmatprep.subr.bf16.mxu0 0
        %397 = vmatpush1.bf16.msra.mxu0 0
        %398 = vmatprep.subr.bf16.mxu0 0
        %399 = vmatpush1.bf16.msra.mxu0 %v390
        %400 = vmatprep.subr.bf16.mxu0 0
        %401 = vmatpush1.bf16.msra.mxu0 %v379
        %402 = vmatprep.subr.bf16.mxu0 0
        %403 = vmatpush1.bf16.msra.mxu0 %v378
        %404 = vmatprep.subr.bf16.mxu0 0
        %405 = vmatpush1.bf16.msra.mxu0 %v377
        %406 = vmatprep.subr.bf16.mxu0 0
        %407 = vmatpush1.bf16.msra.mxu0 %v376
        %408 = vmatprep.subr.bf16.mxu0 0
        %409 = vmatpush2.bf16.msra.mxu0 0
        %410 = vmatprep.subr.bf16.mxu0 0
        %411 = vmatpush2.bf16.msra.mxu0 0
        %412 = vmatprep.subr.bf16.mxu0 0
        %413 = vmatpush2.bf16.msra.mxu0 0
        %414 = vmatprep.subr.bf16.mxu0 0
        %415 = vmatpush2.bf16.msra.mxu0 0
        %416 = vmatprep.subr.bf16.mxu0 0
        %417 = vmatpush2.bf16.msra.mxu0 0
        %418 = vmatprep.subr.bf16.mxu0 0
        %419 = vmatpush2.bf16.msra.mxu0 0
        %420 = vmatprep.subr.bf16.mxu0 0
        %421 = vmatpush2.bf16.msra.mxu0 0
        %422 = vmatprep.subr.bf16.mxu0 0
        %423 = vmatpush2.bf16.msra.mxu0 0
        %424 = vmatprep.mubr.bf16.mxu0 0
        %425 = vmatmul.mubr.bf16.gmra.mxu0 %v386
        %v426 = vpop.f32.mrf.mxu0
        %v427 = vadd.f32 0.0, %v426
        %v428 = vpop.f32.mrf.mxu0
        %v429 = vpop.f32.mrf.mxu0
        %v430 = vpop.f32.mrf.mxu0
        %431 = vdwg.mxu0
        %v433 = vlaneseq
        %v434 = vshrl.u32 %v433, 7
        %v435 = vsub.s32 0, %v434
        %v436 = vrot.slane %v262, %v435
        %v438 = vadd.f32 %v427, %v436
        %v439 = vmax.f32 %v438, 0.0
        %v440 = vpack.c.bf16 %v439, %v439
        %s441 = sadd.s32 %s272, 1
        %v443 = vunpack.c.l.b16 %v440
        %v444 = vpack.c.b16 %v443, %v443
        %v446 = vshrl.u32 %v444, 16
        %v448 = vrot.slane %v446, 7
        %v449 = vshll.u32 %v444, 16
        %v451 = vor.u32 %v448, %v449
        %s453 = smul.addr %s441, 4
        %s454 = scalar_lea.vmem [#allocation2], %s453
        %vm455 = vcmask 59392
        %vm456 = vsmask.f32 2306
        %vm457 = vmand %vm455, %vm456
        %v458 = vld [vmem:[%s454] sm:$0x7]
        %v459 = vsel %vm457, %v451, %v458
        %460 = vst [vmem:[%s454] sm:$0x7] %v459
        %v462 = vlaneseq
        %v463 = vshrl.u32 %v462, 7
        %v464 = vsub.s32 0, %v463
        %v465 = vrot.slane %v263, %v464
        %466 = vrot.lane.b32.xlu0 %v465, 8
        %v467 = vpop.permute.xlu0 %466
        %v469 = vadd.f32 %v427, %v467
        %471 = vrot.lane.b32.xlu0 %v469, 120
        %v472 = vpop.permute.xlu0 %471
        %s474 = smul.u32 %s272, 4
        %s475 = scalar_lea.vmem [#allocation3], %s474
        %vm476 = vcmask 60416
        %477 = vst.msk [vmem:[%s475] sm:$0xf] %vm476, %v472
      $region49: #{forward.9} parent=43 // loop_footer
        %s276 = sadd.s32 1, %s272
      $region50: #{forward.9} parent=43 // loop_footer_branch
        %271 = sbr.rel target = $region46
      $region51: #{forward.9} parent=43 // loop_exit
        _
      %v478 = vld [vmem:[%s4] sm:$0xf]
      %v479 = vld [vmem:[%s4 + $0x4] sm:$0xf]
      %v480 = vld [vmem:[%s4 + $0x8] sm:$0xf]
      %v481 = vld [vmem:[%s4 + $0xc] sm:$0xf]
      %v482 = vld [vmem:[%s4 + $0x10] sm:$0xf]
      %v483 = vld [vmem:[%s4 + $0x14] sm:$0xf]
      %v484 = vld [vmem:[%s4 + $0x18] sm:$0xf]
      %v485 = vld [vmem:[%s4 + $0x1c] sm:$0xf]
      %v486 = vld [vmem:[%s4 + $0x20] sm:$0xf]
      %v487 = vld [vmem:[%s5] sm:$0x1]
      loop: start=0, step=1, limit=4
      $region52: #{forward.9} parent=43 // loop_pre_header
        _
      $region53: #{forward.9} parent=43 // loop_header
        %s489 = sphi 0, %s493
        %p490 = scmp.ge.s32.totalorder %s489, 4
      $region54: #{forward.9} parent=43 // loop_header_branch
        %492 = sbr.rel (%p490) target = $region58
      $region55: #{forward.9} parent=43 // loop_body
        %s494 = smul.addr %s489, 4
        %s495 = scalar_lea.vmem [#allocation2], %s494
        %v496 = vld [vmem:[%s495] sm:$0x3]
        %v497 = vld [vmem:[%s495] sm:$0x7]
        %v498 = vld [vmem:[%s495] sm:$0x6]
        %s499 = sadd.s32 %s489, 1
        %s500 = smul.addr %s499, 4
        %s501 = scalar_lea.vmem [#allocation2], %s500
        %v502 = vld [vmem:[%s501] sm:$0x3]
        %v503 = vld [vmem:[%s501] sm:$0x7]
        %v504 = vld [vmem:[%s501] sm:$0x6]
        %s505 = sadd.s32 %s489, 2
        %s506 = smul.addr %s505, 4
        %s507 = scalar_lea.vmem [#allocation2], %s506
        %v508 = vld [vmem:[%s507] sm:$0x3]
        %v509 = vld [vmem:[%s507] sm:$0x7]
        %v510 = vld [vmem:[%s507] sm:$0x6]
        %v512 = vunpack.c.l.b16 %v497
        %v513 = vpack.c.b16 %v512, %v512
        %v515 = vshrl.u32 %v513, 16
        %v517 = vshll.u32 %v513, 16
        %v519 = vrot.slane %v517, 1
        %v520 = vor.u32 %v515, %v519
        %521 = vrot.lane.b32.xlu0 %v520, 8
        %v522 = vpop.permute.xlu0 %521
        %v524 = vunpack.c.l.b16 %v498
        %v525 = vpack.c.b16 %v524, %v524
        %v526 = vrot.slane %v525, 1
        %527 = vrot.lane.b32.xlu0 %v526, 16
        %v528 = vpop.permute.xlu0 %527
        %v530 = vunpack.c.l.b16 %v502
        %v531 = vpack.c.b16 %v530, %v530
        %532 = vrot.lane.b32.xlu0 %v531, 24
        %v533 = vpop.permute.xlu0 %532
        %v535 = vunpack.c.l.b16 %v503
        %v536 = vpack.c.b16 %v535, %v535
        %v538 = vshrl.u32 %v536, 16
        %v540 = vshll.u32 %v536, 16
        %v542 = vrot.slane %v540, 1
        %v543 = vor.u32 %v538, %v542
        %544 = vrot.lane.b32.xlu0 %v543, 32
        %v545 = vpop.permute.xlu0 %544
        %v547 = vunpack.c.l.b16 %v504
        %v548 = vpack.c.b16 %v547, %v547
        %v549 = vrot.slane %v548, 1
        %550 = vrot.lane.b32.xlu0 %v549, 40
        %v551 = vpop.permute.xlu0 %550
        %v553 = vunpack.c.l.b16 %v508
        %v554 = vpack.c.b16 %v553, %v553
        %555 = vrot.lane.b32.xlu0 %v554, 48
        %v556 = vpop.permute.xlu0 %555
        %v558 = vunpack.c.l.b16 %v509
        %v559 = vpack.c.b16 %v558, %v558
        %v561 = vshrl.u32 %v559, 16
        %v563 = vshll.u32 %v559, 16
        %v565 = vrot.slane %v563, 1
        %v566 = vor.u32 %v561, %v565
        %567 = vrot.lane.b32.xlu0 %v566, 56
        %v568 = vpop.permute.xlu0 %567
        %v570 = vunpack.c.l.b16 %v510
        %v571 = vpack.c.b16 %v570, %v570
        %v572 = vrot.slane %v571, 1
        %573 = vrot.lane.b32.xlu0 %v572, 64
        %v574 = vpop.permute.xlu0 %573
        %vm575 = vcmask 64512
        %v578 = vsel %vm575, %v496, %v522
        %vm579 = vcmask 130048
        %v581 = vsel %vm579, %v578, %v528
        %vm582 = vcmask 195584
        %v584 = vsel %vm582, %v581, %v533
        %vm585 = vcmask 261120
        %v587 = vsel %vm585, %v584, %v545
        %vm588 = vcmask 326656
        %v590 = vsel %vm588, %v587, %v551
        %vm591 = vcmask 392192
        %v593 = vsel %vm591, %v590, %v556
        %vm594 = vcmask 457728
        %v596 = vsel %vm594, %v593, %v568
        %vm597 = vcmask 523264
        %v599 = vsel %vm597, %v596, %v574
        %v601 = vlaneseq
        %v602 = vshrl.u32 %v601, 7
        %v603 = vsub.s32 0, %v602
        %v604 = vrot.slane %v487, %v603
        %v615 = vunpack.c.l.b16 %v478
        %v616 = vunpack.c.l.b16 %v479
        %v617 = vunpack.c.l.b16 %v480
        %v618 = vunpack.c.l.b16 %v481
        %v619 = vunpack.c.l.b16 %v482
        %v620 = vunpack.c.l.b16 %v483
        %v621 = vunpack.c.l.b16 %v484
        %v622 = vunpack.c.l.b16 %v485
        %v623 = vunpack.c.l.b16 %v486
        %v624 = vpack.c.b16 %v616, %v615
        %v625 = vpack.c.b16 %v618, %v617
        %v626 = vpack.c.b16 %v620, %v619
        %v627 = vpack.c.b16 %v622, %v621
        %v628 = vpack.c.b16 %v623, %v623
        %vm633 = vcmask 588800
        %v634 = vsel %vm633, %v599, 0
        %vm636 = vcmask 1043456
        %v638 = vsel %vm636, %v628, 0
        %640 = vmatprep.subr.bf16.mxu0 0
        %641 = vmatpush1.bf16.msra.mxu0 0
        %642 = vmatprep.subr.bf16.mxu0 0
        %643 = vmatpush1.bf16.msra.mxu0 0
        %644 = vmatprep.subr.bf16.mxu0 0
        %645 = vmatpush1.bf16.msra.mxu0 0
        %646 = vmatprep.subr.bf16.mxu0 0
        %647 = vmatpush1.bf16.msra.mxu0 %v638
        %648 = vmatprep.subr.bf16.mxu0 0
        %649 = vmatpush1.bf16.msra.mxu0 %v627
        %650 = vmatprep.subr.bf16.mxu0 0
        %651 = vmatpush1.bf16.msra.mxu0 %v626
        %652 = vmatprep.subr.bf16.mxu0 0
        %653 = vmatpush1.bf16.msra.mxu0 %v625
        %654 = vmatprep.subr.bf16.mxu0 0
        %655 = vmatpush1.bf16.msra.mxu0 %v624
        %656 = vmatprep.subr.bf16.mxu0 0
        %657 = vmatpush2.bf16.msra.mxu0 0
        %658 = vmatprep.subr.bf16.mxu0 0
        %659 = vmatpush2.bf16.msra.mxu0 0
        %660 = vmatprep.subr.bf16.mxu0 0
        %661 = vmatpush2.bf16.msra.mxu0 0
        %662 = vmatprep.subr.bf16.mxu0 0
        %663 = vmatpush2.bf16.msra.mxu0 0
        %664 = vmatprep.subr.bf16.mxu0 0
        %665 = vmatpush2.bf16.msra.mxu0 0
        %666 = vmatprep.subr.bf16.mxu0 0
        %667 = vmatpush2.bf16.msra.mxu0 0
        %668 = vmatprep.subr.bf16.mxu0 0
        %669 = vmatpush2.bf16.msra.mxu0 0
        %670 = vmatprep.subr.bf16.mxu0 0
        %671 = vmatpush2.bf16.msra.mxu0 0
        %672 = vmatprep.mubr.bf16.mxu0 0
        %673 = vmatmul.mubr.bf16.gmra.mxu0 %v634
        %v674 = vpop.f32.mrf.mxu0
        %v675 = vadd.f32 %v604, %v674
        %v676 = vpop.f32.mrf.mxu0
        %v677 = vpop.f32.mrf.mxu0
        %v678 = vpop.f32.mrf.mxu0
        %679 = vdwg.mxu0
        %s680 = smul.u32 %s489, 4
        %s681 = scalar_lea.vmem [#allocation3], %s680
        %v682 = vld [vmem:[%s681] sm:$0xf]
        %v683 = vadd.f32 %v675, %v682
        %v684 = vmax.f32 %v683, 0.0
        %v685 = vpack.c.bf16 %v684, %v684
        %s686 = smul.addr %s489, 2
        %s687 = scalar_lea.vmem %s251, %s686
        %vm688 = vcmask 58368
        %689 = vst.msk [vmem:[%s687] sm:$0x3] %vm688, %v685
      $region56: #{forward.9} parent=43 // loop_footer
        %s493 = sadd.s32 1, %s489
      $region57: #{forward.9} parent=43 // loop_footer_branch
        %488 = sbr.rel target = $region53
      $region58: #{forward.9} parent=43 // loop_exit
        _
      %p690 = scmp.lt.s32.totalorder %s17, 1
      %s691 = scalar_select %p690, %s17, 1
      %s692 = smul.addr %s691, 4
      %s693 = smul.addr %s692, 2
      %s694 = scalar_lea.vmem %s6, %s693
      // Predicated region
      $region59: #{forward.9} parent=43 // pred_check
        %p695 = pneg %p166
      $region60: #{forward.9} parent=43 // pred_check_branch
        %697 = sbr.rel (%p695) target = $region62
      $region61: #{forward.9} parent=43 // pred_region
        _
      $region62: #{forward.9} parent=43 // pred_fallthru
        _
    $region44: #{forward.9} parent=5 // pred_fallthru
      _
    %p698 = scmp.le.s32.totalorder 2, %s12
    // Predicated region
    $region63: #{forward.9} parent=5 // pred_check
      %p699 = pneg %p698
    $region64: #{forward.9} parent=5 // pred_check_branch
      %701 = sbr.rel (%p699) target = $region66
    $region65: #{forward.9} parent=5 // pred_region
      %s702 = ssub.s32 %s12, 2
      // Predicated region
      $region67: #{forward.9} parent=65 // pred_check
        %p703 = pneg %p172
      $region68: #{forward.9} parent=65 // pred_check_branch
        %705 = sbr.rel (%p703) target = $region70
      $region69: #{forward.9} parent=65 // pred_region
        %p706 = scmp.lt.s32.totalorder %s18, 1
        %s707 = scalar_select %p706, %s18, 1
        %s708 = smul.addr %s707, 4
        %s709 = smul.addr %s708, 2
        %s710 = scalar_lea.vmem %s6, %s709
      $region70: #{forward.9} parent=65 // pred_fallthru
        _
    $region66: #{forward.9} parent=5 // pred_fallthru
      _
  $region6: #{forward.9} parent=0 // loop_footer
    %s16 = sadd.s32 1, %s12
  $region7: #{forward.9} parent=0 // loop_footer_branch
    %11 = sbr.rel target = $region3
  $region8: #{forward.9} parent=0 // loop_exit
    _

// kernel: forward.10
$region0: #{forward.10}
  #allocation0 [shape = 'u32[]', space=smem, size = 0x4, offset = 0x4, fixed_abs, tag = 'smem constant byte address 0x4 - core index']
  #allocation1 [shape = 'u32[144,128]{1,0:T(1,128)}', space=vmem, size = 0x12000, scoped, tag = 'internal scratch']
  #allocation2 [shape = 'bf16[4,4,16]{2,1,0:T(4,128)(2,1)}', space=vmem, size = 0x1000, scoped, tag = 'scratch operand']
  #allocation3 [shape = 'f32[2,2,16]{2,1,0:T(2,128)}', space=vmem, size = 0x800, scoped, tag = 'scratch operand']
  %s0 = inlined_call_operand.vmem [shape: bf16[2,6,3,16], index: 0, kind: input, shape index: {}]
  %s1 = inlined_call_operand.vmem [shape: bf16[72,32], index: 1, kind: input, shape index: {}]
  %s2 = inlined_call_operand.vmem [shape: f32[1,16], index: 2, kind: input, shape index: {}]
  %s3 = inlined_call_operand.vmem [shape: f32[1,16], index: 3, kind: input, shape index: {}]
  %s4 = inlined_call_operand.vmem [shape: bf16[144,16], index: 4, kind: input, shape index: {}]
  %s5 = inlined_call_operand.vmem [shape: f32[1,16], index: 5, kind: input, shape index: {}]
  %s6 = inlined_call_operand.vmem [shape: bf16[2,2,2,16], index: 6, kind: output, shape index: {}]
  %s7 = sld [smem:[#allocation0]]
  $region71: #{forward.10} parent=0
    _
  %s9 = ssub.s32 1, %s7
  %s10 = scalar_select 0, %s9, %s7
  loop: start=0, step=1, limit=4
  $region2: #{forward.10} parent=0 // loop_pre_header
    _
  $region3: #{forward.10} parent=0 // loop_header
    %s12 = sphi 0, %s16
    %p13 = scmp.ge.s32.totalorder %s12, 4
    %s22 = sphi 0, %s24
    %s25 = sphi 0, %s22
    %s26 = sphi 0, %s25
    %s42 = sphi 0, %s26
    %s46 = sphi 0, %s46
    %s48 = sphi 0, %s46
    %s49 = sphi 0, %s48
    %s63 = sphi 0, %s49
    %s67 = sphi 0, %s67
    %s69 = sphi 0, %s67
    %s70 = sphi 0, %s69
    %s84 = sphi 0, %s70
    %s88 = sphi 0, %s88
    %s90 = sphi 0, %s88
    %s91 = sphi 0, %s90
    %s105 = sphi 0, %s91
    %s109 = sphi 0, %s109
    %s111 = sphi 0, %s109
    %s112 = sphi 0, %s111
    %s126 = sphi 0, %s112
    %s130 = sphi 0, %s130
    %s132 = sphi 0, %s130
    %s133 = sphi 0, %s132
    %s147 = sphi 0, %s133
    %s153 = sphi 0, %s155
    %s156 = sphi 0, %s153
    %s157 = sphi 0, %s156
    %s173 = sphi 0, %s157
  $region4: #{forward.10} parent=0 // loop_header_branch
    %15 = sbr.rel (%p13) target = $region8
  $region5: #{forward.10} parent=0 // loop_body
    %s17 = ssub.s32 %s12, 1
    %s18 = ssub.s32 %s12, 2
    %s19 = sadd.s32 %s12, 1
    %s20 = ssub.s32 %s12, %s19
    %p21 = scmp.eq.s32.totalorder %s20, 0
    %s23 = sadd.s32 %s22, 1
    %s24 = scalar_select %p21, %s22, %s23
    %p27 = pneg %p21
    %p28 = scmp.eq.s32.totalorder %s12, 1
    %p29 = por %p27, %p28
    %p30 = scmp.ne.s32.totalorder %s22, %s25
    %p31 = scmp.eq.s32.totalorder %s12, 0
    %p32 = por %p30, %p31
    %p33 = scmp.ne.s32.totalorder %s22, %s25
    %p34 = scmp.eq.s32.totalorder %s17, 1
    %p35 = por %p33, %p34
    %p36 = scmp.ne.s32.totalorder %s25, %s26
    %p37 = scmp.eq.s32.totalorder %s17, 0
    %p38 = por %p36, %p37
    %p39 = scmp.ne.s32.totalorder %s25, %s26
    %p40 = scmp.eq.s32.totalorder %s18, 1
    %p41 = por %p39, %p40
    %p43 = scmp.ne.s32.totalorder %s26, %s42
    %p44 = scmp.eq.s32.totalorder %s18, 0
    %p45 = por %p43, %p44
    %s47 = sadd.s32 %s46, 1
    %p50 = scmp.eq.s32.totalorder %s12, 1
    %p51 = scmp.ne.s32.totalorder %s46, %s48
    %p52 = scmp.eq.s32.totalorder %s12, 0
    %p53 = por %p51, %p52
    %p54 = scmp.ne.s32.totalorder %s46, %s48
    %p55 = scmp.eq.s32.totalorder %s17, 1
    %p56 = por %p54, %p55
    %p57 = scmp.ne.s32.totalorder %s48, %s49
    %p58 = scmp.eq.s32.totalorder %s17, 0
    %p59 = por %p57, %p58
    %p60 = scmp.ne.s32.totalorder %s48, %s49
    %p61 = scmp.eq.s32.totalorder %s18, 1
    %p62 = por %p60, %p61
    %p64 = scmp.ne.s32.totalorder %s49, %s63
    %p65 = scmp.eq.s32.totalorder %s18, 0
    %p66 = por %p64, %p65
    %s68 = sadd.s32 %s67, 1
    %p71 = scmp.eq.s32.totalorder %s12, 1
    %p72 = scmp.ne.s32.totalorder %s67, %s69
    %p73 = scmp.eq.s32.totalorder %s12, 0
    %p74 = por %p72, %p73
    %p75 = scmp.ne.s32.totalorder %s67, %s69
    %p76 = scmp.eq.s32.totalorder %s17, 1
    %p77 = por %p75, %p76
    %p78 = scmp.ne.s32.totalorder %s69, %s70
    %p79 = scmp.eq.s32.totalorder %s17, 0
    %p80 = por %p78, %p79
    %p81 = scmp.ne.s32.totalorder %s69, %s70
    %p82 = scmp.eq.s32.totalorder %s18, 1
    %p83 = por %p81, %p82
    %p85 = scmp.ne.s32.totalorder %s70, %s84
    %p86 = scmp.eq.s32.totalorder %s18, 0
    %p87 = por %p85, %p86
    %s89 = sadd.s32 %s88, 1
    %p92 = scmp.eq.s32.totalorder %s12, 1
    %p93 = scmp.ne.s32.totalorder %s88, %s90
    %p94 = scmp.eq.s32.totalorder %s12, 0
    %p95 = por %p93, %p94
    %p96 = scmp.ne.s32.totalorder %s88, %s90
    %p97 = scmp.eq.s32.totalorder %s17, 1
    %p98 = por %p96, %p97
    %p99 = scmp.ne.s32.totalorder %s90, %s91
    %p100 = scmp.eq.s32.totalorder %s17, 0
    %p101 = por %p99, %p100
    %p102 = scmp.ne.s32.totalorder %s90, %s91
    %p103 = scmp.eq.s32.totalorder %s18, 1
    %p104 = por %p102, %p103
    %p106 = scmp.ne.s32.totalorder %s91, %s105
    %p107 = scmp.eq.s32.totalorder %s18, 0
    %p108 = por %p106, %p107
    %s110 = sadd.s32 %s109, 1
    %p113 = scmp.eq.s32.totalorder %s12, 1
    %p114 = scmp.ne.s32.totalorder %s109, %s111
    %p115 = scmp.eq.s32.totalorder %s12, 0
    %p116 = por %p114, %p115
    %p117 = scmp.ne.s32.totalorder %s109, %s111
    %p118 = scmp.eq.s32.totalorder %s17, 1
    %p119 = por %p117, %p118
    %p120 = scmp.ne.s32.totalorder %s111, %s112
    %p121 = scmp.eq.s32.totalorder %s17, 0
    %p122 = por %p120, %p121
    %p123 = scmp.ne.s32.totalorder %s111, %s112
    %p124 = scmp.eq.s32.totalorder %s18, 1
    %p125 = por %p123, %p124
    %p127 = scmp.ne.s32.totalorder %s112, %s126
    %p128 = scmp.eq.s32.totalorder %s18, 0
    %p129 = por %p127, %p128
    %s131 = sadd.s32 %s130, 1
    %p134 = scmp.eq.s32.totalorder %s12, 1
    %p135 = scmp.ne.s32.totalorder %s130, %s132
    %p136 = scmp.eq.s32.totalorder %s12, 0
    %p137 = por %p135, %p136
    %p138 = scmp.ne.s32.totalorder %s130, %s132
    %p139 = scmp.eq.s32.totalorder %s17, 1
    %p140 = por %p138, %p139
    %p141 = scmp.ne.s32.totalorder %s132, %s133
    %p142 = scmp.eq.s32.totalorder %s17, 0
    %p143 = por %p141, %p142
    %p144 = scmp.ne.s32.totalorder %s132, %s133
    %p145 = scmp.eq.s32.totalorder %s18, 1
    %p146 = por %p144, %p145
    %p148 = scmp.ne.s32.totalorder %s133, %s147
    %p149 = scmp.eq.s32.totalorder %s18, 0
    %p150 = por %p148, %p149
    %s151 = ssub.s32 %s12, %s19
    %p152 = scmp.eq.s32.totalorder %s151, 0
    %s154 = sadd.s32 %s153, 1
    %s155 = scalar_select %p152, %s153, %s154
    %p158 = pneg %p152
    %p159 = scmp.eq.s32.totalorder %s12, 1
    %p160 = por %p158, %p159
    %p161 = scmp.ne.s32.totalorder %s153, %s156
    %p162 = scmp.eq.s32.totalorder %s12, 0
    %p163 = por %p161, %p162
    %p164 = scmp.ne.s32.totalorder %s153, %s156
    %p165 = scmp.eq.s32.totalorder %s17, 1
    %p166 = por %p164, %p165
    %p167 = scmp.ne.s32.totalorder %s156, %s157
    %p168 = scmp.eq.s32.totalorder %s17, 0
    %p169 = por %p167, %p168
    %p170 = scmp.ne.s32.totalorder %s156, %s157
    %p171 = scmp.eq.s32.totalorder %s18, 1
    %p172 = por %p170, %p171
    %p174 = scmp.ne.s32.totalorder %s157, %s173
    %p175 = scmp.eq.s32.totalorder %s18, 0
    %p176 = por %p174, %p175
    %p177 = scmp.le.s32.totalorder 1, %s12
    %p178 = scmp.lt.s32.totalorder %s12, 3
    %p179 = pnand %p177, %p178
    %p180 = pneg %p179
    // Predicated region
    $region9: #{forward.10} parent=5 // pred_check
      _
    $region10: #{forward.10} parent=5 // pred_check_branch
      %182 = sbr.rel (%p179) target = $region12
    $region11: #{forward.10} parent=5 // pred_region
      %s183 = ssub.s32 %s12, 1
      // Predicated region
      $region13: #{forward.10} parent=11 // pred_check
        %p184 = pneg %p59
      $region14: #{forward.10} parent=11 // pred_check_branch
        %186 = sbr.rel (%p184) target = $region16
      $region15: #{forward.10} parent=11 // pred_region
        _
      $region16: #{forward.10} parent=11 // pred_fallthru
        _
      // Predicated region
      $region17: #{forward.10} parent=11 // pred_check
        %p187 = pneg %p80
      $region18: #{forward.10} parent=11 // pred_check_branch
        %189 = sbr.rel (%p187) target = $region20
      $region19: #{forward.10} parent=11 // pred_region
        _
      $region20: #{forward.10} parent=11 // pred_fallthru
        _
      // Predicated region
      $region21: #{forward.10} parent=11 // pred_check
        %p190 = pneg %p101
      $region22: #{forward.10} parent=11 // pred_check_branch
        %192 = sbr.rel (%p190) target = $region24
      $region23: #{forward.10} parent=11 // pred_region
        _
      $region24: #{forward.10} parent=11 // pred_fallthru
        _
      // Predicated region
      $region25: #{forward.10} parent=11 // pred_check
        %p193 = pneg %p122
      $region26: #{forward.10} parent=11 // pred_check_branch
        %195 = sbr.rel (%p193) target = $region28
      $region27: #{forward.10} parent=11 // pred_region
        _
      $region28: #{forward.10} parent=11 // pred_fallthru
        _
      // Predicated region
      $region29: #{forward.10} parent=11 // pred_check
        %p196 = pneg %p143
      $region30: #{forward.10} parent=11 // pred_check_branch
        %198 = sbr.rel (%p196) target = $region32
      $region31: #{forward.10} parent=11 // pred_region
        _
      $region32: #{forward.10} parent=11 // pred_fallthru
        _
    $region12: #{forward.10} parent=5 // pred_fallthru
      _
    %p199 = scmp.lt.s32.totalorder %s12, 2
    // Predicated region
    $region33: #{forward.10} parent=5 // pred_check
      %p200 = pneg %p199
    $region34: #{forward.10} parent=5 // pred_check_branch
      %202 = sbr.rel (%p200) target = $region36
    $region35: #{forward.10} parent=5 // pred_region
      // Predicated region
      $region37: #{forward.10} parent=35 // pred_check
        %p203 = pneg %p32
      $region38: #{forward.10} parent=35 // pred_check_branch
        %205 = sbr.rel (%p203) target = $region40
      $region39: #{forward.10} parent=35 // pred_region
        %p206 = scmp.lt.s32.totalorder %s12, 1
        %s207 = scalar_select %p206, %s12, 1
        %s208 = smul.addr %s207, 6
        %s209 = smul.addr %s208, 2
        %s210 = scalar_lea.vmem %s0, %s209
      $region40: #{forward.10} parent=35 // pred_fallthru
        _
    $region36: #{forward.10} parent=5 // pred_fallthru
      _
    %p211 = scmp.le.s32.totalorder 1, %s12
    %p212 = scmp.lt.s32.totalorder %s12, 3
    %p213 = pnand %p211, %p212
    %p214 = pneg %p213
    // Predicated region
    $region41: #{forward.10} parent=5 // pred_check
      _
    $region42: #{forward.10} parent=5 // pred_check_branch
      %216 = sbr.rel (%p213) target = $region44
    $region43: #{forward.10} parent=5 // pred_region
      %s217 = ssub.s32 %s12, 1
      %p218 = scmp.lt.s32.totalorder %s17, 1
      %s219 = scalar_select %p218, %s17, 1
      %s220 = smul.addr %s219, 6
      %s221 = smul.addr %s220, 2
      %s222 = scalar_lea.vmem %s0, %s221
      %p223 = pneg %p38
      %p224 = pneg %p35
      %p225 = pneg %p59
      %p226 = pneg %p56
      %p227 = pneg %p80
      %p228 = pneg %p77
      %p229 = pneg %p101
      %p230 = pneg %p98
      %p231 = pneg %p122
      %p232 = pneg %p119
      %p233 = pneg %p143
      %p234 = pneg %p140
      %p235 = pneg %p169
      %p236 = pneg %p166
      %p237 = scmp.lt.s32.totalorder %s17, 1
      %s238 = scalar_select %p237, %s17, 1
      %s239 = smul.addr %s238, 2
      %s240 = scalar_lea.vmem %s6, %s239
      %p241 = scmp.lt.s32.totalorder %s17, 1
      %s242 = scalar_select %p241, %s17, 1
      %s243 = smul.addr %s242, 6
      %s244 = smul.addr %s243, 2
      %s245 = scalar_lea.vmem %s0, %s244
      %p246 = scmp.lt.s32.totalorder %s17, 1
      %s247 = scalar_select %p246, %s17, 1
      %s248 = smul.addr %s247, 2
      %s249 = scalar_lea.vmem %s6, %s248
      %v251 = vld [vmem:[%s1] sm:$0xf]
      %v252 = vld [vmem:[%s1 + $0x4] sm:$0xf]
      %v253 = vld [vmem:[%s1 + $0x8] sm:$0xf]
      %v254 = vld [vmem:[%s1 + $0xc] sm:$0xf]
      %v255 = vld [vmem:[%s1 + $0x10] sm:$0xf]
      %v256 = vld [vmem:[%s1 + $0x14] sm:$0xf]
      %v257 = vld [vmem:[%s1 + $0x18] sm:$0xf]
      %v258 = vld [vmem:[%s1 + $0x1c] sm:$0xf]
      %v259 = vld [vmem:[%s1 + $0x20] sm:$0xf]
      %v260 = vld [vmem:[%s2] sm:$0x1]
      %v261 = vld [vmem:[%s3] sm:$0x1]
      %vm262 = vcmask 123904
      %263 = vst.msk [vmem:[#allocation2] sm:$0x3] %vm262, 0
      %264 = vst.msk [vmem:[#allocation2 + $0x2] sm:$0x3] %vm262, 0
      %265 = vst.msk [vmem:[#allocation2 + $0x4] sm:$0x3] %vm262, 0
      %266 = vst.msk [vmem:[#allocation2 + $0x6] sm:$0x3] %vm262, 0
      loop: start=0, step=1, limit=2
      $region45: #{forward.10} parent=43 // loop_pre_header
        _
      $region46: #{forward.10} parent=43 // loop_header
        %s268 = sphi 0, %s272
        %p269 = scmp.ge.s32.totalorder %s268, 2
      $region47: #{forward.10} parent=43 // loop_header_branch
        %271 = sbr.rel (%p269) target = $region51
      $region48: #{forward.10} parent=43 // loop_body
        %s273 = smul.u32 %s268, 2
        %s274 = smul.addr %s273, 2
        %s275 = scalar_lea.vmem %s245, %s274
        %v276 = vld [vmem:[%s275] sm:$0x1]
        %v277 = vld [vmem:[%s275] sm:$0x3]
        %s278 = sadd.s32 %s273, 1
        %s279 = smul.addr %s278, 2
        %s280 = scalar_lea.vmem %s245, %s279
        %v281 = vld [vmem:[%s280] sm:$0x1]
        %v282 = vld [vmem:[%s280] sm:$0x3]
        %s283 = sadd.s32 %s273, 2
        %s284 = smul.addr %s283, 2
        %s285 = scalar_lea.vmem %s245, %s284
        %v286 = vld [vmem:[%s285] sm:$0x1]
        %v287 = vld [vmem:[%s285] sm:$0x3]
        %v290 = vunpack.c.l.s4 1983009808
        %v291 = vunpack.c.0.s8 %v290
        %v292 = vlaneseq
        %v293 = vshrl.u32 %v292, 7
        %v294 = vsub.s32 %v291, %v293
        %v295 = vrot.slane %v277, %v294
        %v297 = vshrl.u32 %v295, 16
        %v299 = vshll.u32 %v295, 16
        %v301 = vrot.slane %v299, 1
        %v302 = vor.u32 %v297, %v301
        %303 = vrot.lane.b32.xlu0 %v302, 16
        %v304 = vpop.permute.xlu0 %303
        %v307 = vunpack.c.l.s4 1983009808
        %v308 = vunpack.c.0.s8 %v307
        %v309 = vlaneseq
        %v310 = vshrl.u32 %v309, 7
        %v311 = vsub.s32 %v308, %v310
        %v312 = vrot.slane %v281, %v311
        %313 = vrot.lane.b32.xlu0 %v312, 24
        %v314 = vpop.permute.xlu0 %313
        %v317 = vunpack.c.l.s4 1983009808
        %v318 = vunpack.c.0.s8 %v317
        %v319 = vlaneseq
        %v320 = vshrl.u32 %v319, 7
        %v321 = vsub.s32 %v318, %v320
        %v322 = vrot.slane %v282, %v321
        %v324 = vshrl.u32 %v322, 16
        %v326 = vshll.u32 %v322, 16
        %v328 = vrot.slane %v326, 1
        %v329 = vor.u32 %v324, %v328
        %330 = vrot.lane.b32.xlu0 %v329, 40
        %v331 = vpop.permute.xlu0 %330
        %v334 = vunpack.c.l.s4 1983009808
        %v335 = vunpack.c.0.s8 %v334
        %v336 = vlaneseq
        %v337 = vshrl.u32 %v336, 7
        %v338 = vsub.s32 %v335, %v337
        %v339 = vrot.slane %v286, %v338
        %340 = vrot.lane.b32.xlu0 %v339, 48
        %v341 = vpop.permute.xlu0 %340
        %v344 = vunpack.c.l.s4 1983009808
        %v345 = vunpack.c.0.s8 %v344
        %v346 = vlaneseq
        %v347 = vshrl.u32 %v346, 7
        %v348 = vsub.s32 %v345, %v347
        %v349 = vrot.slane %v287, %v348
        %v351 = vshrl.u32 %v349, 16
        %v353 = vshll.u32 %v349, 16
        %v355 = vrot.slane %v353, 1
        %v356 = vor.u32 %v351, %v355
        %357 = vrot.lane.b32.xlu0 %v356, 64
        %v358 = vpop.permute.xlu0 %357
        %vm360 = vcmask 130048
        %v362 = vsel %vm360, %v276, %v304
        %vm363 = vcmask 195584
        %v365 = vsel %vm363, %v362, %v314
        %vm366 = vcmask 261120
        %v367 = vsel %vm366, %v365, %v314
        %vm368 = vcmask 326656
        %v370 = vsel %vm368, %v367, %v331
        %vm371 = vcmask 392192
        %v373 = vsel %vm371, %v370, %v341
        %vm374 = vcmask 457728
        %v375 = vsel %vm374, %v373, %v341
        %vm376 = vcmask 523264
        %v378 = vsel %vm376, %v375, %v358
        %v388 = vunpack.c.l.b16 %v251
        %v389 = vunpack.c.l.b16 %v252
        %v390 = vunpack.c.l.b16 %v253
        %v391 = vunpack.c.l.b16 %v254
        %v392 = vunpack.c.l.b16 %v255
        %v393 = vunpack.c.l.b16 %v256
        %v394 = vunpack.c.l.b16 %v257
        %v395 = vunpack.c.l.b16 %v258
        %v396 = vunpack.c.l.b16 %v259
        %v397 = vpack.c.b16 %v389, %v388
        %v398 = vpack.c.b16 %v391, %v390
        %v399 = vpack.c.b16 %v393, %v392
        %v400 = vpack.c.b16 %v395, %v394
        %v401 = vpack.c.b16 %v396, %v396
        %vm406 = vcmask 588800
        %v407 = vsel %vm406, %v378, 0
        %vm409 = vcmask 1043456
        %v411 = vsel %vm409, %v401, 0
        %413 = vmatprep.subr.bf16.mxu0 0
        %414 = vmatpush1.bf16.msra.mxu0 0
        %415 = vmatprep.subr.bf16.mxu0 0
        %416 = vmatpush1.bf16.msra.mxu0 0
        %417 = vmatprep.subr.bf16.mxu0 0
        %418 = vmatpush1.bf16.msra.mxu0 0
        %419 = vmatprep.subr.bf16.mxu0 0
        %420 = vmatpush1.bf16.msra.mxu0 %v411
        %421 = vmatprep.subr.bf16.mxu0 0
        %422 = vmatpush1.bf16.msra.mxu0 %v400
        %423 = vmatprep.subr.bf16.mxu0 0
        %424 = vmatpush1.bf16.msra.mxu0 %v399
        %425 = vmatprep.subr.bf16.mxu0 0
        %426 = vmatpush1.bf16.msra.mxu0 %v398
        %427 = vmatprep.subr.bf16.mxu0 0
        %428 = vmatpush1.bf16.msra.mxu0 %v397
        %429 = vmatprep.subr.bf16.mxu0 0
        %430 = vmatpush2.bf16.msra.mxu0 0
        %431 = vmatprep.subr.bf16.mxu0 0
        %432 = vmatpush2.bf16.msra.mxu0 0
        %433 = vmatprep.subr.bf16.mxu0 0
        %434 = vmatpush2.bf16.msra.mxu0 0
        %435 = vmatprep.subr.bf16.mxu0 0
        %436 = vmatpush2.bf16.msra.mxu0 0
        %437 = vmatprep.subr.bf16.mxu0 0
        %438 = vmatpush2.bf16.msra.mxu0 0
        %439 = vmatprep.subr.bf16.mxu0 0
        %440 = vmatpush2.bf16.msra.mxu0 0
        %441 = vmatprep.subr.bf16.mxu0 0
        %442 = vmatpush2.bf16.msra.mxu0 0
        %443 = vmatprep.subr.bf16.mxu0 0
        %444 = vmatpush2.bf16.msra.mxu0 0
        %445 = vmatprep.mubr.bf16.mxu0 0
        %446 = vmatmul.mubr.bf16.gmra.mxu0 %v407
        %v447 = vpop.f32.mrf.mxu0
        %v448 = vadd.f32 0.0, %v447
        %v449 = vpop.f32.mrf.mxu0
        %v450 = vpop.f32.mrf.mxu0
        %v451 = vpop.f32.mrf.mxu0
        %452 = vdwg.mxu0
        %v454 = vlaneseq
        %v455 = vshrl.u32 %v454, 7
        %v456 = vsub.s32 0, %v455
        %v457 = vrot.slane %v260, %v456
        %v459 = vadd.f32 %v448, %v457
        %v460 = vmax.f32 %v459, 0.0
        %v461 = vpack.c.bf16 %v460, %v460
        %s462 = sadd.s32 %s268, 1
        %v465 = vunpack.c.l.s4 1983009808
        %v466 = vunpack.c.0.s8 %v465
        %v467 = vlaneseq
        %v468 = vshrl.u32 %v467, 7
        %v469 = vsub.s32 %v466, %v468
        %v470 = vrot.slane %v461, %v469
        %v472 = vshrl.u32 %v470, 16
        %v474 = vrot.slane %v472, 7
        %v475 = vshll.u32 %v470, 16
        %v477 = vor.u32 %v474, %v475
        %s479 = smul.addr %s462, 2
        %s480 = scalar_lea.vmem [#allocation2], %s479
        %vm481 = vcmask 123904
        %vm482 = vsmask.f32 1282
        %vm483 = vmand %vm481, %vm482
        %v484 = vld [vmem:[%s480] sm:$0x3]
        %v485 = vsel %vm483, %v477, %v484
        %486 = vst [vmem:[%s480] sm:$0x3] %v485
        %v488 = vlaneseq
        %v489 = vshrl.u32 %v488, 7
        %v490 = vsub.s32 0, %v489
        %v491 = vrot.slane %v261, %v490
        %492 = vrot.lane.b32.xlu0 %v491, 16
        %v493 = vpop.permute.xlu0 %492
        %v495 = vadd.f32 %v448, %v493
        %497 = vrot.lane.b32.xlu0 %v495, 112
        %v498 = vpop.permute.xlu0 %497
        %s500 = scalar_lea.vmem [#allocation3], %s273
        %501 = vst.msk [vmem:[%s500] sm:$0x3] %vm262, %v498
      $region49: #{forward.10} parent=43 // loop_footer
        %s272 = sadd.s32 1, %s268
      $region50: #{forward.10} parent=43 // loop_footer_branch
        %267 = sbr.rel target = $region46
      $region51: #{forward.10} parent=43 // loop_exit
        _
      %v502 = vld [vmem:[%s4] sm:$0xf]
      %v503 = vld [vmem:[%s4 + $0x4] sm:$0xf]
      %v504 = vld [vmem:[%s4 + $0x8] sm:$0xf]
      %v505 = vld [vmem:[%s4 + $0xc] sm:$0xf]
      %v506 = vld [vmem:[%s4 + $0x10] sm:$0xf]
      %v507 = vld [vmem:[%s4 + $0x14] sm:$0xf]
      %v508 = vld [vmem:[%s4 + $0x18] sm:$0xf]
      %v509 = vld [vmem:[%s4 + $0x1c] sm:$0xf]
      %v510 = vld [vmem:[%s4 + $0x20] sm:$0xf]
      %v511 = vld [vmem:[%s4 + $0x24] sm:$0xf]
      %v512 = vld [vmem:[%s4 + $0x28] sm:$0xf]
      %v513 = vld [vmem:[%s4 + $0x2c] sm:$0xf]
      %v514 = vld [vmem:[%s4 + $0x30] sm:$0xf]
      %v515 = vld [vmem:[%s4 + $0x34] sm:$0xf]
      %v516 = vld [vmem:[%s4 + $0x38] sm:$0xf]
      %v517 = vld [vmem:[%s4 + $0x3c] sm:$0xf]
      %v518 = vld [vmem:[%s4 + $0x40] sm:$0xf]
      %v519 = vld [vmem:[%s4 + $0x44] sm:$0xf]
      %v520 = vld [vmem:[%s5] sm:$0x1]
      loop: start=0, step=1, limit=2
      $region52: #{forward.10} parent=43 // loop_pre_header
        _
      $region53: #{forward.10} parent=43 // loop_header
        %s522 = sphi 0, %s526
        %p523 = scmp.ge.s32.totalorder %s522, 2
      $region54: #{forward.10} parent=43 // loop_header_branch
        %525 = sbr.rel (%p523) target = $region58
      $region55: #{forward.10} parent=43 // loop_body
        %s527 = smul.addr %s522, 2
        %s528 = scalar_lea.vmem [#allocation2], %s527
        %v529 = vld [vmem:[%s528] sm:$0x1]
        %v530 = vld [vmem:[%s528] sm:$0x3]
        %v531 = vld [vmem:[%s528] sm:$0x2]
        %s532 = sadd.s32 %s522, 1
        %s533 = smul.addr %s532, 2
        %s534 = scalar_lea.vmem [#allocation2], %s533
        %v535 = vld [vmem:[%s534] sm:$0x1]
        %v536 = vld [vmem:[%s534] sm:$0x3]
        %v537 = vld [vmem:[%s534] sm:$0x2]
        %s538 = sadd.s32 %s522, 2
        %s539 = smul.addr %s538, 2
        %s540 = scalar_lea.vmem [#allocation2], %s539
        %v541 = vld [vmem:[%s540] sm:$0x1]
        %v542 = vld [vmem:[%s540] sm:$0x3]
        %v543 = vld [vmem:[%s540] sm:$0x2]
        %v546 = vunpack.c.l.s4 1983009808
        %v547 = vunpack.c.0.s8 %v546
        %v548 = vlaneseq
        %v549 = vshrl.u32 %v548, 7
        %v550 = vsub.s32 %v547, %v549
        %v551 = vrot.slane %v530, %v550
        %v553 = vshrl.u32 %v551, 16
        %v555 = vshll.u32 %v551, 16
        %v557 = vrot.slane %v555, 1
        %v558 = vor.u32 %v553, %v557
        %559 = vrot.lane.b32.xlu0 %v558, 16
        %v560 = vpop.permute.xlu0 %559
        %v563 = vunpack.c.l.s4 1983009808
        %v564 = vunpack.c.0.s8 %v563
        %v565 = vlaneseq
        %v566 = vshrl.u32 %v565, 7
        %v567 = vsub.s32 %v564, %v566
        %v568 = vrot.slane %v531, %v567
        %v569 = vrot.slane %v568, 1
        %570 = vrot.lane.b32.xlu0 %v569, 32
        %v571 = vpop.permute.xlu0 %570
        %v574 = vunpack.c.l.s4 1983009808
        %v575 = vunpack.c.0.s8 %v574
        %v576 = vlaneseq
        %v577 = vshrl.u32 %v576, 7
        %v578 = vsub.s32 %v575, %v577
        %v579 = vrot.slane %v535, %v578
        %580 = vrot.lane.b32.xlu0 %v579, 48
        %v581 = vpop.permute.xlu0 %580
        %v584 = vunpack.c.l.s4 1983009808
        %v585 = vunpack.c.0.s8 %v584
        %v586 = vlaneseq
        %v587 = vshrl.u32 %v586, 7
        %v588 = vsub.s32 %v585, %v587
        %v589 = vrot.slane %v536, %v588
        %v591 = vshrl.u32 %v589, 16
        %v593 = vshll.u32 %v589, 16
        %v595 = vrot.slane %v593, 1
        %v596 = vor.u32 %v591, %v595
        %597 = vrot.lane.b32.xlu0 %v596, 64
        %v598 = vpop.permute.xlu0 %597
        %v601 = vunpack.c.l.s4 1983009808
        %v602 = vunpack.c.0.s8 %v601
        %v603 = vlaneseq
        %v604 = vshrl.u32 %v603, 7
        %v605 = vsub.s32 %v602, %v604
        %v606 = vrot.slane %v537, %v605
        %v607 = vrot.slane %v606, 1
        %608 = vrot.lane.b32.xlu0 %v607, 80
        %v609 = vpop.permute.xlu0 %608
        %v612 = vunpack.c.l.s4 1983009808
        %v613 = vunpack.c.0.s8 %v612
        %v614 = vlaneseq
        %v615 = vshrl.u32 %v614, 7
        %v616 = vsub.s32 %v613, %v615
        %v617 = vrot.slane %v541, %v616
        %618 = vrot.lane.b32.xlu0 %v617, 96
        %v619 = vpop.permute.xlu0 %618
        %v622 = vunpack.c.l.s4 1983009808
        %v623 = vunpack.c.0.s8 %v622
        %v624 = vlaneseq
        %v625 = vshrl.u32 %v624, 7
        %v626 = vsub.s32 %v623, %v625
        %v627 = vrot.slane %v542, %v626
        %v629 = vshrl.u32 %v627, 16
        %v631 = vshll.u32 %v627, 16
        %v633 = vrot.slane %v631, 1
        %v634 = vor.u32 %v629, %v633
        %635 = vrot.lane.b32.xlu0 %v634, 112
        %v636 = vpop.permute.xlu0 %635
        %v639 = vunpack.c.l.s4 1983009808
        %v640 = vunpack.c.0.s8 %v639
        %v641 = vlaneseq
        %v642 = vshrl.u32 %v641, 7
        %v643 = vsub.s32 %v640, %v642
        %v644 = vrot.slane %v543, %v643
        %v645 = vrot.slane %v644, 1
        %vm646 = vcmask 130048
        %v649 = vsel %vm646, %v529, %v560
        %vm650 = vcmask 261120
        %v652 = vsel %vm650, %v649, %v571
        %vm653 = vcmask 392192
        %v655 = vsel %vm653, %v652, %v581
        %vm656 = vcmask 523264
        %v658 = vsel %vm656, %v655, %v598
        %vm659 = vcmask 654336
        %v661 = vsel %vm659, %v658, %v609
        %vm662 = vcmask 785408
        %v664 = vsel %vm662, %v661, %v619
        %vm665 = vcmask 916480
        %v667 = vsel %vm665, %v664, %v636
        %v670 = vlaneseq
        %v671 = vshrl.u32 %v670, 7
        %v672 = vsub.s32 0, %v671
        %v673 = vrot.slane %v520, %v672
        %v693 = vunpack.c.l.b16 %v502
        %v694 = vunpack.c.l.b16 %v503
        %v695 = vunpack.c.l.b16 %v504
        %v696 = vunpack.c.l.b16 %v505
        %v697 = vunpack.c.l.b16 %v506
        %v698 = vunpack.c.l.b16 %v507
        %v699 = vunpack.c.l.b16 %v508
        %v700 = vunpack.c.l.b16 %v509
        %v701 = vunpack.c.l.b16 %v510
        %v702 = vunpack.c.l.b16 %v511
        %v703 = vunpack.c.l.b16 %v512
        %v704 = vunpack.c.l.b16 %v513
        %v705 = vunpack.c.l.b16 %v514
        %v706 = vunpack.c.l.b16 %v515
        %v707 = vunpack.c.l.b16 %v516
        %v708 = vunpack.c.l.b16 %v517
        %v709 = vunpack.c.l.b16 %v518
        %v710 = vunpack.c.l.b16 %v519
        %v711 = vpack.c.b16 %v694, %v693
        %v712 = vpack.c.b16 %v696, %v695
        %v713 = vpack.c.b16 %v698, %v697
        %v714 = vpack.c.b16 %v700, %v699
        %v715 = vpack.c.b16 %v702, %v701
        %v716 = vpack.c.b16 %v704, %v703
        %v717 = vpack.c.b16 %v706, %v705
        %v718 = vpack.c.b16 %v708, %v707
        %v719 = vpack.c.b16 %v710, %v709
        %v730 = vsel %vm646, %v645, 0
        %732 = vmatprep.subr.bf16.mxu0 0
        %733 = vmatpush1.bf16.msra.mxu0 %v718
        %734 = vmatprep.subr.bf16.mxu0 0
        %735 = vmatpush1.bf16.msra.mxu0 %v717
        %736 = vmatprep.subr.bf16.mxu0 0
        %737 = vmatpush1.bf16.msra.mxu0 %v716
        %738 = vmatprep.subr.bf16.mxu0 0
        %739 = vmatpush1.bf16.msra.mxu0 %v715
        %740 = vmatprep.subr.bf16.mxu0 0
        %741 = vmatpush1.bf16.msra.mxu0 %v714
        %742 = vmatprep.subr.bf16.mxu0 0
        %743 = vmatpush1.bf16.msra.mxu0 %v713
        %744 = vmatprep.subr.bf16.mxu0 0
        %745 = vmatpush1.bf16.msra.mxu0 %v712
        %746 = vmatprep.subr.bf16.mxu0 0
        %747 = vmatpush1.bf16.msra.mxu0 %v711
        %748 = vmatprep.subr.bf16.mxu0 0
        %749 = vmatpush2.bf16.msra.mxu0 0
        %750 = vmatprep.subr.bf16.mxu0 0
        %751 = vmatpush2.bf16.msra.mxu0 0
        %752 = vmatprep.subr.bf16.mxu0 0
        %753 = vmatpush2.bf16.msra.mxu0 0
        %754 = vmatprep.subr.bf16.mxu0 0
        %755 = vmatpush2.bf16.msra.mxu0 0
        %756 = vmatprep.subr.bf16.mxu0 0
        %757 = vmatpush2.bf16.msra.mxu0 0
        %758 = vmatprep.subr.bf16.mxu0 0
        %759 = vmatpush2.bf16.msra.mxu0 0
        %760 = vmatprep.subr.bf16.mxu0 0
        %761 = vmatpush2.bf16.msra.mxu0 0
        %762 = vmatprep.subr.bf16.mxu0 0
        %763 = vmatpush2.bf16.msra.mxu0 %v719
        %764 = vmatprep.mubr.bf16.mxu0 %v730
        %765 = vmatmul.mubr.bf16.gmra.mxu0 %v667
        %v766 = vpop.f32.mrf.mxu0
        %v767 = vadd.f32 %v673, %v766
        %v768 = vpop.f32.mrf.mxu0
        %v769 = vpop.f32.mrf.mxu0
        %v770 = vpop.f32.mrf.mxu0
        %771 = vdwg.mxu0
        %s772 = smul.u32 %s522, 2
        %s773 = scalar_lea.vmem [#allocation3], %s772
        %v774 = vld [vmem:[%s773] sm:$0x3]
        %v775 = vadd.f32 %v767, %v774
        %v776 = vmax.f32 %v775, 0.0
        %v777 = vpack.c.bf16 %v776, %v776
        %s778 = scalar_lea.vmem %s249, %s522
        %vm779 = vcmask 122880
        %780 = vst.msk [vmem:[%s778] sm:$0x1] %vm779, %v777
      $region56: #{forward.10} parent=43 // loop_footer
        %s526 = sadd.s32 1, %s522
      $region57: #{forward.10} parent=43 // loop_footer_branch
        %521 = sbr.rel target = $region53
      $region58: #{forward.10} parent=43 // loop_exit
        _
      %p781 = scmp.lt.s32.totalorder %s17, 1
      %s782 = scalar_select %p781, %s17, 1
      %s783 = smul.addr %s782, 2
      %s784 = scalar_lea.vmem %s6, %s783
      // Predicated region
      $region59: #{forward.10} parent=43 // pred_check
        %p785 = pneg %p166
      $region60: #{forward.10} parent=43 // pred_check_branch
        %787 = sbr.rel (%p785) target = $region62
      $region61: #{forward.10} parent=43 // pred_region
        _
      $region62: #{forward.10} parent=43 // pred_fallthru
        _
    $region44: #{forward.10} parent=5 // pred_fallthru
      _
    %p788 = scmp.le.s32.totalorder 2, %s12
    // Predicated region
    $region63: #{forward.10} parent=5 // pred_check
      %p789 = pneg %p788
    $region64: #{forward.10} parent=5 // pred_check_branch
      %791 = sbr.rel (%p789) target = $region66
    $region65: #{forward.10} parent=5 // pred_region
      %s792 = ssub.s32 %s12, 2
      // Predicated region
      $region67: #{forward.10} parent=65 // pred_check
        %p793 = pneg %p172
      $region68: #{forward.10} parent=65 // pred_check_branch
        %795 = sbr.rel (%p793) target = $region70
      $region69: #{forward.10} parent=65 // pred_region
        %p796 = scmp.lt.s32.totalorder %s18, 1
        %s797 = scalar_select %p796, %s18, 1
        %s798 = smul.addr %s797, 2
        %s799 = scalar_lea.vmem %s6, %s798
      $region70: #{forward.10} parent=65 // pred_fallthru
        _
    $region66: #{forward.10} parent=5 // pred_fallthru
      _
  $region6: #{forward.10} parent=0 // loop_footer
    %s16 = sadd.s32 1, %s12
  $region7: #{forward.10} parent=0 // loop_footer_branch
    %11 = sbr.rel target = $region3
  $region8: #{forward.10} parent=0 // loop_exit
    _

// kernel: forward.12
$region0: #{forward.12}
  #allocation0 [shape = 'u32[]', space=smem, size = 0x4, offset = 0x4, fixed_abs, tag = 'smem constant byte address 0x4 - core index']
  #allocation1 [shape = 'u32[144,128]{1,0:T(1,128)}', space=vmem, size = 0x12000, scoped, tag = 'internal scratch']
  #allocation2 [shape = 'bf16[3,3,16]{2,1,0:T(4,128)(2,1)}', space=vmem, size = 0xc00, scoped, tag = 'scratch operand']
  #allocation3 [shape = 'f32[1,1,16]{2,1,0:T(1,128)}', space=vmem, size = 0x200, scoped, tag = 'scratch operand']
  %s0 = inlined_call_operand.vmem [shape: bf16[2,3,2,32], index: 0, kind: input, shape index: {}]
  %s1 = inlined_call_operand.vmem [shape: bf16[144,32], index: 1, kind: input, shape index: {}]
  %s2 = inlined_call_operand.vmem [shape: f32[1,16], index: 2, kind: input, shape index: {}]
  %s3 = inlined_call_operand.vmem [shape: f32[1,16], index: 3, kind: input, shape index: {}]
  %s4 = inlined_call_operand.vmem [shape: bf16[144,16], index: 4, kind: input, shape index: {}]
  %s5 = inlined_call_operand.vmem [shape: f32[1,16], index: 5, kind: input, shape index: {}]
  %s6 = inlined_call_operand.vmem [shape: bf16[2,1,1,16], index: 6, kind: output, shape index: {}]
  %s7 = sld [smem:[#allocation0]]
  $region57: #{forward.12} parent=0
    _
  %s9 = ssub.s32 1, %s7
  %s10 = scalar_select 0, %s9, %s7
  loop: start=0, step=1, limit=4
  $region2: #{forward.12} parent=0 // loop_pre_header
    _
  $region3: #{forward.12} parent=0 // loop_header
    %s12 = sphi 0, %s16
    %p13 = scmp.ge.s32.totalorder %s12, 4
    %s22 = sphi 0, %s24
    %s25 = sphi 0, %s22
    %s26 = sphi 0, %s25
    %s42 = sphi 0, %s26
    %s46 = sphi 0, %s46
    %s48 = sphi 0, %s46
    %s49 = sphi 0, %s48
    %s63 = sphi 0, %s49
    %s67 = sphi 0, %s67
    %s69 = sphi 0, %s67
    %s70 = sphi 0, %s69
    %s84 = sphi 0, %s70
    %s88 = sphi 0, %s88
    %s90 = sphi 0, %s88
    %s91 = sphi 0, %s90
    %s105 = sphi 0, %s91
    %s109 = sphi 0, %s109
    %s111 = sphi 0, %s109
    %s112 = sphi 0, %s111
    %s126 = sphi 0, %s112
    %s130 = sphi 0, %s130
    %s132 = sphi 0, %s130
    %s133 = sphi 0, %s132
    %s147 = sphi 0, %s133
    %s153 = sphi 0, %s155
    %s156 = sphi 0, %s153
    %s157 = sphi 0, %s156
    %s173 = sphi 0, %s157
  $region4: #{forward.12} parent=0 // loop_header_branch
    %15 = sbr.rel (%p13) target = $region8
  $region5: #{forward.12} parent=0 // loop_body
    %s17 = ssub.s32 %s12, 1
    %s18 = ssub.s32 %s12, 2
    %s19 = sadd.s32 %s12, 1
    %s20 = ssub.s32 %s12, %s19
    %p21 = scmp.eq.s32.totalorder %s20, 0
    %s23 = sadd.s32 %s22, 1
    %s24 = scalar_select %p21, %s22, %s23
    %p27 = pneg %p21
    %p28 = scmp.eq.s32.totalorder %s12, 1
    %p29 = por %p27, %p28
    %p30 = scmp.ne.s32.totalorder %s22, %s25
    %p31 = scmp.eq.s32.totalorder %s12, 0
    %p32 = por %p30, %p31
    %p33 = scmp.ne.s32.totalorder %s22, %s25
    %p34 = scmp.eq.s32.totalorder %s17, 1
    %p35 = por %p33, %p34
    %p36 = scmp.ne.s32.totalorder %s25, %s26
    %p37 = scmp.eq.s32.totalorder %s17, 0
    %p38 = por %p36, %p37
    %p39 = scmp.ne.s32.totalorder %s25, %s26
    %p40 = scmp.eq.s32.totalorder %s18, 1
    %p41 = por %p39, %p40
    %p43 = scmp.ne.s32.totalorder %s26, %s42
    %p44 = scmp.eq.s32.totalorder %s18, 0
    %p45 = por %p43, %p44
    %s47 = sadd.s32 %s46, 1
    %p50 = scmp.eq.s32.totalorder %s12, 1
    %p51 = scmp.ne.s32.totalorder %s46, %s48
    %p52 = scmp.eq.s32.totalorder %s12, 0
    %p53 = por %p51, %p52
    %p54 = scmp.ne.s32.totalorder %s46, %s48
    %p55 = scmp.eq.s32.totalorder %s17, 1
    %p56 = por %p54, %p55
    %p57 = scmp.ne.s32.totalorder %s48, %s49
    %p58 = scmp.eq.s32.totalorder %s17, 0
    %p59 = por %p57, %p58
    %p60 = scmp.ne.s32.totalorder %s48, %s49
    %p61 = scmp.eq.s32.totalorder %s18, 1
    %p62 = por %p60, %p61
    %p64 = scmp.ne.s32.totalorder %s49, %s63
    %p65 = scmp.eq.s32.totalorder %s18, 0
    %p66 = por %p64, %p65
    %s68 = sadd.s32 %s67, 1
    %p71 = scmp.eq.s32.totalorder %s12, 1
    %p72 = scmp.ne.s32.totalorder %s67, %s69
    %p73 = scmp.eq.s32.totalorder %s12, 0
    %p74 = por %p72, %p73
    %p75 = scmp.ne.s32.totalorder %s67, %s69
    %p76 = scmp.eq.s32.totalorder %s17, 1
    %p77 = por %p75, %p76
    %p78 = scmp.ne.s32.totalorder %s69, %s70
    %p79 = scmp.eq.s32.totalorder %s17, 0
    %p80 = por %p78, %p79
    %p81 = scmp.ne.s32.totalorder %s69, %s70
    %p82 = scmp.eq.s32.totalorder %s18, 1
    %p83 = por %p81, %p82
    %p85 = scmp.ne.s32.totalorder %s70, %s84
    %p86 = scmp.eq.s32.totalorder %s18, 0
    %p87 = por %p85, %p86
    %s89 = sadd.s32 %s88, 1
    %p92 = scmp.eq.s32.totalorder %s12, 1
    %p93 = scmp.ne.s32.totalorder %s88, %s90
    %p94 = scmp.eq.s32.totalorder %s12, 0
    %p95 = por %p93, %p94
    %p96 = scmp.ne.s32.totalorder %s88, %s90
    %p97 = scmp.eq.s32.totalorder %s17, 1
    %p98 = por %p96, %p97
    %p99 = scmp.ne.s32.totalorder %s90, %s91
    %p100 = scmp.eq.s32.totalorder %s17, 0
    %p101 = por %p99, %p100
    %p102 = scmp.ne.s32.totalorder %s90, %s91
    %p103 = scmp.eq.s32.totalorder %s18, 1
    %p104 = por %p102, %p103
    %p106 = scmp.ne.s32.totalorder %s91, %s105
    %p107 = scmp.eq.s32.totalorder %s18, 0
    %p108 = por %p106, %p107
    %s110 = sadd.s32 %s109, 1
    %p113 = scmp.eq.s32.totalorder %s12, 1
    %p114 = scmp.ne.s32.totalorder %s109, %s111
    %p115 = scmp.eq.s32.totalorder %s12, 0
    %p116 = por %p114, %p115
    %p117 = scmp.ne.s32.totalorder %s109, %s111
    %p118 = scmp.eq.s32.totalorder %s17, 1
    %p119 = por %p117, %p118
    %p120 = scmp.ne.s32.totalorder %s111, %s112
    %p121 = scmp.eq.s32.totalorder %s17, 0
    %p122 = por %p120, %p121
    %p123 = scmp.ne.s32.totalorder %s111, %s112
    %p124 = scmp.eq.s32.totalorder %s18, 1
    %p125 = por %p123, %p124
    %p127 = scmp.ne.s32.totalorder %s112, %s126
    %p128 = scmp.eq.s32.totalorder %s18, 0
    %p129 = por %p127, %p128
    %s131 = sadd.s32 %s130, 1
    %p134 = scmp.eq.s32.totalorder %s12, 1
    %p135 = scmp.ne.s32.totalorder %s130, %s132
    %p136 = scmp.eq.s32.totalorder %s12, 0
    %p137 = por %p135, %p136
    %p138 = scmp.ne.s32.totalorder %s130, %s132
    %p139 = scmp.eq.s32.totalorder %s17, 1
    %p140 = por %p138, %p139
    %p141 = scmp.ne.s32.totalorder %s132, %s133
    %p142 = scmp.eq.s32.totalorder %s17, 0
    %p143 = por %p141, %p142
    %p144 = scmp.ne.s32.totalorder %s132, %s133
    %p145 = scmp.eq.s32.totalorder %s18, 1
    %p146 = por %p144, %p145
    %p148 = scmp.ne.s32.totalorder %s133, %s147
    %p149 = scmp.eq.s32.totalorder %s18, 0
    %p150 = por %p148, %p149
    %s151 = ssub.s32 %s12, %s19
    %p152 = scmp.eq.s32.totalorder %s151, 0
    %s154 = sadd.s32 %s153, 1
    %s155 = scalar_select %p152, %s153, %s154
    %p158 = pneg %p152
    %p159 = scmp.eq.s32.totalorder %s12, 1
    %p160 = por %p158, %p159
    %p161 = scmp.ne.s32.totalorder %s153, %s156
    %p162 = scmp.eq.s32.totalorder %s12, 0
    %p163 = por %p161, %p162
    %p164 = scmp.ne.s32.totalorder %s153, %s156
    %p165 = scmp.eq.s32.totalorder %s17, 1
    %p166 = por %p164, %p165
    %p167 = scmp.ne.s32.totalorder %s156, %s157
    %p168 = scmp.eq.s32.totalorder %s17, 0
    %p169 = por %p167, %p168
    %p170 = scmp.ne.s32.totalorder %s156, %s157
    %p171 = scmp.eq.s32.totalorder %s18, 1
    %p172 = por %p170, %p171
    %p174 = scmp.ne.s32.totalorder %s157, %s173
    %p175 = scmp.eq.s32.totalorder %s18, 0
    %p176 = por %p174, %p175
    %p177 = scmp.le.s32.totalorder 1, %s12
    %p178 = scmp.lt.s32.totalorder %s12, 3
    %p179 = pnand %p177, %p178
    %p180 = pneg %p179
    // Predicated region
    $region9: #{forward.12} parent=5 // pred_check
      _
    $region10: #{forward.12} parent=5 // pred_check_branch
      %182 = sbr.rel (%p179) target = $region12
    $region11: #{forward.12} parent=5 // pred_region
      %s183 = ssub.s32 %s12, 1
      // Predicated region
      $region13: #{forward.12} parent=11 // pred_check
        %p184 = pneg %p59
      $region14: #{forward.12} parent=11 // pred_check_branch
        %186 = sbr.rel (%p184) target = $region16
      $region15: #{forward.12} parent=11 // pred_region
        _
      $region16: #{forward.12} parent=11 // pred_fallthru
        _
      // Predicated region
      $region17: #{forward.12} parent=11 // pred_check
        %p187 = pneg %p80
      $region18: #{forward.12} parent=11 // pred_check_branch
        %189 = sbr.rel (%p187) target = $region20
      $region19: #{forward.12} parent=11 // pred_region
        _
      $region20: #{forward.12} parent=11 // pred_fallthru
        _
      // Predicated region
      $region21: #{forward.12} parent=11 // pred_check
        %p190 = pneg %p101
      $region22: #{forward.12} parent=11 // pred_check_branch
        %192 = sbr.rel (%p190) target = $region24
      $region23: #{forward.12} parent=11 // pred_region
        _
      $region24: #{forward.12} parent=11 // pred_fallthru
        _
      // Predicated region
      $region25: #{forward.12} parent=11 // pred_check
        %p193 = pneg %p122
      $region26: #{forward.12} parent=11 // pred_check_branch
        %195 = sbr.rel (%p193) target = $region28
      $region27: #{forward.12} parent=11 // pred_region
        _
      $region28: #{forward.12} parent=11 // pred_fallthru
        _
      // Predicated region
      $region29: #{forward.12} parent=11 // pred_check
        %p196 = pneg %p143
      $region30: #{forward.12} parent=11 // pred_check_branch
        %198 = sbr.rel (%p196) target = $region32
      $region31: #{forward.12} parent=11 // pred_region
        _
      $region32: #{forward.12} parent=11 // pred_fallthru
        _
    $region12: #{forward.12} parent=5 // pred_fallthru
      _
    %p199 = scmp.lt.s32.totalorder %s12, 2
    // Predicated region
    $region33: #{forward.12} parent=5 // pred_check
      %p200 = pneg %p199
    $region34: #{forward.12} parent=5 // pred_check_branch
      %202 = sbr.rel (%p200) target = $region36
    $region35: #{forward.12} parent=5 // pred_region
      // Predicated region
      $region37: #{forward.12} parent=35 // pred_check
        %p203 = pneg %p32
      $region38: #{forward.12} parent=35 // pred_check_branch
        %205 = sbr.rel (%p203) target = $region40
      $region39: #{forward.12} parent=35 // pred_region
        %p206 = scmp.lt.s32.totalorder %s12, 1
        %s207 = scalar_select %p206, %s12, 1
        %s208 = smul.addr %s207, 3
        %s209 = scalar_lea.vmem %s0, %s208
      $region40: #{forward.12} parent=35 // pred_fallthru
        _
    $region36: #{forward.12} parent=5 // pred_fallthru
      _
    %p210 = scmp.le.s32.totalorder 1, %s12
    %p211 = scmp.lt.s32.totalorder %s12, 3
    %p212 = pnand %p210, %p211
    %p213 = pneg %p212
    // Predicated region
    $region41: #{forward.12} parent=5 // pred_check
      _
    $region42: #{forward.12} parent=5 // pred_check_branch
      %215 = sbr.rel (%p212) target = $region44
    $region43: #{forward.12} parent=5 // pred_region
      %s216 = ssub.s32 %s12, 1
      %p217 = scmp.lt.s32.totalorder %s17, 1
      %s218 = scalar_select %p217, %s17, 1
      %s219 = smul.addr %s218, 3
      %s220 = scalar_lea.vmem %s0, %s219
      %p221 = pneg %p38
      %p222 = pneg %p35
      %p223 = pneg %p59
      %p224 = pneg %p56
      %p225 = pneg %p80
      %p226 = pneg %p77
      %p227 = pneg %p101
      %p228 = pneg %p98
      %p229 = pneg %p122
      %p230 = pneg %p119
      %p231 = pneg %p143
      %p232 = pneg %p140
      %p233 = pneg %p169
      %p234 = pneg %p166
      %p235 = scmp.lt.s32.totalorder %s17, 1
      %s236 = scalar_select %p235, %s17, 1
      %s237 = scalar_lea.vmem %s6, %s236
      %p238 = scmp.lt.s32.totalorder %s17, 1
      %s239 = scalar_select %p238, %s17, 1
      %s240 = smul.addr %s239, 3
      %s241 = scalar_lea.vmem %s0, %s240
      %p242 = scmp.lt.s32.totalorder %s17, 1
      %s243 = scalar_select %p242, %s17, 1
      %s244 = scalar_lea.vmem %s6, %s243
      %v246 = vld [vmem:[%s1] sm:$0xf]
      %v247 = vld [vmem:[%s1 + $0x4] sm:$0xf]
      %v248 = vld [vmem:[%s1 + $0x8] sm:$0xf]
      %v249 = vld [vmem:[%s1 + $0xc] sm:$0xf]
      %v250 = vld [vmem:[%s1 + $0x10] sm:$0xf]
      %v251 = vld [vmem:[%s1 + $0x14] sm:$0xf]
      %v252 = vld [vmem:[%s1 + $0x18] sm:$0xf]
      %v253 = vld [vmem:[%s1 + $0x1c] sm:$0xf]
      %v254 = vld [vmem:[%s1 + $0x20] sm:$0xf]
      %v255 = vld [vmem:[%s1 + $0x24] sm:$0xf]
      %v256 = vld [vmem:[%s1 + $0x28] sm:$0xf]
      %v257 = vld [vmem:[%s1 + $0x2c] sm:$0xf]
      %v258 = vld [vmem:[%s1 + $0x30] sm:$0xf]
      %v259 = vld [vmem:[%s1 + $0x34] sm:$0xf]
      %v260 = vld [vmem:[%s1 + $0x38] sm:$0xf]
      %v261 = vld [vmem:[%s1 + $0x3c] sm:$0xf]
      %v262 = vld [vmem:[%s1 + $0x40] sm:$0xf]
      %v263 = vld [vmem:[%s1 + $0x44] sm:$0xf]
      %v264 = vld [vmem:[%s2] sm:$0x1]
      %v265 = vld [vmem:[%s3] sm:$0x1]
      %vm266 = vcmask 123904
      %vm267 = vsmask.f32 1280
      %vm268 = vmand %vm266, %vm267
      %v269 = vld [vmem:[#allocation2] sm:$0x3]
      %v270 = vsel %vm268, 0, %v269
      %271 = vst [vmem:[#allocation2] sm:$0x3] %v270
      %v272 = vld [vmem:[#allocation2 + $0x2] sm:$0x3]
      %v273 = vsel %vm268, 0, %v272
      %274 = vst [vmem:[#allocation2 + $0x2] sm:$0x3] %v273
      %v275 = vld [vmem:[#allocation2 + $0x4] sm:$0x3]
      %v276 = vsel %vm268, 0, %v275
      %277 = vst [vmem:[#allocation2 + $0x4] sm:$0x3] %v276
      %v278 = vld [vmem:[%s241] sm:$0x1]
      %s279 = scalar_lea.vmem %s241, 1
      %v280 = vld [vmem:[%s279] sm:$0x1]
      %s281 = scalar_lea.vmem %s241, 2
      %v282 = vld [vmem:[%s281] sm:$0x1]
      %v285 = vunpack.c.l.s4 1966171168
      %v286 = vunpack.c.0.s8 %v285
      %v287 = vlaneseq
      %v288 = vshrl.u32 %v287, 7
      %v289 = vsub.s32 %v286, %v288
      %v290 = vrot.slane %v278, %v289
      %v292 = vunpack.c.l.s4 1966171168
      %v293 = vunpack.c.0.s8 %v292
      %v294 = vlaneseq
      %v295 = vshrl.u32 %v294, 7
      %v296 = vsub.s32 %v293, %v295
      %v297 = vrot.slane %v290, %v296
      %v299 = vshrl.u32 %v297, 16
      %301 = vrot.lane.b32.xlu0 %v299, 32
      %v302 = vpop.permute.xlu0 %301
      %v305 = vunpack.c.l.s4 1966171168
      %v306 = vunpack.c.0.s8 %v305
      %v307 = vlaneseq
      %v308 = vshrl.u32 %v307, 7
      %v309 = vsub.s32 %v306, %v308
      %v310 = vrot.slane %v280, %v309
      %v312 = vunpack.c.l.s4 1966171168
      %v313 = vunpack.c.0.s8 %v312
      %v314 = vlaneseq
      %v315 = vshrl.u32 %v314, 7
      %v316 = vsub.s32 %v313, %v315
      %v317 = vrot.slane %v310, %v316
      %318 = vrot.lane.b32.xlu0 %v317, 48
      %v319 = vpop.permute.xlu0 %318
      %v321 = vshrl.u32 %v317, 16
      %323 = vrot.lane.b32.xlu0 %v321, 80
      %v324 = vpop.permute.xlu0 %323
      %v327 = vunpack.c.l.s4 1966171168
      %v328 = vunpack.c.0.s8 %v327
      %v329 = vlaneseq
      %v330 = vshrl.u32 %v329, 7
      %v331 = vsub.s32 %v328, %v330
      %v332 = vrot.slane %v282, %v331
      %v334 = vunpack.c.l.s4 1966171168
      %v335 = vunpack.c.0.s8 %v334
      %v336 = vlaneseq
      %v337 = vshrl.u32 %v336, 7
      %v338 = vsub.s32 %v335, %v337
      %v339 = vrot.slane %v332, %v338
      %340 = vrot.lane.b32.xlu0 %v339, 96
      %v341 = vpop.permute.xlu0 %340
      %v343 = vshrl.u32 %v339, 16
      %vm345 = vcmask 130048
      %vm347 = vcmask 261120
      %v349 = vsel %vm347, %v278, %v302
      %vm350 = vcmask 392192
      %v352 = vsel %vm350, %v349, %v319
      %vm353 = vcmask 523264
      %v354 = vsel %vm353, %v352, %v319
      %vm355 = vcmask 654336
      %v357 = vsel %vm355, %v354, %v324
      %vm358 = vcmask 785408
      %v360 = vsel %vm358, %v357, %v341
      %vm361 = vcmask 916480
      %v362 = vsel %vm361, %v360, %v341
      %v382 = vunpack.c.l.b16 %v246
      %v383 = vunpack.c.l.b16 %v247
      %v384 = vunpack.c.l.b16 %v248
      %v385 = vunpack.c.l.b16 %v249
      %v386 = vunpack.c.l.b16 %v250
      %v387 = vunpack.c.l.b16 %v251
      %v388 = vunpack.c.l.b16 %v252
      %v389 = vunpack.c.l.b16 %v253
      %v390 = vunpack.c.l.b16 %v254
      %v391 = vunpack.c.l.b16 %v255
      %v392 = vunpack.c.l.b16 %v256
      %v393 = vunpack.c.l.b16 %v257
      %v394 = vunpack.c.l.b16 %v258
      %v395 = vunpack.c.l.b16 %v259
      %v396 = vunpack.c.l.b16 %v260
      %v397 = vunpack.c.l.b16 %v261
      %v398 = vunpack.c.l.b16 %v262
      %v399 = vunpack.c.l.b16 %v263
      %v400 = vpack.c.b16 %v383, %v382
      %v401 = vpack.c.b16 %v385, %v384
      %v402 = vpack.c.b16 %v387, %v386
      %v403 = vpack.c.b16 %v389, %v388
      %v404 = vpack.c.b16 %v391, %v390
      %v405 = vpack.c.b16 %v393, %v392
      %v406 = vpack.c.b16 %v395, %v394
      %v407 = vpack.c.b16 %v397, %v396
      %v408 = vpack.c.b16 %v399, %v398
      %v419 = vsel %vm345, %v343, 0
      %421 = vmatprep.subr.bf16.mxu0 0
      %422 = vmatpush1.bf16.msra.mxu0 %v407
      %423 = vmatprep.subr.bf16.mxu0 0
      %424 = vmatpush1.bf16.msra.mxu0 %v406
      %425 = vmatprep.subr.bf16.mxu0 0
      %426 = vmatpush1.bf16.msra.mxu0 %v405
      %427 = vmatprep.subr.bf16.mxu0 0
      %428 = vmatpush1.bf16.msra.mxu0 %v404
      %429 = vmatprep.subr.bf16.mxu0 0
      %430 = vmatpush1.bf16.msra.mxu0 %v403
      %431 = vmatprep.subr.bf16.mxu0 0
      %432 = vmatpush1.bf16.msra.mxu0 %v402
      %433 = vmatprep.subr.bf16.mxu0 0
      %434 = vmatpush1.bf16.msra.mxu0 %v401
      %435 = vmatprep.subr.bf16.mxu0 0
      %436 = vmatpush1.bf16.msra.mxu0 %v400
      %437 = vmatprep.subr.bf16.mxu0 0
      %438 = vmatpush2.bf16.msra.mxu0 0
      %439 = vmatprep.subr.bf16.mxu0 0
      %440 = vmatpush2.bf16.msra.mxu0 0
      %441 = vmatprep.subr.bf16.mxu0 0
      %442 = vmatpush2.bf16.msra.mxu0 0
      %443 = vmatprep.subr.bf16.mxu0 0
      %444 = vmatpush2.bf16.msra.mxu0 0
      %445 = vmatprep.subr.bf16.mxu0 0
      %446 = vmatpush2.bf16.msra.mxu0 0
      %447 = vmatprep.subr.bf16.mxu0 0
      %448 = vmatpush2.bf16.msra.mxu0 0
      %449 = vmatprep.subr.bf16.mxu0 0
      %450 = vmatpush2.bf16.msra.mxu0 0
      %451 = vmatprep.subr.bf16.mxu0 0
      %452 = vmatpush2.bf16.msra.mxu0 %v408
      %453 = vmatprep.mubr.bf16.mxu0 %v419
      %454 = vmatmul.mubr.bf16.gmra.mxu0 %v362
      %v455 = vpop.f32.mrf.mxu0
      %v456 = vadd.f32 0.0, %v455
      %v457 = vpop.f32.mrf.mxu0
      %v458 = vpop.f32.mrf.mxu0
      %v459 = vpop.f32.mrf.mxu0
      %460 = vdwg.mxu0
      %v461 = vadd.f32 %v456, %v264
      %v462 = vmax.f32 %v461, 0.0
      %v463 = vpack.c.bf16 %v462, %v462
      %v466 = vunpack.c.l.s4 1983009808
      %v467 = vunpack.c.0.s8 %v466
      %v468 = vlaneseq
      %v469 = vshrl.u32 %v468, 7
      %v470 = vsub.s32 %v467, %v469
      %v471 = vrot.slane %v463, %v470
      %v473 = vshll.u32 %v471, 16
      %s476 = scalar_lea.vmem [#allocation2], 2
      %vm477 = vcmask 122880
      %vm478 = vsmask.f32 7938
      %vm479 = vmand %vm477, %vm478
      %v480 = vld [vmem:[%s476] sm:$0x1]
      %v481 = vsel %vm479, %v473, %v480
      %482 = vst [vmem:[%s476] sm:$0x1] %v481
      %v484 = vlaneseq
      %v485 = vshrl.u32 %v484, 7
      %v486 = vsub.s32 0, %v485
      %v487 = vrot.slane %v265, %v486
      %488 = vrot.lane.b32.xlu0 %v487, 16
      %v489 = vpop.permute.xlu0 %488
      %v491 = vadd.f32 %v456, %v489
      %493 = vrot.lane.b32.xlu0 %v491, 112
      %v494 = vpop.permute.xlu0 %493
      %vm496 = vcmask 122880
      %497 = vst.msk [vmem:[#allocation3] sm:$0x1] %vm496, %v494
      %v498 = vld [vmem:[%s4] sm:$0xf]
      %v499 = vld [vmem:[%s4 + $0x4] sm:$0xf]
      %v500 = vld [vmem:[%s4 + $0x8] sm:$0xf]
      %v501 = vld [vmem:[%s4 + $0xc] sm:$0xf]
      %v502 = vld [vmem:[%s4 + $0x10] sm:$0xf]
      %v503 = vld [vmem:[%s4 + $0x14] sm:$0xf]
      %v504 = vld [vmem:[%s4 + $0x18] sm:$0xf]
      %v505 = vld [vmem:[%s4 + $0x1c] sm:$0xf]
      %v506 = vld [vmem:[%s4 + $0x20] sm:$0xf]
      %v507 = vld [vmem:[%s4 + $0x24] sm:$0xf]
      %v508 = vld [vmem:[%s4 + $0x28] sm:$0xf]
      %v509 = vld [vmem:[%s4 + $0x2c] sm:$0xf]
      %v510 = vld [vmem:[%s4 + $0x30] sm:$0xf]
      %v511 = vld [vmem:[%s4 + $0x34] sm:$0xf]
      %v512 = vld [vmem:[%s4 + $0x38] sm:$0xf]
      %v513 = vld [vmem:[%s4 + $0x3c] sm:$0xf]
      %v514 = vld [vmem:[%s4 + $0x40] sm:$0xf]
      %v515 = vld [vmem:[%s4 + $0x44] sm:$0xf]
      %v516 = vld [vmem:[%s5] sm:$0x1]
      %v517 = vld [vmem:[#allocation2] sm:$0x1]
      %v518 = vld [vmem:[#allocation2] sm:$0x2]
      %v519 = vld [vmem:[%s476] sm:$0x1]
      %v520 = vld [vmem:[%s476] sm:$0x2]
      %s521 = scalar_lea.vmem [#allocation2], 4
      %v522 = vld [vmem:[%s521] sm:$0x1]
      %v523 = vld [vmem:[%s521] sm:$0x2]
      %v526 = vunpack.c.l.s4 1983009808
      %v527 = vunpack.c.0.s8 %v526
      %v528 = vlaneseq
      %v529 = vshrl.u32 %v528, 7
      %v530 = vsub.s32 %v527, %v529
      %v531 = vrot.slane %v517, %v530
      %v533 = vshrl.u32 %v531, 16
      %535 = vrot.lane.b32.xlu0 %v533, 16
      %v536 = vpop.permute.xlu0 %535
      %v539 = vunpack.c.l.s4 1983009808
      %v540 = vunpack.c.0.s8 %v539
      %v541 = vlaneseq
      %v542 = vshrl.u32 %v541, 7
      %v543 = vsub.s32 %v540, %v542
      %v544 = vrot.slane %v518, %v543
      %v545 = vrot.slane %v544, 1
      %546 = vrot.lane.b32.xlu0 %v545, 32
      %v547 = vpop.permute.xlu0 %546
      %v550 = vunpack.c.l.s4 1983009808
      %v551 = vunpack.c.0.s8 %v550
      %v552 = vlaneseq
      %v553 = vshrl.u32 %v552, 7
      %v554 = vsub.s32 %v551, %v553
      %v555 = vrot.slane %v519, %v554
      %556 = vrot.lane.b32.xlu0 %v555, 48
      %v557 = vpop.permute.xlu0 %556
      %v559 = vshrl.u32 %v555, 16
      %561 = vrot.lane.b32.xlu0 %v559, 64
      %v562 = vpop.permute.xlu0 %561
      %v565 = vunpack.c.l.s4 1983009808
      %v566 = vunpack.c.0.s8 %v565
      %v567 = vlaneseq
      %v568 = vshrl.u32 %v567, 7
      %v569 = vsub.s32 %v566, %v568
      %v570 = vrot.slane %v520, %v569
      %v571 = vrot.slane %v570, 1
      %572 = vrot.lane.b32.xlu0 %v571, 80
      %v573 = vpop.permute.xlu0 %572
      %v576 = vunpack.c.l.s4 1983009808
      %v577 = vunpack.c.0.s8 %v576
      %v578 = vlaneseq
      %v579 = vshrl.u32 %v578, 7
      %v580 = vsub.s32 %v577, %v579
      %v581 = vrot.slane %v522, %v580
      %582 = vrot.lane.b32.xlu0 %v581, 96
      %v583 = vpop.permute.xlu0 %582
      %v585 = vshrl.u32 %v581, 16
      %587 = vrot.lane.b32.xlu0 %v585, 112
      %v588 = vpop.permute.xlu0 %587
      %v591 = vunpack.c.l.s4 1983009808
      %v592 = vunpack.c.0.s8 %v591
      %v593 = vlaneseq
      %v594 = vshrl.u32 %v593, 7
      %v595 = vsub.s32 %v592, %v594
      %v596 = vrot.slane %v523, %v595
      %v597 = vrot.slane %v596, 1
      %v600 = vsel %vm345, %v517, %v536
      %v602 = vsel %vm347, %v600, %v547
      %v604 = vsel %vm350, %v602, %v557
      %v606 = vsel %vm353, %v604, %v562
      %v608 = vsel %vm355, %v606, %v573
      %v610 = vsel %vm358, %v608, %v583
      %v612 = vsel %vm361, %v610, %v588
      %v632 = vunpack.c.l.b16 %v498
      %v633 = vunpack.c.l.b16 %v499
      %v634 = vunpack.c.l.b16 %v500
      %v635 = vunpack.c.l.b16 %v501
      %v636 = vunpack.c.l.b16 %v502
      %v637 = vunpack.c.l.b16 %v503
      %v638 = vunpack.c.l.b16 %v504
      %v639 = vunpack.c.l.b16 %v505
      %v640 = vunpack.c.l.b16 %v506
      %v641 = vunpack.c.l.b16 %v507
      %v642 = vunpack.c.l.b16 %v508
      %v643 = vunpack.c.l.b16 %v509
      %v644 = vunpack.c.l.b16 %v510
      %v645 = vunpack.c.l.b16 %v511
      %v646 = vunpack.c.l.b16 %v512
      %v647 = vunpack.c.l.b16 %v513
      %v648 = vunpack.c.l.b16 %v514
      %v649 = vunpack.c.l.b16 %v515
      %v650 = vpack.c.b16 %v633, %v632
      %v651 = vpack.c.b16 %v635, %v634
      %v652 = vpack.c.b16 %v637, %v636
      %v653 = vpack.c.b16 %v639, %v638
      %v654 = vpack.c.b16 %v641, %v640
      %v655 = vpack.c.b16 %v643, %v642
      %v656 = vpack.c.b16 %v645, %v644
      %v657 = vpack.c.b16 %v647, %v646
      %v658 = vpack.c.b16 %v649, %v648
      %v669 = vsel %vm345, %v597, 0
      %671 = vmatprep.subr.bf16.mxu0 0
      %672 = vmatpush1.bf16.msra.mxu0 %v657
      %673 = vmatprep.subr.bf16.mxu0 0
      %674 = vmatpush1.bf16.msra.mxu0 %v656
      %675 = vmatprep.subr.bf16.mxu0 0
      %676 = vmatpush1.bf16.msra.mxu0 %v655
      %677 = vmatprep.subr.bf16.mxu0 0
      %678 = vmatpush1.bf16.msra.mxu0 %v654
      %679 = vmatprep.subr.bf16.mxu0 0
      %680 = vmatpush1.bf16.msra.mxu0 %v653
      %681 = vmatprep.subr.bf16.mxu0 0
      %682 = vmatpush1.bf16.msra.mxu0 %v652
      %683 = vmatprep.subr.bf16.mxu0 0
      %684 = vmatpush1.bf16.msra.mxu0 %v651
      %685 = vmatprep.subr.bf16.mxu0 0
      %686 = vmatpush1.bf16.msra.mxu0 %v650
      %687 = vmatprep.subr.bf16.mxu0 0
      %688 = vmatpush2.bf16.msra.mxu0 0
      %689 = vmatprep.subr.bf16.mxu0 0
      %690 = vmatpush2.bf16.msra.mxu0 0
      %691 = vmatprep.subr.bf16.mxu0 0
      %692 = vmatpush2.bf16.msra.mxu0 0
      %693 = vmatprep.subr.bf16.mxu0 0
      %694 = vmatpush2.bf16.msra.mxu0 0
      %695 = vmatprep.subr.bf16.mxu0 0
      %696 = vmatpush2.bf16.msra.mxu0 0
      %697 = vmatprep.subr.bf16.mxu0 0
      %698 = vmatpush2.bf16.msra.mxu0 0
      %699 = vmatprep.subr.bf16.mxu0 0
      %700 = vmatpush2.bf16.msra.mxu0 0
      %701 = vmatprep.subr.bf16.mxu0 0
      %702 = vmatpush2.bf16.msra.mxu0 %v658
      %703 = vmatprep.mubr.bf16.mxu0 %v669
      %704 = vmatmul.mubr.bf16.gmra.mxu0 %v612
      %v705 = vpop.f32.mrf.mxu0
      %v706 = vadd.f32 %v516, %v705
      %v707 = vpop.f32.mrf.mxu0
      %v708 = vpop.f32.mrf.mxu0
      %v709 = vpop.f32.mrf.mxu0
      %710 = vdwg.mxu0
      %v711 = vld [vmem:[#allocation3] sm:$0x1]
      %v712 = vadd.f32 %v706, %v711
      %v713 = vmax.f32 %v712, 0.0
      %v714 = vpack.c.bf16 %v713, %v713
      %vm715 = vsmask.f32 256
      %vm716 = vmand %vm477, %vm715
      %v717 = vld [vmem:[%s244] sm:$0x1]
      %v718 = vsel %vm716, %v714, %v717
      %719 = vst [vmem:[%s244] sm:$0x1] %v718
      %p720 = scmp.lt.s32.totalorder %s17, 1
      %s721 = scalar_select %p720, %s17, 1
      %s722 = scalar_lea.vmem %s6, %s721
      // Predicated region
      $region45: #{forward.12} parent=43 // pred_check
        %p723 = pneg %p166
      $region46: #{forward.12} parent=43 // pred_check_branch
        %725 = sbr.rel (%p723) target = $region48
      $region47: #{forward.12} parent=43 // pred_region
        _
      $region48: #{forward.12} parent=43 // pred_fallthru
        _
    $region44: #{forward.12} parent=5 // pred_fallthru
      _
    %p726 = scmp.le.s32.totalorder 2, %s12
    // Predicated region
    $region49: #{forward.12} parent=5 // pred_check
      %p727 = pneg %p726
    $region50: #{forward.12} parent=5 // pred_check_branch
      %729 = sbr.rel (%p727) target = $region52
    $region51: #{forward.12} parent=5 // pred_region
      %s730 = ssub.s32 %s12, 2
      // Predicated region
      $region53: #{forward.12} parent=51 // pred_check
        %p731 = pneg %p172
      $region54: #{forward.12} parent=51 // pred_check_branch
        %733 = sbr.rel (%p731) target = $region56
      $region55: #{forward.12} parent=51 // pred_region
        %p734 = scmp.lt.s32.totalorder %s18, 1
        %s735 = scalar_select %p734, %s18, 1
        %s736 = scalar_lea.vmem %s6, %s735
      $region56: #{forward.12} parent=51 // pred_fallthru
        _
    $region52: #{forward.12} parent=5 // pred_fallthru
      _
  $region6: #{forward.12} parent=0 // loop_footer
    %s16 = sadd.s32 1, %s12
  $region7: #{forward.12} parent=0 // loop_footer_branch
    %11 = sbr.rel target = $region3
  $region8: #{forward.12} parent=0 // loop_exit
    _

// kernel: forward.11
$region0: #{forward.11}
  #allocation0 [shape = 'u32[]', space=smem, size = 0x4, offset = 0x4, fixed_abs, tag = 'smem constant byte address 0x4 - core index']
  #allocation1 [shape = 'u32[144,128]{1,0:T(1,128)}', space=vmem, size = 0x12000, scoped, tag = 'internal scratch']
  #allocation2 [shape = 'bf16[3,3,16]{2,1,0:T(4,128)(2,1)}', space=vmem, size = 0xc00, scoped, tag = 'scratch operand']
  #allocation3 [shape = 'f32[1,1,16]{2,1,0:T(1,128)}', space=vmem, size = 0x200, scoped, tag = 'scratch operand']
  %s0 = inlined_call_operand.vmem [shape: bf16[2,4,2,32], index: 0, kind: input, shape index: {}]
  %s1 = inlined_call_operand.vmem [shape: bf16[144,32], index: 1, kind: input, shape index: {}]
  %s2 = inlined_call_operand.vmem [shape: f32[1,16], index: 2, kind: input, shape index: {}]
  %s3 = inlined_call_operand.vmem [shape: f32[1,16], index: 3, kind: input, shape index: {}]
  %s4 = inlined_call_operand.vmem [shape: bf16[144,16], index: 4, kind: input, shape index: {}]
  %s5 = inlined_call_operand.vmem [shape: f32[1,16], index: 5, kind: input, shape index: {}]
  %s6 = inlined_call_operand.vmem [shape: bf16[2,1,1,16], index: 6, kind: output, shape index: {}]
  %s7 = sld [smem:[#allocation0]]
  $region57: #{forward.11} parent=0
    _
  %s9 = ssub.s32 1, %s7
  %s10 = scalar_select 0, %s9, %s7
  loop: start=0, step=1, limit=4
  $region2: #{forward.11} parent=0 // loop_pre_header
    _
  $region3: #{forward.11} parent=0 // loop_header
    %s12 = sphi 0, %s16
    %p13 = scmp.ge.s32.totalorder %s12, 4
    %s22 = sphi 0, %s24
    %s25 = sphi 0, %s22
    %s26 = sphi 0, %s25
    %s42 = sphi 0, %s26
    %s46 = sphi 0, %s46
    %s48 = sphi 0, %s46
    %s49 = sphi 0, %s48
    %s63 = sphi 0, %s49
    %s67 = sphi 0, %s67
    %s69 = sphi 0, %s67
    %s70 = sphi 0, %s69
    %s84 = sphi 0, %s70
    %s88 = sphi 0, %s88
    %s90 = sphi 0, %s88
    %s91 = sphi 0, %s90
    %s105 = sphi 0, %s91
    %s109 = sphi 0, %s109
    %s111 = sphi 0, %s109
    %s112 = sphi 0, %s111
    %s126 = sphi 0, %s112
    %s130 = sphi 0, %s130
    %s132 = sphi 0, %s130
    %s133 = sphi 0, %s132
    %s147 = sphi 0, %s133
    %s153 = sphi 0, %s155
    %s156 = sphi 0, %s153
    %s157 = sphi 0, %s156
    %s173 = sphi 0, %s157
  $region4: #{forward.11} parent=0 // loop_header_branch
    %15 = sbr.rel (%p13) target = $region8
  $region5: #{forward.11} parent=0 // loop_body
    %s17 = ssub.s32 %s12, 1
    %s18 = ssub.s32 %s12, 2
    %s19 = sadd.s32 %s12, 1
    %s20 = ssub.s32 %s12, %s19
    %p21 = scmp.eq.s32.totalorder %s20, 0
    %s23 = sadd.s32 %s22, 1
    %s24 = scalar_select %p21, %s22, %s23
    %p27 = pneg %p21
    %p28 = scmp.eq.s32.totalorder %s12, 1
    %p29 = por %p27, %p28
    %p30 = scmp.ne.s32.totalorder %s22, %s25
    %p31 = scmp.eq.s32.totalorder %s12, 0
    %p32 = por %p30, %p31
    %p33 = scmp.ne.s32.totalorder %s22, %s25
    %p34 = scmp.eq.s32.totalorder %s17, 1
    %p35 = por %p33, %p34
    %p36 = scmp.ne.s32.totalorder %s25, %s26
    %p37 = scmp.eq.s32.totalorder %s17, 0
    %p38 = por %p36, %p37
    %p39 = scmp.ne.s32.totalorder %s25, %s26
    %p40 = scmp.eq.s32.totalorder %s18, 1
    %p41 = por %p39, %p40
    %p43 = scmp.ne.s32.totalorder %s26, %s42
    %p44 = scmp.eq.s32.totalorder %s18, 0
    %p45 = por %p43, %p44
    %s47 = sadd.s32 %s46, 1
    %p50 = scmp.eq.s32.totalorder %s12, 1
    %p51 = scmp.ne.s32.totalorder %s46, %s48
    %p52 = scmp.eq.s32.totalorder %s12, 0
    %p53 = por %p51, %p52
    %p54 = scmp.ne.s32.totalorder %s46, %s48
    %p55 = scmp.eq.s32.totalorder %s17, 1
    %p56 = por %p54, %p55
    %p57 = scmp.ne.s32.totalorder %s48, %s49
    %p58 = scmp.eq.s32.totalorder %s17, 0
    %p59 = por %p57, %p58
    %p60 = scmp.ne.s32.totalorder %s48, %s49
    %p61 = scmp.eq.s32.totalorder %s18, 1
    %p62 = por %p60, %p61
    %p64 = scmp.ne.s32.totalorder %s49, %s63
    %p65 = scmp.eq.s32.totalorder %s18, 0
    %p66 = por %p64, %p65
    %s68 = sadd.s32 %s67, 1
    %p71 = scmp.eq.s32.totalorder %s12, 1
    %p72 = scmp.ne.s32.totalorder %s67, %s69
    %p73 = scmp.eq.s32.totalorder %s12, 0
    %p74 = por %p72, %p73
    %p75 = scmp.ne.s32.totalorder %s67, %s69
    %p76 = scmp.eq.s32.totalorder %s17, 1
    %p77 = por %p75, %p76
    %p78 = scmp.ne.s32.totalorder %s69, %s70
    %p79 = scmp.eq.s32.totalorder %s17, 0
    %p80 = por %p78, %p79
    %p81 = scmp.ne.s32.totalorder %s69, %s70
    %p82 = scmp.eq.s32.totalorder %s18, 1
    %p83 = por %p81, %p82
    %p85 = scmp.ne.s32.totalorder %s70, %s84
    %p86 = scmp.eq.s32.totalorder %s18, 0
    %p87 = por %p85, %p86
    %s89 = sadd.s32 %s88, 1
    %p92 = scmp.eq.s32.totalorder %s12, 1
    %p93 = scmp.ne.s32.totalorder %s88, %s90
    %p94 = scmp.eq.s32.totalorder %s12, 0
    %p95 = por %p93, %p94
    %p96 = scmp.ne.s32.totalorder %s88, %s90
    %p97 = scmp.eq.s32.totalorder %s17, 1
    %p98 = por %p96, %p97
    %p99 = scmp.ne.s32.totalorder %s90, %s91
    %p100 = scmp.eq.s32.totalorder %s17, 0
    %p101 = por %p99, %p100
    %p102 = scmp.ne.s32.totalorder %s90, %s91
    %p103 = scmp.eq.s32.totalorder %s18, 1
    %p104 = por %p102, %p103
    %p106 = scmp.ne.s32.totalorder %s91, %s105
    %p107 = scmp.eq.s32.totalorder %s18, 0
    %p108 = por %p106, %p107
    %s110 = sadd.s32 %s109, 1
    %p113 = scmp.eq.s32.totalorder %s12, 1
    %p114 = scmp.ne.s32.totalorder %s109, %s111
    %p115 = scmp.eq.s32.totalorder %s12, 0
    %p116 = por %p114, %p115
    %p117 = scmp.ne.s32.totalorder %s109, %s111
    %p118 = scmp.eq.s32.totalorder %s17, 1
    %p119 = por %p117, %p118
    %p120 = scmp.ne.s32.totalorder %s111, %s112
    %p121 = scmp.eq.s32.totalorder %s17, 0
    %p122 = por %p120, %p121
    %p123 = scmp.ne.s32.totalorder %s111, %s112
    %p124 = scmp.eq.s32.totalorder %s18, 1
    %p125 = por %p123, %p124
    %p127 = scmp.ne.s32.totalorder %s112, %s126
    %p128 = scmp.eq.s32.totalorder %s18, 0
    %p129 = por %p127, %p128
    %s131 = sadd.s32 %s130, 1
    %p134 = scmp.eq.s32.totalorder %s12, 1
    %p135 = scmp.ne.s32.totalorder %s130, %s132
    %p136 = scmp.eq.s32.totalorder %s12, 0
    %p137 = por %p135, %p136
    %p138 = scmp.ne.s32.totalorder %s130, %s132
    %p139 = scmp.eq.s32.totalorder %s17, 1
    %p140 = por %p138, %p139
    %p141 = scmp.ne.s32.totalorder %s132, %s133
    %p142 = scmp.eq.s32.totalorder %s17, 0
    %p143 = por %p141, %p142
    %p144 = scmp.ne.s32.totalorder %s132, %s133
    %p145 = scmp.eq.s32.totalorder %s18, 1
    %p146 = por %p144, %p145
    %p148 = scmp.ne.s32.totalorder %s133, %s147
    %p149 = scmp.eq.s32.totalorder %s18, 0
    %p150 = por %p148, %p149
    %s151 = ssub.s32 %s12, %s19
    %p152 = scmp.eq.s32.totalorder %s151, 0
    %s154 = sadd.s32 %s153, 1
    %s155 = scalar_select %p152, %s153, %s154
    %p158 = pneg %p152
    %p159 = scmp.eq.s32.totalorder %s12, 1
    %p160 = por %p158, %p159
    %p161 = scmp.ne.s32.totalorder %s153, %s156
    %p162 = scmp.eq.s32.totalorder %s12, 0
    %p163 = por %p161, %p162
    %p164 = scmp.ne.s32.totalorder %s153, %s156
    %p165 = scmp.eq.s32.totalorder %s17, 1
    %p166 = por %p164, %p165
    %p167 = scmp.ne.s32.totalorder %s156, %s157
    %p168 = scmp.eq.s32.totalorder %s17, 0
    %p169 = por %p167, %p168
    %p170 = scmp.ne.s32.totalorder %s156, %s157
    %p171 = scmp.eq.s32.totalorder %s18, 1
    %p172 = por %p170, %p171
    %p174 = scmp.ne.s32.totalorder %s157, %s173
    %p175 = scmp.eq.s32.totalorder %s18, 0
    %p176 = por %p174, %p175
    %p177 = scmp.le.s32.totalorder 1, %s12
    %p178 = scmp.lt.s32.totalorder %s12, 3
    %p179 = pnand %p177, %p178
    %p180 = pneg %p179
    // Predicated region
    $region9: #{forward.11} parent=5 // pred_check
      _
    $region10: #{forward.11} parent=5 // pred_check_branch
      %182 = sbr.rel (%p179) target = $region12
    $region11: #{forward.11} parent=5 // pred_region
      %s183 = ssub.s32 %s12, 1
      // Predicated region
      $region13: #{forward.11} parent=11 // pred_check
        %p184 = pneg %p59
      $region14: #{forward.11} parent=11 // pred_check_branch
        %186 = sbr.rel (%p184) target = $region16
      $region15: #{forward.11} parent=11 // pred_region
        _
      $region16: #{forward.11} parent=11 // pred_fallthru
        _
      // Predicated region
      $region17: #{forward.11} parent=11 // pred_check
        %p187 = pneg %p80
      $region18: #{forward.11} parent=11 // pred_check_branch
        %189 = sbr.rel (%p187) target = $region20
      $region19: #{forward.11} parent=11 // pred_region
        _
      $region20: #{forward.11} parent=11 // pred_fallthru
        _
      // Predicated region
      $region21: #{forward.11} parent=11 // pred_check
        %p190 = pneg %p101
      $region22: #{forward.11} parent=11 // pred_check_branch
        %192 = sbr.rel (%p190) target = $region24
      $region23: #{forward.11} parent=11 // pred_region
        _
      $region24: #{forward.11} parent=11 // pred_fallthru
        _
      // Predicated region
      $region25: #{forward.11} parent=11 // pred_check
        %p193 = pneg %p122
      $region26: #{forward.11} parent=11 // pred_check_branch
        %195 = sbr.rel (%p193) target = $region28
      $region27: #{forward.11} parent=11 // pred_region
        _
      $region28: #{forward.11} parent=11 // pred_fallthru
        _
      // Predicated region
      $region29: #{forward.11} parent=11 // pred_check
        %p196 = pneg %p143
      $region30: #{forward.11} parent=11 // pred_check_branch
        %198 = sbr.rel (%p196) target = $region32
      $region31: #{forward.11} parent=11 // pred_region
        _
      $region32: #{forward.11} parent=11 // pred_fallthru
        _
    $region12: #{forward.11} parent=5 // pred_fallthru
      _
    %p199 = scmp.lt.s32.totalorder %s12, 2
    // Predicated region
    $region33: #{forward.11} parent=5 // pred_check
      %p200 = pneg %p199
    $region34: #{forward.11} parent=5 // pred_check_branch
      %202 = sbr.rel (%p200) target = $region36
    $region35: #{forward.11} parent=5 // pred_region
      // Predicated region
      $region37: #{forward.11} parent=35 // pred_check
        %p203 = pneg %p32
      $region38: #{forward.11} parent=35 // pred_check_branch
        %205 = sbr.rel (%p203) target = $region40
      $region39: #{forward.11} parent=35 // pred_region
        %p206 = scmp.lt.s32.totalorder %s12, 1
        %s207 = scalar_select %p206, %s12, 1
        %s208 = smul.addr %s207, 4
        %s209 = scalar_lea.vmem %s0, %s208
      $region40: #{forward.11} parent=35 // pred_fallthru
        _
    $region36: #{forward.11} parent=5 // pred_fallthru
      _
    %p210 = scmp.le.s32.totalorder 1, %s12
    %p211 = scmp.lt.s32.totalorder %s12, 3
    %p212 = pnand %p210, %p211
    %p213 = pneg %p212
    // Predicated region
    $region41: #{forward.11} parent=5 // pred_check
      _
    $region42: #{forward.11} parent=5 // pred_check_branch
      %215 = sbr.rel (%p212) target = $region44
    $region43: #{forward.11} parent=5 // pred_region
      %s216 = ssub.s32 %s12, 1
      %p217 = scmp.lt.s32.totalorder %s17, 1
      %s218 = scalar_select %p217, %s17, 1
      %s219 = smul.addr %s218, 4
      %s220 = scalar_lea.vmem %s0, %s219
      %p221 = pneg %p38
      %p222 = pneg %p35
      %p223 = pneg %p59
      %p224 = pneg %p56
      %p225 = pneg %p80
      %p226 = pneg %p77
      %p227 = pneg %p101
      %p228 = pneg %p98
      %p229 = pneg %p122
      %p230 = pneg %p119
      %p231 = pneg %p143
      %p232 = pneg %p140
      %p233 = pneg %p169
      %p234 = pneg %p166
      %p235 = scmp.lt.s32.totalorder %s17, 1
      %s236 = scalar_select %p235, %s17, 1
      %s237 = scalar_lea.vmem %s6, %s236
      %p238 = scmp.lt.s32.totalorder %s17, 1
      %s239 = scalar_select %p238, %s17, 1
      %s240 = smul.addr %s239, 4
      %s241 = scalar_lea.vmem %s0, %s240
      %p242 = scmp.lt.s32.totalorder %s17, 1
      %s243 = scalar_select %p242, %s17, 1
      %s244 = scalar_lea.vmem %s6, %s243
      %v246 = vld [vmem:[%s1] sm:$0xf]
      %v247 = vld [vmem:[%s1 + $0x4] sm:$0xf]
      %v248 = vld [vmem:[%s1 + $0x8] sm:$0xf]
      %v249 = vld [vmem:[%s1 + $0xc] sm:$0xf]
      %v250 = vld [vmem:[%s1 + $0x10] sm:$0xf]
      %v251 = vld [vmem:[%s1 + $0x14] sm:$0xf]
      %v252 = vld [vmem:[%s1 + $0x18] sm:$0xf]
      %v253 = vld [vmem:[%s1 + $0x1c] sm:$0xf]
      %v254 = vld [vmem:[%s1 + $0x20] sm:$0xf]
      %v255 = vld [vmem:[%s1 + $0x24] sm:$0xf]
      %v256 = vld [vmem:[%s1 + $0x28] sm:$0xf]
      %v257 = vld [vmem:[%s1 + $0x2c] sm:$0xf]
      %v258 = vld [vmem:[%s1 + $0x30] sm:$0xf]
      %v259 = vld [vmem:[%s1 + $0x34] sm:$0xf]
      %v260 = vld [vmem:[%s1 + $0x38] sm:$0xf]
      %v261 = vld [vmem:[%s1 + $0x3c] sm:$0xf]
      %v262 = vld [vmem:[%s1 + $0x40] sm:$0xf]
      %v263 = vld [vmem:[%s1 + $0x44] sm:$0xf]
      %v264 = vld [vmem:[%s2] sm:$0x1]
      %v265 = vld [vmem:[%s3] sm:$0x1]
      %vm266 = vcmask 123904
      %vm267 = vsmask.f32 1280
      %vm268 = vmand %vm266, %vm267
      %v269 = vld [vmem:[#allocation2] sm:$0x3]
      %v270 = vsel %vm268, 0, %v269
      %271 = vst [vmem:[#allocation2] sm:$0x3] %v270
      %v272 = vld [vmem:[#allocation2 + $0x2] sm:$0x3]
      %v273 = vsel %vm268, 0, %v272
      %274 = vst [vmem:[#allocation2 + $0x2] sm:$0x3] %v273
      %v275 = vld [vmem:[#allocation2 + $0x4] sm:$0x3]
      %v276 = vsel %vm268, 0, %v275
      %277 = vst [vmem:[#allocation2 + $0x4] sm:$0x3] %v276
      %v278 = vld [vmem:[%s241] sm:$0x1]
      %s279 = scalar_lea.vmem %s241, 1
      %v280 = vld [vmem:[%s279] sm:$0x1]
      %s281 = scalar_lea.vmem %s241, 2
      %v282 = vld [vmem:[%s281] sm:$0x1]
      %v285 = vunpack.c.l.s4 1966171168
      %v286 = vunpack.c.0.s8 %v285
      %v287 = vlaneseq
      %v288 = vshrl.u32 %v287, 7
      %v289 = vsub.s32 %v286, %v288
      %v290 = vrot.slane %v278, %v289
      %v292 = vunpack.c.l.s4 1966171168
      %v293 = vunpack.c.0.s8 %v292
      %v294 = vlaneseq
      %v295 = vshrl.u32 %v294, 7
      %v296 = vsub.s32 %v293, %v295
      %v297 = vrot.slane %v290, %v296
      %v299 = vshrl.u32 %v297, 16
      %301 = vrot.lane.b32.xlu0 %v299, 32
      %v302 = vpop.permute.xlu0 %301
      %v305 = vunpack.c.l.s4 1966171168
      %v306 = vunpack.c.0.s8 %v305
      %v307 = vlaneseq
      %v308 = vshrl.u32 %v307, 7
      %v309 = vsub.s32 %v306, %v308
      %v310 = vrot.slane %v280, %v309
      %v312 = vunpack.c.l.s4 1966171168
      %v313 = vunpack.c.0.s8 %v312
      %v314 = vlaneseq
      %v315 = vshrl.u32 %v314, 7
      %v316 = vsub.s32 %v313, %v315
      %v317 = vrot.slane %v310, %v316
      %318 = vrot.lane.b32.xlu0 %v317, 48
      %v319 = vpop.permute.xlu0 %318
      %v321 = vshrl.u32 %v317, 16
      %323 = vrot.lane.b32.xlu0 %v321, 80
      %v324 = vpop.permute.xlu0 %323
      %v327 = vunpack.c.l.s4 1966171168
      %v328 = vunpack.c.0.s8 %v327
      %v329 = vlaneseq
      %v330 = vshrl.u32 %v329, 7
      %v331 = vsub.s32 %v328, %v330
      %v332 = vrot.slane %v282, %v331
      %v334 = vunpack.c.l.s4 1966171168
      %v335 = vunpack.c.0.s8 %v334
      %v336 = vlaneseq
      %v337 = vshrl.u32 %v336, 7
      %v338 = vsub.s32 %v335, %v337
      %v339 = vrot.slane %v332, %v338
      %340 = vrot.lane.b32.xlu0 %v339, 96
      %v341 = vpop.permute.xlu0 %340
      %v343 = vshrl.u32 %v339, 16
      %vm345 = vcmask 130048
      %vm347 = vcmask 261120
      %v349 = vsel %vm347, %v278, %v302
      %vm350 = vcmask 392192
      %v352 = vsel %vm350, %v349, %v319
      %vm353 = vcmask 523264
      %v354 = vsel %vm353, %v352, %v319
      %vm355 = vcmask 654336
      %v357 = vsel %vm355, %v354, %v324
      %vm358 = vcmask 785408
      %v360 = vsel %vm358, %v357, %v341
      %vm361 = vcmask 916480
      %v362 = vsel %vm361, %v360, %v341
      %v382 = vunpack.c.l.b16 %v246
      %v383 = vunpack.c.l.b16 %v247
      %v384 = vunpack.c.l.b16 %v248
      %v385 = vunpack.c.l.b16 %v249
      %v386 = vunpack.c.l.b16 %v250
      %v387 = vunpack.c.l.b16 %v251
      %v388 = vunpack.c.l.b16 %v252
      %v389 = vunpack.c.l.b16 %v253
      %v390 = vunpack.c.l.b16 %v254
      %v391 = vunpack.c.l.b16 %v255
      %v392 = vunpack.c.l.b16 %v256
      %v393 = vunpack.c.l.b16 %v257
      %v394 = vunpack.c.l.b16 %v258
      %v395 = vunpack.c.l.b16 %v259
      %v396 = vunpack.c.l.b16 %v260
      %v397 = vunpack.c.l.b16 %v261
      %v398 = vunpack.c.l.b16 %v262
      %v399 = vunpack.c.l.b16 %v263
      %v400 = vpack.c.b16 %v383, %v382
      %v401 = vpack.c.b16 %v385, %v384
      %v402 = vpack.c.b16 %v387, %v386
      %v403 = vpack.c.b16 %v389, %v388
      %v404 = vpack.c.b16 %v391, %v390
      %v405 = vpack.c.b16 %v393, %v392
      %v406 = vpack.c.b16 %v395, %v394
      %v407 = vpack.c.b16 %v397, %v396
      %v408 = vpack.c.b16 %v399, %v398
      %v419 = vsel %vm345, %v343, 0
      %421 = vmatprep.subr.bf16.mxu0 0
      %422 = vmatpush1.bf16.msra.mxu0 %v407
      %423 = vmatprep.subr.bf16.mxu0 0
      %424 = vmatpush1.bf16.msra.mxu0 %v406
      %425 = vmatprep.subr.bf16.mxu0 0
      %426 = vmatpush1.bf16.msra.mxu0 %v405
      %427 = vmatprep.subr.bf16.mxu0 0
      %428 = vmatpush1.bf16.msra.mxu0 %v404
      %429 = vmatprep.subr.bf16.mxu0 0
      %430 = vmatpush1.bf16.msra.mxu0 %v403
      %431 = vmatprep.subr.bf16.mxu0 0
      %432 = vmatpush1.bf16.msra.mxu0 %v402
      %433 = vmatprep.subr.bf16.mxu0 0
      %434 = vmatpush1.bf16.msra.mxu0 %v401
      %435 = vmatprep.subr.bf16.mxu0 0
      %436 = vmatpush1.bf16.msra.mxu0 %v400
      %437 = vmatprep.subr.bf16.mxu0 0
      %438 = vmatpush2.bf16.msra.mxu0 0
      %439 = vmatprep.subr.bf16.mxu0 0
      %440 = vmatpush2.bf16.msra.mxu0 0
      %441 = vmatprep.subr.bf16.mxu0 0
      %442 = vmatpush2.bf16.msra.mxu0 0
      %443 = vmatprep.subr.bf16.mxu0 0
      %444 = vmatpush2.bf16.msra.mxu0 0
      %445 = vmatprep.subr.bf16.mxu0 0
      %446 = vmatpush2.bf16.msra.mxu0 0
      %447 = vmatprep.subr.bf16.mxu0 0
      %448 = vmatpush2.bf16.msra.mxu0 0
      %449 = vmatprep.subr.bf16.mxu0 0
      %450 = vmatpush2.bf16.msra.mxu0 0
      %451 = vmatprep.subr.bf16.mxu0 0
      %452 = vmatpush2.bf16.msra.mxu0 %v408
      %453 = vmatprep.mubr.bf16.mxu0 %v419
      %454 = vmatmul.mubr.bf16.gmra.mxu0 %v362
      %v455 = vpop.f32.mrf.mxu0
      %v456 = vadd.f32 0.0, %v455
      %v457 = vpop.f32.mrf.mxu0
      %v458 = vpop.f32.mrf.mxu0
      %v459 = vpop.f32.mrf.mxu0
      %460 = vdwg.mxu0
      %v461 = vadd.f32 %v456, %v264
      %v462 = vmax.f32 %v461, 0.0
      %v463 = vpack.c.bf16 %v462, %v462
      %v466 = vunpack.c.l.s4 1983009808
      %v467 = vunpack.c.0.s8 %v466
      %v468 = vlaneseq
      %v469 = vshrl.u32 %v468, 7
      %v470 = vsub.s32 %v467, %v469
      %v471 = vrot.slane %v463, %v470
      %v473 = vshll.u32 %v471, 16
      %s476 = scalar_lea.vmem [#allocation2], 2
      %vm477 = vcmask 122880
      %vm478 = vsmask.f32 7938
      %vm479 = vmand %vm477, %vm478
      %v480 = vld [vmem:[%s476] sm:$0x1]
      %v481 = vsel %vm479, %v473, %v480
      %482 = vst [vmem:[%s476] sm:$0x1] %v481
      %v484 = vlaneseq
      %v485 = vshrl.u32 %v484, 7
      %v486 = vsub.s32 0, %v485
      %v487 = vrot.slane %v265, %v486
      %488 = vrot.lane.b32.xlu0 %v487, 16
      %v489 = vpop.permute.xlu0 %488
      %v491 = vadd.f32 %v456, %v489
      %493 = vrot.lane.b32.xlu0 %v491, 112
      %v494 = vpop.permute.xlu0 %493
      %vm496 = vcmask 122880
      %497 = vst.msk [vmem:[#allocation3] sm:$0x1] %vm496, %v494
      %v498 = vld [vmem:[%s4] sm:$0xf]
      %v499 = vld [vmem:[%s4 + $0x4] sm:$0xf]
      %v500 = vld [vmem:[%s4 + $0x8] sm:$0xf]
      %v501 = vld [vmem:[%s4 + $0xc] sm:$0xf]
      %v502 = vld [vmem:[%s4 + $0x10] sm:$0xf]
      %v503 = vld [vmem:[%s4 + $0x14] sm:$0xf]
      %v504 = vld [vmem:[%s4 + $0x18] sm:$0xf]
      %v505 = vld [vmem:[%s4 + $0x1c] sm:$0xf]
      %v506 = vld [vmem:[%s4 + $0x20] sm:$0xf]
      %v507 = vld [vmem:[%s4 + $0x24] sm:$0xf]
      %v508 = vld [vmem:[%s4 + $0x28] sm:$0xf]
      %v509 = vld [vmem:[%s4 + $0x2c] sm:$0xf]
      %v510 = vld [vmem:[%s4 + $0x30] sm:$0xf]
      %v511 = vld [vmem:[%s4 + $0x34] sm:$0xf]
      %v512 = vld [vmem:[%s4 + $0x38] sm:$0xf]
      %v513 = vld [vmem:[%s4 + $0x3c] sm:$0xf]
      %v514 = vld [vmem:[%s4 + $0x40] sm:$0xf]
      %v515 = vld [vmem:[%s4 + $0x44] sm:$0xf]
      %v516 = vld [vmem:[%s5] sm:$0x1]
      %v517 = vld [vmem:[#allocation2] sm:$0x1]
      %v518 = vld [vmem:[#allocation2] sm:$0x2]
      %v519 = vld [vmem:[%s476] sm:$0x1]
      %v520 = vld [vmem:[%s476] sm:$0x2]
      %s521 = scalar_lea.vmem [#allocation2], 4
      %v522 = vld [vmem:[%s521] sm:$0x1]
      %v523 = vld [vmem:[%s521] sm:$0x2]
      %v526 = vunpack.c.l.s4 1983009808
      %v527 = vunpack.c.0.s8 %v526
      %v528 = vlaneseq
      %v529 = vshrl.u32 %v528, 7
      %v530 = vsub.s32 %v527, %v529
      %v531 = vrot.slane %v517, %v530
      %v533 = vshrl.u32 %v531, 16
      %535 = vrot.lane.b32.xlu0 %v533, 16
      %v536 = vpop.permute.xlu0 %535
      %v539 = vunpack.c.l.s4 1983009808
      %v540 = vunpack.c.0.s8 %v539
      %v541 = vlaneseq
      %v542 = vshrl.u32 %v541, 7
      %v543 = vsub.s32 %v540, %v542
      %v544 = vrot.slane %v518, %v543
      %v545 = vrot.slane %v544, 1
      %546 = vrot.lane.b32.xlu0 %v545, 32
      %v547 = vpop.permute.xlu0 %546
      %v550 = vunpack.c.l.s4 1983009808
      %v551 = vunpack.c.0.s8 %v550
      %v552 = vlaneseq
      %v553 = vshrl.u32 %v552, 7
      %v554 = vsub.s32 %v551, %v553
      %v555 = vrot.slane %v519, %v554
      %556 = vrot.lane.b32.xlu0 %v555, 48
      %v557 = vpop.permute.xlu0 %556
      %v559 = vshrl.u32 %v555, 16
      %561 = vrot.lane.b32.xlu0 %v559, 64
      %v562 = vpop.permute.xlu0 %561
      %v565 = vunpack.c.l.s4 1983009808
      %v566 = vunpack.c.0.s8 %v565
      %v567 = vlaneseq
      %v568 = vshrl.u32 %v567, 7
      %v569 = vsub.s32 %v566, %v568
      %v570 = vrot.slane %v520, %v569
      %v571 = vrot.slane %v570, 1
      %572 = vrot.lane.b32.xlu0 %v571, 80
      %v573 = vpop.permute.xlu0 %572
      %v576 = vunpack.c.l.s4 1983009808
      %v577 = vunpack.c.0.s8 %v576
      %v578 = vlaneseq
      %v579 = vshrl.u32 %v578, 7
      %v580 = vsub.s32 %v577, %v579
      %v581 = vrot.slane %v522, %v580
      %582 = vrot.lane.b32.xlu0 %v581, 96
      %v583 = vpop.permute.xlu0 %582
      %v585 = vshrl.u32 %v581, 16
      %587 = vrot.lane.b32.xlu0 %v585, 112
      %v588 = vpop.permute.xlu0 %587
      %v591 = vunpack.c.l.s4 1983009808
      %v592 = vunpack.c.0.s8 %v591
      %v593 = vlaneseq
      %v594 = vshrl.u32 %v593, 7
      %v595 = vsub.s32 %v592, %v594
      %v596 = vrot.slane %v523, %v595
      %v597 = vrot.slane %v596, 1
      %v600 = vsel %vm345, %v517, %v536
      %v602 = vsel %vm347, %v600, %v547
      %v604 = vsel %vm350, %v602, %v557
      %v606 = vsel %vm353, %v604, %v562
      %v608 = vsel %vm355, %v606, %v573
      %v610 = vsel %vm358, %v608, %v583
      %v612 = vsel %vm361, %v610, %v588
      %v632 = vunpack.c.l.b16 %v498
      %v633 = vunpack.c.l.b16 %v499
      %v634 = vunpack.c.l.b16 %v500
      %v635 = vunpack.c.l.b16 %v501
      %v636 = vunpack.c.l.b16 %v502
      %v637 = vunpack.c.l.b16 %v503
      %v638 = vunpack.c.l.b16 %v504
      %v639 = vunpack.c.l.b16 %v505
      %v640 = vunpack.c.l.b16 %v506
      %v641 = vunpack.c.l.b16 %v507
      %v642 = vunpack.c.l.b16 %v508
      %v643 = vunpack.c.l.b16 %v509
      %v644 = vunpack.c.l.b16 %v510
      %v645 = vunpack.c.l.b16 %v511
      %v646 = vunpack.c.l.b16 %v512
      %v647 = vunpack.c.l.b16 %v513
      %v648 = vunpack.c.l.b16 %v514
      %v649 = vunpack.c.l.b16 %v515
      %v650 = vpack.c.b16 %v633, %v632
      %v651 = vpack.c.b16 %v635, %v634
      %v652 = vpack.c.b16 %v637, %v636
      %v653 = vpack.c.b16 %v639, %v638
      %v654 = vpack.c.b16 %v641, %v640
      %v655 = vpack.c.b16 %v643, %v642
      %v656 = vpack.c.b16 %v645, %v644
      %v657 = vpack.c.b16 %v647, %v646
      %v658 = vpack.c.b16 %v649, %v648
      %v669 = vsel %vm345, %v597, 0
      %671 = vmatprep.subr.bf16.mxu0 0
      %672 = vmatpush1.bf16.msra.mxu0 %v657
      %673 = vmatprep.subr.bf16.mxu0 0
      %674 = vmatpush1.bf16.msra.mxu0 %v656
      %675 = vmatprep.subr.bf16.mxu0 0
      %676 = vmatpush1.bf16.msra.mxu0 %v655
      %677 = vmatprep.subr.bf16.mxu0 0
      %678 = vmatpush1.bf16.msra.mxu0 %v654
      %679 = vmatprep.subr.bf16.mxu0 0
      %680 = vmatpush1.bf16.msra.mxu0 %v653
      %681 = vmatprep.subr.bf16.mxu0 0
      %682 = vmatpush1.bf16.msra.mxu0 %v652
      %683 = vmatprep.subr.bf16.mxu0 0
      %684 = vmatpush1.bf16.msra.mxu0 %v651
      %685 = vmatprep.subr.bf16.mxu0 0
      %686 = vmatpush1.bf16.msra.mxu0 %v650
      %687 = vmatprep.subr.bf16.mxu0 0
      %688 = vmatpush2.bf16.msra.mxu0 0
      %689 = vmatprep.subr.bf16.mxu0 0
      %690 = vmatpush2.bf16.msra.mxu0 0
      %691 = vmatprep.subr.bf16.mxu0 0
      %692 = vmatpush2.bf16.msra.mxu0 0
      %693 = vmatprep.subr.bf16.mxu0 0
      %694 = vmatpush2.bf16.msra.mxu0 0
      %695 = vmatprep.subr.bf16.mxu0 0
      %696 = vmatpush2.bf16.msra.mxu0 0
      %697 = vmatprep.subr.bf16.mxu0 0
      %698 = vmatpush2.bf16.msra.mxu0 0
      %699 = vmatprep.subr.bf16.mxu0 0
      %700 = vmatpush2.bf16.msra.mxu0 0
      %701 = vmatprep.subr.bf16.mxu0 0
      %702 = vmatpush2.bf16.msra.mxu0 %v658
      %703 = vmatprep.mubr.bf16.mxu0 %v669
      %704 = vmatmul.mubr.bf16.gmra.mxu0 %v612
      %v705 = vpop.f32.mrf.mxu0
      %v706 = vadd.f32 %v516, %v705
      %v707 = vpop.f32.mrf.mxu0
      %v708 = vpop.f32.mrf.mxu0
      %v709 = vpop.f32.mrf.mxu0
      %710 = vdwg.mxu0
      %v711 = vld [vmem:[#allocation3] sm:$0x1]
      %v712 = vadd.f32 %v706, %v711
      %v713 = vmax.f32 %v712, 0.0
      %v714 = vpack.c.bf16 %v713, %v713
      %vm715 = vsmask.f32 256
      %vm716 = vmand %vm477, %vm715
      %v717 = vld [vmem:[%s244] sm:$0x1]
      %v718 = vsel %vm716, %v714, %v717
      %719 = vst [vmem:[%s244] sm:$0x1] %v718
      %p720 = scmp.lt.s32.totalorder %s17, 1
      %s721 = scalar_select %p720, %s17, 1
      %s722 = scalar_lea.vmem %s6, %s721
      // Predicated region
      $region45: #{forward.11} parent=43 // pred_check
        %p723 = pneg %p166
      $region46: #{forward.11} parent=43 // pred_check_branch
        %725 = sbr.rel (%p723) target = $region48
      $region47: #{forward.11} parent=43 // pred_region
        _
      $region48: #{forward.11} parent=43 // pred_fallthru
        _
    $region44: #{forward.11} parent=5 // pred_fallthru
      _
    %p726 = scmp.le.s32.totalorder 2, %s12
    // Predicated region
    $region49: #{forward.11} parent=5 // pred_check
      %p727 = pneg %p726
    $region50: #{forward.11} parent=5 // pred_check_branch
      %729 = sbr.rel (%p727) target = $region52
    $region51: #{forward.11} parent=5 // pred_region
      %s730 = ssub.s32 %s12, 2
      // Predicated region
      $region53: #{forward.11} parent=51 // pred_check
        %p731 = pneg %p172
      $region54: #{forward.11} parent=51 // pred_check_branch
        %733 = sbr.rel (%p731) target = $region56
      $region55: #{forward.11} parent=51 // pred_region
        %p734 = scmp.lt.s32.totalorder %s18, 1
        %s735 = scalar_select %p734, %s18, 1
        %s736 = scalar_lea.vmem %s6, %s735
      $region56: #{forward.11} parent=51 // pred_fallthru
        _
    $region52: #{forward.11} parent=5 // pred_fallthru
      _
  $region6: #{forward.11} parent=0 // loop_footer
    %s16 = sadd.s32 1, %s12
  $region7: #{forward.11} parent=0 // loop_footer_branch
    %11 = sbr.rel target = $region3
  $region8: #{forward.11} parent=0 // loop_exit
    _

// kernel: forward.14
$region0: #{forward.14}
  #allocation0 [shape = 'u32[]', space=smem, size = 0x4, offset = 0x4, fixed_abs, tag = 'smem constant byte address 0x4 - core index']
  #allocation1 [shape = 'u32[144,128]{1,0:T(1,128)}', space=vmem, size = 0x12000, scoped, tag = 'internal scratch']
  #allocation2 [shape = 'bf16[3,3,32]{2,1,0:T(4,128)(2,1)}', space=vmem, size = 0xc00, scoped, tag = 'scratch operand']
  #allocation3 [shape = 'f32[1,1,32]{2,1,0:T(1,128)}', space=vmem, size = 0x200, scoped, tag = 'scratch operand']
  %s0 = inlined_call_operand.vmem [shape: bf16[2,3,2,32], index: 0, kind: input, shape index: {}]
  %s1 = inlined_call_operand.vmem [shape: bf16[144,64], index: 1, kind: input, shape index: {}]
  %s2 = inlined_call_operand.vmem [shape: f32[1,32], index: 2, kind: input, shape index: {}]
  %s3 = inlined_call_operand.vmem [shape: f32[1,32], index: 3, kind: input, shape index: {}]
  %s4 = inlined_call_operand.vmem [shape: bf16[288,32], index: 4, kind: input, shape index: {}]
  %s5 = inlined_call_operand.vmem [shape: f32[1,32], index: 5, kind: input, shape index: {}]
  %s6 = inlined_call_operand.vmem [shape: bf16[2,1,1,32], index: 6, kind: output, shape index: {}]
  %s7 = sld [smem:[#allocation0]]
  $region57: #{forward.14} parent=0
    _
  %s9 = ssub.s32 1, %s7
  %s10 = scalar_select 0, %s9, %s7
  loop: start=0, step=1, limit=4
  $region2: #{forward.14} parent=0 // loop_pre_header
    _
  $region3: #{forward.14} parent=0 // loop_header
    %s12 = sphi 0, %s16
    %p13 = scmp.ge.s32.totalorder %s12, 4
    %s22 = sphi 0, %s24
    %s25 = sphi 0, %s22
    %s26 = sphi 0, %s25
    %s42 = sphi 0, %s26
    %s46 = sphi 0, %s46
    %s48 = sphi 0, %s46
    %s49 = sphi 0, %s48
    %s63 = sphi 0, %s49
    %s67 = sphi 0, %s67
    %s69 = sphi 0, %s67
    %s70 = sphi 0, %s69
    %s84 = sphi 0, %s70
    %s88 = sphi 0, %s88
    %s90 = sphi 0, %s88
    %s91 = sphi 0, %s90
    %s105 = sphi 0, %s91
    %s109 = sphi 0, %s109
    %s111 = sphi 0, %s109
    %s112 = sphi 0, %s111
    %s126 = sphi 0, %s112
    %s130 = sphi 0, %s130
    %s132 = sphi 0, %s130
    %s133 = sphi 0, %s132
    %s147 = sphi 0, %s133
    %s153 = sphi 0, %s155
    %s156 = sphi 0, %s153
    %s157 = sphi 0, %s156
    %s173 = sphi 0, %s157
  $region4: #{forward.14} parent=0 // loop_header_branch
    %15 = sbr.rel (%p13) target = $region8
  $region5: #{forward.14} parent=0 // loop_body
    %s17 = ssub.s32 %s12, 1
    %s18 = ssub.s32 %s12, 2
    %s19 = sadd.s32 %s12, 1
    %s20 = ssub.s32 %s12, %s19
    %p21 = scmp.eq.s32.totalorder %s20, 0
    %s23 = sadd.s32 %s22, 1
    %s24 = scalar_select %p21, %s22, %s23
    %p27 = pneg %p21
    %p28 = scmp.eq.s32.totalorder %s12, 1
    %p29 = por %p27, %p28
    %p30 = scmp.ne.s32.totalorder %s22, %s25
    %p31 = scmp.eq.s32.totalorder %s12, 0
    %p32 = por %p30, %p31
    %p33 = scmp.ne.s32.totalorder %s22, %s25
    %p34 = scmp.eq.s32.totalorder %s17, 1
    %p35 = por %p33, %p34
    %p36 = scmp.ne.s32.totalorder %s25, %s26
    %p37 = scmp.eq.s32.totalorder %s17, 0
    %p38 = por %p36, %p37
    %p39 = scmp.ne.s32.totalorder %s25, %s26
    %p40 = scmp.eq.s32.totalorder %s18, 1
    %p41 = por %p39, %p40
    %p43 = scmp.ne.s32.totalorder %s26, %s42
    %p44 = scmp.eq.s32.totalorder %s18, 0
    %p45 = por %p43, %p44
    %s47 = sadd.s32 %s46, 1
    %p50 = scmp.eq.s32.totalorder %s12, 1
    %p51 = scmp.ne.s32.totalorder %s46, %s48
    %p52 = scmp.eq.s32.totalorder %s12, 0
    %p53 = por %p51, %p52
    %p54 = scmp.ne.s32.totalorder %s46, %s48
    %p55 = scmp.eq.s32.totalorder %s17, 1
    %p56 = por %p54, %p55
    %p57 = scmp.ne.s32.totalorder %s48, %s49
    %p58 = scmp.eq.s32.totalorder %s17, 0
    %p59 = por %p57, %p58
    %p60 = scmp.ne.s32.totalorder %s48, %s49
    %p61 = scmp.eq.s32.totalorder %s18, 1
    %p62 = por %p60, %p61
    %p64 = scmp.ne.s32.totalorder %s49, %s63
    %p65 = scmp.eq.s32.totalorder %s18, 0
    %p66 = por %p64, %p65
    %s68 = sadd.s32 %s67, 1
    %p71 = scmp.eq.s32.totalorder %s12, 1
    %p72 = scmp.ne.s32.totalorder %s67, %s69
    %p73 = scmp.eq.s32.totalorder %s12, 0
    %p74 = por %p72, %p73
    %p75 = scmp.ne.s32.totalorder %s67, %s69
    %p76 = scmp.eq.s32.totalorder %s17, 1
    %p77 = por %p75, %p76
    %p78 = scmp.ne.s32.totalorder %s69, %s70
    %p79 = scmp.eq.s32.totalorder %s17, 0
    %p80 = por %p78, %p79
    %p81 = scmp.ne.s32.totalorder %s69, %s70
    %p82 = scmp.eq.s32.totalorder %s18, 1
    %p83 = por %p81, %p82
    %p85 = scmp.ne.s32.totalorder %s70, %s84
    %p86 = scmp.eq.s32.totalorder %s18, 0
    %p87 = por %p85, %p86
    %s89 = sadd.s32 %s88, 1
    %p92 = scmp.eq.s32.totalorder %s12, 1
    %p93 = scmp.ne.s32.totalorder %s88, %s90
    %p94 = scmp.eq.s32.totalorder %s12, 0
    %p95 = por %p93, %p94
    %p96 = scmp.ne.s32.totalorder %s88, %s90
    %p97 = scmp.eq.s32.totalorder %s17, 1
    %p98 = por %p96, %p97
    %p99 = scmp.ne.s32.totalorder %s90, %s91
    %p100 = scmp.eq.s32.totalorder %s17, 0
    %p101 = por %p99, %p100
    %p102 = scmp.ne.s32.totalorder %s90, %s91
    %p103 = scmp.eq.s32.totalorder %s18, 1
    %p104 = por %p102, %p103
    %p106 = scmp.ne.s32.totalorder %s91, %s105
    %p107 = scmp.eq.s32.totalorder %s18, 0
    %p108 = por %p106, %p107
    %s110 = sadd.s32 %s109, 1
    %p113 = scmp.eq.s32.totalorder %s12, 1
    %p114 = scmp.ne.s32.totalorder %s109, %s111
    %p115 = scmp.eq.s32.totalorder %s12, 0
    %p116 = por %p114, %p115
    %p117 = scmp.ne.s32.totalorder %s109, %s111
    %p118 = scmp.eq.s32.totalorder %s17, 1
    %p119 = por %p117, %p118
    %p120 = scmp.ne.s32.totalorder %s111, %s112
    %p121 = scmp.eq.s32.totalorder %s17, 0
    %p122 = por %p120, %p121
    %p123 = scmp.ne.s32.totalorder %s111, %s112
    %p124 = scmp.eq.s32.totalorder %s18, 1
    %p125 = por %p123, %p124
    %p127 = scmp.ne.s32.totalorder %s112, %s126
    %p128 = scmp.eq.s32.totalorder %s18, 0
    %p129 = por %p127, %p128
    %s131 = sadd.s32 %s130, 1
    %p134 = scmp.eq.s32.totalorder %s12, 1
    %p135 = scmp.ne.s32.totalorder %s130, %s132
    %p136 = scmp.eq.s32.totalorder %s12, 0
    %p137 = por %p135, %p136
    %p138 = scmp.ne.s32.totalorder %s130, %s132
    %p139 = scmp.eq.s32.totalorder %s17, 1
    %p140 = por %p138, %p139
    %p141 = scmp.ne.s32.totalorder %s132, %s133
    %p142 = scmp.eq.s32.totalorder %s17, 0
    %p143 = por %p141, %p142
    %p144 = scmp.ne.s32.totalorder %s132, %s133
    %p145 = scmp.eq.s32.totalorder %s18, 1
    %p146 = por %p144, %p145
    %p148 = scmp.ne.s32.totalorder %s133, %s147
    %p149 = scmp.eq.s32.totalorder %s18, 0
    %p150 = por %p148, %p149
    %s151 = ssub.s32 %s12, %s19
    %p152 = scmp.eq.s32.totalorder %s151, 0
    %s154 = sadd.s32 %s153, 1
    %s155 = scalar_select %p152, %s153, %s154
    %p158 = pneg %p152
    %p159 = scmp.eq.s32.totalorder %s12, 1
    %p160 = por %p158, %p159
    %p161 = scmp.ne.s32.totalorder %s153, %s156
    %p162 = scmp.eq.s32.totalorder %s12, 0
    %p163 = por %p161, %p162
    %p164 = scmp.ne.s32.totalorder %s153, %s156
    %p165 = scmp.eq.s32.totalorder %s17, 1
    %p166 = por %p164, %p165
    %p167 = scmp.ne.s32.totalorder %s156, %s157
    %p168 = scmp.eq.s32.totalorder %s17, 0
    %p169 = por %p167, %p168
    %p170 = scmp.ne.s32.totalorder %s156, %s157
    %p171 = scmp.eq.s32.totalorder %s18, 1
    %p172 = por %p170, %p171
    %p174 = scmp.ne.s32.totalorder %s157, %s173
    %p175 = scmp.eq.s32.totalorder %s18, 0
    %p176 = por %p174, %p175
    %p177 = scmp.le.s32.totalorder 1, %s12
    %p178 = scmp.lt.s32.totalorder %s12, 3
    %p179 = pnand %p177, %p178
    %p180 = pneg %p179
    // Predicated region
    $region9: #{forward.14} parent=5 // pred_check
      _
    $region10: #{forward.14} parent=5 // pred_check_branch
      %182 = sbr.rel (%p179) target = $region12
    $region11: #{forward.14} parent=5 // pred_region
      %s183 = ssub.s32 %s12, 1
      // Predicated region
      $region13: #{forward.14} parent=11 // pred_check
        %p184 = pneg %p59
      $region14: #{forward.14} parent=11 // pred_check_branch
        %186 = sbr.rel (%p184) target = $region16
      $region15: #{forward.14} parent=11 // pred_region
        _
      $region16: #{forward.14} parent=11 // pred_fallthru
        _
      // Predicated region
      $region17: #{forward.14} parent=11 // pred_check
        %p187 = pneg %p80
      $region18: #{forward.14} parent=11 // pred_check_branch
        %189 = sbr.rel (%p187) target = $region20
      $region19: #{forward.14} parent=11 // pred_region
        _
      $region20: #{forward.14} parent=11 // pred_fallthru
        _
      // Predicated region
      $region21: #{forward.14} parent=11 // pred_check
        %p190 = pneg %p101
      $region22: #{forward.14} parent=11 // pred_check_branch
        %192 = sbr.rel (%p190) target = $region24
      $region23: #{forward.14} parent=11 // pred_region
        _
      $region24: #{forward.14} parent=11 // pred_fallthru
        _
      // Predicated region
      $region25: #{forward.14} parent=11 // pred_check
        %p193 = pneg %p122
      $region26: #{forward.14} parent=11 // pred_check_branch
        %195 = sbr.rel (%p193) target = $region28
      $region27: #{forward.14} parent=11 // pred_region
        _
      $region28: #{forward.14} parent=11 // pred_fallthru
        _
      // Predicated region
      $region29: #{forward.14} parent=11 // pred_check
        %p196 = pneg %p143
      $region30: #{forward.14} parent=11 // pred_check_branch
        %198 = sbr.rel (%p196) target = $region32
      $region31: #{forward.14} parent=11 // pred_region
        _
      $region32: #{forward.14} parent=11 // pred_fallthru
        _
    $region12: #{forward.14} parent=5 // pred_fallthru
      _
    %p199 = scmp.lt.s32.totalorder %s12, 2
    // Predicated region
    $region33: #{forward.14} parent=5 // pred_check
      %p200 = pneg %p199
    $region34: #{forward.14} parent=5 // pred_check_branch
      %202 = sbr.rel (%p200) target = $region36
    $region35: #{forward.14} parent=5 // pred_region
      // Predicated region
      $region37: #{forward.14} parent=35 // pred_check
        %p203 = pneg %p32
      $region38: #{forward.14} parent=35 // pred_check_branch
        %205 = sbr.rel (%p203) target = $region40
      $region39: #{forward.14} parent=35 // pred_region
        %p206 = scmp.lt.s32.totalorder %s12, 1
        %s207 = scalar_select %p206, %s12, 1
        %s208 = smul.addr %s207, 3
        %s209 = scalar_lea.vmem %s0, %s208
      $region40: #{forward.14} parent=35 // pred_fallthru
        _
    $region36: #{forward.14} parent=5 // pred_fallthru
      _
    %p210 = scmp.le.s32.totalorder 1, %s12
    %p211 = scmp.lt.s32.totalorder %s12, 3
    %p212 = pnand %p210, %p211
    %p213 = pneg %p212
    // Predicated region
    $region41: #{forward.14} parent=5 // pred_check
      _
    $region42: #{forward.14} parent=5 // pred_check_branch
      %215 = sbr.rel (%p212) target = $region44
    $region43: #{forward.14} parent=5 // pred_region
      %s216 = ssub.s32 %s12, 1
      %p217 = scmp.lt.s32.totalorder %s17, 1
      %s218 = scalar_select %p217, %s17, 1
      %s219 = smul.addr %s218, 3
      %s220 = scalar_lea.vmem %s0, %s219
      %p221 = pneg %p38
      %p222 = pneg %p35
      %p223 = pneg %p59
      %p224 = pneg %p56
      %p225 = pneg %p80
      %p226 = pneg %p77
      %p227 = pneg %p101
      %p228 = pneg %p98
      %p229 = pneg %p122
      %p230 = pneg %p119
      %p231 = pneg %p143
      %p232 = pneg %p140
      %p233 = pneg %p169
      %p234 = pneg %p166
      %p235 = scmp.lt.s32.totalorder %s17, 1
      %s236 = scalar_select %p235, %s17, 1
      %s237 = scalar_lea.vmem %s6, %s236
      %p238 = scmp.lt.s32.totalorder %s17, 1
      %s239 = scalar_select %p238, %s17, 1
      %s240 = smul.addr %s239, 3
      %s241 = scalar_lea.vmem %s0, %s240
      %p242 = scmp.lt.s32.totalorder %s17, 1
      %s243 = scalar_select %p242, %s17, 1
      %s244 = scalar_lea.vmem %s6, %s243
      %v246 = vld [vmem:[%s1] sm:$0xf]
      %v247 = vld [vmem:[%s1 + $0x4] sm:$0xf]
      %v248 = vld [vmem:[%s1 + $0x8] sm:$0xf]
      %v249 = vld [vmem:[%s1 + $0xc] sm:$0xf]
      %v250 = vld [vmem:[%s1 + $0x10] sm:$0xf]
      %v251 = vld [vmem:[%s1 + $0x14] sm:$0xf]
      %v252 = vld [vmem:[%s1 + $0x18] sm:$0xf]
      %v253 = vld [vmem:[%s1 + $0x1c] sm:$0xf]
      %v254 = vld [vmem:[%s1 + $0x20] sm:$0xf]
      %v255 = vld [vmem:[%s1 + $0x24] sm:$0xf]
      %v256 = vld [vmem:[%s1 + $0x28] sm:$0xf]
      %v257 = vld [vmem:[%s1 + $0x2c] sm:$0xf]
      %v258 = vld [vmem:[%s1 + $0x30] sm:$0xf]
      %v259 = vld [vmem:[%s1 + $0x34] sm:$0xf]
      %v260 = vld [vmem:[%s1 + $0x38] sm:$0xf]
      %v261 = vld [vmem:[%s1 + $0x3c] sm:$0xf]
      %v262 = vld [vmem:[%s1 + $0x40] sm:$0xf]
      %v263 = vld [vmem:[%s1 + $0x44] sm:$0xf]
      %v264 = vld [vmem:[%s2] sm:$0x1]
      %v265 = vld [vmem:[%s3] sm:$0x1]
      %vm266 = vcmask 254976
      %vm267 = vsmask.f32 1280
      %vm268 = vmand %vm266, %vm267
      %v269 = vld [vmem:[#allocation2] sm:$0x3]
      %v270 = vsel %vm268, 0, %v269
      %271 = vst [vmem:[#allocation2] sm:$0x3] %v270
      %v272 = vld [vmem:[#allocation2 + $0x2] sm:$0x3]
      %v273 = vsel %vm268, 0, %v272
      %274 = vst [vmem:[#allocation2 + $0x2] sm:$0x3] %v273
      %v275 = vld [vmem:[#allocation2 + $0x4] sm:$0x3]
      %v276 = vsel %vm268, 0, %v275
      %277 = vst [vmem:[#allocation2 + $0x4] sm:$0x3] %v276
      %v278 = vld [vmem:[%s241] sm:$0x1]
      %s279 = scalar_lea.vmem %s241, 1
      %v280 = vld [vmem:[%s279] sm:$0x1]
      %s281 = scalar_lea.vmem %s241, 2
      %v282 = vld [vmem:[%s281] sm:$0x1]
      %v285 = vunpack.c.l.s4 1966171168
      %v286 = vunpack.c.0.s8 %v285
      %v287 = vlaneseq
      %v288 = vshrl.u32 %v287, 7
      %v289 = vsub.s32 %v286, %v288
      %v290 = vrot.slane %v278, %v289
      %v292 = vunpack.c.l.s4 1966171168
      %v293 = vunpack.c.0.s8 %v292
      %v294 = vlaneseq
      %v295 = vshrl.u32 %v294, 7
      %v296 = vsub.s32 %v293, %v295
      %v297 = vrot.slane %v290, %v296
      %v299 = vshrl.u32 %v297, 16
      %301 = vrot.lane.b32.xlu0 %v299, 32
      %v302 = vpop.permute.xlu0 %301
      %v305 = vunpack.c.l.s4 1966171168
      %v306 = vunpack.c.0.s8 %v305
      %v307 = vlaneseq
      %v308 = vshrl.u32 %v307, 7
      %v309 = vsub.s32 %v306, %v308
      %v310 = vrot.slane %v280, %v309
      %v312 = vunpack.c.l.s4 1966171168
      %v313 = vunpack.c.0.s8 %v312
      %v314 = vlaneseq
      %v315 = vshrl.u32 %v314, 7
      %v316 = vsub.s32 %v313, %v315
      %v317 = vrot.slane %v310, %v316
      %318 = vrot.lane.b32.xlu0 %v317, 48
      %v319 = vpop.permute.xlu0 %318
      %v321 = vshrl.u32 %v317, 16
      %323 = vrot.lane.b32.xlu0 %v321, 80
      %v324 = vpop.permute.xlu0 %323
      %v327 = vunpack.c.l.s4 1966171168
      %v328 = vunpack.c.0.s8 %v327
      %v329 = vlaneseq
      %v330 = vshrl.u32 %v329, 7
      %v331 = vsub.s32 %v328, %v330
      %v332 = vrot.slane %v282, %v331
      %v334 = vunpack.c.l.s4 1966171168
      %v335 = vunpack.c.0.s8 %v334
      %v336 = vlaneseq
      %v337 = vshrl.u32 %v336, 7
      %v338 = vsub.s32 %v335, %v337
      %v339 = vrot.slane %v332, %v338
      %340 = vrot.lane.b32.xlu0 %v339, 96
      %v341 = vpop.permute.xlu0 %340
      %v343 = vshrl.u32 %v339, 16
      %vm345 = vcmask 130048
      %vm347 = vcmask 261120
      %v349 = vsel %vm347, %v278, %v302
      %vm350 = vcmask 392192
      %v352 = vsel %vm350, %v349, %v319
      %vm353 = vcmask 523264
      %v354 = vsel %vm353, %v352, %v319
      %vm355 = vcmask 654336
      %v357 = vsel %vm355, %v354, %v324
      %vm358 = vcmask 785408
      %v360 = vsel %vm358, %v357, %v341
      %vm361 = vcmask 916480
      %v362 = vsel %vm361, %v360, %v341
      %v382 = vunpack.c.l.b16 %v246
      %v383 = vunpack.c.l.b16 %v247
      %v384 = vunpack.c.l.b16 %v248
      %v385 = vunpack.c.l.b16 %v249
      %v386 = vunpack.c.l.b16 %v250
      %v387 = vunpack.c.l.b16 %v251
      %v388 = vunpack.c.l.b16 %v252
      %v389 = vunpack.c.l.b16 %v253
      %v390 = vunpack.c.l.b16 %v254
      %v391 = vunpack.c.l.b16 %v255
      %v392 = vunpack.c.l.b16 %v256
      %v393 = vunpack.c.l.b16 %v257
      %v394 = vunpack.c.l.b16 %v258
      %v395 = vunpack.c.l.b16 %v259
      %v396 = vunpack.c.l.b16 %v260
      %v397 = vunpack.c.l.b16 %v261
      %v398 = vunpack.c.l.b16 %v262
      %v399 = vunpack.c.l.b16 %v263
      %v400 = vpack.c.b16 %v383, %v382
      %v401 = vpack.c.b16 %v385, %v384
      %v402 = vpack.c.b16 %v387, %v386
      %v403 = vpack.c.b16 %v389, %v388
      %v404 = vpack.c.b16 %v391, %v390
      %v405 = vpack.c.b16 %v393, %v392
      %v406 = vpack.c.b16 %v395, %v394
      %v407 = vpack.c.b16 %v397, %v396
      %v408 = vpack.c.b16 %v399, %v398
      %v419 = vsel %vm345, %v343, 0
      %421 = vmatprep.subr.bf16.mxu0 0
      %422 = vmatpush1.bf16.msra.mxu0 %v407
      %423 = vmatprep.subr.bf16.mxu0 0
      %424 = vmatpush1.bf16.msra.mxu0 %v406
      %425 = vmatprep.subr.bf16.mxu0 0
      %426 = vmatpush1.bf16.msra.mxu0 %v405
      %427 = vmatprep.subr.bf16.mxu0 0
      %428 = vmatpush1.bf16.msra.mxu0 %v404
      %429 = vmatprep.subr.bf16.mxu0 0
      %430 = vmatpush1.bf16.msra.mxu0 %v403
      %431 = vmatprep.subr.bf16.mxu0 0
      %432 = vmatpush1.bf16.msra.mxu0 %v402
      %433 = vmatprep.subr.bf16.mxu0 0
      %434 = vmatpush1.bf16.msra.mxu0 %v401
      %435 = vmatprep.subr.bf16.mxu0 0
      %436 = vmatpush1.bf16.msra.mxu0 %v400
      %437 = vmatprep.subr.bf16.mxu0 0
      %438 = vmatpush2.bf16.msra.mxu0 0
      %439 = vmatprep.subr.bf16.mxu0 0
      %440 = vmatpush2.bf16.msra.mxu0 0
      %441 = vmatprep.subr.bf16.mxu0 0
      %442 = vmatpush2.bf16.msra.mxu0 0
      %443 = vmatprep.subr.bf16.mxu0 0
      %444 = vmatpush2.bf16.msra.mxu0 0
      %445 = vmatprep.subr.bf16.mxu0 0
      %446 = vmatpush2.bf16.msra.mxu0 0
      %447 = vmatprep.subr.bf16.mxu0 0
      %448 = vmatpush2.bf16.msra.mxu0 0
      %449 = vmatprep.subr.bf16.mxu0 0
      %450 = vmatpush2.bf16.msra.mxu0 0
      %451 = vmatprep.subr.bf16.mxu0 0
      %452 = vmatpush2.bf16.msra.mxu0 %v408
      %453 = vmatprep.mubr.bf16.mxu0 %v419
      %454 = vmatmul.mubr.bf16.gmra.mxu0 %v362
      %v455 = vpop.f32.mrf.mxu0
      %v456 = vadd.f32 0.0, %v455
      %v457 = vpop.f32.mrf.mxu0
      %v458 = vpop.f32.mrf.mxu0
      %v459 = vpop.f32.mrf.mxu0
      %460 = vdwg.mxu0
      %v461 = vadd.f32 %v456, %v264
      %v462 = vmax.f32 %v461, 0.0
      %v463 = vpack.c.bf16 %v462, %v462
      %v466 = vunpack.c.l.s4 1983009808
      %v467 = vunpack.c.0.s8 %v466
      %v468 = vlaneseq
      %v469 = vshrl.u32 %v468, 7
      %v470 = vsub.s32 %v467, %v469
      %v471 = vrot.slane %v463, %v470
      %v473 = vshll.u32 %v471, 16
      %s476 = scalar_lea.vmem [#allocation2], 2
      %vm477 = vcmask 253952
      %vm478 = vsmask.f32 7938
      %vm479 = vmand %vm477, %vm478
      %v480 = vld [vmem:[%s476] sm:$0x1]
      %v481 = vsel %vm479, %v473, %v480
      %482 = vst [vmem:[%s476] sm:$0x1] %v481
      %v484 = vlaneseq
      %v485 = vshrl.u32 %v484, 7
      %v486 = vsub.s32 0, %v485
      %v487 = vrot.slane %v265, %v486
      %488 = vrot.lane.b32.xlu0 %v487, 32
      %v489 = vpop.permute.xlu0 %488
      %v491 = vadd.f32 %v456, %v489
      %493 = vrot.lane.b32.xlu0 %v491, 96
      %v494 = vpop.permute.xlu0 %493
      %vm496 = vcmask 253952
      %497 = vst.msk [vmem:[#allocation3] sm:$0x1] %vm496, %v494
      %v498 = vld [vmem:[%s4] sm:$0xf]
      %v499 = vld [vmem:[%s4 + $0x4] sm:$0xf]
      %v500 = vld [vmem:[%s4 + $0x8] sm:$0xf]
      %v501 = vld [vmem:[%s4 + $0xc] sm:$0xf]
      %v502 = vld [vmem:[%s4 + $0x10] sm:$0xf]
      %v503 = vld [vmem:[%s4 + $0x14] sm:$0xf]
      %v504 = vld [vmem:[%s4 + $0x18] sm:$0xf]
      %v505 = vld [vmem:[%s4 + $0x1c] sm:$0xf]
      %v506 = vld [vmem:[%s4 + $0x20] sm:$0xf]
      %v507 = vld [vmem:[%s4 + $0x24] sm:$0xf]
      %v508 = vld [vmem:[%s4 + $0x28] sm:$0xf]
      %v509 = vld [vmem:[%s4 + $0x2c] sm:$0xf]
      %v510 = vld [vmem:[%s4 + $0x30] sm:$0xf]
      %v511 = vld [vmem:[%s4 + $0x34] sm:$0xf]
      %v512 = vld [vmem:[%s4 + $0x38] sm:$0xf]
      %v513 = vld [vmem:[%s4 + $0x3c] sm:$0xf]
      %v514 = vld [vmem:[%s4 + $0x40] sm:$0xf]
      %v515 = vld [vmem:[%s4 + $0x44] sm:$0xf]
      %v516 = vld [vmem:[%s4 + $0x48] sm:$0xf]
      %v517 = vld [vmem:[%s4 + $0x4c] sm:$0xf]
      %v518 = vld [vmem:[%s4 + $0x50] sm:$0xf]
      %v519 = vld [vmem:[%s4 + $0x54] sm:$0xf]
      %v520 = vld [vmem:[%s4 + $0x58] sm:$0xf]
      %v521 = vld [vmem:[%s4 + $0x5c] sm:$0xf]
      %v522 = vld [vmem:[%s4 + $0x60] sm:$0xf]
      %v523 = vld [vmem:[%s4 + $0x64] sm:$0xf]
      %v524 = vld [vmem:[%s4 + $0x68] sm:$0xf]
      %v525 = vld [vmem:[%s4 + $0x6c] sm:$0xf]
      %v526 = vld [vmem:[%s4 + $0x70] sm:$0xf]
      %v527 = vld [vmem:[%s4 + $0x74] sm:$0xf]
      %v528 = vld [vmem:[%s4 + $0x78] sm:$0xf]
      %v529 = vld [vmem:[%s4 + $0x7c] sm:$0xf]
      %v530 = vld [vmem:[%s4 + $0x80] sm:$0xf]
      %v531 = vld [vmem:[%s4 + $0x84] sm:$0xf]
      %v532 = vld [vmem:[%s4 + $0x88] sm:$0xf]
      %v533 = vld [vmem:[%s4 + $0x8c] sm:$0xf]
      %v534 = vld [vmem:[%s5] sm:$0x1]
      %v535 = vld [vmem:[#allocation2] sm:$0x1]
      %v536 = vld [vmem:[#allocation2] sm:$0x2]
      %v537 = vld [vmem:[%s476] sm:$0x1]
      %v538 = vld [vmem:[%s476] sm:$0x2]
      %s539 = scalar_lea.vmem [#allocation2], 4
      %v540 = vld [vmem:[%s539] sm:$0x1]
      %v541 = vld [vmem:[%s539] sm:$0x2]
      %v544 = vunpack.c.l.s4 1983009808
      %v545 = vunpack.c.0.s8 %v544
      %v546 = vlaneseq
      %v547 = vshrl.u32 %v546, 7
      %v548 = vsub.s32 %v545, %v547
      %v549 = vrot.slane %v535, %v548
      %v551 = vshrl.u32 %v549, 16
      %553 = vrot.lane.b32.xlu0 %v551, 32
      %v554 = vpop.permute.xlu0 %553
      %v557 = vunpack.c.l.s4 1983009808
      %v558 = vunpack.c.0.s8 %v557
      %v559 = vlaneseq
      %v560 = vshrl.u32 %v559, 7
      %v561 = vsub.s32 %v558, %v560
      %v562 = vrot.slane %v536, %v561
      %v563 = vrot.slane %v562, 1
      %564 = vrot.lane.b32.xlu0 %v563, 64
      %v565 = vpop.permute.xlu0 %564
      %v568 = vunpack.c.l.s4 1983009808
      %v569 = vunpack.c.0.s8 %v568
      %v570 = vlaneseq
      %v571 = vshrl.u32 %v570, 7
      %v572 = vsub.s32 %v569, %v571
      %v573 = vrot.slane %v537, %v572
      %574 = vrot.lane.b32.xlu0 %v573, 96
      %v575 = vpop.permute.xlu0 %574
      %v577 = vshrl.u32 %v573, 16
      %v581 = vunpack.c.l.s4 1983009808
      %v582 = vunpack.c.0.s8 %v581
      %v583 = vlaneseq
      %v584 = vshrl.u32 %v583, 7
      %v585 = vsub.s32 %v582, %v584
      %v586 = vrot.slane %v538, %v585
      %v587 = vrot.slane %v586, 1
      %588 = vrot.lane.b32.xlu0 %v587, 32
      %v589 = vpop.permute.xlu0 %588
      %v592 = vunpack.c.l.s4 1983009808
      %v593 = vunpack.c.0.s8 %v592
      %v594 = vlaneseq
      %v595 = vshrl.u32 %v594, 7
      %v596 = vsub.s32 %v593, %v595
      %v597 = vrot.slane %v540, %v596
      %598 = vrot.lane.b32.xlu0 %v597, 64
      %v599 = vpop.permute.xlu0 %598
      %v601 = vshrl.u32 %v597, 16
      %603 = vrot.lane.b32.xlu0 %v601, 96
      %v604 = vpop.permute.xlu0 %603
      %v607 = vunpack.c.l.s4 1983009808
      %v608 = vunpack.c.0.s8 %v607
      %v609 = vlaneseq
      %v610 = vshrl.u32 %v609, 7
      %v611 = vsub.s32 %v608, %v610
      %v612 = vrot.slane %v541, %v611
      %v613 = vrot.slane %v612, 1
      %v616 = vsel %vm347, %v535, %v554
      %v618 = vsel %vm353, %v616, %v565
      %v620 = vsel %vm358, %v618, %v575
      %v624 = vsel %vm347, %v577, %v589
      %v626 = vsel %vm353, %v624, %v599
      %v628 = vsel %vm358, %v626, %v604
      %v666 = vunpack.c.l.b16 %v498
      %v667 = vunpack.c.l.b16 %v499
      %v668 = vunpack.c.l.b16 %v500
      %v669 = vunpack.c.l.b16 %v501
      %v670 = vunpack.c.l.b16 %v502
      %v671 = vunpack.c.l.b16 %v503
      %v672 = vunpack.c.l.b16 %v504
      %v673 = vunpack.c.l.b16 %v505
      %v674 = vunpack.c.l.b16 %v506
      %v675 = vunpack.c.l.b16 %v507
      %v676 = vunpack.c.l.b16 %v508
      %v677 = vunpack.c.l.b16 %v509
      %v678 = vunpack.c.l.b16 %v510
      %v679 = vunpack.c.l.b16 %v511
      %v680 = vunpack.c.l.b16 %v512
      %v681 = vunpack.c.l.b16 %v513
      %v682 = vunpack.c.l.b16 %v514
      %v683 = vunpack.c.l.b16 %v515
      %v684 = vunpack.c.l.b16 %v516
      %v685 = vunpack.c.l.b16 %v517
      %v686 = vunpack.c.l.b16 %v518
      %v687 = vunpack.c.l.b16 %v519
      %v688 = vunpack.c.l.b16 %v520
      %v689 = vunpack.c.l.b16 %v521
      %v690 = vunpack.c.l.b16 %v522
      %v691 = vunpack.c.l.b16 %v523
      %v692 = vunpack.c.l.b16 %v524
      %v693 = vunpack.c.l.b16 %v525
      %v694 = vunpack.c.l.b16 %v526
      %v695 = vunpack.c.l.b16 %v527
      %v696 = vunpack.c.l.b16 %v528
      %v697 = vunpack.c.l.b16 %v529
      %v698 = vunpack.c.l.b16 %v530
      %v699 = vunpack.c.l.b16 %v531
      %v700 = vunpack.c.l.b16 %v532
      %v701 = vunpack.c.l.b16 %v533
      %v702 = vpack.c.b16 %v667, %v666
      %v703 = vpack.c.b16 %v669, %v668
      %v704 = vpack.c.b16 %v671, %v670
      %v705 = vpack.c.b16 %v673, %v672
      %v706 = vpack.c.b16 %v675, %v674
      %v707 = vpack.c.b16 %v677, %v676
      %v708 = vpack.c.b16 %v679, %v678
      %v709 = vpack.c.b16 %v681, %v680
      %v710 = vpack.c.b16 %v683, %v682
      %v711 = vpack.c.b16 %v685, %v684
      %v712 = vpack.c.b16 %v687, %v686
      %v713 = vpack.c.b16 %v689, %v688
      %v714 = vpack.c.b16 %v691, %v690
      %v715 = vpack.c.b16 %v693, %v692
      %v716 = vpack.c.b16 %v695, %v694
      %v717 = vpack.c.b16 %v697, %v696
      %v718 = vpack.c.b16 %v699, %v698
      %v719 = vpack.c.b16 %v701, %v700
      %v739 = vsel %vm347, %v613, 0
      %741 = vmatprep.subr.bf16.mxu0 0
      %742 = vmatpush1.bf16.msra.mxu0 %v709
      %743 = vmatprep.subr.bf16.mxu0 0
      %744 = vmatpush1.bf16.msra.mxu0 %v708
      %745 = vmatprep.subr.bf16.mxu0 0
      %746 = vmatpush1.bf16.msra.mxu0 %v707
      %747 = vmatprep.subr.bf16.mxu0 0
      %748 = vmatpush1.bf16.msra.mxu0 %v706
      %749 = vmatprep.subr.bf16.mxu0 0
      %750 = vmatpush1.bf16.msra.mxu0 %v705
      %751 = vmatprep.subr.bf16.mxu0 0
      %752 = vmatpush1.bf16.msra.mxu0 %v704
      %753 = vmatprep.subr.bf16.mxu0 0
      %754 = vmatpush1.bf16.msra.mxu0 %v703
      %755 = vmatprep.subr.bf16.mxu0 0
      %756 = vmatpush1.bf16.msra.mxu0 %v702
      %757 = vmatprep.subr.bf16.mxu0 0
      %758 = vmatpush2.bf16.msra.mxu0 %v717
      %759 = vmatprep.subr.bf16.mxu0 0
      %760 = vmatpush2.bf16.msra.mxu0 %v716
      %761 = vmatprep.subr.bf16.mxu0 0
      %762 = vmatpush2.bf16.msra.mxu0 %v715
      %763 = vmatprep.subr.bf16.mxu0 0
      %764 = vmatpush2.bf16.msra.mxu0 %v714
      %765 = vmatprep.subr.bf16.mxu0 0
      %766 = vmatpush2.bf16.msra.mxu0 %v713
      %767 = vmatprep.subr.bf16.mxu0 0
      %768 = vmatpush2.bf16.msra.mxu0 %v712
      %769 = vmatprep.subr.bf16.mxu0 0
      %770 = vmatpush2.bf16.msra.mxu0 %v711
      %771 = vmatprep.subr.bf16.mxu0 0
      %772 = vmatpush2.bf16.msra.mxu0 %v710
      %773 = vmatprep.mubr.bf16.mxu0 %v628
      %774 = vmatmul.mubr.bf16.gmra.mxu0 %v620
      %v775 = vpop.f32.mrf.mxu0
      %v776 = vadd.f32 %v534, %v775
      %v777 = vpop.f32.mrf.mxu0
      %v778 = vpop.f32.mrf.mxu0
      %v779 = vpop.f32.mrf.mxu0
      %780 = vdwg.mxu0
      %781 = vmatprep.subr.bf16.mxu0 0
      %782 = vmatpush1.bf16.msra.mxu0 0
      %783 = vmatprep.subr.bf16.mxu0 0
      %784 = vmatpush1.bf16.msra.mxu0 0
      %785 = vmatprep.subr.bf16.mxu0 0
      %786 = vmatpush1.bf16.msra.mxu0 0
      %787 = vmatprep.subr.bf16.mxu0 0
      %788 = vmatpush1.bf16.msra.mxu0 0
      %789 = vmatprep.subr.bf16.mxu0 0
      %790 = vmatpush1.bf16.msra.mxu0 0
      %791 = vmatprep.subr.bf16.mxu0 0
      %792 = vmatpush1.bf16.msra.mxu0 0
      %793 = vmatprep.subr.bf16.mxu0 0
      %794 = vmatpush1.bf16.msra.mxu0 %v719
      %795 = vmatprep.subr.bf16.mxu0 0
      %796 = vmatpush1.bf16.msra.mxu0 %v718
      %797 = vmatprep.subr.bf16.mxu0 0
      %798 = vmatpush2.bf16.msra.mxu0 0
      %799 = vmatprep.subr.bf16.mxu0 0
      %800 = vmatpush2.bf16.msra.mxu0 0
      %801 = vmatprep.subr.bf16.mxu0 0
      %802 = vmatpush2.bf16.msra.mxu0 0
      %803 = vmatprep.subr.bf16.mxu0 0
      %804 = vmatpush2.bf16.msra.mxu0 0
      %805 = vmatprep.subr.bf16.mxu0 0
      %806 = vmatpush2.bf16.msra.mxu0 0
      %807 = vmatprep.subr.bf16.mxu0 0
      %808 = vmatpush2.bf16.msra.mxu0 0
      %809 = vmatprep.subr.bf16.mxu0 0
      %810 = vmatpush2.bf16.msra.mxu0 0
      %811 = vmatprep.subr.bf16.mxu0 0
      %812 = vmatpush2.bf16.msra.mxu0 0
      %813 = vmatprep.mubr.bf16.mxu0 0
      %814 = vmatmul.mubr.bf16.gmra.mxu0 %v739
      %v815 = vpop.f32.mrf.mxu0
      %v816 = vadd.f32 %v776, %v815
      %v817 = vpop.f32.mrf.mxu0
      %v818 = vpop.f32.mrf.mxu0
      %v819 = vpop.f32.mrf.mxu0
      %820 = vdwg.mxu0
      %v821 = vld [vmem:[#allocation3] sm:$0x1]
      %v822 = vadd.f32 %v816, %v821
      %v823 = vmax.f32 %v822, 0.0
      %v824 = vpack.c.bf16 %v823, %v823
      %vm825 = vsmask.f32 256
      %vm826 = vmand %vm477, %vm825
      %v827 = vld [vmem:[%s244] sm:$0x1]
      %v828 = vsel %vm826, %v824, %v827
      %829 = vst [vmem:[%s244] sm:$0x1] %v828
      %p830 = scmp.lt.s32.totalorder %s17, 1
      %s831 = scalar_select %p830, %s17, 1
      %s832 = scalar_lea.vmem %s6, %s831
      // Predicated region
      $region45: #{forward.14} parent=43 // pred_check
        %p833 = pneg %p166
      $region46: #{forward.14} parent=43 // pred_check_branch
        %835 = sbr.rel (%p833) target = $region48
      $region47: #{forward.14} parent=43 // pred_region
        _
      $region48: #{forward.14} parent=43 // pred_fallthru
        _
    $region44: #{forward.14} parent=5 // pred_fallthru
      _
    %p836 = scmp.le.s32.totalorder 2, %s12
    // Predicated region
    $region49: #{forward.14} parent=5 // pred_check
      %p837 = pneg %p836
    $region50: #{forward.14} parent=5 // pred_check_branch
      %839 = sbr.rel (%p837) target = $region52
    $region51: #{forward.14} parent=5 // pred_region
      %s840 = ssub.s32 %s12, 2
      // Predicated region
      $region53: #{forward.14} parent=51 // pred_check
        %p841 = pneg %p172
      $region54: #{forward.14} parent=51 // pred_check_branch
        %843 = sbr.rel (%p841) target = $region56
      $region55: #{forward.14} parent=51 // pred_region
        %p844 = scmp.lt.s32.totalorder %s18, 1
        %s845 = scalar_select %p844, %s18, 1
        %s846 = scalar_lea.vmem %s6, %s845
      $region56: #{forward.14} parent=51 // pred_fallthru
        _
    $region52: #{forward.14} parent=5 // pred_fallthru
      _
  $region6: #{forward.14} parent=0 // loop_footer
    %s16 = sadd.s32 1, %s12
  $region7: #{forward.14} parent=0 // loop_footer_branch
    %11 = sbr.rel target = $region3
  $region8: #{forward.14} parent=0 // loop_exit
    _

// kernel: forward.15
$region0: #{forward.15}
  #allocation0 [shape = 'u32[]', space=smem, size = 0x4, offset = 0x4, fixed_abs, tag = 'smem constant byte address 0x4 - core index']
  #allocation1 [shape = 'u32[144,128]{1,0:T(1,128)}', space=vmem, size = 0x12000, scoped, tag = 'internal scratch']
  %s0 = inlined_call_operand.vmem [shape: bf16[2,32], index: 0, kind: input, shape index: {}]
  %s1 = inlined_call_operand.vmem [shape: bf16[32,32], index: 1, kind: input, shape index: {}]
  %s2 = inlined_call_operand.vmem [shape: f32[1,32], index: 2, kind: input, shape index: {}]
  %s3 = inlined_call_operand.vmem [shape: bf16[32,128], index: 3, kind: input, shape index: {}]
  %s4 = inlined_call_operand.vmem [shape: f32[1,128], index: 4, kind: input, shape index: {}]
  %s5 = inlined_call_operand.hbm [shape: f32[2,128], index: 5, kind: output, shape index: {}]
  %s6 = sld [smem:[#allocation0]]
  $region30: #{forward.15} parent=0
    _
  %s8 = ssub.s32 1, %s6
  %s9 = scalar_select 0, %s8, %s6
  $region1: #{forward.15} parent=0
    #allocation2 [shape = 'u8[1024]{0}', space=vmem, size = 0x400, scoped, tag = 'output window, operand 0, single buffered']
    #allocation3 [shape = 's32[1]{0}', space=sflag, size = 0x4, scoped, tag = 'scoped memory for forward.15']
    %10 = vsyncpa [#allocation3], 0
    // Predicated region
    $region2: #{forward.15} parent=1 // pred_check
      _
    $region3: #{forward.15} parent=1 // pred_check_branch
      %12 = sbr.rel (0) target = $region5
    $region4: #{forward.15} parent=1 // pred_region
      _
    $region5: #{forward.15} parent=1 // pred_fallthru
      _
    // Predicated region
    $region6: #{forward.15} parent=1 // pred_check
      _
    $region7: #{forward.15} parent=1 // pred_check_branch
      %14 = sbr.rel (0) target = $region9
    $region8: #{forward.15} parent=1 // pred_region
      _
    $region9: #{forward.15} parent=1 // pred_fallthru
      _
    // Predicated region
    $region10: #{forward.15} parent=1 // pred_check
      _
    $region11: #{forward.15} parent=1 // pred_check_branch
      %16 = sbr.rel (0) target = $region13
    $region12: #{forward.15} parent=1 // pred_region
      _
    $region13: #{forward.15} parent=1 // pred_fallthru
      _
    // Predicated region
    $region14: #{forward.15} parent=1 // pred_check
      _
    $region15: #{forward.15} parent=1 // pred_check_branch
      %18 = sbr.rel (0) target = $region17
    $region16: #{forward.15} parent=1 // pred_region
      _
    $region17: #{forward.15} parent=1 // pred_fallthru
      _
    // Predicated region
    $region18: #{forward.15} parent=1 // pred_check
      _
    $region19: #{forward.15} parent=1 // pred_check_branch
      %20 = sbr.rel (0) target = $region21
    $region20: #{forward.15} parent=1 // pred_region
      _
    $region21: #{forward.15} parent=1 // pred_fallthru
      _
    %v22 = vld [vmem:[%s0] sm:$0x1]
    %v23 = vld [vmem:[%s1] sm:$0xf]
    %v24 = vld [vmem:[%s1 + $0x4] sm:$0xf]
    %v25 = vld [vmem:[%s1 + $0x8] sm:$0xf]
    %v26 = vld [vmem:[%s1 + $0xc] sm:$0xf]
    %v27 = vld [vmem:[%s2] sm:$0x1]
    %v29 = vlaneseq
    %v30 = vshrl.u32 %v29, 7
    %v31 = vsub.s32 0, %v30
    %v32 = vrot.slane %v27, %v31
    %v38 = vunpack.c.l.b16 %v23
    %v39 = vunpack.c.l.b16 %v24
    %v40 = vunpack.c.l.b16 %v25
    %v41 = vunpack.c.l.b16 %v26
    %v42 = vpack.c.b16 %v39, %v38
    %v43 = vpack.c.b16 %v41, %v40
    %vm46 = vcmask 261120
    %v48 = vsel %vm46, %v22, 0
    %50 = vmatprep.subr.bf16.mxu0 0
    %51 = vmatpush1.bf16.msra.mxu0 0
    %52 = vmatprep.subr.bf16.mxu0 0
    %53 = vmatpush1.bf16.msra.mxu0 0
    %54 = vmatprep.subr.bf16.mxu0 0
    %55 = vmatpush1.bf16.msra.mxu0 0
    %56 = vmatprep.subr.bf16.mxu0 0
    %57 = vmatpush1.bf16.msra.mxu0 0
    %58 = vmatprep.subr.bf16.mxu0 0
    %59 = vmatpush1.bf16.msra.mxu0 0
    %60 = vmatprep.subr.bf16.mxu0 0
    %61 = vmatpush1.bf16.msra.mxu0 0
    %62 = vmatprep.subr.bf16.mxu0 0
    %63 = vmatpush1.bf16.msra.mxu0 %v43
    %64 = vmatprep.subr.bf16.mxu0 0
    %65 = vmatpush1.bf16.msra.mxu0 %v42
    %66 = vmatprep.subr.bf16.mxu0 0
    %67 = vmatpush2.bf16.msra.mxu0 0
    %68 = vmatprep.subr.bf16.mxu0 0
    %69 = vmatpush2.bf16.msra.mxu0 0
    %70 = vmatprep.subr.bf16.mxu0 0
    %71 = vmatpush2.bf16.msra.mxu0 0
    %72 = vmatprep.subr.bf16.mxu0 0
    %73 = vmatpush2.bf16.msra.mxu0 0
    %74 = vmatprep.subr.bf16.mxu0 0
    %75 = vmatpush2.bf16.msra.mxu0 0
    %76 = vmatprep.subr.bf16.mxu0 0
    %77 = vmatpush2.bf16.msra.mxu0 0
    %78 = vmatprep.subr.bf16.mxu0 0
    %79 = vmatpush2.bf16.msra.mxu0 0
    %80 = vmatprep.subr.bf16.mxu0 0
    %81 = vmatpush2.bf16.msra.mxu0 0
    %82 = vmatprep.mubr.bf16.mxu0 0
    %83 = vmatmul.mubr.bf16.gmra.mxu0 %v48
    %v84 = vpop.f32.mrf.mxu0
    %v85 = vadd.f32 %v32, %v84
    %v86 = vpop.f32.mrf.mxu0
    %v87 = vpop.f32.mrf.mxu0
    %v88 = vpop.f32.mrf.mxu0
    %89 = vdwg.mxu0
    %v90 = vmax.f32 %v85, 0.0
    %v91 = vpack.c.bf16 %v90, %v90
    %v92 = vld [vmem:[%s3] sm:$0xf]
    %v93 = vld [vmem:[%s3 + $0x4] sm:$0xf]
    %v94 = vld [vmem:[%s3 + $0x8] sm:$0xf]
    %v95 = vld [vmem:[%s3 + $0xc] sm:$0xf]
    %v96 = vld [vmem:[%s4] sm:$0x1]
    %v98 = vlaneseq
    %v99 = vshrl.u32 %v98, 7
    %v100 = vsub.s32 0, %v99
    %v101 = vrot.slane %v96, %v100
    %v107 = vunpack.c.l.b16 %v92
    %v108 = vunpack.c.l.b16 %v93
    %v109 = vunpack.c.l.b16 %v94
    %v110 = vunpack.c.l.b16 %v95
    %v111 = vpack.c.b16 %v108, %v107
    %v112 = vpack.c.b16 %v110, %v109
    %v116 = vsel %vm46, %v91, 0
    %118 = vmatprep.subr.bf16.mxu0 0
    %119 = vmatpush1.bf16.msra.mxu0 0
    %120 = vmatprep.subr.bf16.mxu0 0
    %121 = vmatpush1.bf16.msra.mxu0 0
    %122 = vmatprep.subr.bf16.mxu0 0
    %123 = vmatpush1.bf16.msra.mxu0 0
    %124 = vmatprep.subr.bf16.mxu0 0
    %125 = vmatpush1.bf16.msra.mxu0 0
    %126 = vmatprep.subr.bf16.mxu0 0
    %127 = vmatpush1.bf16.msra.mxu0 0
    %128 = vmatprep.subr.bf16.mxu0 0
    %129 = vmatpush1.bf16.msra.mxu0 0
    %130 = vmatprep.subr.bf16.mxu0 0
    %131 = vmatpush1.bf16.msra.mxu0 %v112
    %132 = vmatprep.subr.bf16.mxu0 0
    %133 = vmatpush1.bf16.msra.mxu0 %v111
    %134 = vmatprep.subr.bf16.mxu0 0
    %135 = vmatpush2.bf16.msra.mxu0 0
    %136 = vmatprep.subr.bf16.mxu0 0
    %137 = vmatpush2.bf16.msra.mxu0 0
    %138 = vmatprep.subr.bf16.mxu0 0
    %139 = vmatpush2.bf16.msra.mxu0 0
    %140 = vmatprep.subr.bf16.mxu0 0
    %141 = vmatpush2.bf16.msra.mxu0 0
    %142 = vmatprep.subr.bf16.mxu0 0
    %143 = vmatpush2.bf16.msra.mxu0 0
    %144 = vmatprep.subr.bf16.mxu0 0
    %145 = vmatpush2.bf16.msra.mxu0 0
    %146 = vmatprep.subr.bf16.mxu0 0
    %147 = vmatpush2.bf16.msra.mxu0 0
    %148 = vmatprep.subr.bf16.mxu0 0
    %149 = vmatpush2.bf16.msra.mxu0 0
    %150 = vmatprep.mubr.bf16.mxu0 0
    %151 = vmatmul.mubr.bf16.gmra.mxu0 %v116
    %v152 = vpop.f32.mrf.mxu0
    %v153 = vadd.f32 %v101, %v152
    %v154 = vpop.f32.mrf.mxu0
    %v155 = vpop.f32.mrf.mxu0
    %v156 = vpop.f32.mrf.mxu0
    %157 = vdwg.mxu0
    %158 = vst [vmem:[#allocation2] sm:$0x3] %v153
    // Predicated region
    $region22: #{forward.15} parent=1 // pred_check
      _
    $region23: #{forward.15} parent=1 // pred_check_branch
      %160 = sbr.rel (0) target = $region25
    $region24: #{forward.15} parent=1 // pred_region
      %s162 = ssub.s32 32, 32
      %163 = vsyncadd [#allocation3], %s162
      %s165 = sshll.u32 [#allocation2], 4
      %s166 = int_to_ptr.vmem [resolvable:$true] %s165
      %168 = dma.vmem_to_hbm [thread:$0]  %s166, 32, %s5, [#allocation3]
    $region25: #{forward.15} parent=1 // pred_fallthru
      _
    // Predicated region
    $region26: #{forward.15} parent=1 // pred_check
      _
    $region27: #{forward.15} parent=1 // pred_check_branch
      %170 = sbr.rel (0) target = $region29
    $region28: #{forward.15} parent=1 // pred_region
      %171 = dma.done [#allocation3], 32
    $region29: #{forward.15} parent=1 // pred_fallthru
      _
    %172 = vsyncpa [#allocation3], 1

</llo_original>
